<compile_context>
chip_gen: v5e
topology: v5e:2x2
jax: 0.10.0
libtpu: 0.0.40
codegen_flags: <defaults>
</compile_context>

<pallas_src>
import functools

import jax
import jax.numpy as jnp
from jax import lax
from jax.experimental import pallas as pl
from jax.experimental.pallas import tpu as pltpu

LANE = 128


# ----------------------------- Pallas kernel ------------------------------- #

def _conv_epilogue_kernel(a_ref, w_ref, b_ref, o_ref, *, cout, leaky, fuse_norm,
                          slope, eps, inv_s):
    """One conv output block: o = epilogue(a @ w + b).

    a_ref: (1, TS, K)    bf16 im2col patches for TS output positions
    w_ref: (K, 128)      bf16 weights, Cout zero-padded to 128 lanes
    b_ref: (1, 128)      f32 bias, zero-padded
    o_ref: (1, TS, Cout) real (un-padded) output channels

    Single K step (full-K tile): no accumulator scratch, no K grid axis.
    When fuse_norm, TS == one full sample's spatial extent and the epilogue is
    InstanceNorm3d(affine=False, biased var) + LeakyReLU, matching PyTorch.
    """
    a = a_ref[0]                                             # (TS, K) bf16
    acc = jnp.dot(a, w_ref[...], preferred_element_type=jnp.float32)
    acc = acc + b_ref[...]                                   # (TS, 128) f32
    if fuse_norm:
        # Per-sample, per-channel stats over spatial rows.
        # TODO(synk): sum and sum-of-squares are two VMEM sweeps of the spilled
        # accumulator; a single fused traversal would shave one sweep.
        mean = jnp.sum(acc, axis=0, keepdims=True) * inv_s   # (1, 128)
        msq = jnp.sum(acc * acc, axis=0, keepdims=True) * inv_s
        var = msq - mean * mean
        acc = (acc - mean) * lax.rsqrt(var + eps)
    if leaky:
        acc = jnp.where(acc >= 0, acc, slope * acc)
    o_ref[0] = acc[:, :cout].astype(o_ref.dtype)


# ------------------------------- glue / wrappers ---------------------------- #

def _im2col_3d_cl(x, ksize, stride, pad):
    """x: (N, D, H, W, C) channels-last -> patches (N, Do*Ho*Wo, k^3*C).

    Column order is (kd, kh, kw, C); C is already the minor axis, so this is a
    stack + contiguous reshape (no full-tensor transpose).
    """
    N, D, H, W, C = x.shape
    Do = (D + 2 * pad - ksize) // stride + 1
    Ho = (H + 2 * pad - ksize) // stride + 1
    Wo = (W + 2 * pad - ksize) // stride + 1
    xp = jnp.pad(x, ((0, 0), (pad, pad), (pad, pad), (pad, pad), (0, 0)))
    cols = []
    for kd in range(ksize):
        for kh in range(ksize):
            for kw in range(ksize):
                sl = lax.slice(
                    xp,
                    (0, kd, kh, kw, 0),
                    (N,
                     kd + (Do - 1) * stride + 1,
                     kh + (Ho - 1) * stride + 1,
                     kw + (Wo - 1) * stride + 1,
                     C),
                    (1, stride, stride, stride, 1),
                )                                            # (N, Do, Ho, Wo, C)
                cols.append(sl)
    p = jnp.stack(cols, axis=4)                              # (N, Do, Ho, Wo, 64, C)
    return p.reshape(N, Do * Ho * Wo, ksize ** 3 * C), (Do, Ho, Wo)


def _pick_ts(s):
    """Largest power-of-two spatial tile dividing S (caps the in-kernel f32
    accumulator at (2048, 128) = 1 MiB); falls back to the full extent."""
    for ts in (2048, 1024, 512, 256, 128, 64, 32, 16, 8):
        if s % ts == 0:
            return ts
    return s


def conv3d_layer(x_cl, w, b, *, stride, pad, leaky, fuse_norm, out_dtype,
                 slope=0.2, eps=1e-5):
    """Conv3d (PyTorch semantics) on a channels-last input via im2col + a single
    Pallas matmul-with-epilogue kernel. Returns (N, Do, Ho, Wo, Cout)."""
    Cout, Cin, ksize, _, _ = w.shape
    N = x_cl.shape[0]

    patches, (Do, Ho, Wo) = _im2col_3d_cl(
        x_cl.astype(jnp.bfloat16), ksize, stride, pad)        # (N, S, K) bf16
    _, S, K = patches.shape
    CP = ((Cout + LANE - 1) // LANE) * LANE                   # lane-dense matmul width

    # Weight rows ordered (kd, kh, kw, Cin) to match the im2col columns; pad
    # output channels to 128 so the MXU/VPU work stays lane-dense inside the
    # kernel (only the final store is narrow).
    wmat = jnp.transpose(w, (2, 3, 4, 1, 0)).reshape(K, Cout)
    wmat = jnp.pad(wmat, ((0, 0), (0, CP - Cout))).astype(jnp.bfloat16)
    bmat = jnp.pad(b.reshape(1, Cout), ((0, 0), (0, CP - Cout))).astype(jnp.float32)

    # Fused InstanceNorm needs one full sample per block; otherwise tile S.
    TS = S if fuse_norm else _pick_ts(S)

    out = pl.pallas_call(
        functools.partial(_conv_epilogue_kernel, cout=Cout, leaky=leaky,
                          fuse_norm=fuse_norm, slope=slope, eps=eps,
                          inv_s=1.0 / S),
        out_shape=jax.ShapeDtypeStruct((N, S, Cout), out_dtype),
        grid=(N, S // TS),
        in_specs=[
            pl.BlockSpec((1, TS, K), lambda n, si: (n, si, 0)),
            pl.BlockSpec((K, CP), lambda n, si: (0, 0)),
            pl.BlockSpec((1, CP), lambda n, si: (0, 0)),
        ],
        out_specs=pl.BlockSpec((1, TS, Cout), lambda n, si: (n, si, 0)),
        compiler_params=pltpu.CompilerParams(
            dimension_semantics=("parallel", "parallel"),
            vmem_limit_bytes=32 * 1024 * 1024),
    )(patches, wmat, bmat)
    return out.reshape(N, Do, Ho, Wo, Cout)


# ------------------------------ model definition ---------------------------- #

def init_patchgan_params(key, in_channels=2, ndf=8, n_layers=3):
    """Deterministic synthetic parameters matching PatchGAN.__init__ shapes.
    Returns list of (weight (Cout, Cin, 4, 4, 4), bias (Cout,), stride)."""
    cfgs = [(in_channels, ndf, 2)]                            # first_conv
    nf_mult = 1
    for layer in range(1, n_layers):                          # middle (stride 2)
        nf_mult_prev, nf_mult = nf_mult, min(2 ** layer, 8)
        cfgs.append((ndf * nf_mult_prev, ndf * nf_mult, 2))
    nf_mult_prev, nf_mult = nf_mult, min(2 ** n_layers, 8)
    cfgs.append((ndf * nf_mult_prev, ndf * nf_mult, 1))       # middle (stride 1)
    cfgs.append((ndf * nf_mult, 1, 1))                        # final_conv

    params = []
    for cin, cout, stride in cfgs:
        key, k1, k2 = jax.random.split(key, 3)
        fan_in = cin * 4 ** 3
        bound = 1.0 / float(fan_in) ** 0.5
        w = jax.random.uniform(k1, (cout, cin, 4, 4, 4), jnp.float32, -bound, bound)
        bb = jax.random.uniform(k2, (cout,), jnp.float32, -bound, bound)
        params.append((w, bb, stride))
    return params


def patchgan_forward(x, params):
    """x: (N, C, D, H, W) — PyTorch NCDHW in / out; channels-last internally."""
    x = jnp.transpose(x, (0, 2, 3, 4, 1))                     # -> NDHWC, once
    # first_conv: Conv3d -> LeakyReLU(0.2), fused in the conv epilogue.
    w, b, s = params[0]
    x = conv3d_layer(x, w, b, stride=s, pad=1, leaky=True, fuse_norm=False,
                     out_dtype=jnp.bfloat16)
    # middle_conv: [Conv3d -> InstanceNorm3d -> LeakyReLU(0.2)] fully fused into
    # one Pallas call per layer (no conv->norm HBM round trip).
    for w, b, s in params[1:-1]:
        x = conv3d_layer(x, w, b, stride=s, pad=1, leaky=True, fuse_norm=True,
                         out_dtype=jnp.bfloat16)
    # final_conv: plain Conv3d, f32 output.
    w, b, s = params[-1]
    x = conv3d_layer(x, w, b, stride=s, pad=1, leaky=False, fuse_norm=False,
                     out_dtype=jnp.float32)
    return jnp.transpose(x, (0, 4, 1, 2, 3))                  # back to NCDHW


# ----------------------------------- main ----------------------------------- #

if __name__ == "__main__":
    key = jax.random.PRNGKey(0)
    k_param, k_x = jax.random.split(key)

    # Small-but-valid config: in_channels=2, ndf=8, n_layers=3, 32^3 volume.
    in_channels, ndf, n_layers = 2, 8, 3
    params = init_patchgan_params(k_param, in_channels, ndf, n_layers)

    x = jax.random.normal(k_x, (2, in_channels, 32, 32, 32), jnp.float32)

    fwd = jax.jit(lambda xx: patchgan_forward(xx, params))
    out = fwd(x)
    jax.block_until_ready(out)

    # Expected PatchGAN map shape for a 32^3 input: (2, 1, 2, 2, 2)
    assert out.shape == (2, 1, 2, 2, 2), out.shape
    assert bool(jnp.all(jnp.isfinite(out)))
    print("KERNEL_OK")
</pallas_src>

<mosaic_0001>
module attributes {stable_mosaic.version = 11 : i64} {
  func.func @_conv_epilogue_kernel(%arg0: i32, %arg1: i32, %arg2: memref<1x2048x128xbf16, #tpu.memory_space<vmem>>, %arg3: memref<128x128xbf16, #tpu.memory_space<vmem>>, %arg4: memref<1x128xf32, #tpu.memory_space<vmem>>, %arg5: memref<1x2048x8xbf16, #tpu.memory_space<vmem>>) attributes {dimension_semantics = [#tpu.dimension_semantics<parallel>, #tpu.dimension_semantics<parallel>], iteration_bounds = array<i64: 2, 2>, scalar_prefetch = 0 : i64, scratch_operands = 0 : i64, tpu.core_type = #tpu.core_type<tc>, window_params = [{transform_indices = @transform_0, window_bounds = array<i64: 1, 2048, 128>}, {pipeline_mode = #tpu.pipeline_mode<synchronous>, transform_indices = @transform_1, window_bounds = array<i64: 128, 128>}, {pipeline_mode = #tpu.pipeline_mode<synchronous>, transform_indices = @transform_2, window_bounds = array<i64: 1, 128>}, {transform_indices = @transform_3, window_bounds = array<i64: 1, 2048, 8>}]} {
    %c0 = arith.constant 0 : index
    %c0_0 = arith.constant 0 : index
    %c0_1 = arith.constant 0 : index
    %0 = vector.load %arg2[%c0, %c0_0, %c0_1] : memref<1x2048x128xbf16, #tpu.memory_space<vmem>>, vector<1x2048x128xbf16>
    %1 = vector.shape_cast %0 : vector<1x2048x128xbf16> to vector<2048x128xbf16>
    %c0_2 = arith.constant 0 : index
    %c0_3 = arith.constant 0 : index
    %2 = vector.load %arg3[%c0_2, %c0_3] : memref<128x128xbf16, #tpu.memory_space<vmem>>, vector<128x128xbf16>
    %cst = arith.constant dense<0.000000e+00> : vector<2048x128xf32>
    %3 = tpu.matmul %1, %2, %cst {dimension_numbers = #tpu.dot_dimension_numbers<[1], [0], [0], [1], [0, 0, 1, 1], [], []>} : vector<2048x128xbf16>, vector<128x128xbf16>, vector<2048x128xf32> -> vector<2048x128xf32>
    %c0_4 = arith.constant 0 : index
    %c0_5 = arith.constant 0 : index
    %4 = vector.load %arg4[%c0_4, %c0_5] : memref<1x128xf32, #tpu.memory_space<vmem>>, vector<1x128xf32>
    %5 = vector.broadcast %4 : vector<1x128xf32> to vector<2048x128xf32>
    %6 = arith.addf %3, %5 : vector<2048x128xf32>
    %cst_6 = arith.constant 0.000000e+00 : f32
    %7 = vector.broadcast %cst_6 : f32 to vector<2048x128xf32>
    %8 = arith.cmpf oge, %6, %7 : vector<2048x128xf32>
    %cst_7 = arith.constant 2.000000e-01 : f32
    %9 = vector.broadcast %cst_7 : f32 to vector<2048x128xf32>
    %10 = arith.mulf %9, %6 : vector<2048x128xf32>
    %11 = arith.select %8, %6, %10 : vector<2048x128xi1>, vector<2048x128xf32>
    %12 = vector.extract_strided_slice %11 {offsets = [0, 0], sizes = [2048, 8], strides = [1, 1]} : vector<2048x128xf32> to vector<2048x8xf32>
    %13 = arith.truncf %12 : vector<2048x8xf32> to vector<2048x8xbf16>
    %c0_8 = arith.constant 0 : index
    %c0_9 = arith.constant 0 : index
    %c0_10 = arith.constant 0 : index
    %14 = vector.load %arg5[%c0_8, %c0_9, %c0_10] : memref<1x2048x8xbf16, #tpu.memory_space<vmem>>, vector<1x2048x8xbf16>
    %15 = vector.shape_cast %14 : vector<1x2048x8xbf16> to vector<2048x8xbf16>
    %16 = vector.shape_cast %13 : vector<2048x8xbf16> to vector<1x2048x8xbf16>
    tpu.vector_store %arg5[%c0_8, %c0_9, %c0_10], %16 {strides = array<i32>} : memref<1x2048x8xbf16, #tpu.memory_space<vmem>>, vector<1x2048x8xbf16>,
    return
  }
  func.func @transform_0(%arg0: i32, %arg1: i32) -> (i32, i32, i32) {
    %c0_i32 = arith.constant 0 : i32
    %c0_i32_0 = arith.constant 0 : i32
    return %arg0, %arg1, %c0_i32 : i32, i32, i32
  }
  func.func @transform_1(%arg0: i32, %arg1: i32) -> (i32, i32) {
    %c0_i32 = arith.constant 0 : i32
    %c0_i32_0 = arith.constant 0 : i32
    %c0_i32_1 = arith.constant 0 : i32
    return %c0_i32, %c0_i32_0 : i32, i32
  }
  func.func @transform_2(%arg0: i32, %arg1: i32) -> (i32, i32) {
    %c0_i32 = arith.constant 0 : i32
    %c0_i32_0 = arith.constant 0 : i32
    %c0_i32_1 = arith.constant 0 : i32
    return %c0_i32, %c0_i32_0 : i32, i32
  }
  func.func @transform_3(%arg0: i32, %arg1: i32) -> (i32, i32, i32) {
    %c0_i32 = arith.constant 0 : i32
    %c0_i32_0 = arith.constant 0 : i32
    return %arg0, %arg1, %c0_i32 : i32, i32, i32
  }
}

module attributes {stable_mosaic.version = 11 : i64} {
  func.func @_conv_epilogue_kernel(%arg0: i32, %arg1: i32, %arg2: memref<1x512x512xbf16, #tpu.memory_space<vmem>>, %arg3: memref<512x128xbf16, #tpu.memory_space<vmem>>, %arg4: memref<1x128xf32, #tpu.memory_space<vmem>>, %arg5: memref<1x512x16xbf16, #tpu.memory_space<vmem>>) attributes {dimension_semantics = [#tpu.dimension_semantics<parallel>, #tpu.dimension_semantics<parallel>], iteration_bounds = array<i64: 2, 1>, scalar_prefetch = 0 : i64, scratch_operands = 0 : i64, tpu.core_type = #tpu.core_type<tc>, window_params = [{transform_indices = @transform_0, window_bounds = array<i64: 1, 512, 512>}, {pipeline_mode = #tpu.pipeline_mode<synchronous>, transform_indices = @transform_1, window_bounds = array<i64: 512, 128>}, {pipeline_mode = #tpu.pipeline_mode<synchronous>, transform_indices = @transform_2, window_bounds = array<i64: 1, 128>}, {transform_indices = @transform_3, window_bounds = array<i64: 1, 512, 16>}]} {
    %c0 = arith.constant 0 : index
    %c0_0 = arith.constant 0 : index
    %c0_1 = arith.constant 0 : index
    %0 = vector.load %arg2[%c0, %c0_0, %c0_1] : memref<1x512x512xbf16, #tpu.memory_space<vmem>>, vector<1x512x512xbf16>
    %1 = vector.shape_cast %0 : vector<1x512x512xbf16> to vector<512x512xbf16>
    %c0_2 = arith.constant 0 : index
    %c0_3 = arith.constant 0 : index
    %2 = vector.load %arg3[%c0_2, %c0_3] : memref<512x128xbf16, #tpu.memory_space<vmem>>, vector<512x128xbf16>
    %cst = arith.constant dense<0.000000e+00> : vector<512x128xf32>
    %3 = tpu.matmul %1, %2, %cst {dimension_numbers = #tpu.dot_dimension_numbers<[1], [0], [0], [1], [0, 0, 1, 1], [], []>} : vector<512x512xbf16>, vector<512x128xbf16>, vector<512x128xf32> -> vector<512x128xf32>
    %c0_4 = arith.constant 0 : index
    %c0_5 = arith.constant 0 : index
    %4 = vector.load %arg4[%c0_4, %c0_5] : memref<1x128xf32, #tpu.memory_space<vmem>>, vector<1x128xf32>
    %5 = vector.broadcast %4 : vector<1x128xf32> to vector<512x128xf32>
    %6 = arith.addf %3, %5 : vector<512x128xf32>
    %cst_6 = arith.constant dense<0.000000e+00> : vector<128xf32>
    %7 = vector.multi_reduction <add>, %6, %cst_6 [0] : vector<512x128xf32> to vector<128xf32>
    %8 = vector.shape_cast %7 : vector<128xf32> to vector<1x128xf32>
    %cst_7 = arith.constant 0.001953125 : f32
    %9 = vector.broadcast %cst_7 : f32 to vector<1x128xf32>
    %10 = arith.mulf %8, %9 : vector<1x128xf32>
    %11 = arith.mulf %6, %6 : vector<512x128xf32>
    %cst_8 = arith.constant dense<0.000000e+00> : vector<128xf32>
    %12 = vector.multi_reduction <add>, %11, %cst_8 [0] : vector<512x128xf32> to vector<128xf32>
    %13 = vector.shape_cast %12 : vector<128xf32> to vector<1x128xf32>
    %cst_9 = arith.constant 0.001953125 : f32
    %14 = vector.broadcast %cst_9 : f32 to vector<1x128xf32>
    %15 = arith.mulf %13, %14 : vector<1x128xf32>
    %16 = arith.mulf %10, %10 : vector<1x128xf32>
    %17 = arith.subf %15, %16 : vector<1x128xf32>
    %18 = vector.broadcast %10 : vector<1x128xf32> to vector<512x128xf32>
    %19 = arith.subf %6, %18 : vector<512x128xf32>
    %cst_10 = arith.constant 9.99999974E-6 : f32
    %20 = vector.broadcast %cst_10 : f32 to vector<1x128xf32>
    %21 = arith.addf %17, %20 : vector<1x128xf32>
    %22 = math.rsqrt %21 : vector<1x128xf32>
    %23 = vector.broadcast %22 : vector<1x128xf32> to vector<512x128xf32>
    %24 = arith.mulf %19, %23 : vector<512x128xf32>
    %cst_11 = arith.constant 0.000000e+00 : f32
    %25 = vector.broadcast %cst_11 : f32 to vector<512x128xf32>
    %26 = arith.cmpf oge, %24, %25 : vector<512x128xf32>
    %cst_12 = arith.constant 2.000000e-01 : f32
    %27 = vector.broadcast %cst_12 : f32 to vector<512x128xf32>
    %28 = arith.mulf %27, %24 : vector<512x128xf32>
    %29 = arith.select %26, %24, %28 : vector<512x128xi1>, vector<512x128xf32>
    %30 = vector.extract_strided_slice %29 {offsets = [0, 0], sizes = [512, 16], strides = [1, 1]} : vector<512x128xf32> to vector<512x16xf32>
    %31 = arith.truncf %30 : vector<512x16xf32> to vector<512x16xbf16>
    %c0_13 = arith.constant 0 : index
    %c0_14 = arith.constant 0 : index
    %c0_15 = arith.constant 0 : index
    %32 = vector.load %arg5[%c0_13, %c0_14, %c0_15] : memref<1x512x16xbf16, #tpu.memory_space<vmem>>, vector<1x512x16xbf16>
    %33 = vector.shape_cast %32 : vector<1x512x16xbf16> to vector<512x16xbf16>
    %34 = vector.shape_cast %31 : vector<512x16xbf16> to vector<1x512x16xbf16>
    tpu.vector_store %arg5[%c0_13, %c0_14, %c0_15], %34 {strides = array<i32>} : memref<1x512x16xbf16, #tpu.memory_space<vmem>>, vector<1x512x16xbf16>,
    return
  }
  func.func @transform_0(%arg0: i32, %arg1: i32) -> (i32, i32, i32) {
    %c0_i32 = arith.constant 0 : i32
    %c0_i32_0 = arith.constant 0 : i32
    return %arg0, %arg1, %c0_i32 : i32, i32, i32
  }
  func.func @transform_1(%arg0: i32, %arg1: i32) -> (i32, i32) {
    %c0_i32 = arith.constant 0 : i32
    %c0_i32_0 = arith.constant 0 : i32
    %c0_i32_1 = arith.constant 0 : i32
    return %c0_i32, %c0_i32_0 : i32, i32
  }
  func.func @transform_2(%arg0: i32, %arg1: i32) -> (i32, i32) {
    %c0_i32 = arith.constant 0 : i32
    %c0_i32_0 = arith.constant 0 : i32
    %c0_i32_1 = arith.constant 0 : i32
    return %c0_i32, %c0_i32_0 : i32, i32
  }
  func.func @transform_3(%arg0: i32, %arg1: i32) -> (i32, i32, i32) {
    %c0_i32 = arith.constant 0 : i32
    %c0_i32_0 = arith.constant 0 : i32
    return %arg0, %arg1, %c0_i32 : i32, i32, i32
  }
}

module attributes {stable_mosaic.version = 11 : i64} {
  func.func @_conv_epilogue_kernel(%arg0: i32, %arg1: i32, %arg2: memref<1x64x1024xbf16, #tpu.memory_space<vmem>>, %arg3: memref<1024x128xbf16, #tpu.memory_space<vmem>>, %arg4: memref<1x128xf32, #tpu.memory_space<vmem>>, %arg5: memref<1x64x32xbf16, #tpu.memory_space<vmem>>) attributes {dimension_semantics = [#tpu.dimension_semantics<parallel>, #tpu.dimension_semantics<parallel>], iteration_bounds = array<i64: 2, 1>, scalar_prefetch = 0 : i64, scratch_operands = 0 : i64, tpu.core_type = #tpu.core_type<tc>, window_params = [{transform_indices = @transform_0, window_bounds = array<i64: 1, 64, 1024>}, {pipeline_mode = #tpu.pipeline_mode<synchronous>, transform_indices = @transform_1, window_bounds = array<i64: 1024, 128>}, {pipeline_mode = #tpu.pipeline_mode<synchronous>, transform_indices = @transform_2, window_bounds = array<i64: 1, 128>}, {transform_indices = @transform_3, window_bounds = array<i64: 1, 64, 32>}]} {
    %c0 = arith.constant 0 : index
    %c0_0 = arith.constant 0 : index
    %c0_1 = arith.constant 0 : index
    %0 = vector.load %arg2[%c0, %c0_0, %c0_1] : memref<1x64x1024xbf16, #tpu.memory_space<vmem>>, vector<1x64x1024xbf16>
    %1 = vector.shape_cast %0 : vector<1x64x1024xbf16> to vector<64x1024xbf16>
    %c0_2 = arith.constant 0 : index
    %c0_3 = arith.constant 0 : index
    %2 = vector.load %arg3[%c0_2, %c0_3] : memref<1024x128xbf16, #tpu.memory_space<vmem>>, vector<1024x128xbf16>
    %cst = arith.constant dense<0.000000e+00> : vector<64x128xf32>
    %3 = tpu.matmul %1, %2, %cst {dimension_numbers = #tpu.dot_dimension_numbers<[1], [0], [0], [1], [0, 0, 1, 1], [], []>} : vector<64x1024xbf16>, vector<1024x128xbf16>, vector<64x128xf32> -> vector<64x128xf32>
    %c0_4 = arith.constant 0 : index
    %c0_5 = arith.constant 0 : index
    %4 = vector.load %arg4[%c0_4, %c0_5] : memref<1x128xf32, #tpu.memory_space<vmem>>, vector<1x128xf32>
    %5 = vector.broadcast %4 : vector<1x128xf32> to vector<64x128xf32>
    %6 = arith.addf %3, %5 : vector<64x128xf32>
    %cst_6 = arith.constant dense<0.000000e+00> : vector<128xf32>
    %7 = vector.multi_reduction <add>, %6, %cst_6 [0] : vector<64x128xf32> to vector<128xf32>
    %8 = vector.shape_cast %7 : vector<128xf32> to vector<1x128xf32>
    %cst_7 = arith.constant 1.562500e-02 : f32
    %9 = vector.broadcast %cst_7 : f32 to vector<1x128xf32>
    %10 = arith.mulf %8, %9 : vector<1x128xf32>
    %11 = arith.mulf %6, %6 : vector<64x128xf32>
    %cst_8 = arith.constant dense<0.000000e+00> : vector<128xf32>
    %12 = vector.multi_reduction <add>, %11, %cst_8 [0] : vector<64x128xf32> to vector<128xf32>
    %13 = vector.shape_cast %12 : vector<128xf32> to vector<1x128xf32>
    %cst_9 = arith.constant 1.562500e-02 : f32
    %14 = vector.broadcast %cst_9 : f32 to vector<1x128xf32>
    %15 = arith.mulf %13, %14 : vector<1x128xf32>
    %16 = arith.mulf %10, %10 : vector<1x128xf32>
    %17 = arith.subf %15, %16 : vector<1x128xf32>
    %18 = vector.broadcast %10 : vector<1x128xf32> to vector<64x128xf32>
    %19 = arith.subf %6, %18 : vector<64x128xf32>
    %cst_10 = arith.constant 9.99999974E-6 : f32
    %20 = vector.broadcast %cst_10 : f32 to vector<1x128xf32>
    %21 = arith.addf %17, %20 : vector<1x128xf32>
    %22 = math.rsqrt %21 : vector<1x128xf32>
    %23 = vector.broadcast %22 : vector<1x128xf32> to vector<64x128xf32>
    %24 = arith.mulf %19, %23 : vector<64x128xf32>
    %cst_11 = arith.constant 0.000000e+00 : f32
    %25 = vector.broadcast %cst_11 : f32 to vector<64x128xf32>
    %26 = arith.cmpf oge, %24, %25 : vector<64x128xf32>
    %cst_12 = arith.constant 2.000000e-01 : f32
    %27 = vector.broadcast %cst_12 : f32 to vector<64x128xf32>
    %28 = arith.mulf %27, %24 : vector<64x128xf32>
    %29 = arith.select %26, %24, %28 : vector<64x128xi1>, vector<64x128xf32>
    %30 = vector.extract_strided_slice %29 {offsets = [0, 0], sizes = [64, 32], strides = [1, 1]} : vector<64x128xf32> to vector<64x32xf32>
    %31 = arith.truncf %30 : vector<64x32xf32> to vector<64x32xbf16>
    %c0_13 = arith.constant 0 : index
    %c0_14 = arith.constant 0 : index
    %c0_15 = arith.constant 0 : index
    %32 = vector.load %arg5[%c0_13, %c0_14, %c0_15] : memref<1x64x32xbf16, #tpu.memory_space<vmem>>, vector<1x64x32xbf16>
    %33 = vector.shape_cast %32 : vector<1x64x32xbf16> to vector<64x32xbf16>
    %34 = vector.shape_cast %31 : vector<64x32xbf16> to vector<1x64x32xbf16>
    tpu.vector_store %arg5[%c0_13, %c0_14, %c0_15], %34 {strides = array<i32>} : memref<1x64x32xbf16, #tpu.memory_space<vmem>>, vector<1x64x32xbf16>,
    return
  }
  func.func @transform_0(%arg0: i32, %arg1: i32) -> (i32, i32, i32) {
    %c0_i32 = arith.constant 0 : i32
    %c0_i32_0 = arith.constant 0 : i32
    return %arg0, %arg1, %c0_i32 : i32, i32, i32
  }
  func.func @transform_1(%arg0: i32, %arg1: i32) -> (i32, i32) {
    %c0_i32 = arith.constant 0 : i32
    %c0_i32_0 = arith.constant 0 : i32
    %c0_i32_1 = arith.constant 0 : i32
    return %c0_i32, %c0_i32_0 : i32, i32
  }
  func.func @transform_2(%arg0: i32, %arg1: i32) -> (i32, i32) {
    %c0_i32 = arith.constant 0 : i32
    %c0_i32_0 = arith.constant 0 : i32
    %c0_i32_1 = arith.constant 0 : i32
    return %c0_i32, %c0_i32_0 : i32, i32
  }
  func.func @transform_3(%arg0: i32, %arg1: i32) -> (i32, i32, i32) {
    %c0_i32 = arith.constant 0 : i32
    %c0_i32_0 = arith.constant 0 : i32
    return %arg0, %arg1, %c0_i32 : i32, i32, i32
  }
}

module attributes {stable_mosaic.version = 11 : i64} {
  func.func @_conv_epilogue_kernel(%arg0: i32, %arg1: i32, %arg2: memref<1x27x2048xbf16, #tpu.memory_space<vmem>>, %arg3: memref<2048x128xbf16, #tpu.memory_space<vmem>>, %arg4: memref<1x128xf32, #tpu.memory_space<vmem>>, %arg5: memref<1x27x64xbf16, #tpu.memory_space<vmem>>) attributes {dimension_semantics = [#tpu.dimension_semantics<parallel>, #tpu.dimension_semantics<parallel>], iteration_bounds = array<i64: 2, 1>, scalar_prefetch = 0 : i64, scratch_operands = 0 : i64, tpu.core_type = #tpu.core_type<tc>, window_params = [{transform_indices = @transform_0, window_bounds = array<i64: 1, 27, 2048>}, {pipeline_mode = #tpu.pipeline_mode<synchronous>, transform_indices = @transform_1, window_bounds = array<i64: 2048, 128>}, {pipeline_mode = #tpu.pipeline_mode<synchronous>, transform_indices = @transform_2, window_bounds = array<i64: 1, 128>}, {transform_indices = @transform_3, window_bounds = array<i64: 1, 27, 64>}]} {
    %c0 = arith.constant 0 : index
    %c0_0 = arith.constant 0 : index
    %c0_1 = arith.constant 0 : index
    %0 = vector.load %arg2[%c0, %c0_0, %c0_1] : memref<1x27x2048xbf16, #tpu.memory_space<vmem>>, vector<1x27x2048xbf16>
    %1 = vector.shape_cast %0 : vector<1x27x2048xbf16> to vector<27x2048xbf16>
    %c0_2 = arith.constant 0 : index
    %c0_3 = arith.constant 0 : index
    %2 = vector.load %arg3[%c0_2, %c0_3] : memref<2048x128xbf16, #tpu.memory_space<vmem>>, vector<2048x128xbf16>
    %cst = arith.constant dense<0.000000e+00> : vector<27x128xf32>
    %3 = tpu.matmul %1, %2, %cst {dimension_numbers = #tpu.dot_dimension_numbers<[1], [0], [0], [1], [0, 0, 1, 1], [], []>} : vector<27x2048xbf16>, vector<2048x128xbf16>, vector<27x128xf32> -> vector<27x128xf32>
    %c0_4 = arith.constant 0 : index
    %c0_5 = arith.constant 0 : index
    %4 = vector.load %arg4[%c0_4, %c0_5] : memref<1x128xf32, #tpu.memory_space<vmem>>, vector<1x128xf32>
    %5 = vector.broadcast %4 : vector<1x128xf32> to vector<27x128xf32>
    %6 = arith.addf %3, %5 : vector<27x128xf32>
    %cst_6 = arith.constant dense<0.000000e+00> : vector<128xf32>
    %7 = vector.multi_reduction <add>, %6, %cst_6 [0] : vector<27x128xf32> to vector<128xf32>
    %8 = vector.shape_cast %7 : vector<128xf32> to vector<1x128xf32>
    %cst_7 = arith.constant 0.0370370373 : f32
    %9 = vector.broadcast %cst_7 : f32 to vector<1x128xf32>
    %10 = arith.mulf %8, %9 : vector<1x128xf32>
    %11 = arith.mulf %6, %6 : vector<27x128xf32>
    %cst_8 = arith.constant dense<0.000000e+00> : vector<128xf32>
    %12 = vector.multi_reduction <add>, %11, %cst_8 [0] : vector<27x128xf32> to vector<128xf32>
    %13 = vector.shape_cast %12 : vector<128xf32> to vector<1x128xf32>
    %cst_9 = arith.constant 0.0370370373 : f32
    %14 = vector.broadcast %cst_9 : f32 to vector<1x128xf32>
    %15 = arith.mulf %13, %14 : vector<1x128xf32>
    %16 = arith.mulf %10, %10 : vector<1x128xf32>
    %17 = arith.subf %15, %16 : vector<1x128xf32>
    %18 = vector.broadcast %10 : vector<1x128xf32> to vector<27x128xf32>
    %19 = arith.subf %6, %18 : vector<27x128xf32>
    %cst_10 = arith.constant 9.99999974E-6 : f32
    %20 = vector.broadcast %cst_10 : f32 to vector<1x128xf32>
    %21 = arith.addf %17, %20 : vector<1x128xf32>
    %22 = math.rsqrt %21 : vector<1x128xf32>
    %23 = vector.broadcast %22 : vector<1x128xf32> to vector<27x128xf32>
    %24 = arith.mulf %19, %23 : vector<27x128xf32>
    %cst_11 = arith.constant 0.000000e+00 : f32
    %25 = vector.broadcast %cst_11 : f32 to vector<27x128xf32>
    %26 = arith.cmpf oge, %24, %25 : vector<27x128xf32>
    %cst_12 = arith.constant 2.000000e-01 : f32
    %27 = vector.broadcast %cst_12 : f32 to vector<27x128xf32>
    %28 = arith.mulf %27, %24 : vector<27x128xf32>
    %29 = arith.select %26, %24, %28 : vector<27x128xi1>, vector<27x128xf32>
    %30 = vector.extract_strided_slice %29 {offsets = [0, 0], sizes = [27, 64], strides = [1, 1]} : vector<27x128xf32> to vector<27x64xf32>
    %31 = arith.truncf %30 : vector<27x64xf32> to vector<27x64xbf16>
    %c0_13 = arith.constant 0 : index
    %c0_14 = arith.constant 0 : index
    %c0_15 = arith.constant 0 : index
    %32 = vector.load %arg5[%c0_13, %c0_14, %c0_15] : memref<1x27x64xbf16, #tpu.memory_space<vmem>>, vector<1x27x64xbf16>
    %33 = vector.shape_cast %32 : vector<1x27x64xbf16> to vector<27x64xbf16>
    %34 = vector.shape_cast %31 : vector<27x64xbf16> to vector<1x27x64xbf16>
    tpu.vector_store %arg5[%c0_13, %c0_14, %c0_15], %34 {strides = array<i32>} : memref<1x27x64xbf16, #tpu.memory_space<vmem>>, vector<1x27x64xbf16>,
    return
  }
  func.func @transform_0(%arg0: i32, %arg1: i32) -> (i32, i32, i32) {
    %c0_i32 = arith.constant 0 : i32
    %c0_i32_0 = arith.constant 0 : i32
    return %arg0, %arg1, %c0_i32 : i32, i32, i32
  }
  func.func @transform_1(%arg0: i32, %arg1: i32) -> (i32, i32) {
    %c0_i32 = arith.constant 0 : i32
    %c0_i32_0 = arith.constant 0 : i32
    %c0_i32_1 = arith.constant 0 : i32
    return %c0_i32, %c0_i32_0 : i32, i32
  }
  func.func @transform_2(%arg0: i32, %arg1: i32) -> (i32, i32) {
    %c0_i32 = arith.constant 0 : i32
    %c0_i32_0 = arith.constant 0 : i32
    %c0_i32_1 = arith.constant 0 : i32
    return %c0_i32, %c0_i32_0 : i32, i32
  }
  func.func @transform_3(%arg0: i32, %arg1: i32) -> (i32, i32, i32) {
    %c0_i32 = arith.constant 0 : i32
    %c0_i32_0 = arith.constant 0 : i32
    return %arg0, %arg1, %c0_i32 : i32, i32, i32
  }
}

module attributes {stable_mosaic.version = 11 : i64} {
  func.func @_conv_epilogue_kernel(%arg0: i32, %arg1: i32, %arg2: memref<1x8x4096xbf16, #tpu.memory_space<vmem>>, %arg3: memref<4096x128xbf16, #tpu.memory_space<vmem>>, %arg4: memref<1x128xf32, #tpu.memory_space<vmem>>, %arg5: memref<1x8x1xf32, #tpu.memory_space<vmem>>) attributes {dimension_semantics = [#tpu.dimension_semantics<parallel>, #tpu.dimension_semantics<parallel>], iteration_bounds = array<i64: 2, 1>, scalar_prefetch = 0 : i64, scratch_operands = 0 : i64, tpu.core_type = #tpu.core_type<tc>, window_params = [{transform_indices = @transform_0, window_bounds = array<i64: 1, 8, 4096>}, {pipeline_mode = #tpu.pipeline_mode<synchronous>, transform_indices = @transform_1, window_bounds = array<i64: 4096, 128>}, {pipeline_mode = #tpu.pipeline_mode<synchronous>, transform_indices = @transform_2, window_bounds = array<i64: 1, 128>}, {transform_indices = @transform_3, window_bounds = array<i64: 1, 8, 1>}]} {
    %c0 = arith.constant 0 : index
    %c0_0 = arith.constant 0 : index
    %c0_1 = arith.constant 0 : index
    %0 = vector.load %arg2[%c0, %c0_0, %c0_1] : memref<1x8x4096xbf16, #tpu.memory_space<vmem>>, vector<1x8x4096xbf16>
    %1 = vector.shape_cast %0 : vector<1x8x4096xbf16> to vector<8x4096xbf16>
    %c0_2 = arith.constant 0 : index
    %c0_3 = arith.constant 0 : index
    %2 = vector.load %arg3[%c0_2, %c0_3] : memref<4096x128xbf16, #tpu.memory_space<vmem>>, vector<4096x128xbf16>
    %cst = arith.constant dense<0.000000e+00> : vector<8x128xf32>
    %3 = tpu.matmul %1, %2, %cst {dimension_numbers = #tpu.dot_dimension_numbers<[1], [0], [0], [1], [0, 0, 1, 1], [], []>} : vector<8x4096xbf16>, vector<4096x128xbf16>, vector<8x128xf32> -> vector<8x128xf32>
    %c0_4 = arith.constant 0 : index
    %c0_5 = arith.constant 0 : index
    %4 = vector.load %arg4[%c0_4, %c0_5] : memref<1x128xf32, #tpu.memory_space<vmem>>, vector<1x128xf32>
    %5 = vector.broadcast %4 : vector<1x128xf32> to vector<8x128xf32>
    %6 = arith.addf %3, %5 : vector<8x128xf32>
    %7 = vector.extract_strided_slice %6 {offsets = [0, 0], sizes = [8, 1], strides = [1, 1]} : vector<8x128xf32> to vector<8x1xf32>
    %c0_6 = arith.constant 0 : index
    %c0_7 = arith.constant 0 : index
    %c0_8 = arith.constant 0 : index
    %8 = vector.load %arg5[%c0_6, %c0_7, %c0_8] : memref<1x8x1xf32, #tpu.memory_space<vmem>>, vector<1x8x1xf32>
    %9 = vector.shape_cast %8 : vector<1x8x1xf32> to vector<8x1xf32>
    %10 = vector.shape_cast %7 : vector<8x1xf32> to vector<1x8x1xf32>
    tpu.vector_store %arg5[%c0_6, %c0_7, %c0_8], %10 {strides = array<i32>} : memref<1x8x1xf32, #tpu.memory_space<vmem>>, vector<1x8x1xf32>,
    return
  }
  func.func @transform_0(%arg0: i32, %arg1: i32) -> (i32, i32, i32) {
    %c0_i32 = arith.constant 0 : i32
    %c0_i32_0 = arith.constant 0 : i32
    return %arg0, %arg1, %c0_i32 : i32, i32, i32
  }
  func.func @transform_1(%arg0: i32, %arg1: i32) -> (i32, i32) {
    %c0_i32 = arith.constant 0 : i32
    %c0_i32_0 = arith.constant 0 : i32
    %c0_i32_1 = arith.constant 0 : i32
    return %c0_i32, %c0_i32_0 : i32, i32
  }
  func.func @transform_2(%arg0: i32, %arg1: i32) -> (i32, i32) {
    %c0_i32 = arith.constant 0 : i32
    %c0_i32_0 = arith.constant 0 : i32
    %c0_i32_1 = arith.constant 0 : i32
    return %c0_i32, %c0_i32_0 : i32, i32
  }
  func.func @transform_3(%arg0: i32, %arg1: i32) -> (i32, i32, i32) {
    %c0_i32 = arith.constant 0 : i32
    %c0_i32_0 = arith.constant 0 : i32
    return %arg0, %arg1, %c0_i32 : i32, i32, i32
  }
}

</mosaic_0001>

<llo_original>
// kernel: _lambda_.5
$region0: #{_lambda_.5}
  #allocation0 [shape = 'u32[]', space=smem, size = 0x4, offset = 0x4, fixed_abs, tag = 'smem constant byte address 0x4 - core index']
  #allocation1 [shape = 'u32[72,128]{1,0:T(1,128)}', space=vmem, size = 0x9000, scoped, tag = 'internal scratch']
  %s0 = inlined_call_operand.vmem [shape: bf16[2,4096,128], index: 0, kind: input, shape index: {}]
  %s1 = inlined_call_operand.vmem [shape: bf16[128,128], index: 1, kind: input, shape index: {}]
  %s2 = inlined_call_operand.vmem [shape: f32[1,128], index: 2, kind: input, shape index: {}]
  %s3 = inlined_call_operand.vmem [shape: bf16[2,4096,8], index: 3, kind: output, shape index: {}]
  %s4 = sld [smem:[#allocation0]]
  $region45: #{_lambda_.5} parent=0
    _
  %s6 = ssub.s32 1, %s4
  %s7 = scalar_select 0, %s6, %s4
  loop: start=0, step=1, limit=6
  $region2: #{_lambda_.5} parent=0 // loop_pre_header
    _
  $region3: #{_lambda_.5} parent=0 // loop_header
    %s9 = sphi 0, %s13
    %p10 = scmp.ge.s32.totalorder %s9, 6
    %s16 = sphi 0, %s28
    %s17 = sphi 0, %s24
    %s18 = sphi 0, %s16
    %s19 = sphi 0, %s17
    %s20 = sphi 0, %s18
    %s21 = sphi 0, %s19
    %s33 = sphi 0, %s35
    %s36 = sphi 0, %s33
    %s37 = sphi 0, %s36
    %s53 = sphi 0, %s37
    %s57 = sphi 0, %s57
    %s59 = sphi 0, %s57
    %s60 = sphi 0, %s59
    %s74 = sphi 0, %s60
    %s78 = sphi 0, %s78
    %s80 = sphi 0, %s78
    %s81 = sphi 0, %s80
    %s95 = sphi 0, %s81
    %s103 = sphi 0, %s105
    %s106 = sphi 0, %s103
    %s107 = sphi 0, %s106
    %s123 = sphi 0, %s107
  $region4: #{_lambda_.5} parent=0 // loop_header_branch
    %12 = sbr.rel (%p10) target = $region8
  $region5: #{_lambda_.5} parent=0 // loop_body
    %s14 = ssub.s32 %s9, 1
    %s15 = ssub.s32 %s9, 2
    %s22 = sadd.s32 1, %s17
    %p23 = scmp.ge.s32.totalorder %s22, 2
    %s24 = scalar_select %p23, 0, %s22
    %s25 = sadd.s32 1, %s16
    %s26 = scalar_select %p23, %s25, %s16
    %p27 = scmp.ge.s32.totalorder %s26, 2
    %s28 = scalar_select %p27, 0, %s26
    %s29 = ssub.s32 %s16, %s28
    %s30 = ssub.s32 %s17, %s24
    %s31 = sor.u32 %s29, %s30
    %p32 = scmp.eq.s32.totalorder %s31, 0
    %s34 = sadd.s32 %s33, 1
    %s35 = scalar_select %p32, %s33, %s34
    %p38 = pneg %p32
    %p39 = scmp.eq.s32.totalorder %s9, 3
    %p40 = por %p38, %p39
    %p41 = scmp.ne.s32.totalorder %s33, %s36
    %p42 = scmp.eq.s32.totalorder %s9, 0
    %p43 = por %p41, %p42
    %p44 = scmp.ne.s32.totalorder %s33, %s36
    %p45 = scmp.eq.s32.totalorder %s14, 3
    %p46 = por %p44, %p45
    %p47 = scmp.ne.s32.totalorder %s36, %s37
    %p48 = scmp.eq.s32.totalorder %s14, 0
    %p49 = por %p47, %p48
    %p50 = scmp.ne.s32.totalorder %s36, %s37
    %p51 = scmp.eq.s32.totalorder %s15, 3
    %p52 = por %p50, %p51
    %p54 = scmp.ne.s32.totalorder %s37, %s53
    %p55 = scmp.eq.s32.totalorder %s15, 0
    %p56 = por %p54, %p55
    %s58 = sadd.s32 %s57, 1
    %p61 = scmp.eq.s32.totalorder %s9, 3
    %p62 = scmp.ne.s32.totalorder %s57, %s59
    %p63 = scmp.eq.s32.totalorder %s9, 0
    %p64 = por %p62, %p63
    %p65 = scmp.ne.s32.totalorder %s57, %s59
    %p66 = scmp.eq.s32.totalorder %s14, 3
    %p67 = por %p65, %p66
    %p68 = scmp.ne.s32.totalorder %s59, %s60
    %p69 = scmp.eq.s32.totalorder %s14, 0
    %p70 = por %p68, %p69
    %p71 = scmp.ne.s32.totalorder %s59, %s60
    %p72 = scmp.eq.s32.totalorder %s15, 3
    %p73 = por %p71, %p72
    %p75 = scmp.ne.s32.totalorder %s60, %s74
    %p76 = scmp.eq.s32.totalorder %s15, 0
    %p77 = por %p75, %p76
    %s79 = sadd.s32 %s78, 1
    %p82 = scmp.eq.s32.totalorder %s9, 3
    %p83 = scmp.ne.s32.totalorder %s78, %s80
    %p84 = scmp.eq.s32.totalorder %s9, 0
    %p85 = por %p83, %p84
    %p86 = scmp.ne.s32.totalorder %s78, %s80
    %p87 = scmp.eq.s32.totalorder %s14, 3
    %p88 = por %p86, %p87
    %p89 = scmp.ne.s32.totalorder %s80, %s81
    %p90 = scmp.eq.s32.totalorder %s14, 0
    %p91 = por %p89, %p90
    %p92 = scmp.ne.s32.totalorder %s80, %s81
    %p93 = scmp.eq.s32.totalorder %s15, 3
    %p94 = por %p92, %p93
    %p96 = scmp.ne.s32.totalorder %s81, %s95
    %p97 = scmp.eq.s32.totalorder %s15, 0
    %p98 = por %p96, %p97
    %s99 = ssub.s32 %s16, %s28
    %s100 = ssub.s32 %s17, %s24
    %s101 = sor.u32 %s99, %s100
    %p102 = scmp.eq.s32.totalorder %s101, 0
    %s104 = sadd.s32 %s103, 1
    %s105 = scalar_select %p102, %s103, %s104
    %p108 = pneg %p102
    %p109 = scmp.eq.s32.totalorder %s9, 3
    %p110 = por %p108, %p109
    %p111 = scmp.ne.s32.totalorder %s103, %s106
    %p112 = scmp.eq.s32.totalorder %s9, 0
    %p113 = por %p111, %p112
    %p114 = scmp.ne.s32.totalorder %s103, %s106
    %p115 = scmp.eq.s32.totalorder %s14, 3
    %p116 = por %p114, %p115
    %p117 = scmp.ne.s32.totalorder %s106, %s107
    %p118 = scmp.eq.s32.totalorder %s14, 0
    %p119 = por %p117, %p118
    %p120 = scmp.ne.s32.totalorder %s106, %s107
    %p121 = scmp.eq.s32.totalorder %s15, 3
    %p122 = por %p120, %p121
    %p124 = scmp.ne.s32.totalorder %s107, %s123
    %p125 = scmp.eq.s32.totalorder %s15, 0
    %p126 = por %p124, %p125
    %p127 = scmp.le.s32.totalorder 1, %s9
    %p128 = scmp.lt.s32.totalorder %s9, 5
    %p129 = pnand %p127, %p128
    %p130 = pneg %p129
    // Predicated region
    $region9: #{_lambda_.5} parent=5 // pred_check
      _
    $region10: #{_lambda_.5} parent=5 // pred_check_branch
      %132 = sbr.rel (%p129) target = $region12
    $region11: #{_lambda_.5} parent=5 // pred_region
      %s133 = ssub.s32 %s9, 1
      // Predicated region
      $region13: #{_lambda_.5} parent=11 // pred_check
        %p134 = pneg %p70
      $region14: #{_lambda_.5} parent=11 // pred_check_branch
        %136 = sbr.rel (%p134) target = $region16
      $region15: #{_lambda_.5} parent=11 // pred_region
        _
      $region16: #{_lambda_.5} parent=11 // pred_fallthru
        _
      // Predicated region
      $region17: #{_lambda_.5} parent=11 // pred_check
        %p137 = pneg %p91
      $region18: #{_lambda_.5} parent=11 // pred_check_branch
        %139 = sbr.rel (%p137) target = $region20
      $region19: #{_lambda_.5} parent=11 // pred_region
        _
      $region20: #{_lambda_.5} parent=11 // pred_fallthru
        _
    $region12: #{_lambda_.5} parent=5 // pred_fallthru
      _
    %p140 = scmp.lt.s32.totalorder %s9, 4
    // Predicated region
    $region21: #{_lambda_.5} parent=5 // pred_check
      %p141 = pneg %p140
    $region22: #{_lambda_.5} parent=5 // pred_check_branch
      %143 = sbr.rel (%p141) target = $region24
    $region23: #{_lambda_.5} parent=5 // pred_region
      // Predicated region
      $region25: #{_lambda_.5} parent=23 // pred_check
        %p144 = pneg %p43
      $region26: #{_lambda_.5} parent=23 // pred_check_branch
        %146 = sbr.rel (%p144) target = $region28
      $region27: #{_lambda_.5} parent=23 // pred_region
        %s147 = smul.u32 256, %s17
        %p148 = scmp.lt.s32.totalorder %s16, 1
        %s149 = scalar_select %p148, %s16, 1
        %p150 = scmp.lt.s32.totalorder %s147, 511
        %s151 = scalar_select %p150, %s147, 511
        %s152 = smul.addr %s149, 512
        %s153 = sadd.s32 %s151, %s152
        %s154 = smul.addr %s153, 4
        %s155 = scalar_lea.vmem %s0, %s154
        %s156 = smul.u32 256, %s17
      $region28: #{_lambda_.5} parent=23 // pred_fallthru
        _
    $region24: #{_lambda_.5} parent=5 // pred_fallthru
      _
    %p157 = scmp.le.s32.totalorder 1, %s9
    %p158 = scmp.lt.s32.totalorder %s9, 5
    %p159 = pnand %p157, %p158
    %p160 = pneg %p159
    // Predicated region
    $region29: #{_lambda_.5} parent=5 // pred_check
      _
    $region30: #{_lambda_.5} parent=5 // pred_check_branch
      %162 = sbr.rel (%p159) target = $region32
    $region31: #{_lambda_.5} parent=5 // pred_region
      %s163 = ssub.s32 %s9, 1
      %s164 = smul.u32 256, %s19
      %p165 = scmp.lt.s32.totalorder %s18, 1
      %s166 = scalar_select %p165, %s18, 1
      %p167 = scmp.lt.s32.totalorder %s164, 511
      %s168 = scalar_select %p167, %s164, 511
      %s169 = smul.addr %s166, 512
      %s170 = sadd.s32 %s168, %s169
      %s171 = smul.addr %s170, 4
      %s172 = scalar_lea.vmem %s0, %s171
      %p173 = pneg %p49
      %p174 = pneg %p46
      %p175 = pneg %p70
      %p176 = pneg %p67
      %p177 = pneg %p91
      %p178 = pneg %p88
      %p179 = pneg %p119
      %p180 = pneg %p116
      %s181 = smul.u32 256, %s19
      %p182 = scmp.lt.s32.totalorder %s18, 1
      %s183 = scalar_select %p182, %s18, 1
      %p184 = scmp.lt.s32.totalorder %s181, 511
      %s185 = scalar_select %p184, %s181, 511
      %s186 = smul.addr %s183, 512
      %s187 = sadd.s32 %s185, %s186
      %s188 = smul.addr %s187, 4
      %s189 = scalar_lea.vmem %s3, %s188
      %s190 = smul.u32 256, %s19
      %p191 = scmp.lt.s32.totalorder %s18, 1
      %s192 = scalar_select %p191, %s18, 1
      %p193 = scmp.lt.s32.totalorder %s190, 511
      %s194 = scalar_select %p193, %s190, 511
      %s195 = smul.addr %s192, 512
      %s196 = sadd.s32 %s194, %s195
      %s197 = smul.addr %s196, 4
      %s198 = scalar_lea.vmem %s0, %s197
      %s199 = smul.u32 256, %s19
      %s200 = smul.u32 256, %s19
      %p201 = scmp.lt.s32.totalorder %s18, 1
      %s202 = scalar_select %p201, %s18, 1
      %p203 = scmp.lt.s32.totalorder %s200, 511
      %s204 = scalar_select %p203, %s200, 511
      %s205 = smul.addr %s202, 512
      %s206 = sadd.s32 %s204, %s205
      %s207 = smul.addr %s206, 4
      %s208 = scalar_lea.vmem %s3, %s207
      %s209 = smul.u32 256, %s19
      %v210 = vld [vmem:[%s198] sm:$0xf]
      %v211 = vld [vmem:[%s198 + $0x4] sm:$0xf]
      %v212 = vld [vmem:[%s198 + $0x8] sm:$0xf]
      %v213 = vld [vmem:[%s198 + $0xc] sm:$0xf]
      %v214 = vld [vmem:[%s198 + $0x10] sm:$0xf]
      %v215 = vld [vmem:[%s198 + $0x14] sm:$0xf]
      %v216 = vld [vmem:[%s198 + $0x18] sm:$0xf]
      %v217 = vld [vmem:[%s198 + $0x1c] sm:$0xf]
      %v218 = vld [vmem:[%s198 + $0x20] sm:$0xf]
      %v219 = vld [vmem:[%s198 + $0x24] sm:$0xf]
      %v220 = vld [vmem:[%s198 + $0x28] sm:$0xf]
      %v221 = vld [vmem:[%s198 + $0x2c] sm:$0xf]
      %v222 = vld [vmem:[%s198 + $0x30] sm:$0xf]
      %v223 = vld [vmem:[%s198 + $0x34] sm:$0xf]
      %v224 = vld [vmem:[%s198 + $0x38] sm:$0xf]
      %v225 = vld [vmem:[%s198 + $0x3c] sm:$0xf]
      %v226 = vld [vmem:[%s198 + $0x40] sm:$0xf]
      %v227 = vld [vmem:[%s198 + $0x44] sm:$0xf]
      %v228 = vld [vmem:[%s198 + $0x48] sm:$0xf]
      %v229 = vld [vmem:[%s198 + $0x4c] sm:$0xf]
      %v230 = vld [vmem:[%s198 + $0x50] sm:$0xf]
      %v231 = vld [vmem:[%s198 + $0x54] sm:$0xf]
      %v232 = vld [vmem:[%s198 + $0x58] sm:$0xf]
      %v233 = vld [vmem:[%s198 + $0x5c] sm:$0xf]
      %v234 = vld [vmem:[%s198 + $0x60] sm:$0xf]
      %v235 = vld [vmem:[%s198 + $0x64] sm:$0xf]
      %v236 = vld [vmem:[%s198 + $0x68] sm:$0xf]
      %v237 = vld [vmem:[%s198 + $0x6c] sm:$0xf]
      %v238 = vld [vmem:[%s198 + $0x70] sm:$0xf]
      %v239 = vld [vmem:[%s198 + $0x74] sm:$0xf]
      %v240 = vld [vmem:[%s198 + $0x78] sm:$0xf]
      %v241 = vld [vmem:[%s198 + $0x7c] sm:$0xf]
      %v242 = vld [vmem:[%s198 + $0x80] sm:$0xf]
      %v243 = vld [vmem:[%s198 + $0x84] sm:$0xf]
      %v244 = vld [vmem:[%s198 + $0x88] sm:$0xf]
      %v245 = vld [vmem:[%s198 + $0x8c] sm:$0xf]
      %v246 = vld [vmem:[%s198 + $0x90] sm:$0xf]
      %v247 = vld [vmem:[%s198 + $0x94] sm:$0xf]
      %v248 = vld [vmem:[%s198 + $0x98] sm:$0xf]
      %v249 = vld [vmem:[%s198 + $0x9c] sm:$0xf]
      %v250 = vld [vmem:[%s198 + $0xa0] sm:$0xf]
      %v251 = vld [vmem:[%s198 + $0xa4] sm:$0xf]
      %v252 = vld [vmem:[%s198 + $0xa8] sm:$0xf]
      %v253 = vld [vmem:[%s198 + $0xac] sm:$0xf]
      %v254 = vld [vmem:[%s198 + $0xb0] sm:$0xf]
      %v255 = vld [vmem:[%s198 + $0xb4] sm:$0xf]
      %v256 = vld [vmem:[%s198 + $0xb8] sm:$0xf]
      %v257 = vld [vmem:[%s198 + $0xbc] sm:$0xf]
      %v258 = vld [vmem:[%s198 + $0xc0] sm:$0xf]
      %v259 = vld [vmem:[%s198 + $0xc4] sm:$0xf]
      %v260 = vld [vmem:[%s198 + $0xc8] sm:$0xf]
      %v261 = vld [vmem:[%s198 + $0xcc] sm:$0xf]
      %v262 = vld [vmem:[%s198 + $0xd0] sm:$0xf]
      %v263 = vld [vmem:[%s198 + $0xd4] sm:$0xf]
      %v264 = vld [vmem:[%s198 + $0xd8] sm:$0xf]
      %v265 = vld [vmem:[%s198 + $0xdc] sm:$0xf]
      %v266 = vld [vmem:[%s198 + $0xe0] sm:$0xf]
      %v267 = vld [vmem:[%s198 + $0xe4] sm:$0xf]
      %v268 = vld [vmem:[%s198 + $0xe8] sm:$0xf]
      %v269 = vld [vmem:[%s198 + $0xec] sm:$0xf]
      %v270 = vld [vmem:[%s198 + $0xf0] sm:$0xf]
      %v271 = vld [vmem:[%s198 + $0xf4] sm:$0xf]
      %v272 = vld [vmem:[%s198 + $0xf8] sm:$0xf]
      %v273 = vld [vmem:[%s198 + $0xfc] sm:$0xf]
      %v274 = vld [vmem:[%s198 + $0x100] sm:$0xf]
      %v275 = vld [vmem:[%s198 + $0x104] sm:$0xf]
      %v276 = vld [vmem:[%s198 + $0x108] sm:$0xf]
      %v277 = vld [vmem:[%s198 + $0x10c] sm:$0xf]
      %v278 = vld [vmem:[%s198 + $0x110] sm:$0xf]
      %v279 = vld [vmem:[%s198 + $0x114] sm:$0xf]
      %v280 = vld [vmem:[%s198 + $0x118] sm:$0xf]
      %v281 = vld [vmem:[%s198 + $0x11c] sm:$0xf]
      %v282 = vld [vmem:[%s198 + $0x120] sm:$0xf]
      %v283 = vld [vmem:[%s198 + $0x124] sm:$0xf]
      %v284 = vld [vmem:[%s198 + $0x128] sm:$0xf]
      %v285 = vld [vmem:[%s198 + $0x12c] sm:$0xf]
      %v286 = vld [vmem:[%s198 + $0x130] sm:$0xf]
      %v287 = vld [vmem:[%s198 + $0x134] sm:$0xf]
      %v288 = vld [vmem:[%s198 + $0x138] sm:$0xf]
      %v289 = vld [vmem:[%s198 + $0x13c] sm:$0xf]
      %v290 = vld [vmem:[%s198 + $0x140] sm:$0xf]
      %v291 = vld [vmem:[%s198 + $0x144] sm:$0xf]
      %v292 = vld [vmem:[%s198 + $0x148] sm:$0xf]
      %v293 = vld [vmem:[%s198 + $0x14c] sm:$0xf]
      %v294 = vld [vmem:[%s198 + $0x150] sm:$0xf]
      %v295 = vld [vmem:[%s198 + $0x154] sm:$0xf]
      %v296 = vld [vmem:[%s198 + $0x158] sm:$0xf]
      %v297 = vld [vmem:[%s198 + $0x15c] sm:$0xf]
      %v298 = vld [vmem:[%s198 + $0x160] sm:$0xf]
      %v299 = vld [vmem:[%s198 + $0x164] sm:$0xf]
      %v300 = vld [vmem:[%s198 + $0x168] sm:$0xf]
      %v301 = vld [vmem:[%s198 + $0x16c] sm:$0xf]
      %v302 = vld [vmem:[%s198 + $0x170] sm:$0xf]
      %v303 = vld [vmem:[%s198 + $0x174] sm:$0xf]
      %v304 = vld [vmem:[%s198 + $0x178] sm:$0xf]
      %v305 = vld [vmem:[%s198 + $0x17c] sm:$0xf]
      %v306 = vld [vmem:[%s198 + $0x180] sm:$0xf]
      %v307 = vld [vmem:[%s198 + $0x184] sm:$0xf]
      %v308 = vld [vmem:[%s198 + $0x188] sm:$0xf]
      %v309 = vld [vmem:[%s198 + $0x18c] sm:$0xf]
      %v310 = vld [vmem:[%s198 + $0x190] sm:$0xf]
      %v311 = vld [vmem:[%s198 + $0x194] sm:$0xf]
      %v312 = vld [vmem:[%s198 + $0x198] sm:$0xf]
      %v313 = vld [vmem:[%s198 + $0x19c] sm:$0xf]
      %v314 = vld [vmem:[%s198 + $0x1a0] sm:$0xf]
      %v315 = vld [vmem:[%s198 + $0x1a4] sm:$0xf]
      %v316 = vld [vmem:[%s198 + $0x1a8] sm:$0xf]
      %v317 = vld [vmem:[%s198 + $0x1ac] sm:$0xf]
      %v318 = vld [vmem:[%s198 + $0x1b0] sm:$0xf]
      %v319 = vld [vmem:[%s198 + $0x1b4] sm:$0xf]
      %v320 = vld [vmem:[%s198 + $0x1b8] sm:$0xf]
      %v321 = vld [vmem:[%s198 + $0x1bc] sm:$0xf]
      %v322 = vld [vmem:[%s198 + $0x1c0] sm:$0xf]
      %v323 = vld [vmem:[%s198 + $0x1c4] sm:$0xf]
      %v324 = vld [vmem:[%s198 + $0x1c8] sm:$0xf]
      %v325 = vld [vmem:[%s198 + $0x1cc] sm:$0xf]
      %v326 = vld [vmem:[%s198 + $0x1d0] sm:$0xf]
      %v327 = vld [vmem:[%s198 + $0x1d4] sm:$0xf]
      %v328 = vld [vmem:[%s198 + $0x1d8] sm:$0xf]
      %v329 = vld [vmem:[%s198 + $0x1dc] sm:$0xf]
      %v330 = vld [vmem:[%s198 + $0x1e0] sm:$0xf]
      %v331 = vld [vmem:[%s198 + $0x1e4] sm:$0xf]
      %v332 = vld [vmem:[%s198 + $0x1e8] sm:$0xf]
      %v333 = vld [vmem:[%s198 + $0x1ec] sm:$0xf]
      %v334 = vld [vmem:[%s198 + $0x1f0] sm:$0xf]
      %v335 = vld [vmem:[%s198 + $0x1f4] sm:$0xf]
      %v336 = vld [vmem:[%s198 + $0x1f8] sm:$0xf]
      %v337 = vld [vmem:[%s198 + $0x1fc] sm:$0xf]
      %v338 = vld [vmem:[%s198 + $0x200] sm:$0xf]
      %v339 = vld [vmem:[%s198 + $0x204] sm:$0xf]
      %v340 = vld [vmem:[%s198 + $0x208] sm:$0xf]
      %v341 = vld [vmem:[%s198 + $0x20c] sm:$0xf]
      %v342 = vld [vmem:[%s198 + $0x210] sm:$0xf]
      %v343 = vld [vmem:[%s198 + $0x214] sm:$0xf]
      %v344 = vld [vmem:[%s198 + $0x218] sm:$0xf]
      %v345 = vld [vmem:[%s198 + $0x21c] sm:$0xf]
      %v346 = vld [vmem:[%s198 + $0x220] sm:$0xf]
      %v347 = vld [vmem:[%s198 + $0x224] sm:$0xf]
      %v348 = vld [vmem:[%s198 + $0x228] sm:$0xf]
      %v349 = vld [vmem:[%s198 + $0x22c] sm:$0xf]
      %v350 = vld [vmem:[%s198 + $0x230] sm:$0xf]
      %v351 = vld [vmem:[%s198 + $0x234] sm:$0xf]
      %v352 = vld [vmem:[%s198 + $0x238] sm:$0xf]
      %v353 = vld [vmem:[%s198 + $0x23c] sm:$0xf]
      %v354 = vld [vmem:[%s198 + $0x240] sm:$0xf]
      %v355 = vld [vmem:[%s198 + $0x244] sm:$0xf]
      %v356 = vld [vmem:[%s198 + $0x248] sm:$0xf]
      %v357 = vld [vmem:[%s198 + $0x24c] sm:$0xf]
      %v358 = vld [vmem:[%s198 + $0x250] sm:$0xf]
      %v359 = vld [vmem:[%s198 + $0x254] sm:$0xf]
      %v360 = vld [vmem:[%s198 + $0x258] sm:$0xf]
      %v361 = vld [vmem:[%s198 + $0x25c] sm:$0xf]
      %v362 = vld [vmem:[%s198 + $0x260] sm:$0xf]
      %v363 = vld [vmem:[%s198 + $0x264] sm:$0xf]
      %v364 = vld [vmem:[%s198 + $0x268] sm:$0xf]
      %v365 = vld [vmem:[%s198 + $0x26c] sm:$0xf]
      %v366 = vld [vmem:[%s198 + $0x270] sm:$0xf]
      %v367 = vld [vmem:[%s198 + $0x274] sm:$0xf]
      %v368 = vld [vmem:[%s198 + $0x278] sm:$0xf]
      %v369 = vld [vmem:[%s198 + $0x27c] sm:$0xf]
      %v370 = vld [vmem:[%s198 + $0x280] sm:$0xf]
      %v371 = vld [vmem:[%s198 + $0x284] sm:$0xf]
      %v372 = vld [vmem:[%s198 + $0x288] sm:$0xf]
      %v373 = vld [vmem:[%s198 + $0x28c] sm:$0xf]
      %v374 = vld [vmem:[%s198 + $0x290] sm:$0xf]
      %v375 = vld [vmem:[%s198 + $0x294] sm:$0xf]
      %v376 = vld [vmem:[%s198 + $0x298] sm:$0xf]
      %v377 = vld [vmem:[%s198 + $0x29c] sm:$0xf]
      %v378 = vld [vmem:[%s198 + $0x2a0] sm:$0xf]
      %v379 = vld [vmem:[%s198 + $0x2a4] sm:$0xf]
      %v380 = vld [vmem:[%s198 + $0x2a8] sm:$0xf]
      %v381 = vld [vmem:[%s198 + $0x2ac] sm:$0xf]
      %v382 = vld [vmem:[%s198 + $0x2b0] sm:$0xf]
      %v383 = vld [vmem:[%s198 + $0x2b4] sm:$0xf]
      %v384 = vld [vmem:[%s198 + $0x2b8] sm:$0xf]
      %v385 = vld [vmem:[%s198 + $0x2bc] sm:$0xf]
      %v386 = vld [vmem:[%s198 + $0x2c0] sm:$0xf]
      %v387 = vld [vmem:[%s198 + $0x2c4] sm:$0xf]
      %v388 = vld [vmem:[%s198 + $0x2c8] sm:$0xf]
      %v389 = vld [vmem:[%s198 + $0x2cc] sm:$0xf]
      %v390 = vld [vmem:[%s198 + $0x2d0] sm:$0xf]
      %v391 = vld [vmem:[%s198 + $0x2d4] sm:$0xf]
      %v392 = vld [vmem:[%s198 + $0x2d8] sm:$0xf]
      %v393 = vld [vmem:[%s198 + $0x2dc] sm:$0xf]
      %v394 = vld [vmem:[%s198 + $0x2e0] sm:$0xf]
      %v395 = vld [vmem:[%s198 + $0x2e4] sm:$0xf]
      %v396 = vld [vmem:[%s198 + $0x2e8] sm:$0xf]
      %v397 = vld [vmem:[%s198 + $0x2ec] sm:$0xf]
      %v398 = vld [vmem:[%s198 + $0x2f0] sm:$0xf]
      %v399 = vld [vmem:[%s198 + $0x2f4] sm:$0xf]
      %v400 = vld [vmem:[%s198 + $0x2f8] sm:$0xf]
      %v401 = vld [vmem:[%s198 + $0x2fc] sm:$0xf]
      %v402 = vld [vmem:[%s198 + $0x300] sm:$0xf]
      %v403 = vld [vmem:[%s198 + $0x304] sm:$0xf]
      %v404 = vld [vmem:[%s198 + $0x308] sm:$0xf]
      %v405 = vld [vmem:[%s198 + $0x30c] sm:$0xf]
      %v406 = vld [vmem:[%s198 + $0x310] sm:$0xf]
      %v407 = vld [vmem:[%s198 + $0x314] sm:$0xf]
      %v408 = vld [vmem:[%s198 + $0x318] sm:$0xf]
      %v409 = vld [vmem:[%s198 + $0x31c] sm:$0xf]
      %v410 = vld [vmem:[%s198 + $0x320] sm:$0xf]
      %v411 = vld [vmem:[%s198 + $0x324] sm:$0xf]
      %v412 = vld [vmem:[%s198 + $0x328] sm:$0xf]
      %v413 = vld [vmem:[%s198 + $0x32c] sm:$0xf]
      %v414 = vld [vmem:[%s198 + $0x330] sm:$0xf]
      %v415 = vld [vmem:[%s198 + $0x334] sm:$0xf]
      %v416 = vld [vmem:[%s198 + $0x338] sm:$0xf]
      %v417 = vld [vmem:[%s198 + $0x33c] sm:$0xf]
      %v418 = vld [vmem:[%s198 + $0x340] sm:$0xf]
      %v419 = vld [vmem:[%s198 + $0x344] sm:$0xf]
      %v420 = vld [vmem:[%s198 + $0x348] sm:$0xf]
      %v421 = vld [vmem:[%s198 + $0x34c] sm:$0xf]
      %v422 = vld [vmem:[%s198 + $0x350] sm:$0xf]
      %v423 = vld [vmem:[%s198 + $0x354] sm:$0xf]
      %v424 = vld [vmem:[%s198 + $0x358] sm:$0xf]
      %v425 = vld [vmem:[%s198 + $0x35c] sm:$0xf]
      %v426 = vld [vmem:[%s198 + $0x360] sm:$0xf]
      %v427 = vld [vmem:[%s198 + $0x364] sm:$0xf]
      %v428 = vld [vmem:[%s198 + $0x368] sm:$0xf]
      %v429 = vld [vmem:[%s198 + $0x36c] sm:$0xf]
      %v430 = vld [vmem:[%s198 + $0x370] sm:$0xf]
      %v431 = vld [vmem:[%s198 + $0x374] sm:$0xf]
      %v432 = vld [vmem:[%s198 + $0x378] sm:$0xf]
      %v433 = vld [vmem:[%s198 + $0x37c] sm:$0xf]
      %v434 = vld [vmem:[%s198 + $0x380] sm:$0xf]
      %v435 = vld [vmem:[%s198 + $0x384] sm:$0xf]
      %v436 = vld [vmem:[%s198 + $0x388] sm:$0xf]
      %v437 = vld [vmem:[%s198 + $0x38c] sm:$0xf]
      %v438 = vld [vmem:[%s198 + $0x390] sm:$0xf]
      %v439 = vld [vmem:[%s198 + $0x394] sm:$0xf]
      %v440 = vld [vmem:[%s198 + $0x398] sm:$0xf]
      %v441 = vld [vmem:[%s198 + $0x39c] sm:$0xf]
      %v442 = vld [vmem:[%s198 + $0x3a0] sm:$0xf]
      %v443 = vld [vmem:[%s198 + $0x3a4] sm:$0xf]
      %v444 = vld [vmem:[%s198 + $0x3a8] sm:$0xf]
      %v445 = vld [vmem:[%s198 + $0x3ac] sm:$0xf]
      %v446 = vld [vmem:[%s198 + $0x3b0] sm:$0xf]
      %v447 = vld [vmem:[%s198 + $0x3b4] sm:$0xf]
      %v448 = vld [vmem:[%s198 + $0x3b8] sm:$0xf]
      %v449 = vld [vmem:[%s198 + $0x3bc] sm:$0xf]
      %v450 = vld [vmem:[%s198 + $0x3c0] sm:$0xf]
      %v451 = vld [vmem:[%s198 + $0x3c4] sm:$0xf]
      %v452 = vld [vmem:[%s198 + $0x3c8] sm:$0xf]
      %v453 = vld [vmem:[%s198 + $0x3cc] sm:$0xf]
      %v454 = vld [vmem:[%s198 + $0x3d0] sm:$0xf]
      %v455 = vld [vmem:[%s198 + $0x3d4] sm:$0xf]
      %v456 = vld [vmem:[%s198 + $0x3d8] sm:$0xf]
      %v457 = vld [vmem:[%s198 + $0x3dc] sm:$0xf]
      %v458 = vld [vmem:[%s198 + $0x3e0] sm:$0xf]
      %v459 = vld [vmem:[%s198 + $0x3e4] sm:$0xf]
      %v460 = vld [vmem:[%s198 + $0x3e8] sm:$0xf]
      %v461 = vld [vmem:[%s198 + $0x3ec] sm:$0xf]
      %v462 = vld [vmem:[%s198 + $0x3f0] sm:$0xf]
      %v463 = vld [vmem:[%s198 + $0x3f4] sm:$0xf]
      %v464 = vld [vmem:[%s198 + $0x3f8] sm:$0xf]
      %v465 = vld [vmem:[%s198 + $0x3fc] sm:$0xf]
      %v466 = vld [vmem:[%s1] sm:$0xf]
      %v467 = vld [vmem:[%s1 + $0x4] sm:$0xf]
      %v468 = vld [vmem:[%s1 + $0x8] sm:$0xf]
      %v469 = vld [vmem:[%s1 + $0xc] sm:$0xf]
      %v470 = vld [vmem:[%s1 + $0x10] sm:$0xf]
      %v471 = vld [vmem:[%s1 + $0x14] sm:$0xf]
      %v472 = vld [vmem:[%s1 + $0x18] sm:$0xf]
      %v473 = vld [vmem:[%s1 + $0x1c] sm:$0xf]
      %v474 = vld [vmem:[%s1 + $0x20] sm:$0xf]
      %v475 = vld [vmem:[%s1 + $0x24] sm:$0xf]
      %v476 = vld [vmem:[%s1 + $0x28] sm:$0xf]
      %v477 = vld [vmem:[%s1 + $0x2c] sm:$0xf]
      %v478 = vld [vmem:[%s1 + $0x30] sm:$0xf]
      %v479 = vld [vmem:[%s1 + $0x34] sm:$0xf]
      %v480 = vld [vmem:[%s1 + $0x38] sm:$0xf]
      %v481 = vld [vmem:[%s1 + $0x3c] sm:$0xf]
      %v482 = vld [vmem:[%s2] sm:$0x1]
      %v484 = vperm.slane %v482, 0
      %v742 = vunpack.c.l.b16 %v210
      %v743 = vunpack.c.l.b16 %v211
      %v744 = vunpack.c.l.b16 %v212
      %v745 = vunpack.c.l.b16 %v213
      %v746 = vunpack.c.l.b16 %v214
      %v747 = vunpack.c.l.b16 %v215
      %v748 = vunpack.c.l.b16 %v216
      %v749 = vunpack.c.l.b16 %v217
      %v750 = vunpack.c.l.b16 %v218
      %v751 = vunpack.c.l.b16 %v219
      %v752 = vunpack.c.l.b16 %v220
      %v753 = vunpack.c.l.b16 %v221
      %v754 = vunpack.c.l.b16 %v222
      %v755 = vunpack.c.l.b16 %v223
      %v756 = vunpack.c.l.b16 %v224
      %v757 = vunpack.c.l.b16 %v225
      %v758 = vunpack.c.l.b16 %v226
      %v759 = vunpack.c.l.b16 %v227
      %v760 = vunpack.c.l.b16 %v228
      %v761 = vunpack.c.l.b16 %v229
      %v762 = vunpack.c.l.b16 %v230
      %v763 = vunpack.c.l.b16 %v231
      %v764 = vunpack.c.l.b16 %v232
      %v765 = vunpack.c.l.b16 %v233
      %v766 = vunpack.c.l.b16 %v234
      %v767 = vunpack.c.l.b16 %v235
      %v768 = vunpack.c.l.b16 %v236
      %v769 = vunpack.c.l.b16 %v237
      %v770 = vunpack.c.l.b16 %v238
      %v771 = vunpack.c.l.b16 %v239
      %v772 = vunpack.c.l.b16 %v240
      %v773 = vunpack.c.l.b16 %v241
      %v774 = vunpack.c.l.b16 %v242
      %v775 = vunpack.c.l.b16 %v243
      %v776 = vunpack.c.l.b16 %v244
      %v777 = vunpack.c.l.b16 %v245
      %v778 = vunpack.c.l.b16 %v246
      %v779 = vunpack.c.l.b16 %v247
      %v780 = vunpack.c.l.b16 %v248
      %v781 = vunpack.c.l.b16 %v249
      %v782 = vunpack.c.l.b16 %v250
      %v783 = vunpack.c.l.b16 %v251
      %v784 = vunpack.c.l.b16 %v252
      %v785 = vunpack.c.l.b16 %v253
      %v786 = vunpack.c.l.b16 %v254
      %v787 = vunpack.c.l.b16 %v255
      %v788 = vunpack.c.l.b16 %v256
      %v789 = vunpack.c.l.b16 %v257
      %v790 = vunpack.c.l.b16 %v258
      %v791 = vunpack.c.l.b16 %v259
      %v792 = vunpack.c.l.b16 %v260
      %v793 = vunpack.c.l.b16 %v261
      %v794 = vunpack.c.l.b16 %v262
      %v795 = vunpack.c.l.b16 %v263
      %v796 = vunpack.c.l.b16 %v264
      %v797 = vunpack.c.l.b16 %v265
      %v798 = vunpack.c.l.b16 %v266
      %v799 = vunpack.c.l.b16 %v267
      %v800 = vunpack.c.l.b16 %v268
      %v801 = vunpack.c.l.b16 %v269
      %v802 = vunpack.c.l.b16 %v270
      %v803 = vunpack.c.l.b16 %v271
      %v804 = vunpack.c.l.b16 %v272
      %v805 = vunpack.c.l.b16 %v273
      %v806 = vunpack.c.l.b16 %v274
      %v807 = vunpack.c.l.b16 %v275
      %v808 = vunpack.c.l.b16 %v276
      %v809 = vunpack.c.l.b16 %v277
      %v810 = vunpack.c.l.b16 %v278
      %v811 = vunpack.c.l.b16 %v279
      %v812 = vunpack.c.l.b16 %v280
      %v813 = vunpack.c.l.b16 %v281
      %v814 = vunpack.c.l.b16 %v282
      %v815 = vunpack.c.l.b16 %v283
      %v816 = vunpack.c.l.b16 %v284
      %v817 = vunpack.c.l.b16 %v285
      %v818 = vunpack.c.l.b16 %v286
      %v819 = vunpack.c.l.b16 %v287
      %v820 = vunpack.c.l.b16 %v288
      %v821 = vunpack.c.l.b16 %v289
      %v822 = vunpack.c.l.b16 %v290
      %v823 = vunpack.c.l.b16 %v291
      %v824 = vunpack.c.l.b16 %v292
      %v825 = vunpack.c.l.b16 %v293
      %v826 = vunpack.c.l.b16 %v294
      %v827 = vunpack.c.l.b16 %v295
      %v828 = vunpack.c.l.b16 %v296
      %v829 = vunpack.c.l.b16 %v297
      %v830 = vunpack.c.l.b16 %v298
      %v831 = vunpack.c.l.b16 %v299
      %v832 = vunpack.c.l.b16 %v300
      %v833 = vunpack.c.l.b16 %v301
      %v834 = vunpack.c.l.b16 %v302
      %v835 = vunpack.c.l.b16 %v303
      %v836 = vunpack.c.l.b16 %v304
      %v837 = vunpack.c.l.b16 %v305
      %v838 = vunpack.c.l.b16 %v306
      %v839 = vunpack.c.l.b16 %v307
      %v840 = vunpack.c.l.b16 %v308
      %v841 = vunpack.c.l.b16 %v309
      %v842 = vunpack.c.l.b16 %v310
      %v843 = vunpack.c.l.b16 %v311
      %v844 = vunpack.c.l.b16 %v312
      %v845 = vunpack.c.l.b16 %v313
      %v846 = vunpack.c.l.b16 %v314
      %v847 = vunpack.c.l.b16 %v315
      %v848 = vunpack.c.l.b16 %v316
      %v849 = vunpack.c.l.b16 %v317
      %v850 = vunpack.c.l.b16 %v318
      %v851 = vunpack.c.l.b16 %v319
      %v852 = vunpack.c.l.b16 %v320
      %v853 = vunpack.c.l.b16 %v321
      %v854 = vunpack.c.l.b16 %v322
      %v855 = vunpack.c.l.b16 %v323
      %v856 = vunpack.c.l.b16 %v324
      %v857 = vunpack.c.l.b16 %v325
      %v858 = vunpack.c.l.b16 %v326
      %v859 = vunpack.c.l.b16 %v327
      %v860 = vunpack.c.l.b16 %v328
      %v861 = vunpack.c.l.b16 %v329
      %v862 = vunpack.c.l.b16 %v330
      %v863 = vunpack.c.l.b16 %v331
      %v864 = vunpack.c.l.b16 %v332
      %v865 = vunpack.c.l.b16 %v333
      %v866 = vunpack.c.l.b16 %v334
      %v867 = vunpack.c.l.b16 %v335
      %v868 = vunpack.c.l.b16 %v336
      %v869 = vunpack.c.l.b16 %v337
      %v870 = vunpack.c.l.b16 %v338
      %v871 = vunpack.c.l.b16 %v339
      %v872 = vunpack.c.l.b16 %v340
      %v873 = vunpack.c.l.b16 %v341
      %v874 = vunpack.c.l.b16 %v342
      %v875 = vunpack.c.l.b16 %v343
      %v876 = vunpack.c.l.b16 %v344
      %v877 = vunpack.c.l.b16 %v345
      %v878 = vunpack.c.l.b16 %v346
      %v879 = vunpack.c.l.b16 %v347
      %v880 = vunpack.c.l.b16 %v348
      %v881 = vunpack.c.l.b16 %v349
      %v882 = vunpack.c.l.b16 %v350
      %v883 = vunpack.c.l.b16 %v351
      %v884 = vunpack.c.l.b16 %v352
      %v885 = vunpack.c.l.b16 %v353
      %v886 = vunpack.c.l.b16 %v354
      %v887 = vunpack.c.l.b16 %v355
      %v888 = vunpack.c.l.b16 %v356
      %v889 = vunpack.c.l.b16 %v357
      %v890 = vunpack.c.l.b16 %v358
      %v891 = vunpack.c.l.b16 %v359
      %v892 = vunpack.c.l.b16 %v360
      %v893 = vunpack.c.l.b16 %v361
      %v894 = vunpack.c.l.b16 %v362
      %v895 = vunpack.c.l.b16 %v363
      %v896 = vunpack.c.l.b16 %v364
      %v897 = vunpack.c.l.b16 %v365
      %v898 = vunpack.c.l.b16 %v366
      %v899 = vunpack.c.l.b16 %v367
      %v900 = vunpack.c.l.b16 %v368
      %v901 = vunpack.c.l.b16 %v369
      %v902 = vunpack.c.l.b16 %v370
      %v903 = vunpack.c.l.b16 %v371
      %v904 = vunpack.c.l.b16 %v372
      %v905 = vunpack.c.l.b16 %v373
      %v906 = vunpack.c.l.b16 %v374
      %v907 = vunpack.c.l.b16 %v375
      %v908 = vunpack.c.l.b16 %v376
      %v909 = vunpack.c.l.b16 %v377
      %v910 = vunpack.c.l.b16 %v378
      %v911 = vunpack.c.l.b16 %v379
      %v912 = vunpack.c.l.b16 %v380
      %v913 = vunpack.c.l.b16 %v381
      %v914 = vunpack.c.l.b16 %v382
      %v915 = vunpack.c.l.b16 %v383
      %v916 = vunpack.c.l.b16 %v384
      %v917 = vunpack.c.l.b16 %v385
      %v918 = vunpack.c.l.b16 %v386
      %v919 = vunpack.c.l.b16 %v387
      %v920 = vunpack.c.l.b16 %v388
      %v921 = vunpack.c.l.b16 %v389
      %v922 = vunpack.c.l.b16 %v390
      %v923 = vunpack.c.l.b16 %v391
      %v924 = vunpack.c.l.b16 %v392
      %v925 = vunpack.c.l.b16 %v393
      %v926 = vunpack.c.l.b16 %v394
      %v927 = vunpack.c.l.b16 %v395
      %v928 = vunpack.c.l.b16 %v396
      %v929 = vunpack.c.l.b16 %v397
      %v930 = vunpack.c.l.b16 %v398
      %v931 = vunpack.c.l.b16 %v399
      %v932 = vunpack.c.l.b16 %v400
      %v933 = vunpack.c.l.b16 %v401
      %v934 = vunpack.c.l.b16 %v402
      %v935 = vunpack.c.l.b16 %v403
      %v936 = vunpack.c.l.b16 %v404
      %v937 = vunpack.c.l.b16 %v405
      %v938 = vunpack.c.l.b16 %v406
      %v939 = vunpack.c.l.b16 %v407
      %v940 = vunpack.c.l.b16 %v408
      %v941 = vunpack.c.l.b16 %v409
      %v942 = vunpack.c.l.b16 %v410
      %v943 = vunpack.c.l.b16 %v411
      %v944 = vunpack.c.l.b16 %v412
      %v945 = vunpack.c.l.b16 %v413
      %v946 = vunpack.c.l.b16 %v414
      %v947 = vunpack.c.l.b16 %v415
      %v948 = vunpack.c.l.b16 %v416
      %v949 = vunpack.c.l.b16 %v417
      %v950 = vunpack.c.l.b16 %v418
      %v951 = vunpack.c.l.b16 %v419
      %v952 = vunpack.c.l.b16 %v420
      %v953 = vunpack.c.l.b16 %v421
      %v954 = vunpack.c.l.b16 %v422
      %v955 = vunpack.c.l.b16 %v423
      %v956 = vunpack.c.l.b16 %v424
      %v957 = vunpack.c.l.b16 %v425
      %v958 = vunpack.c.l.b16 %v426
      %v959 = vunpack.c.l.b16 %v427
      %v960 = vunpack.c.l.b16 %v428
      %v961 = vunpack.c.l.b16 %v429
      %v962 = vunpack.c.l.b16 %v430
      %v963 = vunpack.c.l.b16 %v431
      %v964 = vunpack.c.l.b16 %v432
      %v965 = vunpack.c.l.b16 %v433
      %v966 = vunpack.c.l.b16 %v434
      %v967 = vunpack.c.l.b16 %v435
      %v968 = vunpack.c.l.b16 %v436
      %v969 = vunpack.c.l.b16 %v437
      %v970 = vunpack.c.l.b16 %v438
      %v971 = vunpack.c.l.b16 %v439
      %v972 = vunpack.c.l.b16 %v440
      %v973 = vunpack.c.l.b16 %v441
      %v974 = vunpack.c.l.b16 %v442
      %v975 = vunpack.c.l.b16 %v443
      %v976 = vunpack.c.l.b16 %v444
      %v977 = vunpack.c.l.b16 %v445
      %v978 = vunpack.c.l.b16 %v446
      %v979 = vunpack.c.l.b16 %v447
      %v980 = vunpack.c.l.b16 %v448
      %v981 = vunpack.c.l.b16 %v449
      %v982 = vunpack.c.l.b16 %v450
      %v983 = vunpack.c.l.b16 %v451
      %v984 = vunpack.c.l.b16 %v452
      %v985 = vunpack.c.l.b16 %v453
      %v986 = vunpack.c.l.b16 %v454
      %v987 = vunpack.c.l.b16 %v455
      %v988 = vunpack.c.l.b16 %v456
      %v989 = vunpack.c.l.b16 %v457
      %v990 = vunpack.c.l.b16 %v458
      %v991 = vunpack.c.l.b16 %v459
      %v992 = vunpack.c.l.b16 %v460
      %v993 = vunpack.c.l.b16 %v461
      %v994 = vunpack.c.l.b16 %v462
      %v995 = vunpack.c.l.b16 %v463
      %v996 = vunpack.c.l.b16 %v464
      %v997 = vunpack.c.l.b16 %v465
      %v998 = vpack.c.b16 %v743, %v742
      %v999 = vpack.c.b16 %v745, %v744
      %v1000 = vpack.c.b16 %v747, %v746
      %v1001 = vpack.c.b16 %v749, %v748
      %v1002 = vpack.c.b16 %v751, %v750
      %v1003 = vpack.c.b16 %v753, %v752
      %v1004 = vpack.c.b16 %v755, %v754
      %v1005 = vpack.c.b16 %v757, %v756
      %v1006 = vpack.c.b16 %v759, %v758
      %v1007 = vpack.c.b16 %v761, %v760
      %v1008 = vpack.c.b16 %v763, %v762
      %v1009 = vpack.c.b16 %v765, %v764
      %v1010 = vpack.c.b16 %v767, %v766
      %v1011 = vpack.c.b16 %v769, %v768
      %v1012 = vpack.c.b16 %v771, %v770
      %v1013 = vpack.c.b16 %v773, %v772
      %v1014 = vpack.c.b16 %v775, %v774
      %v1015 = vpack.c.b16 %v777, %v776
      %v1016 = vpack.c.b16 %v779, %v778
      %v1017 = vpack.c.b16 %v781, %v780
      %v1018 = vpack.c.b16 %v783, %v782
      %v1019 = vpack.c.b16 %v785, %v784
      %v1020 = vpack.c.b16 %v787, %v786
      %v1021 = vpack.c.b16 %v789, %v788
      %v1022 = vpack.c.b16 %v791, %v790
      %v1023 = vpack.c.b16 %v793, %v792
      %v1024 = vpack.c.b16 %v795, %v794
      %v1025 = vpack.c.b16 %v797, %v796
      %v1026 = vpack.c.b16 %v799, %v798
      %v1027 = vpack.c.b16 %v801, %v800
      %v1028 = vpack.c.b16 %v803, %v802
      %v1029 = vpack.c.b16 %v805, %v804
      %v1030 = vpack.c.b16 %v807, %v806
      %v1031 = vpack.c.b16 %v809, %v808
      %v1032 = vpack.c.b16 %v811, %v810
      %v1033 = vpack.c.b16 %v813, %v812
      %v1034 = vpack.c.b16 %v815, %v814
      %v1035 = vpack.c.b16 %v817, %v816
      %v1036 = vpack.c.b16 %v819, %v818
      %v1037 = vpack.c.b16 %v821, %v820
      %v1038 = vpack.c.b16 %v823, %v822
      %v1039 = vpack.c.b16 %v825, %v824
      %v1040 = vpack.c.b16 %v827, %v826
      %v1041 = vpack.c.b16 %v829, %v828
      %v1042 = vpack.c.b16 %v831, %v830
      %v1043 = vpack.c.b16 %v833, %v832
      %v1044 = vpack.c.b16 %v835, %v834
      %v1045 = vpack.c.b16 %v837, %v836
      %v1046 = vpack.c.b16 %v839, %v838
      %v1047 = vpack.c.b16 %v841, %v840
      %v1048 = vpack.c.b16 %v843, %v842
      %v1049 = vpack.c.b16 %v845, %v844
      %v1050 = vpack.c.b16 %v847, %v846
      %v1051 = vpack.c.b16 %v849, %v848
      %v1052 = vpack.c.b16 %v851, %v850
      %v1053 = vpack.c.b16 %v853, %v852
      %v1054 = vpack.c.b16 %v855, %v854
      %v1055 = vpack.c.b16 %v857, %v856
      %v1056 = vpack.c.b16 %v859, %v858
      %v1057 = vpack.c.b16 %v861, %v860
      %v1058 = vpack.c.b16 %v863, %v862
      %v1059 = vpack.c.b16 %v865, %v864
      %v1060 = vpack.c.b16 %v867, %v866
      %v1061 = vpack.c.b16 %v869, %v868
      %v1062 = vpack.c.b16 %v871, %v870
      %v1063 = vpack.c.b16 %v873, %v872
      %v1064 = vpack.c.b16 %v875, %v874
      %v1065 = vpack.c.b16 %v877, %v876
      %v1066 = vpack.c.b16 %v879, %v878
      %v1067 = vpack.c.b16 %v881, %v880
      %v1068 = vpack.c.b16 %v883, %v882
      %v1069 = vpack.c.b16 %v885, %v884
      %v1070 = vpack.c.b16 %v887, %v886
      %v1071 = vpack.c.b16 %v889, %v888
      %v1072 = vpack.c.b16 %v891, %v890
      %v1073 = vpack.c.b16 %v893, %v892
      %v1074 = vpack.c.b16 %v895, %v894
      %v1075 = vpack.c.b16 %v897, %v896
      %v1076 = vpack.c.b16 %v899, %v898
      %v1077 = vpack.c.b16 %v901, %v900
      %v1078 = vpack.c.b16 %v903, %v902
      %v1079 = vpack.c.b16 %v905, %v904
      %v1080 = vpack.c.b16 %v907, %v906
      %v1081 = vpack.c.b16 %v909, %v908
      %v1082 = vpack.c.b16 %v911, %v910
      %v1083 = vpack.c.b16 %v913, %v912
      %v1084 = vpack.c.b16 %v915, %v914
      %v1085 = vpack.c.b16 %v917, %v916
      %v1086 = vpack.c.b16 %v919, %v918
      %v1087 = vpack.c.b16 %v921, %v920
      %v1088 = vpack.c.b16 %v923, %v922
      %v1089 = vpack.c.b16 %v925, %v924
      %v1090 = vpack.c.b16 %v927, %v926
      %v1091 = vpack.c.b16 %v929, %v928
      %v1092 = vpack.c.b16 %v931, %v930
      %v1093 = vpack.c.b16 %v933, %v932
      %v1094 = vpack.c.b16 %v935, %v934
      %v1095 = vpack.c.b16 %v937, %v936
      %v1096 = vpack.c.b16 %v939, %v938
      %v1097 = vpack.c.b16 %v941, %v940
      %v1098 = vpack.c.b16 %v943, %v942
      %v1099 = vpack.c.b16 %v945, %v944
      %v1100 = vpack.c.b16 %v947, %v946
      %v1101 = vpack.c.b16 %v949, %v948
      %v1102 = vpack.c.b16 %v951, %v950
      %v1103 = vpack.c.b16 %v953, %v952
      %v1104 = vpack.c.b16 %v955, %v954
      %v1105 = vpack.c.b16 %v957, %v956
      %v1106 = vpack.c.b16 %v959, %v958
      %v1107 = vpack.c.b16 %v961, %v960
      %v1108 = vpack.c.b16 %v963, %v962
      %v1109 = vpack.c.b16 %v965, %v964
      %v1110 = vpack.c.b16 %v967, %v966
      %v1111 = vpack.c.b16 %v969, %v968
      %v1112 = vpack.c.b16 %v971, %v970
      %v1113 = vpack.c.b16 %v973, %v972
      %v1114 = vpack.c.b16 %v975, %v974
      %v1115 = vpack.c.b16 %v977, %v976
      %v1116 = vpack.c.b16 %v979, %v978
      %v1117 = vpack.c.b16 %v981, %v980
      %v1118 = vpack.c.b16 %v983, %v982
      %v1119 = vpack.c.b16 %v985, %v984
      %v1120 = vpack.c.b16 %v987, %v986
      %v1121 = vpack.c.b16 %v989, %v988
      %v1122 = vpack.c.b16 %v991, %v990
      %v1123 = vpack.c.b16 %v993, %v992
      %v1124 = vpack.c.b16 %v995, %v994
      %v1125 = vpack.c.b16 %v997, %v996
      %v1270 = vunpack.c.l.b16 %v466
      %v1271 = vunpack.c.l.b16 %v467
      %v1272 = vunpack.c.l.b16 %v468
      %v1273 = vunpack.c.l.b16 %v469
      %v1274 = vunpack.c.l.b16 %v470
      %v1275 = vunpack.c.l.b16 %v471
      %v1276 = vunpack.c.l.b16 %v472
      %v1277 = vunpack.c.l.b16 %v473
      %v1278 = vunpack.c.l.b16 %v474
      %v1279 = vunpack.c.l.b16 %v475
      %v1280 = vunpack.c.l.b16 %v476
      %v1281 = vunpack.c.l.b16 %v477
      %v1282 = vunpack.c.l.b16 %v478
      %v1283 = vunpack.c.l.b16 %v479
      %v1284 = vunpack.c.l.b16 %v480
      %v1285 = vunpack.c.l.b16 %v481
      %v1286 = vpack.c.b16 %v1271, %v1270
      %v1287 = vpack.c.b16 %v1273, %v1272
      %v1288 = vpack.c.b16 %v1275, %v1274
      %v1289 = vpack.c.b16 %v1277, %v1276
      %v1290 = vpack.c.b16 %v1279, %v1278
      %v1291 = vpack.c.b16 %v1281, %v1280
      %v1292 = vpack.c.b16 %v1283, %v1282
      %v1293 = vpack.c.b16 %v1285, %v1284
      %1302 = vmatpush.bf16.msra.mxu0 %v1293
      %1303 = vmatpush.bf16.msra.mxu0 %v1292
      %1304 = vmatpush.bf16.msra.mxu0 %v1291
      %1305 = vmatpush.bf16.msra.mxu0 %v1290
      %1306 = vmatpush.bf16.msra.mxu0 %v1289
      %1307 = vmatpush.bf16.msra.mxu0 %v1288
      %1308 = vmatpush.bf16.msra.mxu0 %v1287
      %1309 = vmatpush.bf16.msra.mxu0 %v1286
      %1310 = vmatmul.bf16.gmra.mxu0 %v998
      %v1311 = vpop.f32.mrf.mxu0
      %v1312 = vadd.f32 %v484, %v1311
      %v1313 = vpop.f32.mrf.mxu0
      %v1314 = vadd.f32 %v484, %v1313
      %1315 = vmatmul.bf16.gmra.mxu0 %v999
      %v1316 = vpop.f32.mrf.mxu0
      %v1317 = vadd.f32 %v484, %v1316
      %v1318 = vpop.f32.mrf.mxu0
      %v1319 = vadd.f32 %v484, %v1318
      %1320 = vmatmul.bf16.gmra.mxu0 %v1000
      %v1321 = vpop.f32.mrf.mxu0
      %v1322 = vadd.f32 %v484, %v1321
      %v1323 = vpop.f32.mrf.mxu0
      %v1324 = vadd.f32 %v484, %v1323
      %1325 = vmatmul.bf16.gmra.mxu0 %v1001
      %v1326 = vpop.f32.mrf.mxu0
      %v1327 = vadd.f32 %v484, %v1326
      %v1328 = vpop.f32.mrf.mxu0
      %v1329 = vadd.f32 %v484, %v1328
      %1330 = vmatmul.bf16.gmra.mxu0 %v1002
      %v1331 = vpop.f32.mrf.mxu0
      %v1332 = vadd.f32 %v484, %v1331
      %v1333 = vpop.f32.mrf.mxu0
      %v1334 = vadd.f32 %v484, %v1333
      %1335 = vmatmul.bf16.gmra.mxu0 %v1003
      %v1336 = vpop.f32.mrf.mxu0
      %v1337 = vadd.f32 %v484, %v1336
      %v1338 = vpop.f32.mrf.mxu0
      %v1339 = vadd.f32 %v484, %v1338
      %1340 = vmatmul.bf16.gmra.mxu0 %v1004
      %v1341 = vpop.f32.mrf.mxu0
      %v1342 = vadd.f32 %v484, %v1341
      %v1343 = vpop.f32.mrf.mxu0
      %v1344 = vadd.f32 %v484, %v1343
      %1345 = vmatmul.bf16.gmra.mxu0 %v1005
      %v1346 = vpop.f32.mrf.mxu0
      %v1347 = vadd.f32 %v484, %v1346
      %v1348 = vpop.f32.mrf.mxu0
      %v1349 = vadd.f32 %v484, %v1348
      %1350 = vmatmul.bf16.gmra.mxu0 %v1006
      %v1351 = vpop.f32.mrf.mxu0
      %v1352 = vadd.f32 %v484, %v1351
      %v1353 = vpop.f32.mrf.mxu0
      %v1354 = vadd.f32 %v484, %v1353
      %1355 = vmatmul.bf16.gmra.mxu0 %v1007
      %v1356 = vpop.f32.mrf.mxu0
      %v1357 = vadd.f32 %v484, %v1356
      %v1358 = vpop.f32.mrf.mxu0
      %v1359 = vadd.f32 %v484, %v1358
      %1360 = vmatmul.bf16.gmra.mxu0 %v1008
      %v1361 = vpop.f32.mrf.mxu0
      %v1362 = vadd.f32 %v484, %v1361
      %v1363 = vpop.f32.mrf.mxu0
      %v1364 = vadd.f32 %v484, %v1363
      %1365 = vmatmul.bf16.gmra.mxu0 %v1009
      %v1366 = vpop.f32.mrf.mxu0
      %v1367 = vadd.f32 %v484, %v1366
      %v1368 = vpop.f32.mrf.mxu0
      %v1369 = vadd.f32 %v484, %v1368
      %1370 = vmatmul.bf16.gmra.mxu0 %v1010
      %v1371 = vpop.f32.mrf.mxu0
      %v1372 = vadd.f32 %v484, %v1371
      %v1373 = vpop.f32.mrf.mxu0
      %v1374 = vadd.f32 %v484, %v1373
      %1375 = vmatmul.bf16.gmra.mxu0 %v1011
      %v1376 = vpop.f32.mrf.mxu0
      %v1377 = vadd.f32 %v484, %v1376
      %v1378 = vpop.f32.mrf.mxu0
      %v1379 = vadd.f32 %v484, %v1378
      %1380 = vmatmul.bf16.gmra.mxu0 %v1012
      %v1381 = vpop.f32.mrf.mxu0
      %v1382 = vadd.f32 %v484, %v1381
      %v1383 = vpop.f32.mrf.mxu0
      %v1384 = vadd.f32 %v484, %v1383
      %1385 = vmatmul.bf16.gmra.mxu0 %v1013
      %v1386 = vpop.f32.mrf.mxu0
      %v1387 = vadd.f32 %v484, %v1386
      %v1388 = vpop.f32.mrf.mxu0
      %v1389 = vadd.f32 %v484, %v1388
      %1390 = vmatmul.bf16.gmra.mxu0 %v1014
      %v1391 = vpop.f32.mrf.mxu0
      %v1392 = vadd.f32 %v484, %v1391
      %v1393 = vpop.f32.mrf.mxu0
      %v1394 = vadd.f32 %v484, %v1393
      %1395 = vmatmul.bf16.gmra.mxu0 %v1015
      %v1396 = vpop.f32.mrf.mxu0
      %v1397 = vadd.f32 %v484, %v1396
      %v1398 = vpop.f32.mrf.mxu0
      %v1399 = vadd.f32 %v484, %v1398
      %1400 = vmatmul.bf16.gmra.mxu0 %v1016
      %v1401 = vpop.f32.mrf.mxu0
      %v1402 = vadd.f32 %v484, %v1401
      %v1403 = vpop.f32.mrf.mxu0
      %v1404 = vadd.f32 %v484, %v1403
      %1405 = vmatmul.bf16.gmra.mxu0 %v1017
      %v1406 = vpop.f32.mrf.mxu0
      %v1407 = vadd.f32 %v484, %v1406
      %v1408 = vpop.f32.mrf.mxu0
      %v1409 = vadd.f32 %v484, %v1408
      %1410 = vmatmul.bf16.gmra.mxu0 %v1018
      %v1411 = vpop.f32.mrf.mxu0
      %v1412 = vadd.f32 %v484, %v1411
      %v1413 = vpop.f32.mrf.mxu0
      %v1414 = vadd.f32 %v484, %v1413
      %1415 = vmatmul.bf16.gmra.mxu0 %v1019
      %v1416 = vpop.f32.mrf.mxu0
      %v1417 = vadd.f32 %v484, %v1416
      %v1418 = vpop.f32.mrf.mxu0
      %v1419 = vadd.f32 %v484, %v1418
      %1420 = vmatmul.bf16.gmra.mxu0 %v1020
      %v1421 = vpop.f32.mrf.mxu0
      %v1422 = vadd.f32 %v484, %v1421
      %v1423 = vpop.f32.mrf.mxu0
      %v1424 = vadd.f32 %v484, %v1423
      %1425 = vmatmul.bf16.gmra.mxu0 %v1021
      %v1426 = vpop.f32.mrf.mxu0
      %v1427 = vadd.f32 %v484, %v1426
      %v1428 = vpop.f32.mrf.mxu0
      %v1429 = vadd.f32 %v484, %v1428
      %1430 = vmatmul.bf16.gmra.mxu0 %v1022
      %v1431 = vpop.f32.mrf.mxu0
      %v1432 = vadd.f32 %v484, %v1431
      %v1433 = vpop.f32.mrf.mxu0
      %v1434 = vadd.f32 %v484, %v1433
      %1435 = vmatmul.bf16.gmra.mxu0 %v1023
      %v1436 = vpop.f32.mrf.mxu0
      %v1437 = vadd.f32 %v484, %v1436
      %v1438 = vpop.f32.mrf.mxu0
      %v1439 = vadd.f32 %v484, %v1438
      %1440 = vmatmul.bf16.gmra.mxu0 %v1024
      %v1441 = vpop.f32.mrf.mxu0
      %v1442 = vadd.f32 %v484, %v1441
      %v1443 = vpop.f32.mrf.mxu0
      %v1444 = vadd.f32 %v484, %v1443
      %1445 = vmatmul.bf16.gmra.mxu0 %v1025
      %v1446 = vpop.f32.mrf.mxu0
      %v1447 = vadd.f32 %v484, %v1446
      %v1448 = vpop.f32.mrf.mxu0
      %v1449 = vadd.f32 %v484, %v1448
      %1450 = vmatmul.bf16.gmra.mxu0 %v1026
      %v1451 = vpop.f32.mrf.mxu0
      %v1452 = vadd.f32 %v484, %v1451
      %v1453 = vpop.f32.mrf.mxu0
      %v1454 = vadd.f32 %v484, %v1453
      %1455 = vmatmul.bf16.gmra.mxu0 %v1027
      %v1456 = vpop.f32.mrf.mxu0
      %v1457 = vadd.f32 %v484, %v1456
      %v1458 = vpop.f32.mrf.mxu0
      %v1459 = vadd.f32 %v484, %v1458
      %1460 = vmatmul.bf16.gmra.mxu0 %v1028
      %v1461 = vpop.f32.mrf.mxu0
      %v1462 = vadd.f32 %v484, %v1461
      %v1463 = vpop.f32.mrf.mxu0
      %v1464 = vadd.f32 %v484, %v1463
      %1465 = vmatmul.bf16.gmra.mxu0 %v1029
      %v1466 = vpop.f32.mrf.mxu0
      %v1467 = vadd.f32 %v484, %v1466
      %v1468 = vpop.f32.mrf.mxu0
      %v1469 = vadd.f32 %v484, %v1468
      %1470 = vmatmul.bf16.gmra.mxu0 %v1030
      %v1471 = vpop.f32.mrf.mxu0
      %v1472 = vadd.f32 %v484, %v1471
      %v1473 = vpop.f32.mrf.mxu0
      %v1474 = vadd.f32 %v484, %v1473
      %1475 = vmatmul.bf16.gmra.mxu0 %v1031
      %v1476 = vpop.f32.mrf.mxu0
      %v1477 = vadd.f32 %v484, %v1476
      %v1478 = vpop.f32.mrf.mxu0
      %v1479 = vadd.f32 %v484, %v1478
      %1480 = vmatmul.bf16.gmra.mxu0 %v1032
      %v1481 = vpop.f32.mrf.mxu0
      %v1482 = vadd.f32 %v484, %v1481
      %v1483 = vpop.f32.mrf.mxu0
      %v1484 = vadd.f32 %v484, %v1483
      %1485 = vmatmul.bf16.gmra.mxu0 %v1033
      %v1486 = vpop.f32.mrf.mxu0
      %v1487 = vadd.f32 %v484, %v1486
      %v1488 = vpop.f32.mrf.mxu0
      %v1489 = vadd.f32 %v484, %v1488
      %1490 = vmatmul.bf16.gmra.mxu0 %v1034
      %v1491 = vpop.f32.mrf.mxu0
      %v1492 = vadd.f32 %v484, %v1491
      %v1493 = vpop.f32.mrf.mxu0
      %v1494 = vadd.f32 %v484, %v1493
      %1495 = vmatmul.bf16.gmra.mxu0 %v1035
      %v1496 = vpop.f32.mrf.mxu0
      %v1497 = vadd.f32 %v484, %v1496
      %v1498 = vpop.f32.mrf.mxu0
      %v1499 = vadd.f32 %v484, %v1498
      %1500 = vmatmul.bf16.gmra.mxu0 %v1036
      %v1501 = vpop.f32.mrf.mxu0
      %v1502 = vadd.f32 %v484, %v1501
      %v1503 = vpop.f32.mrf.mxu0
      %v1504 = vadd.f32 %v484, %v1503
      %1505 = vmatmul.bf16.gmra.mxu0 %v1037
      %v1506 = vpop.f32.mrf.mxu0
      %v1507 = vadd.f32 %v484, %v1506
      %v1508 = vpop.f32.mrf.mxu0
      %v1509 = vadd.f32 %v484, %v1508
      %1510 = vmatmul.bf16.gmra.mxu0 %v1038
      %v1511 = vpop.f32.mrf.mxu0
      %v1512 = vadd.f32 %v484, %v1511
      %v1513 = vpop.f32.mrf.mxu0
      %v1514 = vadd.f32 %v484, %v1513
      %1515 = vmatmul.bf16.gmra.mxu0 %v1039
      %v1516 = vpop.f32.mrf.mxu0
      %v1517 = vadd.f32 %v484, %v1516
      %v1518 = vpop.f32.mrf.mxu0
      %v1519 = vadd.f32 %v484, %v1518
      %1520 = vmatmul.bf16.gmra.mxu0 %v1040
      %v1521 = vpop.f32.mrf.mxu0
      %v1522 = vadd.f32 %v484, %v1521
      %v1523 = vpop.f32.mrf.mxu0
      %v1524 = vadd.f32 %v484, %v1523
      %1525 = vmatmul.bf16.gmra.mxu0 %v1041
      %v1526 = vpop.f32.mrf.mxu0
      %v1527 = vadd.f32 %v484, %v1526
      %v1528 = vpop.f32.mrf.mxu0
      %v1529 = vadd.f32 %v484, %v1528
      %1530 = vmatmul.bf16.gmra.mxu0 %v1042
      %v1531 = vpop.f32.mrf.mxu0
      %v1532 = vadd.f32 %v484, %v1531
      %v1533 = vpop.f32.mrf.mxu0
      %v1534 = vadd.f32 %v484, %v1533
      %1535 = vmatmul.bf16.gmra.mxu0 %v1043
      %v1536 = vpop.f32.mrf.mxu0
      %v1537 = vadd.f32 %v484, %v1536
      %v1538 = vpop.f32.mrf.mxu0
      %v1539 = vadd.f32 %v484, %v1538
      %1540 = vmatmul.bf16.gmra.mxu0 %v1044
      %v1541 = vpop.f32.mrf.mxu0
      %v1542 = vadd.f32 %v484, %v1541
      %v1543 = vpop.f32.mrf.mxu0
      %v1544 = vadd.f32 %v484, %v1543
      %1545 = vmatmul.bf16.gmra.mxu0 %v1045
      %v1546 = vpop.f32.mrf.mxu0
      %v1547 = vadd.f32 %v484, %v1546
      %v1548 = vpop.f32.mrf.mxu0
      %v1549 = vadd.f32 %v484, %v1548
      %1550 = vmatmul.bf16.gmra.mxu0 %v1046
      %v1551 = vpop.f32.mrf.mxu0
      %v1552 = vadd.f32 %v484, %v1551
      %v1553 = vpop.f32.mrf.mxu0
      %v1554 = vadd.f32 %v484, %v1553
      %1555 = vmatmul.bf16.gmra.mxu0 %v1047
      %v1556 = vpop.f32.mrf.mxu0
      %v1557 = vadd.f32 %v484, %v1556
      %v1558 = vpop.f32.mrf.mxu0
      %v1559 = vadd.f32 %v484, %v1558
      %1560 = vmatmul.bf16.gmra.mxu0 %v1048
      %v1561 = vpop.f32.mrf.mxu0
      %v1562 = vadd.f32 %v484, %v1561
      %v1563 = vpop.f32.mrf.mxu0
      %v1564 = vadd.f32 %v484, %v1563
      %1565 = vmatmul.bf16.gmra.mxu0 %v1049
      %v1566 = vpop.f32.mrf.mxu0
      %v1567 = vadd.f32 %v484, %v1566
      %v1568 = vpop.f32.mrf.mxu0
      %v1569 = vadd.f32 %v484, %v1568
      %1570 = vmatmul.bf16.gmra.mxu0 %v1050
      %v1571 = vpop.f32.mrf.mxu0
      %v1572 = vadd.f32 %v484, %v1571
      %v1573 = vpop.f32.mrf.mxu0
      %v1574 = vadd.f32 %v484, %v1573
      %1575 = vmatmul.bf16.gmra.mxu0 %v1051
      %v1576 = vpop.f32.mrf.mxu0
      %v1577 = vadd.f32 %v484, %v1576
      %v1578 = vpop.f32.mrf.mxu0
      %v1579 = vadd.f32 %v484, %v1578
      %1580 = vmatmul.bf16.gmra.mxu0 %v1052
      %v1581 = vpop.f32.mrf.mxu0
      %v1582 = vadd.f32 %v484, %v1581
      %v1583 = vpop.f32.mrf.mxu0
      %v1584 = vadd.f32 %v484, %v1583
      %1585 = vmatmul.bf16.gmra.mxu0 %v1053
      %v1586 = vpop.f32.mrf.mxu0
      %v1587 = vadd.f32 %v484, %v1586
      %v1588 = vpop.f32.mrf.mxu0
      %v1589 = vadd.f32 %v484, %v1588
      %1590 = vmatmul.bf16.gmra.mxu0 %v1054
      %v1591 = vpop.f32.mrf.mxu0
      %v1592 = vadd.f32 %v484, %v1591
      %v1593 = vpop.f32.mrf.mxu0
      %v1594 = vadd.f32 %v484, %v1593
      %1595 = vmatmul.bf16.gmra.mxu0 %v1055
      %v1596 = vpop.f32.mrf.mxu0
      %v1597 = vadd.f32 %v484, %v1596
      %v1598 = vpop.f32.mrf.mxu0
      %v1599 = vadd.f32 %v484, %v1598
      %1600 = vmatmul.bf16.gmra.mxu0 %v1056
      %v1601 = vpop.f32.mrf.mxu0
      %v1602 = vadd.f32 %v484, %v1601
      %v1603 = vpop.f32.mrf.mxu0
      %v1604 = vadd.f32 %v484, %v1603
      %1605 = vmatmul.bf16.gmra.mxu0 %v1057
      %v1606 = vpop.f32.mrf.mxu0
      %v1607 = vadd.f32 %v484, %v1606
      %v1608 = vpop.f32.mrf.mxu0
      %v1609 = vadd.f32 %v484, %v1608
      %1610 = vmatmul.bf16.gmra.mxu0 %v1058
      %v1611 = vpop.f32.mrf.mxu0
      %v1612 = vadd.f32 %v484, %v1611
      %v1613 = vpop.f32.mrf.mxu0
      %v1614 = vadd.f32 %v484, %v1613
      %1615 = vmatmul.bf16.gmra.mxu0 %v1059
      %v1616 = vpop.f32.mrf.mxu0
      %v1617 = vadd.f32 %v484, %v1616
      %v1618 = vpop.f32.mrf.mxu0
      %v1619 = vadd.f32 %v484, %v1618
      %1620 = vmatmul.bf16.gmra.mxu0 %v1060
      %v1621 = vpop.f32.mrf.mxu0
      %v1622 = vadd.f32 %v484, %v1621
      %v1623 = vpop.f32.mrf.mxu0
      %v1624 = vadd.f32 %v484, %v1623
      %1625 = vmatmul.bf16.gmra.mxu0 %v1061
      %v1626 = vpop.f32.mrf.mxu0
      %v1627 = vadd.f32 %v484, %v1626
      %v1628 = vpop.f32.mrf.mxu0
      %v1629 = vadd.f32 %v484, %v1628
      %1630 = vmatmul.bf16.gmra.mxu0 %v1062
      %v1631 = vpop.f32.mrf.mxu0
      %v1632 = vadd.f32 %v484, %v1631
      %v1633 = vpop.f32.mrf.mxu0
      %v1634 = vadd.f32 %v484, %v1633
      %1635 = vmatmul.bf16.gmra.mxu0 %v1063
      %v1636 = vpop.f32.mrf.mxu0
      %v1637 = vadd.f32 %v484, %v1636
      %v1638 = vpop.f32.mrf.mxu0
      %v1639 = vadd.f32 %v484, %v1638
      %1640 = vmatmul.bf16.gmra.mxu0 %v1064
      %v1641 = vpop.f32.mrf.mxu0
      %v1642 = vadd.f32 %v484, %v1641
      %v1643 = vpop.f32.mrf.mxu0
      %v1644 = vadd.f32 %v484, %v1643
      %1645 = vmatmul.bf16.gmra.mxu0 %v1065
      %v1646 = vpop.f32.mrf.mxu0
      %v1647 = vadd.f32 %v484, %v1646
      %v1648 = vpop.f32.mrf.mxu0
      %v1649 = vadd.f32 %v484, %v1648
      %1650 = vmatmul.bf16.gmra.mxu0 %v1066
      %v1651 = vpop.f32.mrf.mxu0
      %v1652 = vadd.f32 %v484, %v1651
      %v1653 = vpop.f32.mrf.mxu0
      %v1654 = vadd.f32 %v484, %v1653
      %1655 = vmatmul.bf16.gmra.mxu0 %v1067
      %v1656 = vpop.f32.mrf.mxu0
      %v1657 = vadd.f32 %v484, %v1656
      %v1658 = vpop.f32.mrf.mxu0
      %v1659 = vadd.f32 %v484, %v1658
      %1660 = vmatmul.bf16.gmra.mxu0 %v1068
      %v1661 = vpop.f32.mrf.mxu0
      %v1662 = vadd.f32 %v484, %v1661
      %v1663 = vpop.f32.mrf.mxu0
      %v1664 = vadd.f32 %v484, %v1663
      %1665 = vmatmul.bf16.gmra.mxu0 %v1069
      %v1666 = vpop.f32.mrf.mxu0
      %v1667 = vadd.f32 %v484, %v1666
      %v1668 = vpop.f32.mrf.mxu0
      %v1669 = vadd.f32 %v484, %v1668
      %1670 = vmatmul.bf16.gmra.mxu0 %v1070
      %v1671 = vpop.f32.mrf.mxu0
      %v1672 = vadd.f32 %v484, %v1671
      %v1673 = vpop.f32.mrf.mxu0
      %v1674 = vadd.f32 %v484, %v1673
      %1675 = vmatmul.bf16.gmra.mxu0 %v1071
      %v1676 = vpop.f32.mrf.mxu0
      %v1677 = vadd.f32 %v484, %v1676
      %v1678 = vpop.f32.mrf.mxu0
      %v1679 = vadd.f32 %v484, %v1678
      %1680 = vmatmul.bf16.gmra.mxu0 %v1072
      %v1681 = vpop.f32.mrf.mxu0
      %v1682 = vadd.f32 %v484, %v1681
      %v1683 = vpop.f32.mrf.mxu0
      %v1684 = vadd.f32 %v484, %v1683
      %1685 = vmatmul.bf16.gmra.mxu0 %v1073
      %v1686 = vpop.f32.mrf.mxu0
      %v1687 = vadd.f32 %v484, %v1686
      %v1688 = vpop.f32.mrf.mxu0
      %v1689 = vadd.f32 %v484, %v1688
      %1690 = vmatmul.bf16.gmra.mxu0 %v1074
      %v1691 = vpop.f32.mrf.mxu0
      %v1692 = vadd.f32 %v484, %v1691
      %v1693 = vpop.f32.mrf.mxu0
      %v1694 = vadd.f32 %v484, %v1693
      %1695 = vmatmul.bf16.gmra.mxu0 %v1075
      %v1696 = vpop.f32.mrf.mxu0
      %v1697 = vadd.f32 %v484, %v1696
      %v1698 = vpop.f32.mrf.mxu0
      %v1699 = vadd.f32 %v484, %v1698
      %1700 = vmatmul.bf16.gmra.mxu0 %v1076
      %v1701 = vpop.f32.mrf.mxu0
      %v1702 = vadd.f32 %v484, %v1701
      %v1703 = vpop.f32.mrf.mxu0
      %v1704 = vadd.f32 %v484, %v1703
      %1705 = vmatmul.bf16.gmra.mxu0 %v1077
      %v1706 = vpop.f32.mrf.mxu0
      %v1707 = vadd.f32 %v484, %v1706
      %v1708 = vpop.f32.mrf.mxu0
      %v1709 = vadd.f32 %v484, %v1708
      %1710 = vmatmul.bf16.gmra.mxu0 %v1078
      %v1711 = vpop.f32.mrf.mxu0
      %v1712 = vadd.f32 %v484, %v1711
      %v1713 = vpop.f32.mrf.mxu0
      %v1714 = vadd.f32 %v484, %v1713
      %1715 = vmatmul.bf16.gmra.mxu0 %v1079
      %v1716 = vpop.f32.mrf.mxu0
      %v1717 = vadd.f32 %v484, %v1716
      %v1718 = vpop.f32.mrf.mxu0
      %v1719 = vadd.f32 %v484, %v1718
      %1720 = vmatmul.bf16.gmra.mxu0 %v1080
      %v1721 = vpop.f32.mrf.mxu0
      %v1722 = vadd.f32 %v484, %v1721
      %v1723 = vpop.f32.mrf.mxu0
      %v1724 = vadd.f32 %v484, %v1723
      %1725 = vmatmul.bf16.gmra.mxu0 %v1081
      %v1726 = vpop.f32.mrf.mxu0
      %v1727 = vadd.f32 %v484, %v1726
      %v1728 = vpop.f32.mrf.mxu0
      %v1729 = vadd.f32 %v484, %v1728
      %1730 = vmatmul.bf16.gmra.mxu0 %v1082
      %v1731 = vpop.f32.mrf.mxu0
      %v1732 = vadd.f32 %v484, %v1731
      %v1733 = vpop.f32.mrf.mxu0
      %v1734 = vadd.f32 %v484, %v1733
      %1735 = vmatmul.bf16.gmra.mxu0 %v1083
      %v1736 = vpop.f32.mrf.mxu0
      %v1737 = vadd.f32 %v484, %v1736
      %v1738 = vpop.f32.mrf.mxu0
      %v1739 = vadd.f32 %v484, %v1738
      %1740 = vmatmul.bf16.gmra.mxu0 %v1084
      %v1741 = vpop.f32.mrf.mxu0
      %v1742 = vadd.f32 %v484, %v1741
      %v1743 = vpop.f32.mrf.mxu0
      %v1744 = vadd.f32 %v484, %v1743
      %1745 = vmatmul.bf16.gmra.mxu0 %v1085
      %v1746 = vpop.f32.mrf.mxu0
      %v1747 = vadd.f32 %v484, %v1746
      %v1748 = vpop.f32.mrf.mxu0
      %v1749 = vadd.f32 %v484, %v1748
      %1750 = vmatmul.bf16.gmra.mxu0 %v1086
      %v1751 = vpop.f32.mrf.mxu0
      %v1752 = vadd.f32 %v484, %v1751
      %v1753 = vpop.f32.mrf.mxu0
      %v1754 = vadd.f32 %v484, %v1753
      %1755 = vmatmul.bf16.gmra.mxu0 %v1087
      %v1756 = vpop.f32.mrf.mxu0
      %v1757 = vadd.f32 %v484, %v1756
      %v1758 = vpop.f32.mrf.mxu0
      %v1759 = vadd.f32 %v484, %v1758
      %1760 = vmatmul.bf16.gmra.mxu0 %v1088
      %v1761 = vpop.f32.mrf.mxu0
      %v1762 = vadd.f32 %v484, %v1761
      %v1763 = vpop.f32.mrf.mxu0
      %v1764 = vadd.f32 %v484, %v1763
      %1765 = vmatmul.bf16.gmra.mxu0 %v1089
      %v1766 = vpop.f32.mrf.mxu0
      %v1767 = vadd.f32 %v484, %v1766
      %v1768 = vpop.f32.mrf.mxu0
      %v1769 = vadd.f32 %v484, %v1768
      %1770 = vmatmul.bf16.gmra.mxu0 %v1090
      %v1771 = vpop.f32.mrf.mxu0
      %v1772 = vadd.f32 %v484, %v1771
      %v1773 = vpop.f32.mrf.mxu0
      %v1774 = vadd.f32 %v484, %v1773
      %1775 = vmatmul.bf16.gmra.mxu0 %v1091
      %v1776 = vpop.f32.mrf.mxu0
      %v1777 = vadd.f32 %v484, %v1776
      %v1778 = vpop.f32.mrf.mxu0
      %v1779 = vadd.f32 %v484, %v1778
      %1780 = vmatmul.bf16.gmra.mxu0 %v1092
      %v1781 = vpop.f32.mrf.mxu0
      %v1782 = vadd.f32 %v484, %v1781
      %v1783 = vpop.f32.mrf.mxu0
      %v1784 = vadd.f32 %v484, %v1783
      %1785 = vmatmul.bf16.gmra.mxu0 %v1093
      %v1786 = vpop.f32.mrf.mxu0
      %v1787 = vadd.f32 %v484, %v1786
      %v1788 = vpop.f32.mrf.mxu0
      %v1789 = vadd.f32 %v484, %v1788
      %1790 = vmatmul.bf16.gmra.mxu0 %v1094
      %v1791 = vpop.f32.mrf.mxu0
      %v1792 = vadd.f32 %v484, %v1791
      %v1793 = vpop.f32.mrf.mxu0
      %v1794 = vadd.f32 %v484, %v1793
      %1795 = vmatmul.bf16.gmra.mxu0 %v1095
      %v1796 = vpop.f32.mrf.mxu0
      %v1797 = vadd.f32 %v484, %v1796
      %v1798 = vpop.f32.mrf.mxu0
      %v1799 = vadd.f32 %v484, %v1798
      %1800 = vmatmul.bf16.gmra.mxu0 %v1096
      %v1801 = vpop.f32.mrf.mxu0
      %v1802 = vadd.f32 %v484, %v1801
      %v1803 = vpop.f32.mrf.mxu0
      %v1804 = vadd.f32 %v484, %v1803
      %1805 = vmatmul.bf16.gmra.mxu0 %v1097
      %v1806 = vpop.f32.mrf.mxu0
      %v1807 = vadd.f32 %v484, %v1806
      %v1808 = vpop.f32.mrf.mxu0
      %v1809 = vadd.f32 %v484, %v1808
      %1810 = vmatmul.bf16.gmra.mxu0 %v1098
      %v1811 = vpop.f32.mrf.mxu0
      %v1812 = vadd.f32 %v484, %v1811
      %v1813 = vpop.f32.mrf.mxu0
      %v1814 = vadd.f32 %v484, %v1813
      %1815 = vmatmul.bf16.gmra.mxu0 %v1099
      %v1816 = vpop.f32.mrf.mxu0
      %v1817 = vadd.f32 %v484, %v1816
      %v1818 = vpop.f32.mrf.mxu0
      %v1819 = vadd.f32 %v484, %v1818
      %1820 = vmatmul.bf16.gmra.mxu0 %v1100
      %v1821 = vpop.f32.mrf.mxu0
      %v1822 = vadd.f32 %v484, %v1821
      %v1823 = vpop.f32.mrf.mxu0
      %v1824 = vadd.f32 %v484, %v1823
      %1825 = vmatmul.bf16.gmra.mxu0 %v1101
      %v1826 = vpop.f32.mrf.mxu0
      %v1827 = vadd.f32 %v484, %v1826
      %v1828 = vpop.f32.mrf.mxu0
      %v1829 = vadd.f32 %v484, %v1828
      %1830 = vmatmul.bf16.gmra.mxu0 %v1102
      %v1831 = vpop.f32.mrf.mxu0
      %v1832 = vadd.f32 %v484, %v1831
      %v1833 = vpop.f32.mrf.mxu0
      %v1834 = vadd.f32 %v484, %v1833
      %1835 = vmatmul.bf16.gmra.mxu0 %v1103
      %v1836 = vpop.f32.mrf.mxu0
      %v1837 = vadd.f32 %v484, %v1836
      %v1838 = vpop.f32.mrf.mxu0
      %v1839 = vadd.f32 %v484, %v1838
      %1840 = vmatmul.bf16.gmra.mxu0 %v1104
      %v1841 = vpop.f32.mrf.mxu0
      %v1842 = vadd.f32 %v484, %v1841
      %v1843 = vpop.f32.mrf.mxu0
      %v1844 = vadd.f32 %v484, %v1843
      %1845 = vmatmul.bf16.gmra.mxu0 %v1105
      %v1846 = vpop.f32.mrf.mxu0
      %v1847 = vadd.f32 %v484, %v1846
      %v1848 = vpop.f32.mrf.mxu0
      %v1849 = vadd.f32 %v484, %v1848
      %1850 = vmatmul.bf16.gmra.mxu0 %v1106
      %v1851 = vpop.f32.mrf.mxu0
      %v1852 = vadd.f32 %v484, %v1851
      %v1853 = vpop.f32.mrf.mxu0
      %v1854 = vadd.f32 %v484, %v1853
      %1855 = vmatmul.bf16.gmra.mxu0 %v1107
      %v1856 = vpop.f32.mrf.mxu0
      %v1857 = vadd.f32 %v484, %v1856
      %v1858 = vpop.f32.mrf.mxu0
      %v1859 = vadd.f32 %v484, %v1858
      %1860 = vmatmul.bf16.gmra.mxu0 %v1108
      %v1861 = vpop.f32.mrf.mxu0
      %v1862 = vadd.f32 %v484, %v1861
      %v1863 = vpop.f32.mrf.mxu0
      %v1864 = vadd.f32 %v484, %v1863
      %1865 = vmatmul.bf16.gmra.mxu0 %v1109
      %v1866 = vpop.f32.mrf.mxu0
      %v1867 = vadd.f32 %v484, %v1866
      %v1868 = vpop.f32.mrf.mxu0
      %v1869 = vadd.f32 %v484, %v1868
      %1870 = vmatmul.bf16.gmra.mxu0 %v1110
      %v1871 = vpop.f32.mrf.mxu0
      %v1872 = vadd.f32 %v484, %v1871
      %v1873 = vpop.f32.mrf.mxu0
      %v1874 = vadd.f32 %v484, %v1873
      %1875 = vmatmul.bf16.gmra.mxu0 %v1111
      %v1876 = vpop.f32.mrf.mxu0
      %v1877 = vadd.f32 %v484, %v1876
      %v1878 = vpop.f32.mrf.mxu0
      %v1879 = vadd.f32 %v484, %v1878
      %1880 = vmatmul.bf16.gmra.mxu0 %v1112
      %v1881 = vpop.f32.mrf.mxu0
      %v1882 = vadd.f32 %v484, %v1881
      %v1883 = vpop.f32.mrf.mxu0
      %v1884 = vadd.f32 %v484, %v1883
      %1885 = vmatmul.bf16.gmra.mxu0 %v1113
      %v1886 = vpop.f32.mrf.mxu0
      %v1887 = vadd.f32 %v484, %v1886
      %v1888 = vpop.f32.mrf.mxu0
      %v1889 = vadd.f32 %v484, %v1888
      %1890 = vmatmul.bf16.gmra.mxu0 %v1114
      %v1891 = vpop.f32.mrf.mxu0
      %v1892 = vadd.f32 %v484, %v1891
      %v1893 = vpop.f32.mrf.mxu0
      %v1894 = vadd.f32 %v484, %v1893
      %1895 = vmatmul.bf16.gmra.mxu0 %v1115
      %v1896 = vpop.f32.mrf.mxu0
      %v1897 = vadd.f32 %v484, %v1896
      %v1898 = vpop.f32.mrf.mxu0
      %v1899 = vadd.f32 %v484, %v1898
      %1900 = vmatmul.bf16.gmra.mxu0 %v1116
      %v1901 = vpop.f32.mrf.mxu0
      %v1902 = vadd.f32 %v484, %v1901
      %v1903 = vpop.f32.mrf.mxu0
      %v1904 = vadd.f32 %v484, %v1903
      %1905 = vmatmul.bf16.gmra.mxu0 %v1117
      %v1906 = vpop.f32.mrf.mxu0
      %v1907 = vadd.f32 %v484, %v1906
      %v1908 = vpop.f32.mrf.mxu0
      %v1909 = vadd.f32 %v484, %v1908
      %1910 = vmatmul.bf16.gmra.mxu0 %v1118
      %v1911 = vpop.f32.mrf.mxu0
      %v1912 = vadd.f32 %v484, %v1911
      %v1913 = vpop.f32.mrf.mxu0
      %v1914 = vadd.f32 %v484, %v1913
      %1915 = vmatmul.bf16.gmra.mxu0 %v1119
      %v1916 = vpop.f32.mrf.mxu0
      %v1917 = vadd.f32 %v484, %v1916
      %v1918 = vpop.f32.mrf.mxu0
      %v1919 = vadd.f32 %v484, %v1918
      %1920 = vmatmul.bf16.gmra.mxu0 %v1120
      %v1921 = vpop.f32.mrf.mxu0
      %v1922 = vadd.f32 %v484, %v1921
      %v1923 = vpop.f32.mrf.mxu0
      %v1924 = vadd.f32 %v484, %v1923
      %1925 = vmatmul.bf16.gmra.mxu0 %v1121
      %v1926 = vpop.f32.mrf.mxu0
      %v1927 = vadd.f32 %v484, %v1926
      %v1928 = vpop.f32.mrf.mxu0
      %v1929 = vadd.f32 %v484, %v1928
      %1930 = vmatmul.bf16.gmra.mxu0 %v1122
      %v1931 = vpop.f32.mrf.mxu0
      %v1932 = vadd.f32 %v484, %v1931
      %v1933 = vpop.f32.mrf.mxu0
      %v1934 = vadd.f32 %v484, %v1933
      %1935 = vmatmul.bf16.gmra.mxu0 %v1123
      %v1936 = vpop.f32.mrf.mxu0
      %v1937 = vadd.f32 %v484, %v1936
      %v1938 = vpop.f32.mrf.mxu0
      %v1939 = vadd.f32 %v484, %v1938
      %1940 = vmatmul.bf16.gmra.mxu0 %v1124
      %v1941 = vpop.f32.mrf.mxu0
      %v1942 = vadd.f32 %v484, %v1941
      %v1943 = vpop.f32.mrf.mxu0
      %v1944 = vadd.f32 %v484, %v1943
      %1945 = vmatmul.bf16.gmra.mxu0 %v1125
      %v1946 = vpop.f32.mrf.mxu0
      %v1947 = vadd.f32 %v484, %v1946
      %v1948 = vpop.f32.mrf.mxu0
      %v1949 = vadd.f32 %v484, %v1948
      %1950 = vdwg.mxu0
      %vm1951 = vcmp.ge.f32.partialorder %v1312, 0.0
      %vm1952 = vcmp.ge.f32.partialorder %v1314, 0.0
      %vm1953 = vcmp.ge.f32.partialorder %v1317, 0.0
      %vm1954 = vcmp.ge.f32.partialorder %v1319, 0.0
      %vm1955 = vcmp.ge.f32.partialorder %v1322, 0.0
      %vm1956 = vcmp.ge.f32.partialorder %v1324, 0.0
      %vm1957 = vcmp.ge.f32.partialorder %v1327, 0.0
      %vm1958 = vcmp.ge.f32.partialorder %v1329, 0.0
      %vm1959 = vcmp.ge.f32.partialorder %v1332, 0.0
      %vm1960 = vcmp.ge.f32.partialorder %v1334, 0.0
      %vm1961 = vcmp.ge.f32.partialorder %v1337, 0.0
      %vm1962 = vcmp.ge.f32.partialorder %v1339, 0.0
      %vm1963 = vcmp.ge.f32.partialorder %v1342, 0.0
      %vm1964 = vcmp.ge.f32.partialorder %v1344, 0.0
      %vm1965 = vcmp.ge.f32.partialorder %v1347, 0.0
      %vm1966 = vcmp.ge.f32.partialorder %v1349, 0.0
      %vm1967 = vcmp.ge.f32.partialorder %v1352, 0.0
      %vm1968 = vcmp.ge.f32.partialorder %v1354, 0.0
      %vm1969 = vcmp.ge.f32.partialorder %v1357, 0.0
      %vm1970 = vcmp.ge.f32.partialorder %v1359, 0.0
      %vm1971 = vcmp.ge.f32.partialorder %v1362, 0.0
      %vm1972 = vcmp.ge.f32.partialorder %v1364, 0.0
      %vm1973 = vcmp.ge.f32.partialorder %v1367, 0.0
      %vm1974 = vcmp.ge.f32.partialorder %v1369, 0.0
      %vm1975 = vcmp.ge.f32.partialorder %v1372, 0.0
      %vm1976 = vcmp.ge.f32.partialorder %v1374, 0.0
      %vm1977 = vcmp.ge.f32.partialorder %v1377, 0.0
      %vm1978 = vcmp.ge.f32.partialorder %v1379, 0.0
      %vm1979 = vcmp.ge.f32.partialorder %v1382, 0.0
      %vm1980 = vcmp.ge.f32.partialorder %v1384, 0.0
      %vm1981 = vcmp.ge.f32.partialorder %v1387, 0.0
      %vm1982 = vcmp.ge.f32.partialorder %v1389, 0.0
      %vm1983 = vcmp.ge.f32.partialorder %v1392, 0.0
      %vm1984 = vcmp.ge.f32.partialorder %v1394, 0.0
      %vm1985 = vcmp.ge.f32.partialorder %v1397, 0.0
      %vm1986 = vcmp.ge.f32.partialorder %v1399, 0.0
      %vm1987 = vcmp.ge.f32.partialorder %v1402, 0.0
      %vm1988 = vcmp.ge.f32.partialorder %v1404, 0.0
      %vm1989 = vcmp.ge.f32.partialorder %v1407, 0.0
      %vm1990 = vcmp.ge.f32.partialorder %v1409, 0.0
      %vm1991 = vcmp.ge.f32.partialorder %v1412, 0.0
      %vm1992 = vcmp.ge.f32.partialorder %v1414, 0.0
      %vm1993 = vcmp.ge.f32.partialorder %v1417, 0.0
      %vm1994 = vcmp.ge.f32.partialorder %v1419, 0.0
      %vm1995 = vcmp.ge.f32.partialorder %v1422, 0.0
      %vm1996 = vcmp.ge.f32.partialorder %v1424, 0.0
      %vm1997 = vcmp.ge.f32.partialorder %v1427, 0.0
      %vm1998 = vcmp.ge.f32.partialorder %v1429, 0.0
      %vm1999 = vcmp.ge.f32.partialorder %v1432, 0.0
      %vm2000 = vcmp.ge.f32.partialorder %v1434, 0.0
      %vm2001 = vcmp.ge.f32.partialorder %v1437, 0.0
      %vm2002 = vcmp.ge.f32.partialorder %v1439, 0.0
      %vm2003 = vcmp.ge.f32.partialorder %v1442, 0.0
      %vm2004 = vcmp.ge.f32.partialorder %v1444, 0.0
      %vm2005 = vcmp.ge.f32.partialorder %v1447, 0.0
      %vm2006 = vcmp.ge.f32.partialorder %v1449, 0.0
      %vm2007 = vcmp.ge.f32.partialorder %v1452, 0.0
      %vm2008 = vcmp.ge.f32.partialorder %v1454, 0.0
      %vm2009 = vcmp.ge.f32.partialorder %v1457, 0.0
      %vm2010 = vcmp.ge.f32.partialorder %v1459, 0.0
      %vm2011 = vcmp.ge.f32.partialorder %v1462, 0.0
      %vm2012 = vcmp.ge.f32.partialorder %v1464, 0.0
      %vm2013 = vcmp.ge.f32.partialorder %v1467, 0.0
      %vm2014 = vcmp.ge.f32.partialorder %v1469, 0.0
      %vm2015 = vcmp.ge.f32.partialorder %v1472, 0.0
      %vm2016 = vcmp.ge.f32.partialorder %v1474, 0.0
      %vm2017 = vcmp.ge.f32.partialorder %v1477, 0.0
      %vm2018 = vcmp.ge.f32.partialorder %v1479, 0.0
      %vm2019 = vcmp.ge.f32.partialorder %v1482, 0.0
      %vm2020 = vcmp.ge.f32.partialorder %v1484, 0.0
      %vm2021 = vcmp.ge.f32.partialorder %v1487, 0.0
      %vm2022 = vcmp.ge.f32.partialorder %v1489, 0.0
      %vm2023 = vcmp.ge.f32.partialorder %v1492, 0.0
      %vm2024 = vcmp.ge.f32.partialorder %v1494, 0.0
      %vm2025 = vcmp.ge.f32.partialorder %v1497, 0.0
      %vm2026 = vcmp.ge.f32.partialorder %v1499, 0.0
      %vm2027 = vcmp.ge.f32.partialorder %v1502, 0.0
      %vm2028 = vcmp.ge.f32.partialorder %v1504, 0.0
      %vm2029 = vcmp.ge.f32.partialorder %v1507, 0.0
      %vm2030 = vcmp.ge.f32.partialorder %v1509, 0.0
      %vm2031 = vcmp.ge.f32.partialorder %v1512, 0.0
      %vm2032 = vcmp.ge.f32.partialorder %v1514, 0.0
      %vm2033 = vcmp.ge.f32.partialorder %v1517, 0.0
      %vm2034 = vcmp.ge.f32.partialorder %v1519, 0.0
      %vm2035 = vcmp.ge.f32.partialorder %v1522, 0.0
      %vm2036 = vcmp.ge.f32.partialorder %v1524, 0.0
      %vm2037 = vcmp.ge.f32.partialorder %v1527, 0.0
      %vm2038 = vcmp.ge.f32.partialorder %v1529, 0.0
      %vm2039 = vcmp.ge.f32.partialorder %v1532, 0.0
      %vm2040 = vcmp.ge.f32.partialorder %v1534, 0.0
      %vm2041 = vcmp.ge.f32.partialorder %v1537, 0.0
      %vm2042 = vcmp.ge.f32.partialorder %v1539, 0.0
      %vm2043 = vcmp.ge.f32.partialorder %v1542, 0.0
      %vm2044 = vcmp.ge.f32.partialorder %v1544, 0.0
      %vm2045 = vcmp.ge.f32.partialorder %v1547, 0.0
      %vm2046 = vcmp.ge.f32.partialorder %v1549, 0.0
      %vm2047 = vcmp.ge.f32.partialorder %v1552, 0.0
      %vm2048 = vcmp.ge.f32.partialorder %v1554, 0.0
      %vm2049 = vcmp.ge.f32.partialorder %v1557, 0.0
      %vm2050 = vcmp.ge.f32.partialorder %v1559, 0.0
      %vm2051 = vcmp.ge.f32.partialorder %v1562, 0.0
      %vm2052 = vcmp.ge.f32.partialorder %v1564, 0.0
      %vm2053 = vcmp.ge.f32.partialorder %v1567, 0.0
      %vm2054 = vcmp.ge.f32.partialorder %v1569, 0.0
      %vm2055 = vcmp.ge.f32.partialorder %v1572, 0.0
      %vm2056 = vcmp.ge.f32.partialorder %v1574, 0.0
      %vm2057 = vcmp.ge.f32.partialorder %v1577, 0.0
      %vm2058 = vcmp.ge.f32.partialorder %v1579, 0.0
      %vm2059 = vcmp.ge.f32.partialorder %v1582, 0.0
      %vm2060 = vcmp.ge.f32.partialorder %v1584, 0.0
      %vm2061 = vcmp.ge.f32.partialorder %v1587, 0.0
      %vm2062 = vcmp.ge.f32.partialorder %v1589, 0.0
      %vm2063 = vcmp.ge.f32.partialorder %v1592, 0.0
      %vm2064 = vcmp.ge.f32.partialorder %v1594, 0.0
      %vm2065 = vcmp.ge.f32.partialorder %v1597, 0.0
      %vm2066 = vcmp.ge.f32.partialorder %v1599, 0.0
      %vm2067 = vcmp.ge.f32.partialorder %v1602, 0.0
      %vm2068 = vcmp.ge.f32.partialorder %v1604, 0.0
      %vm2069 = vcmp.ge.f32.partialorder %v1607, 0.0
      %vm2070 = vcmp.ge.f32.partialorder %v1609, 0.0
      %vm2071 = vcmp.ge.f32.partialorder %v1612, 0.0
      %vm2072 = vcmp.ge.f32.partialorder %v1614, 0.0
      %vm2073 = vcmp.ge.f32.partialorder %v1617, 0.0
      %vm2074 = vcmp.ge.f32.partialorder %v1619, 0.0
      %vm2075 = vcmp.ge.f32.partialorder %v1622, 0.0
      %vm2076 = vcmp.ge.f32.partialorder %v1624, 0.0
      %vm2077 = vcmp.ge.f32.partialorder %v1627, 0.0
      %vm2078 = vcmp.ge.f32.partialorder %v1629, 0.0
      %vm2079 = vcmp.ge.f32.partialorder %v1632, 0.0
      %vm2080 = vcmp.ge.f32.partialorder %v1634, 0.0
      %vm2081 = vcmp.ge.f32.partialorder %v1637, 0.0
      %vm2082 = vcmp.ge.f32.partialorder %v1639, 0.0
      %vm2083 = vcmp.ge.f32.partialorder %v1642, 0.0
      %vm2084 = vcmp.ge.f32.partialorder %v1644, 0.0
      %vm2085 = vcmp.ge.f32.partialorder %v1647, 0.0
      %vm2086 = vcmp.ge.f32.partialorder %v1649, 0.0
      %vm2087 = vcmp.ge.f32.partialorder %v1652, 0.0
      %vm2088 = vcmp.ge.f32.partialorder %v1654, 0.0
      %vm2089 = vcmp.ge.f32.partialorder %v1657, 0.0
      %vm2090 = vcmp.ge.f32.partialorder %v1659, 0.0
      %vm2091 = vcmp.ge.f32.partialorder %v1662, 0.0
      %vm2092 = vcmp.ge.f32.partialorder %v1664, 0.0
      %vm2093 = vcmp.ge.f32.partialorder %v1667, 0.0
      %vm2094 = vcmp.ge.f32.partialorder %v1669, 0.0
      %vm2095 = vcmp.ge.f32.partialorder %v1672, 0.0
      %vm2096 = vcmp.ge.f32.partialorder %v1674, 0.0
      %vm2097 = vcmp.ge.f32.partialorder %v1677, 0.0
      %vm2098 = vcmp.ge.f32.partialorder %v1679, 0.0
      %vm2099 = vcmp.ge.f32.partialorder %v1682, 0.0
      %vm2100 = vcmp.ge.f32.partialorder %v1684, 0.0
      %vm2101 = vcmp.ge.f32.partialorder %v1687, 0.0
      %vm2102 = vcmp.ge.f32.partialorder %v1689, 0.0
      %vm2103 = vcmp.ge.f32.partialorder %v1692, 0.0
      %vm2104 = vcmp.ge.f32.partialorder %v1694, 0.0
      %vm2105 = vcmp.ge.f32.partialorder %v1697, 0.0
      %vm2106 = vcmp.ge.f32.partialorder %v1699, 0.0
      %vm2107 = vcmp.ge.f32.partialorder %v1702, 0.0
      %vm2108 = vcmp.ge.f32.partialorder %v1704, 0.0
      %vm2109 = vcmp.ge.f32.partialorder %v1707, 0.0
      %vm2110 = vcmp.ge.f32.partialorder %v1709, 0.0
      %vm2111 = vcmp.ge.f32.partialorder %v1712, 0.0
      %vm2112 = vcmp.ge.f32.partialorder %v1714, 0.0
      %vm2113 = vcmp.ge.f32.partialorder %v1717, 0.0
      %vm2114 = vcmp.ge.f32.partialorder %v1719, 0.0
      %vm2115 = vcmp.ge.f32.partialorder %v1722, 0.0
      %vm2116 = vcmp.ge.f32.partialorder %v1724, 0.0
      %vm2117 = vcmp.ge.f32.partialorder %v1727, 0.0
      %vm2118 = vcmp.ge.f32.partialorder %v1729, 0.0
      %vm2119 = vcmp.ge.f32.partialorder %v1732, 0.0
      %vm2120 = vcmp.ge.f32.partialorder %v1734, 0.0
      %vm2121 = vcmp.ge.f32.partialorder %v1737, 0.0
      %vm2122 = vcmp.ge.f32.partialorder %v1739, 0.0
      %vm2123 = vcmp.ge.f32.partialorder %v1742, 0.0
      %vm2124 = vcmp.ge.f32.partialorder %v1744, 0.0
      %vm2125 = vcmp.ge.f32.partialorder %v1747, 0.0
      %vm2126 = vcmp.ge.f32.partialorder %v1749, 0.0
      %vm2127 = vcmp.ge.f32.partialorder %v1752, 0.0
      %vm2128 = vcmp.ge.f32.partialorder %v1754, 0.0
      %vm2129 = vcmp.ge.f32.partialorder %v1757, 0.0
      %vm2130 = vcmp.ge.f32.partialorder %v1759, 0.0
      %vm2131 = vcmp.ge.f32.partialorder %v1762, 0.0
      %vm2132 = vcmp.ge.f32.partialorder %v1764, 0.0
      %vm2133 = vcmp.ge.f32.partialorder %v1767, 0.0
      %vm2134 = vcmp.ge.f32.partialorder %v1769, 0.0
      %vm2135 = vcmp.ge.f32.partialorder %v1772, 0.0
      %vm2136 = vcmp.ge.f32.partialorder %v1774, 0.0
      %vm2137 = vcmp.ge.f32.partialorder %v1777, 0.0
      %vm2138 = vcmp.ge.f32.partialorder %v1779, 0.0
      %vm2139 = vcmp.ge.f32.partialorder %v1782, 0.0
      %vm2140 = vcmp.ge.f32.partialorder %v1784, 0.0
      %vm2141 = vcmp.ge.f32.partialorder %v1787, 0.0
      %vm2142 = vcmp.ge.f32.partialorder %v1789, 0.0
      %vm2143 = vcmp.ge.f32.partialorder %v1792, 0.0
      %vm2144 = vcmp.ge.f32.partialorder %v1794, 0.0
      %vm2145 = vcmp.ge.f32.partialorder %v1797, 0.0
      %vm2146 = vcmp.ge.f32.partialorder %v1799, 0.0
      %vm2147 = vcmp.ge.f32.partialorder %v1802, 0.0
      %vm2148 = vcmp.ge.f32.partialorder %v1804, 0.0
      %vm2149 = vcmp.ge.f32.partialorder %v1807, 0.0
      %vm2150 = vcmp.ge.f32.partialorder %v1809, 0.0
      %vm2151 = vcmp.ge.f32.partialorder %v1812, 0.0
      %vm2152 = vcmp.ge.f32.partialorder %v1814, 0.0
      %vm2153 = vcmp.ge.f32.partialorder %v1817, 0.0
      %vm2154 = vcmp.ge.f32.partialorder %v1819, 0.0
      %vm2155 = vcmp.ge.f32.partialorder %v1822, 0.0
      %vm2156 = vcmp.ge.f32.partialorder %v1824, 0.0
      %vm2157 = vcmp.ge.f32.partialorder %v1827, 0.0
      %vm2158 = vcmp.ge.f32.partialorder %v1829, 0.0
      %vm2159 = vcmp.ge.f32.partialorder %v1832, 0.0
      %vm2160 = vcmp.ge.f32.partialorder %v1834, 0.0
      %vm2161 = vcmp.ge.f32.partialorder %v1837, 0.0
      %vm2162 = vcmp.ge.f32.partialorder %v1839, 0.0
      %vm2163 = vcmp.ge.f32.partialorder %v1842, 0.0
      %vm2164 = vcmp.ge.f32.partialorder %v1844, 0.0
      %vm2165 = vcmp.ge.f32.partialorder %v1847, 0.0
      %vm2166 = vcmp.ge.f32.partialorder %v1849, 0.0
      %vm2167 = vcmp.ge.f32.partialorder %v1852, 0.0
      %vm2168 = vcmp.ge.f32.partialorder %v1854, 0.0
      %vm2169 = vcmp.ge.f32.partialorder %v1857, 0.0
      %vm2170 = vcmp.ge.f32.partialorder %v1859, 0.0
      %vm2171 = vcmp.ge.f32.partialorder %v1862, 0.0
      %vm2172 = vcmp.ge.f32.partialorder %v1864, 0.0
      %vm2173 = vcmp.ge.f32.partialorder %v1867, 0.0
      %vm2174 = vcmp.ge.f32.partialorder %v1869, 0.0
      %vm2175 = vcmp.ge.f32.partialorder %v1872, 0.0
      %vm2176 = vcmp.ge.f32.partialorder %v1874, 0.0
      %vm2177 = vcmp.ge.f32.partialorder %v1877, 0.0
      %vm2178 = vcmp.ge.f32.partialorder %v1879, 0.0
      %vm2179 = vcmp.ge.f32.partialorder %v1882, 0.0
      %vm2180 = vcmp.ge.f32.partialorder %v1884, 0.0
      %vm2181 = vcmp.ge.f32.partialorder %v1887, 0.0
      %vm2182 = vcmp.ge.f32.partialorder %v1889, 0.0
      %vm2183 = vcmp.ge.f32.partialorder %v1892, 0.0
      %vm2184 = vcmp.ge.f32.partialorder %v1894, 0.0
      %vm2185 = vcmp.ge.f32.partialorder %v1897, 0.0
      %vm2186 = vcmp.ge.f32.partialorder %v1899, 0.0
      %vm2187 = vcmp.ge.f32.partialorder %v1902, 0.0
      %vm2188 = vcmp.ge.f32.partialorder %v1904, 0.0
      %vm2189 = vcmp.ge.f32.partialorder %v1907, 0.0
      %vm2190 = vcmp.ge.f32.partialorder %v1909, 0.0
      %vm2191 = vcmp.ge.f32.partialorder %v1912, 0.0
      %vm2192 = vcmp.ge.f32.partialorder %v1914, 0.0
      %vm2193 = vcmp.ge.f32.partialorder %v1917, 0.0
      %vm2194 = vcmp.ge.f32.partialorder %v1919, 0.0
      %vm2195 = vcmp.ge.f32.partialorder %v1922, 0.0
      %vm2196 = vcmp.ge.f32.partialorder %v1924, 0.0
      %vm2197 = vcmp.ge.f32.partialorder %v1927, 0.0
      %vm2198 = vcmp.ge.f32.partialorder %v1929, 0.0
      %vm2199 = vcmp.ge.f32.partialorder %v1932, 0.0
      %vm2200 = vcmp.ge.f32.partialorder %v1934, 0.0
      %vm2201 = vcmp.ge.f32.partialorder %v1937, 0.0
      %vm2202 = vcmp.ge.f32.partialorder %v1939, 0.0
      %vm2203 = vcmp.ge.f32.partialorder %v1942, 0.0
      %vm2204 = vcmp.ge.f32.partialorder %v1944, 0.0
      %vm2205 = vcmp.ge.f32.partialorder %v1947, 0.0
      %vm2206 = vcmp.ge.f32.partialorder %v1949, 0.0
      %v2207 = vmul.f32 %v1312, 0.2
      %v2208 = vmul.f32 %v1314, 0.2
      %v2209 = vmul.f32 %v1317, 0.2
      %v2210 = vmul.f32 %v1319, 0.2
      %v2211 = vmul.f32 %v1322, 0.2
      %v2212 = vmul.f32 %v1324, 0.2
      %v2213 = vmul.f32 %v1327, 0.2
      %v2214 = vmul.f32 %v1329, 0.2
      %v2215 = vmul.f32 %v1332, 0.2
      %v2216 = vmul.f32 %v1334, 0.2
      %v2217 = vmul.f32 %v1337, 0.2
      %v2218 = vmul.f32 %v1339, 0.2
      %v2219 = vmul.f32 %v1342, 0.2
      %v2220 = vmul.f32 %v1344, 0.2
      %v2221 = vmul.f32 %v1347, 0.2
      %v2222 = vmul.f32 %v1349, 0.2
      %v2223 = vmul.f32 %v1352, 0.2
      %v2224 = vmul.f32 %v1354, 0.2
      %v2225 = vmul.f32 %v1357, 0.2
      %v2226 = vmul.f32 %v1359, 0.2
      %v2227 = vmul.f32 %v1362, 0.2
      %v2228 = vmul.f32 %v1364, 0.2
      %v2229 = vmul.f32 %v1367, 0.2
      %v2230 = vmul.f32 %v1369, 0.2
      %v2231 = vmul.f32 %v1372, 0.2
      %v2232 = vmul.f32 %v1374, 0.2
      %v2233 = vmul.f32 %v1377, 0.2
      %v2234 = vmul.f32 %v1379, 0.2
      %v2235 = vmul.f32 %v1382, 0.2
      %v2236 = vmul.f32 %v1384, 0.2
      %v2237 = vmul.f32 %v1387, 0.2
      %v2238 = vmul.f32 %v1389, 0.2
      %v2239 = vmul.f32 %v1392, 0.2
      %v2240 = vmul.f32 %v1394, 0.2
      %v2241 = vmul.f32 %v1397, 0.2
      %v2242 = vmul.f32 %v1399, 0.2
      %v2243 = vmul.f32 %v1402, 0.2
      %v2244 = vmul.f32 %v1404, 0.2
      %v2245 = vmul.f32 %v1407, 0.2
      %v2246 = vmul.f32 %v1409, 0.2
      %v2247 = vmul.f32 %v1412, 0.2
      %v2248 = vmul.f32 %v1414, 0.2
      %v2249 = vmul.f32 %v1417, 0.2
      %v2250 = vmul.f32 %v1419, 0.2
      %v2251 = vmul.f32 %v1422, 0.2
      %v2252 = vmul.f32 %v1424, 0.2
      %v2253 = vmul.f32 %v1427, 0.2
      %v2254 = vmul.f32 %v1429, 0.2
      %v2255 = vmul.f32 %v1432, 0.2
      %v2256 = vmul.f32 %v1434, 0.2
      %v2257 = vmul.f32 %v1437, 0.2
      %v2258 = vmul.f32 %v1439, 0.2
      %v2259 = vmul.f32 %v1442, 0.2
      %v2260 = vmul.f32 %v1444, 0.2
      %v2261 = vmul.f32 %v1447, 0.2
      %v2262 = vmul.f32 %v1449, 0.2
      %v2263 = vmul.f32 %v1452, 0.2
      %v2264 = vmul.f32 %v1454, 0.2
      %v2265 = vmul.f32 %v1457, 0.2
      %v2266 = vmul.f32 %v1459, 0.2
      %v2267 = vmul.f32 %v1462, 0.2
      %v2268 = vmul.f32 %v1464, 0.2
      %v2269 = vmul.f32 %v1467, 0.2
      %v2270 = vmul.f32 %v1469, 0.2
      %v2271 = vmul.f32 %v1472, 0.2
      %v2272 = vmul.f32 %v1474, 0.2
      %v2273 = vmul.f32 %v1477, 0.2
      %v2274 = vmul.f32 %v1479, 0.2
      %v2275 = vmul.f32 %v1482, 0.2
      %v2276 = vmul.f32 %v1484, 0.2
      %v2277 = vmul.f32 %v1487, 0.2
      %v2278 = vmul.f32 %v1489, 0.2
      %v2279 = vmul.f32 %v1492, 0.2
      %v2280 = vmul.f32 %v1494, 0.2
      %v2281 = vmul.f32 %v1497, 0.2
      %v2282 = vmul.f32 %v1499, 0.2
      %v2283 = vmul.f32 %v1502, 0.2
      %v2284 = vmul.f32 %v1504, 0.2
      %v2285 = vmul.f32 %v1507, 0.2
      %v2286 = vmul.f32 %v1509, 0.2
      %v2287 = vmul.f32 %v1512, 0.2
      %v2288 = vmul.f32 %v1514, 0.2
      %v2289 = vmul.f32 %v1517, 0.2
      %v2290 = vmul.f32 %v1519, 0.2
      %v2291 = vmul.f32 %v1522, 0.2
      %v2292 = vmul.f32 %v1524, 0.2
      %v2293 = vmul.f32 %v1527, 0.2
      %v2294 = vmul.f32 %v1529, 0.2
      %v2295 = vmul.f32 %v1532, 0.2
      %v2296 = vmul.f32 %v1534, 0.2
      %v2297 = vmul.f32 %v1537, 0.2
      %v2298 = vmul.f32 %v1539, 0.2
      %v2299 = vmul.f32 %v1542, 0.2
      %v2300 = vmul.f32 %v1544, 0.2
      %v2301 = vmul.f32 %v1547, 0.2
      %v2302 = vmul.f32 %v1549, 0.2
      %v2303 = vmul.f32 %v1552, 0.2
      %v2304 = vmul.f32 %v1554, 0.2
      %v2305 = vmul.f32 %v1557, 0.2
      %v2306 = vmul.f32 %v1559, 0.2
      %v2307 = vmul.f32 %v1562, 0.2
      %v2308 = vmul.f32 %v1564, 0.2
      %v2309 = vmul.f32 %v1567, 0.2
      %v2310 = vmul.f32 %v1569, 0.2
      %v2311 = vmul.f32 %v1572, 0.2
      %v2312 = vmul.f32 %v1574, 0.2
      %v2313 = vmul.f32 %v1577, 0.2
      %v2314 = vmul.f32 %v1579, 0.2
      %v2315 = vmul.f32 %v1582, 0.2
      %v2316 = vmul.f32 %v1584, 0.2
      %v2317 = vmul.f32 %v1587, 0.2
      %v2318 = vmul.f32 %v1589, 0.2
      %v2319 = vmul.f32 %v1592, 0.2
      %v2320 = vmul.f32 %v1594, 0.2
      %v2321 = vmul.f32 %v1597, 0.2
      %v2322 = vmul.f32 %v1599, 0.2
      %v2323 = vmul.f32 %v1602, 0.2
      %v2324 = vmul.f32 %v1604, 0.2
      %v2325 = vmul.f32 %v1607, 0.2
      %v2326 = vmul.f32 %v1609, 0.2
      %v2327 = vmul.f32 %v1612, 0.2
      %v2328 = vmul.f32 %v1614, 0.2
      %v2329 = vmul.f32 %v1617, 0.2
      %v2330 = vmul.f32 %v1619, 0.2
      %v2331 = vmul.f32 %v1622, 0.2
      %v2332 = vmul.f32 %v1624, 0.2
      %v2333 = vmul.f32 %v1627, 0.2
      %v2334 = vmul.f32 %v1629, 0.2
      %v2335 = vmul.f32 %v1632, 0.2
      %v2336 = vmul.f32 %v1634, 0.2
      %v2337 = vmul.f32 %v1637, 0.2
      %v2338 = vmul.f32 %v1639, 0.2
      %v2339 = vmul.f32 %v1642, 0.2
      %v2340 = vmul.f32 %v1644, 0.2
      %v2341 = vmul.f32 %v1647, 0.2
      %v2342 = vmul.f32 %v1649, 0.2
      %v2343 = vmul.f32 %v1652, 0.2
      %v2344 = vmul.f32 %v1654, 0.2
      %v2345 = vmul.f32 %v1657, 0.2
      %v2346 = vmul.f32 %v1659, 0.2
      %v2347 = vmul.f32 %v1662, 0.2
      %v2348 = vmul.f32 %v1664, 0.2
      %v2349 = vmul.f32 %v1667, 0.2
      %v2350 = vmul.f32 %v1669, 0.2
      %v2351 = vmul.f32 %v1672, 0.2
      %v2352 = vmul.f32 %v1674, 0.2
      %v2353 = vmul.f32 %v1677, 0.2
      %v2354 = vmul.f32 %v1679, 0.2
      %v2355 = vmul.f32 %v1682, 0.2
      %v2356 = vmul.f32 %v1684, 0.2
      %v2357 = vmul.f32 %v1687, 0.2
      %v2358 = vmul.f32 %v1689, 0.2
      %v2359 = vmul.f32 %v1692, 0.2
      %v2360 = vmul.f32 %v1694, 0.2
      %v2361 = vmul.f32 %v1697, 0.2
      %v2362 = vmul.f32 %v1699, 0.2
      %v2363 = vmul.f32 %v1702, 0.2
      %v2364 = vmul.f32 %v1704, 0.2
      %v2365 = vmul.f32 %v1707, 0.2
      %v2366 = vmul.f32 %v1709, 0.2
      %v2367 = vmul.f32 %v1712, 0.2
      %v2368 = vmul.f32 %v1714, 0.2
      %v2369 = vmul.f32 %v1717, 0.2
      %v2370 = vmul.f32 %v1719, 0.2
      %v2371 = vmul.f32 %v1722, 0.2
      %v2372 = vmul.f32 %v1724, 0.2
      %v2373 = vmul.f32 %v1727, 0.2
      %v2374 = vmul.f32 %v1729, 0.2
      %v2375 = vmul.f32 %v1732, 0.2
      %v2376 = vmul.f32 %v1734, 0.2
      %v2377 = vmul.f32 %v1737, 0.2
      %v2378 = vmul.f32 %v1739, 0.2
      %v2379 = vmul.f32 %v1742, 0.2
      %v2380 = vmul.f32 %v1744, 0.2
      %v2381 = vmul.f32 %v1747, 0.2
      %v2382 = vmul.f32 %v1749, 0.2
      %v2383 = vmul.f32 %v1752, 0.2
      %v2384 = vmul.f32 %v1754, 0.2
      %v2385 = vmul.f32 %v1757, 0.2
      %v2386 = vmul.f32 %v1759, 0.2
      %v2387 = vmul.f32 %v1762, 0.2
      %v2388 = vmul.f32 %v1764, 0.2
      %v2389 = vmul.f32 %v1767, 0.2
      %v2390 = vmul.f32 %v1769, 0.2
      %v2391 = vmul.f32 %v1772, 0.2
      %v2392 = vmul.f32 %v1774, 0.2
      %v2393 = vmul.f32 %v1777, 0.2
      %v2394 = vmul.f32 %v1779, 0.2
      %v2395 = vmul.f32 %v1782, 0.2
      %v2396 = vmul.f32 %v1784, 0.2
      %v2397 = vmul.f32 %v1787, 0.2
      %v2398 = vmul.f32 %v1789, 0.2
      %v2399 = vmul.f32 %v1792, 0.2
      %v2400 = vmul.f32 %v1794, 0.2
      %v2401 = vmul.f32 %v1797, 0.2
      %v2402 = vmul.f32 %v1799, 0.2
      %v2403 = vmul.f32 %v1802, 0.2
      %v2404 = vmul.f32 %v1804, 0.2
      %v2405 = vmul.f32 %v1807, 0.2
      %v2406 = vmul.f32 %v1809, 0.2
      %v2407 = vmul.f32 %v1812, 0.2
      %v2408 = vmul.f32 %v1814, 0.2
      %v2409 = vmul.f32 %v1817, 0.2
      %v2410 = vmul.f32 %v1819, 0.2
      %v2411 = vmul.f32 %v1822, 0.2
      %v2412 = vmul.f32 %v1824, 0.2
      %v2413 = vmul.f32 %v1827, 0.2
      %v2414 = vmul.f32 %v1829, 0.2
      %v2415 = vmul.f32 %v1832, 0.2
      %v2416 = vmul.f32 %v1834, 0.2
      %v2417 = vmul.f32 %v1837, 0.2
      %v2418 = vmul.f32 %v1839, 0.2
      %v2419 = vmul.f32 %v1842, 0.2
      %v2420 = vmul.f32 %v1844, 0.2
      %v2421 = vmul.f32 %v1847, 0.2
      %v2422 = vmul.f32 %v1849, 0.2
      %v2423 = vmul.f32 %v1852, 0.2
      %v2424 = vmul.f32 %v1854, 0.2
      %v2425 = vmul.f32 %v1857, 0.2
      %v2426 = vmul.f32 %v1859, 0.2
      %v2427 = vmul.f32 %v1862, 0.2
      %v2428 = vmul.f32 %v1864, 0.2
      %v2429 = vmul.f32 %v1867, 0.2
      %v2430 = vmul.f32 %v1869, 0.2
      %v2431 = vmul.f32 %v1872, 0.2
      %v2432 = vmul.f32 %v1874, 0.2
      %v2433 = vmul.f32 %v1877, 0.2
      %v2434 = vmul.f32 %v1879, 0.2
      %v2435 = vmul.f32 %v1882, 0.2
      %v2436 = vmul.f32 %v1884, 0.2
      %v2437 = vmul.f32 %v1887, 0.2
      %v2438 = vmul.f32 %v1889, 0.2
      %v2439 = vmul.f32 %v1892, 0.2
      %v2440 = vmul.f32 %v1894, 0.2
      %v2441 = vmul.f32 %v1897, 0.2
      %v2442 = vmul.f32 %v1899, 0.2
      %v2443 = vmul.f32 %v1902, 0.2
      %v2444 = vmul.f32 %v1904, 0.2
      %v2445 = vmul.f32 %v1907, 0.2
      %v2446 = vmul.f32 %v1909, 0.2
      %v2447 = vmul.f32 %v1912, 0.2
      %v2448 = vmul.f32 %v1914, 0.2
      %v2449 = vmul.f32 %v1917, 0.2
      %v2450 = vmul.f32 %v1919, 0.2
      %v2451 = vmul.f32 %v1922, 0.2
      %v2452 = vmul.f32 %v1924, 0.2
      %v2453 = vmul.f32 %v1927, 0.2
      %v2454 = vmul.f32 %v1929, 0.2
      %v2455 = vmul.f32 %v1932, 0.2
      %v2456 = vmul.f32 %v1934, 0.2
      %v2457 = vmul.f32 %v1937, 0.2
      %v2458 = vmul.f32 %v1939, 0.2
      %v2459 = vmul.f32 %v1942, 0.2
      %v2460 = vmul.f32 %v1944, 0.2
      %v2461 = vmul.f32 %v1947, 0.2
      %v2462 = vmul.f32 %v1949, 0.2
      %v2463 = vsel %vm1951, %v1312, %v2207
      %v2464 = vsel %vm1952, %v1314, %v2208
      %v2465 = vsel %vm1953, %v1317, %v2209
      %v2466 = vsel %vm1954, %v1319, %v2210
      %v2467 = vsel %vm1955, %v1322, %v2211
      %v2468 = vsel %vm1956, %v1324, %v2212
      %v2469 = vsel %vm1957, %v1327, %v2213
      %v2470 = vsel %vm1958, %v1329, %v2214
      %v2471 = vsel %vm1959, %v1332, %v2215
      %v2472 = vsel %vm1960, %v1334, %v2216
      %v2473 = vsel %vm1961, %v1337, %v2217
      %v2474 = vsel %vm1962, %v1339, %v2218
      %v2475 = vsel %vm1963, %v1342, %v2219
      %v2476 = vsel %vm1964, %v1344, %v2220
      %v2477 = vsel %vm1965, %v1347, %v2221
      %v2478 = vsel %vm1966, %v1349, %v2222
      %v2479 = vsel %vm1967, %v1352, %v2223
      %v2480 = vsel %vm1968, %v1354, %v2224
      %v2481 = vsel %vm1969, %v1357, %v2225
      %v2482 = vsel %vm1970, %v1359, %v2226
      %v2483 = vsel %vm1971, %v1362, %v2227
      %v2484 = vsel %vm1972, %v1364, %v2228
      %v2485 = vsel %vm1973, %v1367, %v2229
      %v2486 = vsel %vm1974, %v1369, %v2230
      %v2487 = vsel %vm1975, %v1372, %v2231
      %v2488 = vsel %vm1976, %v1374, %v2232
      %v2489 = vsel %vm1977, %v1377, %v2233
      %v2490 = vsel %vm1978, %v1379, %v2234
      %v2491 = vsel %vm1979, %v1382, %v2235
      %v2492 = vsel %vm1980, %v1384, %v2236
      %v2493 = vsel %vm1981, %v1387, %v2237
      %v2494 = vsel %vm1982, %v1389, %v2238
      %v2495 = vsel %vm1983, %v1392, %v2239
      %v2496 = vsel %vm1984, %v1394, %v2240
      %v2497 = vsel %vm1985, %v1397, %v2241
      %v2498 = vsel %vm1986, %v1399, %v2242
      %v2499 = vsel %vm1987, %v1402, %v2243
      %v2500 = vsel %vm1988, %v1404, %v2244
      %v2501 = vsel %vm1989, %v1407, %v2245
      %v2502 = vsel %vm1990, %v1409, %v2246
      %v2503 = vsel %vm1991, %v1412, %v2247
      %v2504 = vsel %vm1992, %v1414, %v2248
      %v2505 = vsel %vm1993, %v1417, %v2249
      %v2506 = vsel %vm1994, %v1419, %v2250
      %v2507 = vsel %vm1995, %v1422, %v2251
      %v2508 = vsel %vm1996, %v1424, %v2252
      %v2509 = vsel %vm1997, %v1427, %v2253
      %v2510 = vsel %vm1998, %v1429, %v2254
      %v2511 = vsel %vm1999, %v1432, %v2255
      %v2512 = vsel %vm2000, %v1434, %v2256
      %v2513 = vsel %vm2001, %v1437, %v2257
      %v2514 = vsel %vm2002, %v1439, %v2258
      %v2515 = vsel %vm2003, %v1442, %v2259
      %v2516 = vsel %vm2004, %v1444, %v2260
      %v2517 = vsel %vm2005, %v1447, %v2261
      %v2518 = vsel %vm2006, %v1449, %v2262
      %v2519 = vsel %vm2007, %v1452, %v2263
      %v2520 = vsel %vm2008, %v1454, %v2264
      %v2521 = vsel %vm2009, %v1457, %v2265
      %v2522 = vsel %vm2010, %v1459, %v2266
      %v2523 = vsel %vm2011, %v1462, %v2267
      %v2524 = vsel %vm2012, %v1464, %v2268
      %v2525 = vsel %vm2013, %v1467, %v2269
      %v2526 = vsel %vm2014, %v1469, %v2270
      %v2527 = vsel %vm2015, %v1472, %v2271
      %v2528 = vsel %vm2016, %v1474, %v2272
      %v2529 = vsel %vm2017, %v1477, %v2273
      %v2530 = vsel %vm2018, %v1479, %v2274
      %v2531 = vsel %vm2019, %v1482, %v2275
      %v2532 = vsel %vm2020, %v1484, %v2276
      %v2533 = vsel %vm2021, %v1487, %v2277
      %v2534 = vsel %vm2022, %v1489, %v2278
      %v2535 = vsel %vm2023, %v1492, %v2279
      %v2536 = vsel %vm2024, %v1494, %v2280
      %v2537 = vsel %vm2025, %v1497, %v2281
      %v2538 = vsel %vm2026, %v1499, %v2282
      %v2539 = vsel %vm2027, %v1502, %v2283
      %v2540 = vsel %vm2028, %v1504, %v2284
      %v2541 = vsel %vm2029, %v1507, %v2285
      %v2542 = vsel %vm2030, %v1509, %v2286
      %v2543 = vsel %vm2031, %v1512, %v2287
      %v2544 = vsel %vm2032, %v1514, %v2288
      %v2545 = vsel %vm2033, %v1517, %v2289
      %v2546 = vsel %vm2034, %v1519, %v2290
      %v2547 = vsel %vm2035, %v1522, %v2291
      %v2548 = vsel %vm2036, %v1524, %v2292
      %v2549 = vsel %vm2037, %v1527, %v2293
      %v2550 = vsel %vm2038, %v1529, %v2294
      %v2551 = vsel %vm2039, %v1532, %v2295
      %v2552 = vsel %vm2040, %v1534, %v2296
      %v2553 = vsel %vm2041, %v1537, %v2297
      %v2554 = vsel %vm2042, %v1539, %v2298
      %v2555 = vsel %vm2043, %v1542, %v2299
      %v2556 = vsel %vm2044, %v1544, %v2300
      %v2557 = vsel %vm2045, %v1547, %v2301
      %v2558 = vsel %vm2046, %v1549, %v2302
      %v2559 = vsel %vm2047, %v1552, %v2303
      %v2560 = vsel %vm2048, %v1554, %v2304
      %v2561 = vsel %vm2049, %v1557, %v2305
      %v2562 = vsel %vm2050, %v1559, %v2306
      %v2563 = vsel %vm2051, %v1562, %v2307
      %v2564 = vsel %vm2052, %v1564, %v2308
      %v2565 = vsel %vm2053, %v1567, %v2309
      %v2566 = vsel %vm2054, %v1569, %v2310
      %v2567 = vsel %vm2055, %v1572, %v2311
      %v2568 = vsel %vm2056, %v1574, %v2312
      %v2569 = vsel %vm2057, %v1577, %v2313
      %v2570 = vsel %vm2058, %v1579, %v2314
      %v2571 = vsel %vm2059, %v1582, %v2315
      %v2572 = vsel %vm2060, %v1584, %v2316
      %v2573 = vsel %vm2061, %v1587, %v2317
      %v2574 = vsel %vm2062, %v1589, %v2318
      %v2575 = vsel %vm2063, %v1592, %v2319
      %v2576 = vsel %vm2064, %v1594, %v2320
      %v2577 = vsel %vm2065, %v1597, %v2321
      %v2578 = vsel %vm2066, %v1599, %v2322
      %v2579 = vsel %vm2067, %v1602, %v2323
      %v2580 = vsel %vm2068, %v1604, %v2324
      %v2581 = vsel %vm2069, %v1607, %v2325
      %v2582 = vsel %vm2070, %v1609, %v2326
      %v2583 = vsel %vm2071, %v1612, %v2327
      %v2584 = vsel %vm2072, %v1614, %v2328
      %v2585 = vsel %vm2073, %v1617, %v2329
      %v2586 = vsel %vm2074, %v1619, %v2330
      %v2587 = vsel %vm2075, %v1622, %v2331
      %v2588 = vsel %vm2076, %v1624, %v2332
      %v2589 = vsel %vm2077, %v1627, %v2333
      %v2590 = vsel %vm2078, %v1629, %v2334
      %v2591 = vsel %vm2079, %v1632, %v2335
      %v2592 = vsel %vm2080, %v1634, %v2336
      %v2593 = vsel %vm2081, %v1637, %v2337
      %v2594 = vsel %vm2082, %v1639, %v2338
      %v2595 = vsel %vm2083, %v1642, %v2339
      %v2596 = vsel %vm2084, %v1644, %v2340
      %v2597 = vsel %vm2085, %v1647, %v2341
      %v2598 = vsel %vm2086, %v1649, %v2342
      %v2599 = vsel %vm2087, %v1652, %v2343
      %v2600 = vsel %vm2088, %v1654, %v2344
      %v2601 = vsel %vm2089, %v1657, %v2345
      %v2602 = vsel %vm2090, %v1659, %v2346
      %v2603 = vsel %vm2091, %v1662, %v2347
      %v2604 = vsel %vm2092, %v1664, %v2348
      %v2605 = vsel %vm2093, %v1667, %v2349
      %v2606 = vsel %vm2094, %v1669, %v2350
      %v2607 = vsel %vm2095, %v1672, %v2351
      %v2608 = vsel %vm2096, %v1674, %v2352
      %v2609 = vsel %vm2097, %v1677, %v2353
      %v2610 = vsel %vm2098, %v1679, %v2354
      %v2611 = vsel %vm2099, %v1682, %v2355
      %v2612 = vsel %vm2100, %v1684, %v2356
      %v2613 = vsel %vm2101, %v1687, %v2357
      %v2614 = vsel %vm2102, %v1689, %v2358
      %v2615 = vsel %vm2103, %v1692, %v2359
      %v2616 = vsel %vm2104, %v1694, %v2360
      %v2617 = vsel %vm2105, %v1697, %v2361
      %v2618 = vsel %vm2106, %v1699, %v2362
      %v2619 = vsel %vm2107, %v1702, %v2363
      %v2620 = vsel %vm2108, %v1704, %v2364
      %v2621 = vsel %vm2109, %v1707, %v2365
      %v2622 = vsel %vm2110, %v1709, %v2366
      %v2623 = vsel %vm2111, %v1712, %v2367
      %v2624 = vsel %vm2112, %v1714, %v2368
      %v2625 = vsel %vm2113, %v1717, %v2369
      %v2626 = vsel %vm2114, %v1719, %v2370
      %v2627 = vsel %vm2115, %v1722, %v2371
      %v2628 = vsel %vm2116, %v1724, %v2372
      %v2629 = vsel %vm2117, %v1727, %v2373
      %v2630 = vsel %vm2118, %v1729, %v2374
      %v2631 = vsel %vm2119, %v1732, %v2375
      %v2632 = vsel %vm2120, %v1734, %v2376
      %v2633 = vsel %vm2121, %v1737, %v2377
      %v2634 = vsel %vm2122, %v1739, %v2378
      %v2635 = vsel %vm2123, %v1742, %v2379
      %v2636 = vsel %vm2124, %v1744, %v2380
      %v2637 = vsel %vm2125, %v1747, %v2381
      %v2638 = vsel %vm2126, %v1749, %v2382
      %v2639 = vsel %vm2127, %v1752, %v2383
      %v2640 = vsel %vm2128, %v1754, %v2384
      %v2641 = vsel %vm2129, %v1757, %v2385
      %v2642 = vsel %vm2130, %v1759, %v2386
      %v2643 = vsel %vm2131, %v1762, %v2387
      %v2644 = vsel %vm2132, %v1764, %v2388
      %v2645 = vsel %vm2133, %v1767, %v2389
      %v2646 = vsel %vm2134, %v1769, %v2390
      %v2647 = vsel %vm2135, %v1772, %v2391
      %v2648 = vsel %vm2136, %v1774, %v2392
      %v2649 = vsel %vm2137, %v1777, %v2393
      %v2650 = vsel %vm2138, %v1779, %v2394
      %v2651 = vsel %vm2139, %v1782, %v2395
      %v2652 = vsel %vm2140, %v1784, %v2396
      %v2653 = vsel %vm2141, %v1787, %v2397
      %v2654 = vsel %vm2142, %v1789, %v2398
      %v2655 = vsel %vm2143, %v1792, %v2399
      %v2656 = vsel %vm2144, %v1794, %v2400
      %v2657 = vsel %vm2145, %v1797, %v2401
      %v2658 = vsel %vm2146, %v1799, %v2402
      %v2659 = vsel %vm2147, %v1802, %v2403
      %v2660 = vsel %vm2148, %v1804, %v2404
      %v2661 = vsel %vm2149, %v1807, %v2405
      %v2662 = vsel %vm2150, %v1809, %v2406
      %v2663 = vsel %vm2151, %v1812, %v2407
      %v2664 = vsel %vm2152, %v1814, %v2408
      %v2665 = vsel %vm2153, %v1817, %v2409
      %v2666 = vsel %vm2154, %v1819, %v2410
      %v2667 = vsel %vm2155, %v1822, %v2411
      %v2668 = vsel %vm2156, %v1824, %v2412
      %v2669 = vsel %vm2157, %v1827, %v2413
      %v2670 = vsel %vm2158, %v1829, %v2414
      %v2671 = vsel %vm2159, %v1832, %v2415
      %v2672 = vsel %vm2160, %v1834, %v2416
      %v2673 = vsel %vm2161, %v1837, %v2417
      %v2674 = vsel %vm2162, %v1839, %v2418
      %v2675 = vsel %vm2163, %v1842, %v2419
      %v2676 = vsel %vm2164, %v1844, %v2420
      %v2677 = vsel %vm2165, %v1847, %v2421
      %v2678 = vsel %vm2166, %v1849, %v2422
      %v2679 = vsel %vm2167, %v1852, %v2423
      %v2680 = vsel %vm2168, %v1854, %v2424
      %v2681 = vsel %vm2169, %v1857, %v2425
      %v2682 = vsel %vm2170, %v1859, %v2426
      %v2683 = vsel %vm2171, %v1862, %v2427
      %v2684 = vsel %vm2172, %v1864, %v2428
      %v2685 = vsel %vm2173, %v1867, %v2429
      %v2686 = vsel %vm2174, %v1869, %v2430
      %v2687 = vsel %vm2175, %v1872, %v2431
      %v2688 = vsel %vm2176, %v1874, %v2432
      %v2689 = vsel %vm2177, %v1877, %v2433
      %v2690 = vsel %vm2178, %v1879, %v2434
      %v2691 = vsel %vm2179, %v1882, %v2435
      %v2692 = vsel %vm2180, %v1884, %v2436
      %v2693 = vsel %vm2181, %v1887, %v2437
      %v2694 = vsel %vm2182, %v1889, %v2438
      %v2695 = vsel %vm2183, %v1892, %v2439
      %v2696 = vsel %vm2184, %v1894, %v2440
      %v2697 = vsel %vm2185, %v1897, %v2441
      %v2698 = vsel %vm2186, %v1899, %v2442
      %v2699 = vsel %vm2187, %v1902, %v2443
      %v2700 = vsel %vm2188, %v1904, %v2444
      %v2701 = vsel %vm2189, %v1907, %v2445
      %v2702 = vsel %vm2190, %v1909, %v2446
      %v2703 = vsel %vm2191, %v1912, %v2447
      %v2704 = vsel %vm2192, %v1914, %v2448
      %v2705 = vsel %vm2193, %v1917, %v2449
      %v2706 = vsel %vm2194, %v1919, %v2450
      %v2707 = vsel %vm2195, %v1922, %v2451
      %v2708 = vsel %vm2196, %v1924, %v2452
      %v2709 = vsel %vm2197, %v1927, %v2453
      %v2710 = vsel %vm2198, %v1929, %v2454
      %v2711 = vsel %vm2199, %v1932, %v2455
      %v2712 = vsel %vm2200, %v1934, %v2456
      %v2713 = vsel %vm2201, %v1937, %v2457
      %v2714 = vsel %vm2202, %v1939, %v2458
      %v2715 = vsel %vm2203, %v1942, %v2459
      %v2716 = vsel %vm2204, %v1944, %v2460
      %v2717 = vsel %vm2205, %v1947, %v2461
      %v2718 = vsel %vm2206, %v1949, %v2462
      %v2719 = vpack.c.bf16 %v2463, %v2463
      %v2720 = vpack.c.bf16 %v2464, %v2464
      %v2721 = vpack.c.bf16 %v2465, %v2465
      %v2722 = vpack.c.bf16 %v2466, %v2466
      %v2723 = vpack.c.bf16 %v2467, %v2467
      %v2724 = vpack.c.bf16 %v2468, %v2468
      %v2725 = vpack.c.bf16 %v2469, %v2469
      %v2726 = vpack.c.bf16 %v2470, %v2470
      %v2727 = vpack.c.bf16 %v2471, %v2471
      %v2728 = vpack.c.bf16 %v2472, %v2472
      %v2729 = vpack.c.bf16 %v2473, %v2473
      %v2730 = vpack.c.bf16 %v2474, %v2474
      %v2731 = vpack.c.bf16 %v2475, %v2475
      %v2732 = vpack.c.bf16 %v2476, %v2476
      %v2733 = vpack.c.bf16 %v2477, %v2477
      %v2734 = vpack.c.bf16 %v2478, %v2478
      %v2735 = vpack.c.bf16 %v2479, %v2479
      %v2736 = vpack.c.bf16 %v2480, %v2480
      %v2737 = vpack.c.bf16 %v2481, %v2481
      %v2738 = vpack.c.bf16 %v2482, %v2482
      %v2739 = vpack.c.bf16 %v2483, %v2483
      %v2740 = vpack.c.bf16 %v2484, %v2484
      %v2741 = vpack.c.bf16 %v2485, %v2485
      %v2742 = vpack.c.bf16 %v2486, %v2486
      %v2743 = vpack.c.bf16 %v2487, %v2487
      %v2744 = vpack.c.bf16 %v2488, %v2488
      %v2745 = vpack.c.bf16 %v2489, %v2489
      %v2746 = vpack.c.bf16 %v2490, %v2490
      %v2747 = vpack.c.bf16 %v2491, %v2491
      %v2748 = vpack.c.bf16 %v2492, %v2492
      %v2749 = vpack.c.bf16 %v2493, %v2493
      %v2750 = vpack.c.bf16 %v2494, %v2494
      %v2751 = vpack.c.bf16 %v2495, %v2495
      %v2752 = vpack.c.bf16 %v2496, %v2496
      %v2753 = vpack.c.bf16 %v2497, %v2497
      %v2754 = vpack.c.bf16 %v2498, %v2498
      %v2755 = vpack.c.bf16 %v2499, %v2499
      %v2756 = vpack.c.bf16 %v2500, %v2500
      %v2757 = vpack.c.bf16 %v2501, %v2501
      %v2758 = vpack.c.bf16 %v2502, %v2502
      %v2759 = vpack.c.bf16 %v2503, %v2503
      %v2760 = vpack.c.bf16 %v2504, %v2504
      %v2761 = vpack.c.bf16 %v2505, %v2505
      %v2762 = vpack.c.bf16 %v2506, %v2506
      %v2763 = vpack.c.bf16 %v2507, %v2507
      %v2764 = vpack.c.bf16 %v2508, %v2508
      %v2765 = vpack.c.bf16 %v2509, %v2509
      %v2766 = vpack.c.bf16 %v2510, %v2510
      %v2767 = vpack.c.bf16 %v2511, %v2511
      %v2768 = vpack.c.bf16 %v2512, %v2512
      %v2769 = vpack.c.bf16 %v2513, %v2513
      %v2770 = vpack.c.bf16 %v2514, %v2514
      %v2771 = vpack.c.bf16 %v2515, %v2515
      %v2772 = vpack.c.bf16 %v2516, %v2516
      %v2773 = vpack.c.bf16 %v2517, %v2517
      %v2774 = vpack.c.bf16 %v2518, %v2518
      %v2775 = vpack.c.bf16 %v2519, %v2519
      %v2776 = vpack.c.bf16 %v2520, %v2520
      %v2777 = vpack.c.bf16 %v2521, %v2521
      %v2778 = vpack.c.bf16 %v2522, %v2522
      %v2779 = vpack.c.bf16 %v2523, %v2523
      %v2780 = vpack.c.bf16 %v2524, %v2524
      %v2781 = vpack.c.bf16 %v2525, %v2525
      %v2782 = vpack.c.bf16 %v2526, %v2526
      %v2783 = vpack.c.bf16 %v2527, %v2527
      %v2784 = vpack.c.bf16 %v2528, %v2528
      %v2785 = vpack.c.bf16 %v2529, %v2529
      %v2786 = vpack.c.bf16 %v2530, %v2530
      %v2787 = vpack.c.bf16 %v2531, %v2531
      %v2788 = vpack.c.bf16 %v2532, %v2532
      %v2789 = vpack.c.bf16 %v2533, %v2533
      %v2790 = vpack.c.bf16 %v2534, %v2534
      %v2791 = vpack.c.bf16 %v2535, %v2535
      %v2792 = vpack.c.bf16 %v2536, %v2536
      %v2793 = vpack.c.bf16 %v2537, %v2537
      %v2794 = vpack.c.bf16 %v2538, %v2538
      %v2795 = vpack.c.bf16 %v2539, %v2539
      %v2796 = vpack.c.bf16 %v2540, %v2540
      %v2797 = vpack.c.bf16 %v2541, %v2541
      %v2798 = vpack.c.bf16 %v2542, %v2542
      %v2799 = vpack.c.bf16 %v2543, %v2543
      %v2800 = vpack.c.bf16 %v2544, %v2544
      %v2801 = vpack.c.bf16 %v2545, %v2545
      %v2802 = vpack.c.bf16 %v2546, %v2546
      %v2803 = vpack.c.bf16 %v2547, %v2547
      %v2804 = vpack.c.bf16 %v2548, %v2548
      %v2805 = vpack.c.bf16 %v2549, %v2549
      %v2806 = vpack.c.bf16 %v2550, %v2550
      %v2807 = vpack.c.bf16 %v2551, %v2551
      %v2808 = vpack.c.bf16 %v2552, %v2552
      %v2809 = vpack.c.bf16 %v2553, %v2553
      %v2810 = vpack.c.bf16 %v2554, %v2554
      %v2811 = vpack.c.bf16 %v2555, %v2555
      %v2812 = vpack.c.bf16 %v2556, %v2556
      %v2813 = vpack.c.bf16 %v2557, %v2557
      %v2814 = vpack.c.bf16 %v2558, %v2558
      %v2815 = vpack.c.bf16 %v2559, %v2559
      %v2816 = vpack.c.bf16 %v2560, %v2560
      %v2817 = vpack.c.bf16 %v2561, %v2561
      %v2818 = vpack.c.bf16 %v2562, %v2562
      %v2819 = vpack.c.bf16 %v2563, %v2563
      %v2820 = vpack.c.bf16 %v2564, %v2564
      %v2821 = vpack.c.bf16 %v2565, %v2565
      %v2822 = vpack.c.bf16 %v2566, %v2566
      %v2823 = vpack.c.bf16 %v2567, %v2567
      %v2824 = vpack.c.bf16 %v2568, %v2568
      %v2825 = vpack.c.bf16 %v2569, %v2569
      %v2826 = vpack.c.bf16 %v2570, %v2570
      %v2827 = vpack.c.bf16 %v2571, %v2571
      %v2828 = vpack.c.bf16 %v2572, %v2572
      %v2829 = vpack.c.bf16 %v2573, %v2573
      %v2830 = vpack.c.bf16 %v2574, %v2574
      %v2831 = vpack.c.bf16 %v2575, %v2575
      %v2832 = vpack.c.bf16 %v2576, %v2576
      %v2833 = vpack.c.bf16 %v2577, %v2577
      %v2834 = vpack.c.bf16 %v2578, %v2578
      %v2835 = vpack.c.bf16 %v2579, %v2579
      %v2836 = vpack.c.bf16 %v2580, %v2580
      %v2837 = vpack.c.bf16 %v2581, %v2581
      %v2838 = vpack.c.bf16 %v2582, %v2582
      %v2839 = vpack.c.bf16 %v2583, %v2583
      %v2840 = vpack.c.bf16 %v2584, %v2584
      %v2841 = vpack.c.bf16 %v2585, %v2585
      %v2842 = vpack.c.bf16 %v2586, %v2586
      %v2843 = vpack.c.bf16 %v2587, %v2587
      %v2844 = vpack.c.bf16 %v2588, %v2588
      %v2845 = vpack.c.bf16 %v2589, %v2589
      %v2846 = vpack.c.bf16 %v2590, %v2590
      %v2847 = vpack.c.bf16 %v2591, %v2591
      %v2848 = vpack.c.bf16 %v2592, %v2592
      %v2849 = vpack.c.bf16 %v2593, %v2593
      %v2850 = vpack.c.bf16 %v2594, %v2594
      %v2851 = vpack.c.bf16 %v2595, %v2595
      %v2852 = vpack.c.bf16 %v2596, %v2596
      %v2853 = vpack.c.bf16 %v2597, %v2597
      %v2854 = vpack.c.bf16 %v2598, %v2598
      %v2855 = vpack.c.bf16 %v2599, %v2599
      %v2856 = vpack.c.bf16 %v2600, %v2600
      %v2857 = vpack.c.bf16 %v2601, %v2601
      %v2858 = vpack.c.bf16 %v2602, %v2602
      %v2859 = vpack.c.bf16 %v2603, %v2603
      %v2860 = vpack.c.bf16 %v2604, %v2604
      %v2861 = vpack.c.bf16 %v2605, %v2605
      %v2862 = vpack.c.bf16 %v2606, %v2606
      %v2863 = vpack.c.bf16 %v2607, %v2607
      %v2864 = vpack.c.bf16 %v2608, %v2608
      %v2865 = vpack.c.bf16 %v2609, %v2609
      %v2866 = vpack.c.bf16 %v2610, %v2610
      %v2867 = vpack.c.bf16 %v2611, %v2611
      %v2868 = vpack.c.bf16 %v2612, %v2612
      %v2869 = vpack.c.bf16 %v2613, %v2613
      %v2870 = vpack.c.bf16 %v2614, %v2614
      %v2871 = vpack.c.bf16 %v2615, %v2615
      %v2872 = vpack.c.bf16 %v2616, %v2616
      %v2873 = vpack.c.bf16 %v2617, %v2617
      %v2874 = vpack.c.bf16 %v2618, %v2618
      %v2875 = vpack.c.bf16 %v2619, %v2619
      %v2876 = vpack.c.bf16 %v2620, %v2620
      %v2877 = vpack.c.bf16 %v2621, %v2621
      %v2878 = vpack.c.bf16 %v2622, %v2622
      %v2879 = vpack.c.bf16 %v2623, %v2623
      %v2880 = vpack.c.bf16 %v2624, %v2624
      %v2881 = vpack.c.bf16 %v2625, %v2625
      %v2882 = vpack.c.bf16 %v2626, %v2626
      %v2883 = vpack.c.bf16 %v2627, %v2627
      %v2884 = vpack.c.bf16 %v2628, %v2628
      %v2885 = vpack.c.bf16 %v2629, %v2629
      %v2886 = vpack.c.bf16 %v2630, %v2630
      %v2887 = vpack.c.bf16 %v2631, %v2631
      %v2888 = vpack.c.bf16 %v2632, %v2632
      %v2889 = vpack.c.bf16 %v2633, %v2633
      %v2890 = vpack.c.bf16 %v2634, %v2634
      %v2891 = vpack.c.bf16 %v2635, %v2635
      %v2892 = vpack.c.bf16 %v2636, %v2636
      %v2893 = vpack.c.bf16 %v2637, %v2637
      %v2894 = vpack.c.bf16 %v2638, %v2638
      %v2895 = vpack.c.bf16 %v2639, %v2639
      %v2896 = vpack.c.bf16 %v2640, %v2640
      %v2897 = vpack.c.bf16 %v2641, %v2641
      %v2898 = vpack.c.bf16 %v2642, %v2642
      %v2899 = vpack.c.bf16 %v2643, %v2643
      %v2900 = vpack.c.bf16 %v2644, %v2644
      %v2901 = vpack.c.bf16 %v2645, %v2645
      %v2902 = vpack.c.bf16 %v2646, %v2646
      %v2903 = vpack.c.bf16 %v2647, %v2647
      %v2904 = vpack.c.bf16 %v2648, %v2648
      %v2905 = vpack.c.bf16 %v2649, %v2649
      %v2906 = vpack.c.bf16 %v2650, %v2650
      %v2907 = vpack.c.bf16 %v2651, %v2651
      %v2908 = vpack.c.bf16 %v2652, %v2652
      %v2909 = vpack.c.bf16 %v2653, %v2653
      %v2910 = vpack.c.bf16 %v2654, %v2654
      %v2911 = vpack.c.bf16 %v2655, %v2655
      %v2912 = vpack.c.bf16 %v2656, %v2656
      %v2913 = vpack.c.bf16 %v2657, %v2657
      %v2914 = vpack.c.bf16 %v2658, %v2658
      %v2915 = vpack.c.bf16 %v2659, %v2659
      %v2916 = vpack.c.bf16 %v2660, %v2660
      %v2917 = vpack.c.bf16 %v2661, %v2661
      %v2918 = vpack.c.bf16 %v2662, %v2662
      %v2919 = vpack.c.bf16 %v2663, %v2663
      %v2920 = vpack.c.bf16 %v2664, %v2664
      %v2921 = vpack.c.bf16 %v2665, %v2665
      %v2922 = vpack.c.bf16 %v2666, %v2666
      %v2923 = vpack.c.bf16 %v2667, %v2667
      %v2924 = vpack.c.bf16 %v2668, %v2668
      %v2925 = vpack.c.bf16 %v2669, %v2669
      %v2926 = vpack.c.bf16 %v2670, %v2670
      %v2927 = vpack.c.bf16 %v2671, %v2671
      %v2928 = vpack.c.bf16 %v2672, %v2672
      %v2929 = vpack.c.bf16 %v2673, %v2673
      %v2930 = vpack.c.bf16 %v2674, %v2674
      %v2931 = vpack.c.bf16 %v2675, %v2675
      %v2932 = vpack.c.bf16 %v2676, %v2676
      %v2933 = vpack.c.bf16 %v2677, %v2677
      %v2934 = vpack.c.bf16 %v2678, %v2678
      %v2935 = vpack.c.bf16 %v2679, %v2679
      %v2936 = vpack.c.bf16 %v2680, %v2680
      %v2937 = vpack.c.bf16 %v2681, %v2681
      %v2938 = vpack.c.bf16 %v2682, %v2682
      %v2939 = vpack.c.bf16 %v2683, %v2683
      %v2940 = vpack.c.bf16 %v2684, %v2684
      %v2941 = vpack.c.bf16 %v2685, %v2685
      %v2942 = vpack.c.bf16 %v2686, %v2686
      %v2943 = vpack.c.bf16 %v2687, %v2687
      %v2944 = vpack.c.bf16 %v2688, %v2688
      %v2945 = vpack.c.bf16 %v2689, %v2689
      %v2946 = vpack.c.bf16 %v2690, %v2690
      %v2947 = vpack.c.bf16 %v2691, %v2691
      %v2948 = vpack.c.bf16 %v2692, %v2692
      %v2949 = vpack.c.bf16 %v2693, %v2693
      %v2950 = vpack.c.bf16 %v2694, %v2694
      %v2951 = vpack.c.bf16 %v2695, %v2695
      %v2952 = vpack.c.bf16 %v2696, %v2696
      %v2953 = vpack.c.bf16 %v2697, %v2697
      %v2954 = vpack.c.bf16 %v2698, %v2698
      %v2955 = vpack.c.bf16 %v2699, %v2699
      %v2956 = vpack.c.bf16 %v2700, %v2700
      %v2957 = vpack.c.bf16 %v2701, %v2701
      %v2958 = vpack.c.bf16 %v2702, %v2702
      %v2959 = vpack.c.bf16 %v2703, %v2703
      %v2960 = vpack.c.bf16 %v2704, %v2704
      %v2961 = vpack.c.bf16 %v2705, %v2705
      %v2962 = vpack.c.bf16 %v2706, %v2706
      %v2963 = vpack.c.bf16 %v2707, %v2707
      %v2964 = vpack.c.bf16 %v2708, %v2708
      %v2965 = vpack.c.bf16 %v2709, %v2709
      %v2966 = vpack.c.bf16 %v2710, %v2710
      %v2967 = vpack.c.bf16 %v2711, %v2711
      %v2968 = vpack.c.bf16 %v2712, %v2712
      %v2969 = vpack.c.bf16 %v2713, %v2713
      %v2970 = vpack.c.bf16 %v2714, %v2714
      %v2971 = vpack.c.bf16 %v2715, %v2715
      %v2972 = vpack.c.bf16 %v2716, %v2716
      %v2973 = vpack.c.bf16 %v2717, %v2717
      %v2974 = vpack.c.bf16 %v2718, %v2718
      %vm2975 = vcmask 60416
      %2976 = vst.msk [vmem:[%s208] sm:$0xf] %vm2975, %v2719
      %2977 = vst.msk [vmem:[%s208 + $0x4] sm:$0xf] %vm2975, %v2720
      %2978 = vst.msk [vmem:[%s208 + $0x8] sm:$0xf] %vm2975, %v2721
      %2979 = vst.msk [vmem:[%s208 + $0xc] sm:$0xf] %vm2975, %v2722
      %2980 = vst.msk [vmem:[%s208 + $0x10] sm:$0xf] %vm2975, %v2723
      %2981 = vst.msk [vmem:[%s208 + $0x14] sm:$0xf] %vm2975, %v2724
      %2982 = vst.msk [vmem:[%s208 + $0x18] sm:$0xf] %vm2975, %v2725
      %2983 = vst.msk [vmem:[%s208 + $0x1c] sm:$0xf] %vm2975, %v2726
      %2984 = vst.msk [vmem:[%s208 + $0x20] sm:$0xf] %vm2975, %v2727
      %2985 = vst.msk [vmem:[%s208 + $0x24] sm:$0xf] %vm2975, %v2728
      %2986 = vst.msk [vmem:[%s208 + $0x28] sm:$0xf] %vm2975, %v2729
      %2987 = vst.msk [vmem:[%s208 + $0x2c] sm:$0xf] %vm2975, %v2730
      %2988 = vst.msk [vmem:[%s208 + $0x30] sm:$0xf] %vm2975, %v2731
      %2989 = vst.msk [vmem:[%s208 + $0x34] sm:$0xf] %vm2975, %v2732
      %2990 = vst.msk [vmem:[%s208 + $0x38] sm:$0xf] %vm2975, %v2733
      %2991 = vst.msk [vmem:[%s208 + $0x3c] sm:$0xf] %vm2975, %v2734
      %2992 = vst.msk [vmem:[%s208 + $0x40] sm:$0xf] %vm2975, %v2735
      %2993 = vst.msk [vmem:[%s208 + $0x44] sm:$0xf] %vm2975, %v2736
      %2994 = vst.msk [vmem:[%s208 + $0x48] sm:$0xf] %vm2975, %v2737
      %2995 = vst.msk [vmem:[%s208 + $0x4c] sm:$0xf] %vm2975, %v2738
      %2996 = vst.msk [vmem:[%s208 + $0x50] sm:$0xf] %vm2975, %v2739
      %2997 = vst.msk [vmem:[%s208 + $0x54] sm:$0xf] %vm2975, %v2740
      %2998 = vst.msk [vmem:[%s208 + $0x58] sm:$0xf] %vm2975, %v2741
      %2999 = vst.msk [vmem:[%s208 + $0x5c] sm:$0xf] %vm2975, %v2742
      %3000 = vst.msk [vmem:[%s208 + $0x60] sm:$0xf] %vm2975, %v2743
      %3001 = vst.msk [vmem:[%s208 + $0x64] sm:$0xf] %vm2975, %v2744
      %3002 = vst.msk [vmem:[%s208 + $0x68] sm:$0xf] %vm2975, %v2745
      %3003 = vst.msk [vmem:[%s208 + $0x6c] sm:$0xf] %vm2975, %v2746
      %3004 = vst.msk [vmem:[%s208 + $0x70] sm:$0xf] %vm2975, %v2747
      %3005 = vst.msk [vmem:[%s208 + $0x74] sm:$0xf] %vm2975, %v2748
      %3006 = vst.msk [vmem:[%s208 + $0x78] sm:$0xf] %vm2975, %v2749
      %3007 = vst.msk [vmem:[%s208 + $0x7c] sm:$0xf] %vm2975, %v2750
      %3008 = vst.msk [vmem:[%s208 + $0x80] sm:$0xf] %vm2975, %v2751
      %3009 = vst.msk [vmem:[%s208 + $0x84] sm:$0xf] %vm2975, %v2752
      %3010 = vst.msk [vmem:[%s208 + $0x88] sm:$0xf] %vm2975, %v2753
      %3011 = vst.msk [vmem:[%s208 + $0x8c] sm:$0xf] %vm2975, %v2754
      %3012 = vst.msk [vmem:[%s208 + $0x90] sm:$0xf] %vm2975, %v2755
      %3013 = vst.msk [vmem:[%s208 + $0x94] sm:$0xf] %vm2975, %v2756
      %3014 = vst.msk [vmem:[%s208 + $0x98] sm:$0xf] %vm2975, %v2757
      %3015 = vst.msk [vmem:[%s208 + $0x9c] sm:$0xf] %vm2975, %v2758
      %3016 = vst.msk [vmem:[%s208 + $0xa0] sm:$0xf] %vm2975, %v2759
      %3017 = vst.msk [vmem:[%s208 + $0xa4] sm:$0xf] %vm2975, %v2760
      %3018 = vst.msk [vmem:[%s208 + $0xa8] sm:$0xf] %vm2975, %v2761
      %3019 = vst.msk [vmem:[%s208 + $0xac] sm:$0xf] %vm2975, %v2762
      %3020 = vst.msk [vmem:[%s208 + $0xb0] sm:$0xf] %vm2975, %v2763
      %3021 = vst.msk [vmem:[%s208 + $0xb4] sm:$0xf] %vm2975, %v2764
      %3022 = vst.msk [vmem:[%s208 + $0xb8] sm:$0xf] %vm2975, %v2765
      %3023 = vst.msk [vmem:[%s208 + $0xbc] sm:$0xf] %vm2975, %v2766
      %3024 = vst.msk [vmem:[%s208 + $0xc0] sm:$0xf] %vm2975, %v2767
      %3025 = vst.msk [vmem:[%s208 + $0xc4] sm:$0xf] %vm2975, %v2768
      %3026 = vst.msk [vmem:[%s208 + $0xc8] sm:$0xf] %vm2975, %v2769
      %3027 = vst.msk [vmem:[%s208 + $0xcc] sm:$0xf] %vm2975, %v2770
      %3028 = vst.msk [vmem:[%s208 + $0xd0] sm:$0xf] %vm2975, %v2771
      %3029 = vst.msk [vmem:[%s208 + $0xd4] sm:$0xf] %vm2975, %v2772
      %3030 = vst.msk [vmem:[%s208 + $0xd8] sm:$0xf] %vm2975, %v2773
      %3031 = vst.msk [vmem:[%s208 + $0xdc] sm:$0xf] %vm2975, %v2774
      %3032 = vst.msk [vmem:[%s208 + $0xe0] sm:$0xf] %vm2975, %v2775
      %3033 = vst.msk [vmem:[%s208 + $0xe4] sm:$0xf] %vm2975, %v2776
      %3034 = vst.msk [vmem:[%s208 + $0xe8] sm:$0xf] %vm2975, %v2777
      %3035 = vst.msk [vmem:[%s208 + $0xec] sm:$0xf] %vm2975, %v2778
      %3036 = vst.msk [vmem:[%s208 + $0xf0] sm:$0xf] %vm2975, %v2779
      %3037 = vst.msk [vmem:[%s208 + $0xf4] sm:$0xf] %vm2975, %v2780
      %3038 = vst.msk [vmem:[%s208 + $0xf8] sm:$0xf] %vm2975, %v2781
      %3039 = vst.msk [vmem:[%s208 + $0xfc] sm:$0xf] %vm2975, %v2782
      %3040 = vst.msk [vmem:[%s208 + $0x100] sm:$0xf] %vm2975, %v2783
      %3041 = vst.msk [vmem:[%s208 + $0x104] sm:$0xf] %vm2975, %v2784
      %3042 = vst.msk [vmem:[%s208 + $0x108] sm:$0xf] %vm2975, %v2785
      %3043 = vst.msk [vmem:[%s208 + $0x10c] sm:$0xf] %vm2975, %v2786
      %3044 = vst.msk [vmem:[%s208 + $0x110] sm:$0xf] %vm2975, %v2787
      %3045 = vst.msk [vmem:[%s208 + $0x114] sm:$0xf] %vm2975, %v2788
      %3046 = vst.msk [vmem:[%s208 + $0x118] sm:$0xf] %vm2975, %v2789
      %3047 = vst.msk [vmem:[%s208 + $0x11c] sm:$0xf] %vm2975, %v2790
      %3048 = vst.msk [vmem:[%s208 + $0x120] sm:$0xf] %vm2975, %v2791
      %3049 = vst.msk [vmem:[%s208 + $0x124] sm:$0xf] %vm2975, %v2792
      %3050 = vst.msk [vmem:[%s208 + $0x128] sm:$0xf] %vm2975, %v2793
      %3051 = vst.msk [vmem:[%s208 + $0x12c] sm:$0xf] %vm2975, %v2794
      %3052 = vst.msk [vmem:[%s208 + $0x130] sm:$0xf] %vm2975, %v2795
      %3053 = vst.msk [vmem:[%s208 + $0x134] sm:$0xf] %vm2975, %v2796
      %3054 = vst.msk [vmem:[%s208 + $0x138] sm:$0xf] %vm2975, %v2797
      %3055 = vst.msk [vmem:[%s208 + $0x13c] sm:$0xf] %vm2975, %v2798
      %3056 = vst.msk [vmem:[%s208 + $0x140] sm:$0xf] %vm2975, %v2799
      %3057 = vst.msk [vmem:[%s208 + $0x144] sm:$0xf] %vm2975, %v2800
      %3058 = vst.msk [vmem:[%s208 + $0x148] sm:$0xf] %vm2975, %v2801
      %3059 = vst.msk [vmem:[%s208 + $0x14c] sm:$0xf] %vm2975, %v2802
      %3060 = vst.msk [vmem:[%s208 + $0x150] sm:$0xf] %vm2975, %v2803
      %3061 = vst.msk [vmem:[%s208 + $0x154] sm:$0xf] %vm2975, %v2804
      %3062 = vst.msk [vmem:[%s208 + $0x158] sm:$0xf] %vm2975, %v2805
      %3063 = vst.msk [vmem:[%s208 + $0x15c] sm:$0xf] %vm2975, %v2806
      %3064 = vst.msk [vmem:[%s208 + $0x160] sm:$0xf] %vm2975, %v2807
      %3065 = vst.msk [vmem:[%s208 + $0x164] sm:$0xf] %vm2975, %v2808
      %3066 = vst.msk [vmem:[%s208 + $0x168] sm:$0xf] %vm2975, %v2809
      %3067 = vst.msk [vmem:[%s208 + $0x16c] sm:$0xf] %vm2975, %v2810
      %3068 = vst.msk [vmem:[%s208 + $0x170] sm:$0xf] %vm2975, %v2811
      %3069 = vst.msk [vmem:[%s208 + $0x174] sm:$0xf] %vm2975, %v2812
      %3070 = vst.msk [vmem:[%s208 + $0x178] sm:$0xf] %vm2975, %v2813
      %3071 = vst.msk [vmem:[%s208 + $0x17c] sm:$0xf] %vm2975, %v2814
      %3072 = vst.msk [vmem:[%s208 + $0x180] sm:$0xf] %vm2975, %v2815
      %3073 = vst.msk [vmem:[%s208 + $0x184] sm:$0xf] %vm2975, %v2816
      %3074 = vst.msk [vmem:[%s208 + $0x188] sm:$0xf] %vm2975, %v2817
      %3075 = vst.msk [vmem:[%s208 + $0x18c] sm:$0xf] %vm2975, %v2818
      %3076 = vst.msk [vmem:[%s208 + $0x190] sm:$0xf] %vm2975, %v2819
      %3077 = vst.msk [vmem:[%s208 + $0x194] sm:$0xf] %vm2975, %v2820
      %3078 = vst.msk [vmem:[%s208 + $0x198] sm:$0xf] %vm2975, %v2821
      %3079 = vst.msk [vmem:[%s208 + $0x19c] sm:$0xf] %vm2975, %v2822
      %3080 = vst.msk [vmem:[%s208 + $0x1a0] sm:$0xf] %vm2975, %v2823
      %3081 = vst.msk [vmem:[%s208 + $0x1a4] sm:$0xf] %vm2975, %v2824
      %3082 = vst.msk [vmem:[%s208 + $0x1a8] sm:$0xf] %vm2975, %v2825
      %3083 = vst.msk [vmem:[%s208 + $0x1ac] sm:$0xf] %vm2975, %v2826
      %3084 = vst.msk [vmem:[%s208 + $0x1b0] sm:$0xf] %vm2975, %v2827
      %3085 = vst.msk [vmem:[%s208 + $0x1b4] sm:$0xf] %vm2975, %v2828
      %3086 = vst.msk [vmem:[%s208 + $0x1b8] sm:$0xf] %vm2975, %v2829
      %3087 = vst.msk [vmem:[%s208 + $0x1bc] sm:$0xf] %vm2975, %v2830
      %3088 = vst.msk [vmem:[%s208 + $0x1c0] sm:$0xf] %vm2975, %v2831
      %3089 = vst.msk [vmem:[%s208 + $0x1c4] sm:$0xf] %vm2975, %v2832
      %3090 = vst.msk [vmem:[%s208 + $0x1c8] sm:$0xf] %vm2975, %v2833
      %3091 = vst.msk [vmem:[%s208 + $0x1cc] sm:$0xf] %vm2975, %v2834
      %3092 = vst.msk [vmem:[%s208 + $0x1d0] sm:$0xf] %vm2975, %v2835
      %3093 = vst.msk [vmem:[%s208 + $0x1d4] sm:$0xf] %vm2975, %v2836
      %3094 = vst.msk [vmem:[%s208 + $0x1d8] sm:$0xf] %vm2975, %v2837
      %3095 = vst.msk [vmem:[%s208 + $0x1dc] sm:$0xf] %vm2975, %v2838
      %3096 = vst.msk [vmem:[%s208 + $0x1e0] sm:$0xf] %vm2975, %v2839
      %3097 = vst.msk [vmem:[%s208 + $0x1e4] sm:$0xf] %vm2975, %v2840
      %3098 = vst.msk [vmem:[%s208 + $0x1e8] sm:$0xf] %vm2975, %v2841
      %3099 = vst.msk [vmem:[%s208 + $0x1ec] sm:$0xf] %vm2975, %v2842
      %3100 = vst.msk [vmem:[%s208 + $0x1f0] sm:$0xf] %vm2975, %v2843
      %3101 = vst.msk [vmem:[%s208 + $0x1f4] sm:$0xf] %vm2975, %v2844
      %3102 = vst.msk [vmem:[%s208 + $0x1f8] sm:$0xf] %vm2975, %v2845
      %3103 = vst.msk [vmem:[%s208 + $0x1fc] sm:$0xf] %vm2975, %v2846
      %3104 = vst.msk [vmem:[%s208 + $0x200] sm:$0xf] %vm2975, %v2847
      %3105 = vst.msk [vmem:[%s208 + $0x204] sm:$0xf] %vm2975, %v2848
      %3106 = vst.msk [vmem:[%s208 + $0x208] sm:$0xf] %vm2975, %v2849
      %3107 = vst.msk [vmem:[%s208 + $0x20c] sm:$0xf] %vm2975, %v2850
      %3108 = vst.msk [vmem:[%s208 + $0x210] sm:$0xf] %vm2975, %v2851
      %3109 = vst.msk [vmem:[%s208 + $0x214] sm:$0xf] %vm2975, %v2852
      %3110 = vst.msk [vmem:[%s208 + $0x218] sm:$0xf] %vm2975, %v2853
      %3111 = vst.msk [vmem:[%s208 + $0x21c] sm:$0xf] %vm2975, %v2854
      %3112 = vst.msk [vmem:[%s208 + $0x220] sm:$0xf] %vm2975, %v2855
      %3113 = vst.msk [vmem:[%s208 + $0x224] sm:$0xf] %vm2975, %v2856
      %3114 = vst.msk [vmem:[%s208 + $0x228] sm:$0xf] %vm2975, %v2857
      %3115 = vst.msk [vmem:[%s208 + $0x22c] sm:$0xf] %vm2975, %v2858
      %3116 = vst.msk [vmem:[%s208 + $0x230] sm:$0xf] %vm2975, %v2859
      %3117 = vst.msk [vmem:[%s208 + $0x234] sm:$0xf] %vm2975, %v2860
      %3118 = vst.msk [vmem:[%s208 + $0x238] sm:$0xf] %vm2975, %v2861
      %3119 = vst.msk [vmem:[%s208 + $0x23c] sm:$0xf] %vm2975, %v2862
      %3120 = vst.msk [vmem:[%s208 + $0x240] sm:$0xf] %vm2975, %v2863
      %3121 = vst.msk [vmem:[%s208 + $0x244] sm:$0xf] %vm2975, %v2864
      %3122 = vst.msk [vmem:[%s208 + $0x248] sm:$0xf] %vm2975, %v2865
      %3123 = vst.msk [vmem:[%s208 + $0x24c] sm:$0xf] %vm2975, %v2866
      %3124 = vst.msk [vmem:[%s208 + $0x250] sm:$0xf] %vm2975, %v2867
      %3125 = vst.msk [vmem:[%s208 + $0x254] sm:$0xf] %vm2975, %v2868
      %3126 = vst.msk [vmem:[%s208 + $0x258] sm:$0xf] %vm2975, %v2869
      %3127 = vst.msk [vmem:[%s208 + $0x25c] sm:$0xf] %vm2975, %v2870
      %3128 = vst.msk [vmem:[%s208 + $0x260] sm:$0xf] %vm2975, %v2871
      %3129 = vst.msk [vmem:[%s208 + $0x264] sm:$0xf] %vm2975, %v2872
      %3130 = vst.msk [vmem:[%s208 + $0x268] sm:$0xf] %vm2975, %v2873
      %3131 = vst.msk [vmem:[%s208 + $0x26c] sm:$0xf] %vm2975, %v2874
      %3132 = vst.msk [vmem:[%s208 + $0x270] sm:$0xf] %vm2975, %v2875
      %3133 = vst.msk [vmem:[%s208 + $0x274] sm:$0xf] %vm2975, %v2876
      %3134 = vst.msk [vmem:[%s208 + $0x278] sm:$0xf] %vm2975, %v2877
      %3135 = vst.msk [vmem:[%s208 + $0x27c] sm:$0xf] %vm2975, %v2878
      %3136 = vst.msk [vmem:[%s208 + $0x280] sm:$0xf] %vm2975, %v2879
      %3137 = vst.msk [vmem:[%s208 + $0x284] sm:$0xf] %vm2975, %v2880
      %3138 = vst.msk [vmem:[%s208 + $0x288] sm:$0xf] %vm2975, %v2881
      %3139 = vst.msk [vmem:[%s208 + $0x28c] sm:$0xf] %vm2975, %v2882
      %3140 = vst.msk [vmem:[%s208 + $0x290] sm:$0xf] %vm2975, %v2883
      %3141 = vst.msk [vmem:[%s208 + $0x294] sm:$0xf] %vm2975, %v2884
      %3142 = vst.msk [vmem:[%s208 + $0x298] sm:$0xf] %vm2975, %v2885
      %3143 = vst.msk [vmem:[%s208 + $0x29c] sm:$0xf] %vm2975, %v2886
      %3144 = vst.msk [vmem:[%s208 + $0x2a0] sm:$0xf] %vm2975, %v2887
      %3145 = vst.msk [vmem:[%s208 + $0x2a4] sm:$0xf] %vm2975, %v2888
      %3146 = vst.msk [vmem:[%s208 + $0x2a8] sm:$0xf] %vm2975, %v2889
      %3147 = vst.msk [vmem:[%s208 + $0x2ac] sm:$0xf] %vm2975, %v2890
      %3148 = vst.msk [vmem:[%s208 + $0x2b0] sm:$0xf] %vm2975, %v2891
      %3149 = vst.msk [vmem:[%s208 + $0x2b4] sm:$0xf] %vm2975, %v2892
      %3150 = vst.msk [vmem:[%s208 + $0x2b8] sm:$0xf] %vm2975, %v2893
      %3151 = vst.msk [vmem:[%s208 + $0x2bc] sm:$0xf] %vm2975, %v2894
      %3152 = vst.msk [vmem:[%s208 + $0x2c0] sm:$0xf] %vm2975, %v2895
      %3153 = vst.msk [vmem:[%s208 + $0x2c4] sm:$0xf] %vm2975, %v2896
      %3154 = vst.msk [vmem:[%s208 + $0x2c8] sm:$0xf] %vm2975, %v2897
      %3155 = vst.msk [vmem:[%s208 + $0x2cc] sm:$0xf] %vm2975, %v2898
      %3156 = vst.msk [vmem:[%s208 + $0x2d0] sm:$0xf] %vm2975, %v2899
      %3157 = vst.msk [vmem:[%s208 + $0x2d4] sm:$0xf] %vm2975, %v2900
      %3158 = vst.msk [vmem:[%s208 + $0x2d8] sm:$0xf] %vm2975, %v2901
      %3159 = vst.msk [vmem:[%s208 + $0x2dc] sm:$0xf] %vm2975, %v2902
      %3160 = vst.msk [vmem:[%s208 + $0x2e0] sm:$0xf] %vm2975, %v2903
      %3161 = vst.msk [vmem:[%s208 + $0x2e4] sm:$0xf] %vm2975, %v2904
      %3162 = vst.msk [vmem:[%s208 + $0x2e8] sm:$0xf] %vm2975, %v2905
      %3163 = vst.msk [vmem:[%s208 + $0x2ec] sm:$0xf] %vm2975, %v2906
      %3164 = vst.msk [vmem:[%s208 + $0x2f0] sm:$0xf] %vm2975, %v2907
      %3165 = vst.msk [vmem:[%s208 + $0x2f4] sm:$0xf] %vm2975, %v2908
      %3166 = vst.msk [vmem:[%s208 + $0x2f8] sm:$0xf] %vm2975, %v2909
      %3167 = vst.msk [vmem:[%s208 + $0x2fc] sm:$0xf] %vm2975, %v2910
      %3168 = vst.msk [vmem:[%s208 + $0x300] sm:$0xf] %vm2975, %v2911
      %3169 = vst.msk [vmem:[%s208 + $0x304] sm:$0xf] %vm2975, %v2912
      %3170 = vst.msk [vmem:[%s208 + $0x308] sm:$0xf] %vm2975, %v2913
      %3171 = vst.msk [vmem:[%s208 + $0x30c] sm:$0xf] %vm2975, %v2914
      %3172 = vst.msk [vmem:[%s208 + $0x310] sm:$0xf] %vm2975, %v2915
      %3173 = vst.msk [vmem:[%s208 + $0x314] sm:$0xf] %vm2975, %v2916
      %3174 = vst.msk [vmem:[%s208 + $0x318] sm:$0xf] %vm2975, %v2917
      %3175 = vst.msk [vmem:[%s208 + $0x31c] sm:$0xf] %vm2975, %v2918
      %3176 = vst.msk [vmem:[%s208 + $0x320] sm:$0xf] %vm2975, %v2919
      %3177 = vst.msk [vmem:[%s208 + $0x324] sm:$0xf] %vm2975, %v2920
      %3178 = vst.msk [vmem:[%s208 + $0x328] sm:$0xf] %vm2975, %v2921
      %3179 = vst.msk [vmem:[%s208 + $0x32c] sm:$0xf] %vm2975, %v2922
      %3180 = vst.msk [vmem:[%s208 + $0x330] sm:$0xf] %vm2975, %v2923
      %3181 = vst.msk [vmem:[%s208 + $0x334] sm:$0xf] %vm2975, %v2924
      %3182 = vst.msk [vmem:[%s208 + $0x338] sm:$0xf] %vm2975, %v2925
      %3183 = vst.msk [vmem:[%s208 + $0x33c] sm:$0xf] %vm2975, %v2926
      %3184 = vst.msk [vmem:[%s208 + $0x340] sm:$0xf] %vm2975, %v2927
      %3185 = vst.msk [vmem:[%s208 + $0x344] sm:$0xf] %vm2975, %v2928
      %3186 = vst.msk [vmem:[%s208 + $0x348] sm:$0xf] %vm2975, %v2929
      %3187 = vst.msk [vmem:[%s208 + $0x34c] sm:$0xf] %vm2975, %v2930
      %3188 = vst.msk [vmem:[%s208 + $0x350] sm:$0xf] %vm2975, %v2931
      %3189 = vst.msk [vmem:[%s208 + $0x354] sm:$0xf] %vm2975, %v2932
      %3190 = vst.msk [vmem:[%s208 + $0x358] sm:$0xf] %vm2975, %v2933
      %3191 = vst.msk [vmem:[%s208 + $0x35c] sm:$0xf] %vm2975, %v2934
      %3192 = vst.msk [vmem:[%s208 + $0x360] sm:$0xf] %vm2975, %v2935
      %3193 = vst.msk [vmem:[%s208 + $0x364] sm:$0xf] %vm2975, %v2936
      %3194 = vst.msk [vmem:[%s208 + $0x368] sm:$0xf] %vm2975, %v2937
      %3195 = vst.msk [vmem:[%s208 + $0x36c] sm:$0xf] %vm2975, %v2938
      %3196 = vst.msk [vmem:[%s208 + $0x370] sm:$0xf] %vm2975, %v2939
      %3197 = vst.msk [vmem:[%s208 + $0x374] sm:$0xf] %vm2975, %v2940
      %3198 = vst.msk [vmem:[%s208 + $0x378] sm:$0xf] %vm2975, %v2941
      %3199 = vst.msk [vmem:[%s208 + $0x37c] sm:$0xf] %vm2975, %v2942
      %3200 = vst.msk [vmem:[%s208 + $0x380] sm:$0xf] %vm2975, %v2943
      %3201 = vst.msk [vmem:[%s208 + $0x384] sm:$0xf] %vm2975, %v2944
      %3202 = vst.msk [vmem:[%s208 + $0x388] sm:$0xf] %vm2975, %v2945
      %3203 = vst.msk [vmem:[%s208 + $0x38c] sm:$0xf] %vm2975, %v2946
      %3204 = vst.msk [vmem:[%s208 + $0x390] sm:$0xf] %vm2975, %v2947
      %3205 = vst.msk [vmem:[%s208 + $0x394] sm:$0xf] %vm2975, %v2948
      %3206 = vst.msk [vmem:[%s208 + $0x398] sm:$0xf] %vm2975, %v2949
      %3207 = vst.msk [vmem:[%s208 + $0x39c] sm:$0xf] %vm2975, %v2950
      %3208 = vst.msk [vmem:[%s208 + $0x3a0] sm:$0xf] %vm2975, %v2951
      %3209 = vst.msk [vmem:[%s208 + $0x3a4] sm:$0xf] %vm2975, %v2952
      %3210 = vst.msk [vmem:[%s208 + $0x3a8] sm:$0xf] %vm2975, %v2953
      %3211 = vst.msk [vmem:[%s208 + $0x3ac] sm:$0xf] %vm2975, %v2954
      %3212 = vst.msk [vmem:[%s208 + $0x3b0] sm:$0xf] %vm2975, %v2955
      %3213 = vst.msk [vmem:[%s208 + $0x3b4] sm:$0xf] %vm2975, %v2956
      %3214 = vst.msk [vmem:[%s208 + $0x3b8] sm:$0xf] %vm2975, %v2957
      %3215 = vst.msk [vmem:[%s208 + $0x3bc] sm:$0xf] %vm2975, %v2958
      %3216 = vst.msk [vmem:[%s208 + $0x3c0] sm:$0xf] %vm2975, %v2959
      %3217 = vst.msk [vmem:[%s208 + $0x3c4] sm:$0xf] %vm2975, %v2960
      %3218 = vst.msk [vmem:[%s208 + $0x3c8] sm:$0xf] %vm2975, %v2961
      %3219 = vst.msk [vmem:[%s208 + $0x3cc] sm:$0xf] %vm2975, %v2962
      %3220 = vst.msk [vmem:[%s208 + $0x3d0] sm:$0xf] %vm2975, %v2963
      %3221 = vst.msk [vmem:[%s208 + $0x3d4] sm:$0xf] %vm2975, %v2964
      %3222 = vst.msk [vmem:[%s208 + $0x3d8] sm:$0xf] %vm2975, %v2965
      %3223 = vst.msk [vmem:[%s208 + $0x3dc] sm:$0xf] %vm2975, %v2966
      %3224 = vst.msk [vmem:[%s208 + $0x3e0] sm:$0xf] %vm2975, %v2967
      %3225 = vst.msk [vmem:[%s208 + $0x3e4] sm:$0xf] %vm2975, %v2968
      %3226 = vst.msk [vmem:[%s208 + $0x3e8] sm:$0xf] %vm2975, %v2969
      %3227 = vst.msk [vmem:[%s208 + $0x3ec] sm:$0xf] %vm2975, %v2970
      %3228 = vst.msk [vmem:[%s208 + $0x3f0] sm:$0xf] %vm2975, %v2971
      %3229 = vst.msk [vmem:[%s208 + $0x3f4] sm:$0xf] %vm2975, %v2972
      %3230 = vst.msk [vmem:[%s208 + $0x3f8] sm:$0xf] %vm2975, %v2973
      %3231 = vst.msk [vmem:[%s208 + $0x3fc] sm:$0xf] %vm2975, %v2974
      %s3232 = smul.u32 256, %s19
      %p3233 = scmp.lt.s32.totalorder %s18, 1
      %s3234 = scalar_select %p3233, %s18, 1
      %p3235 = scmp.lt.s32.totalorder %s3232, 511
      %s3236 = scalar_select %p3235, %s3232, 511
      %s3237 = smul.addr %s3234, 512
      %s3238 = sadd.s32 %s3236, %s3237
      %s3239 = smul.addr %s3238, 4
      %s3240 = scalar_lea.vmem %s3, %s3239
      // Predicated region
      $region33: #{_lambda_.5} parent=31 // pred_check
        %p3241 = pneg %p116
      $region34: #{_lambda_.5} parent=31 // pred_check_branch
        %3243 = sbr.rel (%p3241) target = $region36
      $region35: #{_lambda_.5} parent=31 // pred_region
        %s3244 = smul.u32 256, %s19
      $region36: #{_lambda_.5} parent=31 // pred_fallthru
        _
    $region32: #{_lambda_.5} parent=5 // pred_fallthru
      _
    %p3245 = scmp.le.s32.totalorder 2, %s9
    // Predicated region
    $region37: #{_lambda_.5} parent=5 // pred_check
      %p3246 = pneg %p3245
    $region38: #{_lambda_.5} parent=5 // pred_check_branch
      %3248 = sbr.rel (%p3246) target = $region40
    $region39: #{_lambda_.5} parent=5 // pred_region
      %s3249 = ssub.s32 %s9, 2
      // Predicated region
      $region41: #{_lambda_.5} parent=39 // pred_check
        %p3250 = pneg %p122
      $region42: #{_lambda_.5} parent=39 // pred_check_branch
        %3252 = sbr.rel (%p3250) target = $region44
      $region43: #{_lambda_.5} parent=39 // pred_region
        %s3253 = smul.u32 256, %s21
        %p3254 = scmp.lt.s32.totalorder %s20, 1
        %s3255 = scalar_select %p3254, %s20, 1
        %p3256 = scmp.lt.s32.totalorder %s3253, 511
        %s3257 = scalar_select %p3256, %s3253, 511
        %s3258 = smul.addr %s3255, 512
        %s3259 = sadd.s32 %s3257, %s3258
        %s3260 = smul.addr %s3259, 4
        %s3261 = scalar_lea.vmem %s3, %s3260
      $region44: #{_lambda_.5} parent=39 // pred_fallthru
        _
    $region40: #{_lambda_.5} parent=5 // pred_fallthru
      _
  $region6: #{_lambda_.5} parent=0 // loop_footer
    %s13 = sadd.s32 1, %s9
  $region7: #{_lambda_.5} parent=0 // loop_footer_branch
    %8 = sbr.rel target = $region3
  $region8: #{_lambda_.5} parent=0 // loop_exit
    _

// kernel: _lambda_.6
$region0: #{_lambda_.6}
  #allocation0 [shape = 'u32[]', space=smem, size = 0x4, offset = 0x4, fixed_abs, tag = 'smem constant byte address 0x4 - core index']
  #allocation1 [shape = 'u32[72,128]{1,0:T(1,128)}', space=vmem, size = 0x9000, scoped, tag = 'internal scratch']
  %s0 = inlined_call_operand.vmem [shape: bf16[2,512,512], index: 0, kind: input, shape index: {}]
  %s1 = inlined_call_operand.vmem [shape: bf16[512,128], index: 1, kind: input, shape index: {}]
  %s2 = inlined_call_operand.vmem [shape: f32[1,128], index: 2, kind: input, shape index: {}]
  %s3 = inlined_call_operand.vmem [shape: bf16[2,512,16], index: 3, kind: output, shape index: {}]
  %s4 = sld [smem:[#allocation0]]
  $region45: #{_lambda_.6} parent=0
    _
  %s6 = ssub.s32 1, %s4
  %s7 = scalar_select 0, %s6, %s4
  loop: start=0, step=1, limit=4
  $region2: #{_lambda_.6} parent=0 // loop_pre_header
    _
  $region3: #{_lambda_.6} parent=0 // loop_header
    %s9 = sphi 0, %s13
    %p10 = scmp.ge.s32.totalorder %s9, 4
    %s16 = sphi 0, %s28
    %s17 = sphi 0, %s24
    %s18 = sphi 0, %s16
    %s19 = sphi 0, %s17
    %s20 = sphi 0, %s18
    %s21 = sphi 0, %s19
    %s33 = sphi 0, %s35
    %s36 = sphi 0, %s33
    %s37 = sphi 0, %s36
    %s53 = sphi 0, %s37
    %s57 = sphi 0, %s57
    %s59 = sphi 0, %s57
    %s60 = sphi 0, %s59
    %s74 = sphi 0, %s60
    %s78 = sphi 0, %s78
    %s80 = sphi 0, %s78
    %s81 = sphi 0, %s80
    %s95 = sphi 0, %s81
    %s103 = sphi 0, %s105
    %s106 = sphi 0, %s103
    %s107 = sphi 0, %s106
    %s123 = sphi 0, %s107
  $region4: #{_lambda_.6} parent=0 // loop_header_branch
    %12 = sbr.rel (%p10) target = $region8
  $region5: #{_lambda_.6} parent=0 // loop_body
    %s14 = ssub.s32 %s9, 1
    %s15 = ssub.s32 %s9, 2
    %s22 = sadd.s32 1, %s17
    %p23 = scmp.ge.s32.totalorder %s22, 1
    %s24 = scalar_select %p23, 0, %s22
    %s25 = sadd.s32 1, %s16
    %s26 = scalar_select %p23, %s25, %s16
    %p27 = scmp.ge.s32.totalorder %s26, 2
    %s28 = scalar_select %p27, 0, %s26
    %s29 = ssub.s32 %s16, %s28
    %s30 = ssub.s32 %s17, %s24
    %s31 = sor.u32 %s29, %s30
    %p32 = scmp.eq.s32.totalorder %s31, 0
    %s34 = sadd.s32 %s33, 1
    %s35 = scalar_select %p32, %s33, %s34
    %p38 = pneg %p32
    %p39 = scmp.eq.s32.totalorder %s9, 1
    %p40 = por %p38, %p39
    %p41 = scmp.ne.s32.totalorder %s33, %s36
    %p42 = scmp.eq.s32.totalorder %s9, 0
    %p43 = por %p41, %p42
    %p44 = scmp.ne.s32.totalorder %s33, %s36
    %p45 = scmp.eq.s32.totalorder %s14, 1
    %p46 = por %p44, %p45
    %p47 = scmp.ne.s32.totalorder %s36, %s37
    %p48 = scmp.eq.s32.totalorder %s14, 0
    %p49 = por %p47, %p48
    %p50 = scmp.ne.s32.totalorder %s36, %s37
    %p51 = scmp.eq.s32.totalorder %s15, 1
    %p52 = por %p50, %p51
    %p54 = scmp.ne.s32.totalorder %s37, %s53
    %p55 = scmp.eq.s32.totalorder %s15, 0
    %p56 = por %p54, %p55
    %s58 = sadd.s32 %s57, 1
    %p61 = scmp.eq.s32.totalorder %s9, 1
    %p62 = scmp.ne.s32.totalorder %s57, %s59
    %p63 = scmp.eq.s32.totalorder %s9, 0
    %p64 = por %p62, %p63
    %p65 = scmp.ne.s32.totalorder %s57, %s59
    %p66 = scmp.eq.s32.totalorder %s14, 1
    %p67 = por %p65, %p66
    %p68 = scmp.ne.s32.totalorder %s59, %s60
    %p69 = scmp.eq.s32.totalorder %s14, 0
    %p70 = por %p68, %p69
    %p71 = scmp.ne.s32.totalorder %s59, %s60
    %p72 = scmp.eq.s32.totalorder %s15, 1
    %p73 = por %p71, %p72
    %p75 = scmp.ne.s32.totalorder %s60, %s74
    %p76 = scmp.eq.s32.totalorder %s15, 0
    %p77 = por %p75, %p76
    %s79 = sadd.s32 %s78, 1
    %p82 = scmp.eq.s32.totalorder %s9, 1
    %p83 = scmp.ne.s32.totalorder %s78, %s80
    %p84 = scmp.eq.s32.totalorder %s9, 0
    %p85 = por %p83, %p84
    %p86 = scmp.ne.s32.totalorder %s78, %s80
    %p87 = scmp.eq.s32.totalorder %s14, 1
    %p88 = por %p86, %p87
    %p89 = scmp.ne.s32.totalorder %s80, %s81
    %p90 = scmp.eq.s32.totalorder %s14, 0
    %p91 = por %p89, %p90
    %p92 = scmp.ne.s32.totalorder %s80, %s81
    %p93 = scmp.eq.s32.totalorder %s15, 1
    %p94 = por %p92, %p93
    %p96 = scmp.ne.s32.totalorder %s81, %s95
    %p97 = scmp.eq.s32.totalorder %s15, 0
    %p98 = por %p96, %p97
    %s99 = ssub.s32 %s16, %s28
    %s100 = ssub.s32 %s17, %s24
    %s101 = sor.u32 %s99, %s100
    %p102 = scmp.eq.s32.totalorder %s101, 0
    %s104 = sadd.s32 %s103, 1
    %s105 = scalar_select %p102, %s103, %s104
    %p108 = pneg %p102
    %p109 = scmp.eq.s32.totalorder %s9, 1
    %p110 = por %p108, %p109
    %p111 = scmp.ne.s32.totalorder %s103, %s106
    %p112 = scmp.eq.s32.totalorder %s9, 0
    %p113 = por %p111, %p112
    %p114 = scmp.ne.s32.totalorder %s103, %s106
    %p115 = scmp.eq.s32.totalorder %s14, 1
    %p116 = por %p114, %p115
    %p117 = scmp.ne.s32.totalorder %s106, %s107
    %p118 = scmp.eq.s32.totalorder %s14, 0
    %p119 = por %p117, %p118
    %p120 = scmp.ne.s32.totalorder %s106, %s107
    %p121 = scmp.eq.s32.totalorder %s15, 1
    %p122 = por %p120, %p121
    %p124 = scmp.ne.s32.totalorder %s107, %s123
    %p125 = scmp.eq.s32.totalorder %s15, 0
    %p126 = por %p124, %p125
    %p127 = scmp.le.s32.totalorder 1, %s9
    %p128 = scmp.lt.s32.totalorder %s9, 3
    %p129 = pnand %p127, %p128
    %p130 = pneg %p129
    // Predicated region
    $region9: #{_lambda_.6} parent=5 // pred_check
      _
    $region10: #{_lambda_.6} parent=5 // pred_check_branch
      %132 = sbr.rel (%p129) target = $region12
    $region11: #{_lambda_.6} parent=5 // pred_region
      %s133 = ssub.s32 %s9, 1
      // Predicated region
      $region13: #{_lambda_.6} parent=11 // pred_check
        %p134 = pneg %p70
      $region14: #{_lambda_.6} parent=11 // pred_check_branch
        %136 = sbr.rel (%p134) target = $region16
      $region15: #{_lambda_.6} parent=11 // pred_region
        _
      $region16: #{_lambda_.6} parent=11 // pred_fallthru
        _
      // Predicated region
      $region17: #{_lambda_.6} parent=11 // pred_check
        %p137 = pneg %p91
      $region18: #{_lambda_.6} parent=11 // pred_check_branch
        %139 = sbr.rel (%p137) target = $region20
      $region19: #{_lambda_.6} parent=11 // pred_region
        _
      $region20: #{_lambda_.6} parent=11 // pred_fallthru
        _
    $region12: #{_lambda_.6} parent=5 // pred_fallthru
      _
    %p140 = scmp.lt.s32.totalorder %s9, 2
    // Predicated region
    $region21: #{_lambda_.6} parent=5 // pred_check
      %p141 = pneg %p140
    $region22: #{_lambda_.6} parent=5 // pred_check_branch
      %143 = sbr.rel (%p141) target = $region24
    $region23: #{_lambda_.6} parent=5 // pred_region
      // Predicated region
      $region25: #{_lambda_.6} parent=23 // pred_check
        %p144 = pneg %p43
      $region26: #{_lambda_.6} parent=23 // pred_check_branch
        %146 = sbr.rel (%p144) target = $region28
      $region27: #{_lambda_.6} parent=23 // pred_region
        %s147 = smul.u32 64, %s17
        %p148 = scmp.lt.s32.totalorder %s16, 1
        %s149 = scalar_select %p148, %s16, 1
        %p150 = scmp.lt.s32.totalorder %s147, 63
        %s151 = scalar_select %p150, %s147, 63
        %s152 = smul.addr %s151, 4
        %s153 = smul.addr %s149, 256
        %s154 = sadd.s32 %s152, %s153
        %s155 = smul.addr %s154, 4
        %s156 = scalar_lea.vmem %s0, %s155
        %s157 = smul.u32 64, %s17
      $region28: #{_lambda_.6} parent=23 // pred_fallthru
        _
    $region24: #{_lambda_.6} parent=5 // pred_fallthru
      _
    %p158 = scmp.le.s32.totalorder 1, %s9
    %p159 = scmp.lt.s32.totalorder %s9, 3
    %p160 = pnand %p158, %p159
    %p161 = pneg %p160
    // Predicated region
    $region29: #{_lambda_.6} parent=5 // pred_check
      _
    $region30: #{_lambda_.6} parent=5 // pred_check_branch
      %163 = sbr.rel (%p160) target = $region32
    $region31: #{_lambda_.6} parent=5 // pred_region
      %s164 = ssub.s32 %s9, 1
      %s165 = smul.u32 64, %s19
      %p166 = scmp.lt.s32.totalorder %s18, 1
      %s167 = scalar_select %p166, %s18, 1
      %p168 = scmp.lt.s32.totalorder %s165, 63
      %s169 = scalar_select %p168, %s165, 63
      %s170 = smul.addr %s169, 4
      %s171 = smul.addr %s167, 256
      %s172 = sadd.s32 %s170, %s171
      %s173 = smul.addr %s172, 4
      %s174 = scalar_lea.vmem %s0, %s173
      %p175 = pneg %p49
      %p176 = pneg %p46
      %p177 = pneg %p70
      %p178 = pneg %p67
      %p179 = pneg %p91
      %p180 = pneg %p88
      %p181 = pneg %p119
      %p182 = pneg %p116
      %s183 = smul.u32 64, %s19
      %p184 = scmp.lt.s32.totalorder %s18, 1
      %s185 = scalar_select %p184, %s18, 1
      %p186 = scmp.lt.s32.totalorder %s183, 63
      %s187 = scalar_select %p186, %s183, 63
      %s188 = smul.addr %s185, 64
      %s189 = sadd.s32 %s187, %s188
      %s190 = smul.addr %s189, 4
      %s191 = scalar_lea.vmem %s3, %s190
      %s192 = smul.u32 64, %s19
      %p193 = scmp.lt.s32.totalorder %s18, 1
      %s194 = scalar_select %p193, %s18, 1
      %p195 = scmp.lt.s32.totalorder %s192, 63
      %s196 = scalar_select %p195, %s192, 63
      %s197 = smul.addr %s196, 4
      %s198 = smul.addr %s194, 256
      %s199 = sadd.s32 %s197, %s198
      %s200 = smul.addr %s199, 4
      %s201 = scalar_lea.vmem %s0, %s200
      %s202 = smul.u32 64, %s19
      %s203 = smul.u32 64, %s19
      %p204 = scmp.lt.s32.totalorder %s18, 1
      %s205 = scalar_select %p204, %s18, 1
      %p206 = scmp.lt.s32.totalorder %s203, 63
      %s207 = scalar_select %p206, %s203, 63
      %s208 = smul.addr %s205, 64
      %s209 = sadd.s32 %s207, %s208
      %s210 = smul.addr %s209, 4
      %s211 = scalar_lea.vmem %s3, %s210
      %s212 = smul.u32 64, %s19
      %v213 = vld [vmem:[%s201] sm:$0xff]
      %v214 = vld [vmem:[%s201 + $0x8] sm:$0xff]
      %v215 = vld [vmem:[%s201 + $0x10] sm:$0xff]
      %v216 = vld [vmem:[%s201 + $0x18] sm:$0xff]
      %v217 = vld [vmem:[%s201 + $0x20] sm:$0xff]
      %v218 = vld [vmem:[%s201 + $0x28] sm:$0xff]
      %v219 = vld [vmem:[%s201 + $0x30] sm:$0xff]
      %v220 = vld [vmem:[%s201 + $0x38] sm:$0xff]
      %v221 = vld [vmem:[%s201 + $0x40] sm:$0xff]
      %v222 = vld [vmem:[%s201 + $0x48] sm:$0xff]
      %v223 = vld [vmem:[%s201 + $0x50] sm:$0xff]
      %v224 = vld [vmem:[%s201 + $0x58] sm:$0xff]
      %v225 = vld [vmem:[%s201 + $0x60] sm:$0xff]
      %v226 = vld [vmem:[%s201 + $0x68] sm:$0xff]
      %v227 = vld [vmem:[%s201 + $0x70] sm:$0xff]
      %v228 = vld [vmem:[%s201 + $0x78] sm:$0xff]
      %v229 = vld [vmem:[%s201 + $0x80] sm:$0xff]
      %v230 = vld [vmem:[%s201 + $0x88] sm:$0xff]
      %v231 = vld [vmem:[%s201 + $0x90] sm:$0xff]
      %v232 = vld [vmem:[%s201 + $0x98] sm:$0xff]
      %v233 = vld [vmem:[%s201 + $0xa0] sm:$0xff]
      %v234 = vld [vmem:[%s201 + $0xa8] sm:$0xff]
      %v235 = vld [vmem:[%s201 + $0xb0] sm:$0xff]
      %v236 = vld [vmem:[%s201 + $0xb8] sm:$0xff]
      %v237 = vld [vmem:[%s201 + $0xc0] sm:$0xff]
      %v238 = vld [vmem:[%s201 + $0xc8] sm:$0xff]
      %v239 = vld [vmem:[%s201 + $0xd0] sm:$0xff]
      %v240 = vld [vmem:[%s201 + $0xd8] sm:$0xff]
      %v241 = vld [vmem:[%s201 + $0xe0] sm:$0xff]
      %v242 = vld [vmem:[%s201 + $0xe8] sm:$0xff]
      %v243 = vld [vmem:[%s201 + $0xf0] sm:$0xff]
      %v244 = vld [vmem:[%s201 + $0xf8] sm:$0xff]
      %v245 = vld [vmem:[%s201 + $0x100] sm:$0xff]
      %v246 = vld [vmem:[%s201 + $0x108] sm:$0xff]
      %v247 = vld [vmem:[%s201 + $0x110] sm:$0xff]
      %v248 = vld [vmem:[%s201 + $0x118] sm:$0xff]
      %v249 = vld [vmem:[%s201 + $0x120] sm:$0xff]
      %v250 = vld [vmem:[%s201 + $0x128] sm:$0xff]
      %v251 = vld [vmem:[%s201 + $0x130] sm:$0xff]
      %v252 = vld [vmem:[%s201 + $0x138] sm:$0xff]
      %v253 = vld [vmem:[%s201 + $0x140] sm:$0xff]
      %v254 = vld [vmem:[%s201 + $0x148] sm:$0xff]
      %v255 = vld [vmem:[%s201 + $0x150] sm:$0xff]
      %v256 = vld [vmem:[%s201 + $0x158] sm:$0xff]
      %v257 = vld [vmem:[%s201 + $0x160] sm:$0xff]
      %v258 = vld [vmem:[%s201 + $0x168] sm:$0xff]
      %v259 = vld [vmem:[%s201 + $0x170] sm:$0xff]
      %v260 = vld [vmem:[%s201 + $0x178] sm:$0xff]
      %v261 = vld [vmem:[%s201 + $0x180] sm:$0xff]
      %v262 = vld [vmem:[%s201 + $0x188] sm:$0xff]
      %v263 = vld [vmem:[%s201 + $0x190] sm:$0xff]
      %v264 = vld [vmem:[%s201 + $0x198] sm:$0xff]
      %v265 = vld [vmem:[%s201 + $0x1a0] sm:$0xff]
      %v266 = vld [vmem:[%s201 + $0x1a8] sm:$0xff]
      %v267 = vld [vmem:[%s201 + $0x1b0] sm:$0xff]
      %v268 = vld [vmem:[%s201 + $0x1b8] sm:$0xff]
      %v269 = vld [vmem:[%s201 + $0x1c0] sm:$0xff]
      %v270 = vld [vmem:[%s201 + $0x1c8] sm:$0xff]
      %v271 = vld [vmem:[%s201 + $0x1d0] sm:$0xff]
      %v272 = vld [vmem:[%s201 + $0x1d8] sm:$0xff]
      %v273 = vld [vmem:[%s201 + $0x1e0] sm:$0xff]
      %v274 = vld [vmem:[%s201 + $0x1e8] sm:$0xff]
      %v275 = vld [vmem:[%s201 + $0x1f0] sm:$0xff]
      %v276 = vld [vmem:[%s201 + $0x1f8] sm:$0xff]
      %v277 = vld [vmem:[%s201 + $0x200] sm:$0xff]
      %v278 = vld [vmem:[%s201 + $0x208] sm:$0xff]
      %v279 = vld [vmem:[%s201 + $0x210] sm:$0xff]
      %v280 = vld [vmem:[%s201 + $0x218] sm:$0xff]
      %v281 = vld [vmem:[%s201 + $0x220] sm:$0xff]
      %v282 = vld [vmem:[%s201 + $0x228] sm:$0xff]
      %v283 = vld [vmem:[%s201 + $0x230] sm:$0xff]
      %v284 = vld [vmem:[%s201 + $0x238] sm:$0xff]
      %v285 = vld [vmem:[%s201 + $0x240] sm:$0xff]
      %v286 = vld [vmem:[%s201 + $0x248] sm:$0xff]
      %v287 = vld [vmem:[%s201 + $0x250] sm:$0xff]
      %v288 = vld [vmem:[%s201 + $0x258] sm:$0xff]
      %v289 = vld [vmem:[%s201 + $0x260] sm:$0xff]
      %v290 = vld [vmem:[%s201 + $0x268] sm:$0xff]
      %v291 = vld [vmem:[%s201 + $0x270] sm:$0xff]
      %v292 = vld [vmem:[%s201 + $0x278] sm:$0xff]
      %v293 = vld [vmem:[%s201 + $0x280] sm:$0xff]
      %v294 = vld [vmem:[%s201 + $0x288] sm:$0xff]
      %v295 = vld [vmem:[%s201 + $0x290] sm:$0xff]
      %v296 = vld [vmem:[%s201 + $0x298] sm:$0xff]
      %v297 = vld [vmem:[%s201 + $0x2a0] sm:$0xff]
      %v298 = vld [vmem:[%s201 + $0x2a8] sm:$0xff]
      %v299 = vld [vmem:[%s201 + $0x2b0] sm:$0xff]
      %v300 = vld [vmem:[%s201 + $0x2b8] sm:$0xff]
      %v301 = vld [vmem:[%s201 + $0x2c0] sm:$0xff]
      %v302 = vld [vmem:[%s201 + $0x2c8] sm:$0xff]
      %v303 = vld [vmem:[%s201 + $0x2d0] sm:$0xff]
      %v304 = vld [vmem:[%s201 + $0x2d8] sm:$0xff]
      %v305 = vld [vmem:[%s201 + $0x2e0] sm:$0xff]
      %v306 = vld [vmem:[%s201 + $0x2e8] sm:$0xff]
      %v307 = vld [vmem:[%s201 + $0x2f0] sm:$0xff]
      %v308 = vld [vmem:[%s201 + $0x2f8] sm:$0xff]
      %v309 = vld [vmem:[%s201 + $0x300] sm:$0xff]
      %v310 = vld [vmem:[%s201 + $0x308] sm:$0xff]
      %v311 = vld [vmem:[%s201 + $0x310] sm:$0xff]
      %v312 = vld [vmem:[%s201 + $0x318] sm:$0xff]
      %v313 = vld [vmem:[%s201 + $0x320] sm:$0xff]
      %v314 = vld [vmem:[%s201 + $0x328] sm:$0xff]
      %v315 = vld [vmem:[%s201 + $0x330] sm:$0xff]
      %v316 = vld [vmem:[%s201 + $0x338] sm:$0xff]
      %v317 = vld [vmem:[%s201 + $0x340] sm:$0xff]
      %v318 = vld [vmem:[%s201 + $0x348] sm:$0xff]
      %v319 = vld [vmem:[%s201 + $0x350] sm:$0xff]
      %v320 = vld [vmem:[%s201 + $0x358] sm:$0xff]
      %v321 = vld [vmem:[%s201 + $0x360] sm:$0xff]
      %v322 = vld [vmem:[%s201 + $0x368] sm:$0xff]
      %v323 = vld [vmem:[%s201 + $0x370] sm:$0xff]
      %v324 = vld [vmem:[%s201 + $0x378] sm:$0xff]
      %v325 = vld [vmem:[%s201 + $0x380] sm:$0xff]
      %v326 = vld [vmem:[%s201 + $0x388] sm:$0xff]
      %v327 = vld [vmem:[%s201 + $0x390] sm:$0xff]
      %v328 = vld [vmem:[%s201 + $0x398] sm:$0xff]
      %v329 = vld [vmem:[%s201 + $0x3a0] sm:$0xff]
      %v330 = vld [vmem:[%s201 + $0x3a8] sm:$0xff]
      %v331 = vld [vmem:[%s201 + $0x3b0] sm:$0xff]
      %v332 = vld [vmem:[%s201 + $0x3b8] sm:$0xff]
      %v333 = vld [vmem:[%s201 + $0x3c0] sm:$0xff]
      %v334 = vld [vmem:[%s201 + $0x3c8] sm:$0xff]
      %v335 = vld [vmem:[%s201 + $0x3d0] sm:$0xff]
      %v336 = vld [vmem:[%s201 + $0x3d8] sm:$0xff]
      %v337 = vld [vmem:[%s201 + $0x3e0] sm:$0xff]
      %v338 = vld [vmem:[%s201 + $0x3e8] sm:$0xff]
      %v339 = vld [vmem:[%s201 + $0x3f0] sm:$0xff]
      %v340 = vld [vmem:[%s201 + $0x3f8] sm:$0xff]
      %v341 = vld [vmem:[%s1] sm:$0xf]
      %v342 = vld [vmem:[%s1 + $0x4] sm:$0xf]
      %v343 = vld [vmem:[%s1 + $0x8] sm:$0xf]
      %v344 = vld [vmem:[%s1 + $0xc] sm:$0xf]
      %v345 = vld [vmem:[%s1 + $0x10] sm:$0xf]
      %v346 = vld [vmem:[%s1 + $0x14] sm:$0xf]
      %v347 = vld [vmem:[%s1 + $0x18] sm:$0xf]
      %v348 = vld [vmem:[%s1 + $0x1c] sm:$0xf]
      %v349 = vld [vmem:[%s1 + $0x20] sm:$0xf]
      %v350 = vld [vmem:[%s1 + $0x24] sm:$0xf]
      %v351 = vld [vmem:[%s1 + $0x28] sm:$0xf]
      %v352 = vld [vmem:[%s1 + $0x2c] sm:$0xf]
      %v353 = vld [vmem:[%s1 + $0x30] sm:$0xf]
      %v354 = vld [vmem:[%s1 + $0x34] sm:$0xf]
      %v355 = vld [vmem:[%s1 + $0x38] sm:$0xf]
      %v356 = vld [vmem:[%s1 + $0x3c] sm:$0xf]
      %v357 = vld [vmem:[%s1 + $0x40] sm:$0xf]
      %v358 = vld [vmem:[%s1 + $0x44] sm:$0xf]
      %v359 = vld [vmem:[%s1 + $0x48] sm:$0xf]
      %v360 = vld [vmem:[%s1 + $0x4c] sm:$0xf]
      %v361 = vld [vmem:[%s1 + $0x50] sm:$0xf]
      %v362 = vld [vmem:[%s1 + $0x54] sm:$0xf]
      %v363 = vld [vmem:[%s1 + $0x58] sm:$0xf]
      %v364 = vld [vmem:[%s1 + $0x5c] sm:$0xf]
      %v365 = vld [vmem:[%s1 + $0x60] sm:$0xf]
      %v366 = vld [vmem:[%s1 + $0x64] sm:$0xf]
      %v367 = vld [vmem:[%s1 + $0x68] sm:$0xf]
      %v368 = vld [vmem:[%s1 + $0x6c] sm:$0xf]
      %v369 = vld [vmem:[%s1 + $0x70] sm:$0xf]
      %v370 = vld [vmem:[%s1 + $0x74] sm:$0xf]
      %v371 = vld [vmem:[%s1 + $0x78] sm:$0xf]
      %v372 = vld [vmem:[%s1 + $0x7c] sm:$0xf]
      %v373 = vld [vmem:[%s1 + $0x80] sm:$0xf]
      %v374 = vld [vmem:[%s1 + $0x84] sm:$0xf]
      %v375 = vld [vmem:[%s1 + $0x88] sm:$0xf]
      %v376 = vld [vmem:[%s1 + $0x8c] sm:$0xf]
      %v377 = vld [vmem:[%s1 + $0x90] sm:$0xf]
      %v378 = vld [vmem:[%s1 + $0x94] sm:$0xf]
      %v379 = vld [vmem:[%s1 + $0x98] sm:$0xf]
      %v380 = vld [vmem:[%s1 + $0x9c] sm:$0xf]
      %v381 = vld [vmem:[%s1 + $0xa0] sm:$0xf]
      %v382 = vld [vmem:[%s1 + $0xa4] sm:$0xf]
      %v383 = vld [vmem:[%s1 + $0xa8] sm:$0xf]
      %v384 = vld [vmem:[%s1 + $0xac] sm:$0xf]
      %v385 = vld [vmem:[%s1 + $0xb0] sm:$0xf]
      %v386 = vld [vmem:[%s1 + $0xb4] sm:$0xf]
      %v387 = vld [vmem:[%s1 + $0xb8] sm:$0xf]
      %v388 = vld [vmem:[%s1 + $0xbc] sm:$0xf]
      %v389 = vld [vmem:[%s1 + $0xc0] sm:$0xf]
      %v390 = vld [vmem:[%s1 + $0xc4] sm:$0xf]
      %v391 = vld [vmem:[%s1 + $0xc8] sm:$0xf]
      %v392 = vld [vmem:[%s1 + $0xcc] sm:$0xf]
      %v393 = vld [vmem:[%s1 + $0xd0] sm:$0xf]
      %v394 = vld [vmem:[%s1 + $0xd4] sm:$0xf]
      %v395 = vld [vmem:[%s1 + $0xd8] sm:$0xf]
      %v396 = vld [vmem:[%s1 + $0xdc] sm:$0xf]
      %v397 = vld [vmem:[%s1 + $0xe0] sm:$0xf]
      %v398 = vld [vmem:[%s1 + $0xe4] sm:$0xf]
      %v399 = vld [vmem:[%s1 + $0xe8] sm:$0xf]
      %v400 = vld [vmem:[%s1 + $0xec] sm:$0xf]
      %v401 = vld [vmem:[%s1 + $0xf0] sm:$0xf]
      %v402 = vld [vmem:[%s1 + $0xf4] sm:$0xf]
      %v403 = vld [vmem:[%s1 + $0xf8] sm:$0xf]
      %v404 = vld [vmem:[%s1 + $0xfc] sm:$0xf]
      %v405 = vld [vmem:[%s2] sm:$0x1]
      %v407 = vperm.slane %v405, 0
      %v537 = vunpack.c.l.b16 %v213
      %v538 = vunpack.c.h.b16 %v213
      %v539 = vunpack.c.l.b16 %v214
      %v540 = vunpack.c.h.b16 %v214
      %v541 = vunpack.c.l.b16 %v215
      %v542 = vunpack.c.h.b16 %v215
      %v543 = vunpack.c.l.b16 %v216
      %v544 = vunpack.c.h.b16 %v216
      %v545 = vunpack.c.l.b16 %v217
      %v546 = vunpack.c.h.b16 %v217
      %v547 = vunpack.c.l.b16 %v218
      %v548 = vunpack.c.h.b16 %v218
      %v549 = vunpack.c.l.b16 %v219
      %v550 = vunpack.c.h.b16 %v219
      %v551 = vunpack.c.l.b16 %v220
      %v552 = vunpack.c.h.b16 %v220
      %v553 = vunpack.c.l.b16 %v221
      %v554 = vunpack.c.h.b16 %v221
      %v555 = vunpack.c.l.b16 %v222
      %v556 = vunpack.c.h.b16 %v222
      %v557 = vunpack.c.l.b16 %v223
      %v558 = vunpack.c.h.b16 %v223
      %v559 = vunpack.c.l.b16 %v224
      %v560 = vunpack.c.h.b16 %v224
      %v561 = vunpack.c.l.b16 %v225
      %v562 = vunpack.c.h.b16 %v225
      %v563 = vunpack.c.l.b16 %v226
      %v564 = vunpack.c.h.b16 %v226
      %v565 = vunpack.c.l.b16 %v227
      %v566 = vunpack.c.h.b16 %v227
      %v567 = vunpack.c.l.b16 %v228
      %v568 = vunpack.c.h.b16 %v228
      %v569 = vunpack.c.l.b16 %v229
      %v570 = vunpack.c.h.b16 %v229
      %v571 = vunpack.c.l.b16 %v230
      %v572 = vunpack.c.h.b16 %v230
      %v573 = vunpack.c.l.b16 %v231
      %v574 = vunpack.c.h.b16 %v231
      %v575 = vunpack.c.l.b16 %v232
      %v576 = vunpack.c.h.b16 %v232
      %v577 = vunpack.c.l.b16 %v233
      %v578 = vunpack.c.h.b16 %v233
      %v579 = vunpack.c.l.b16 %v234
      %v580 = vunpack.c.h.b16 %v234
      %v581 = vunpack.c.l.b16 %v235
      %v582 = vunpack.c.h.b16 %v235
      %v583 = vunpack.c.l.b16 %v236
      %v584 = vunpack.c.h.b16 %v236
      %v585 = vunpack.c.l.b16 %v237
      %v586 = vunpack.c.h.b16 %v237
      %v587 = vunpack.c.l.b16 %v238
      %v588 = vunpack.c.h.b16 %v238
      %v589 = vunpack.c.l.b16 %v239
      %v590 = vunpack.c.h.b16 %v239
      %v591 = vunpack.c.l.b16 %v240
      %v592 = vunpack.c.h.b16 %v240
      %v593 = vunpack.c.l.b16 %v241
      %v594 = vunpack.c.h.b16 %v241
      %v595 = vunpack.c.l.b16 %v242
      %v596 = vunpack.c.h.b16 %v242
      %v597 = vunpack.c.l.b16 %v243
      %v598 = vunpack.c.h.b16 %v243
      %v599 = vunpack.c.l.b16 %v244
      %v600 = vunpack.c.h.b16 %v244
      %v601 = vunpack.c.l.b16 %v245
      %v602 = vunpack.c.h.b16 %v245
      %v603 = vunpack.c.l.b16 %v246
      %v604 = vunpack.c.h.b16 %v246
      %v605 = vunpack.c.l.b16 %v247
      %v606 = vunpack.c.h.b16 %v247
      %v607 = vunpack.c.l.b16 %v248
      %v608 = vunpack.c.h.b16 %v248
      %v609 = vunpack.c.l.b16 %v249
      %v610 = vunpack.c.h.b16 %v249
      %v611 = vunpack.c.l.b16 %v250
      %v612 = vunpack.c.h.b16 %v250
      %v613 = vunpack.c.l.b16 %v251
      %v614 = vunpack.c.h.b16 %v251
      %v615 = vunpack.c.l.b16 %v252
      %v616 = vunpack.c.h.b16 %v252
      %v617 = vunpack.c.l.b16 %v253
      %v618 = vunpack.c.h.b16 %v253
      %v619 = vunpack.c.l.b16 %v254
      %v620 = vunpack.c.h.b16 %v254
      %v621 = vunpack.c.l.b16 %v255
      %v622 = vunpack.c.h.b16 %v255
      %v623 = vunpack.c.l.b16 %v256
      %v624 = vunpack.c.h.b16 %v256
      %v625 = vunpack.c.l.b16 %v257
      %v626 = vunpack.c.h.b16 %v257
      %v627 = vunpack.c.l.b16 %v258
      %v628 = vunpack.c.h.b16 %v258
      %v629 = vunpack.c.l.b16 %v259
      %v630 = vunpack.c.h.b16 %v259
      %v631 = vunpack.c.l.b16 %v260
      %v632 = vunpack.c.h.b16 %v260
      %v633 = vunpack.c.l.b16 %v261
      %v634 = vunpack.c.h.b16 %v261
      %v635 = vunpack.c.l.b16 %v262
      %v636 = vunpack.c.h.b16 %v262
      %v637 = vunpack.c.l.b16 %v263
      %v638 = vunpack.c.h.b16 %v263
      %v639 = vunpack.c.l.b16 %v264
      %v640 = vunpack.c.h.b16 %v264
      %v641 = vunpack.c.l.b16 %v265
      %v642 = vunpack.c.h.b16 %v265
      %v643 = vunpack.c.l.b16 %v266
      %v644 = vunpack.c.h.b16 %v266
      %v645 = vunpack.c.l.b16 %v267
      %v646 = vunpack.c.h.b16 %v267
      %v647 = vunpack.c.l.b16 %v268
      %v648 = vunpack.c.h.b16 %v268
      %v649 = vunpack.c.l.b16 %v269
      %v650 = vunpack.c.h.b16 %v269
      %v651 = vunpack.c.l.b16 %v270
      %v652 = vunpack.c.h.b16 %v270
      %v653 = vunpack.c.l.b16 %v271
      %v654 = vunpack.c.h.b16 %v271
      %v655 = vunpack.c.l.b16 %v272
      %v656 = vunpack.c.h.b16 %v272
      %v657 = vunpack.c.l.b16 %v273
      %v658 = vunpack.c.h.b16 %v273
      %v659 = vunpack.c.l.b16 %v274
      %v660 = vunpack.c.h.b16 %v274
      %v661 = vunpack.c.l.b16 %v275
      %v662 = vunpack.c.h.b16 %v275
      %v663 = vunpack.c.l.b16 %v276
      %v664 = vunpack.c.h.b16 %v276
      %v665 = vunpack.c.l.b16 %v277
      %v666 = vunpack.c.h.b16 %v277
      %v667 = vunpack.c.l.b16 %v278
      %v668 = vunpack.c.h.b16 %v278
      %v669 = vunpack.c.l.b16 %v279
      %v670 = vunpack.c.h.b16 %v279
      %v671 = vunpack.c.l.b16 %v280
      %v672 = vunpack.c.h.b16 %v280
      %v673 = vunpack.c.l.b16 %v281
      %v674 = vunpack.c.h.b16 %v281
      %v675 = vunpack.c.l.b16 %v282
      %v676 = vunpack.c.h.b16 %v282
      %v677 = vunpack.c.l.b16 %v283
      %v678 = vunpack.c.h.b16 %v283
      %v679 = vunpack.c.l.b16 %v284
      %v680 = vunpack.c.h.b16 %v284
      %v681 = vunpack.c.l.b16 %v285
      %v682 = vunpack.c.h.b16 %v285
      %v683 = vunpack.c.l.b16 %v286
      %v684 = vunpack.c.h.b16 %v286
      %v685 = vunpack.c.l.b16 %v287
      %v686 = vunpack.c.h.b16 %v287
      %v687 = vunpack.c.l.b16 %v288
      %v688 = vunpack.c.h.b16 %v288
      %v689 = vunpack.c.l.b16 %v289
      %v690 = vunpack.c.h.b16 %v289
      %v691 = vunpack.c.l.b16 %v290
      %v692 = vunpack.c.h.b16 %v290
      %v693 = vunpack.c.l.b16 %v291
      %v694 = vunpack.c.h.b16 %v291
      %v695 = vunpack.c.l.b16 %v292
      %v696 = vunpack.c.h.b16 %v292
      %v697 = vunpack.c.l.b16 %v293
      %v698 = vunpack.c.h.b16 %v293
      %v699 = vunpack.c.l.b16 %v294
      %v700 = vunpack.c.h.b16 %v294
      %v701 = vunpack.c.l.b16 %v295
      %v702 = vunpack.c.h.b16 %v295
      %v703 = vunpack.c.l.b16 %v296
      %v704 = vunpack.c.h.b16 %v296
      %v705 = vunpack.c.l.b16 %v297
      %v706 = vunpack.c.h.b16 %v297
      %v707 = vunpack.c.l.b16 %v298
      %v708 = vunpack.c.h.b16 %v298
      %v709 = vunpack.c.l.b16 %v299
      %v710 = vunpack.c.h.b16 %v299
      %v711 = vunpack.c.l.b16 %v300
      %v712 = vunpack.c.h.b16 %v300
      %v713 = vunpack.c.l.b16 %v301
      %v714 = vunpack.c.h.b16 %v301
      %v715 = vunpack.c.l.b16 %v302
      %v716 = vunpack.c.h.b16 %v302
      %v717 = vunpack.c.l.b16 %v303
      %v718 = vunpack.c.h.b16 %v303
      %v719 = vunpack.c.l.b16 %v304
      %v720 = vunpack.c.h.b16 %v304
      %v721 = vunpack.c.l.b16 %v305
      %v722 = vunpack.c.h.b16 %v305
      %v723 = vunpack.c.l.b16 %v306
      %v724 = vunpack.c.h.b16 %v306
      %v725 = vunpack.c.l.b16 %v307
      %v726 = vunpack.c.h.b16 %v307
      %v727 = vunpack.c.l.b16 %v308
      %v728 = vunpack.c.h.b16 %v308
      %v729 = vunpack.c.l.b16 %v309
      %v730 = vunpack.c.h.b16 %v309
      %v731 = vunpack.c.l.b16 %v310
      %v732 = vunpack.c.h.b16 %v310
      %v733 = vunpack.c.l.b16 %v311
      %v734 = vunpack.c.h.b16 %v311
      %v735 = vunpack.c.l.b16 %v312
      %v736 = vunpack.c.h.b16 %v312
      %v737 = vunpack.c.l.b16 %v313
      %v738 = vunpack.c.h.b16 %v313
      %v739 = vunpack.c.l.b16 %v314
      %v740 = vunpack.c.h.b16 %v314
      %v741 = vunpack.c.l.b16 %v315
      %v742 = vunpack.c.h.b16 %v315
      %v743 = vunpack.c.l.b16 %v316
      %v744 = vunpack.c.h.b16 %v316
      %v745 = vunpack.c.l.b16 %v317
      %v746 = vunpack.c.h.b16 %v317
      %v747 = vunpack.c.l.b16 %v318
      %v748 = vunpack.c.h.b16 %v318
      %v749 = vunpack.c.l.b16 %v319
      %v750 = vunpack.c.h.b16 %v319
      %v751 = vunpack.c.l.b16 %v320
      %v752 = vunpack.c.h.b16 %v320
      %v753 = vunpack.c.l.b16 %v321
      %v754 = vunpack.c.h.b16 %v321
      %v755 = vunpack.c.l.b16 %v322
      %v756 = vunpack.c.h.b16 %v322
      %v757 = vunpack.c.l.b16 %v323
      %v758 = vunpack.c.h.b16 %v323
      %v759 = vunpack.c.l.b16 %v324
      %v760 = vunpack.c.h.b16 %v324
      %v761 = vunpack.c.l.b16 %v325
      %v762 = vunpack.c.h.b16 %v325
      %v763 = vunpack.c.l.b16 %v326
      %v764 = vunpack.c.h.b16 %v326
      %v765 = vunpack.c.l.b16 %v327
      %v766 = vunpack.c.h.b16 %v327
      %v767 = vunpack.c.l.b16 %v328
      %v768 = vunpack.c.h.b16 %v328
      %v769 = vunpack.c.l.b16 %v329
      %v770 = vunpack.c.h.b16 %v329
      %v771 = vunpack.c.l.b16 %v330
      %v772 = vunpack.c.h.b16 %v330
      %v773 = vunpack.c.l.b16 %v331
      %v774 = vunpack.c.h.b16 %v331
      %v775 = vunpack.c.l.b16 %v332
      %v776 = vunpack.c.h.b16 %v332
      %v777 = vunpack.c.l.b16 %v333
      %v778 = vunpack.c.h.b16 %v333
      %v779 = vunpack.c.l.b16 %v334
      %v780 = vunpack.c.h.b16 %v334
      %v781 = vunpack.c.l.b16 %v335
      %v782 = vunpack.c.h.b16 %v335
      %v783 = vunpack.c.l.b16 %v336
      %v784 = vunpack.c.h.b16 %v336
      %v785 = vunpack.c.l.b16 %v337
      %v786 = vunpack.c.h.b16 %v337
      %v787 = vunpack.c.l.b16 %v338
      %v788 = vunpack.c.h.b16 %v338
      %v789 = vunpack.c.l.b16 %v339
      %v790 = vunpack.c.h.b16 %v339
      %v791 = vunpack.c.l.b16 %v340
      %v792 = vunpack.c.h.b16 %v340
      %v793 = vpack.c.b16 %v541, %v537
      %v794 = vpack.c.b16 %v542, %v538
      %v795 = vpack.c.b16 %v543, %v539
      %v796 = vpack.c.b16 %v544, %v540
      %v797 = vpack.c.b16 %v549, %v545
      %v798 = vpack.c.b16 %v550, %v546
      %v799 = vpack.c.b16 %v551, %v547
      %v800 = vpack.c.b16 %v552, %v548
      %v801 = vpack.c.b16 %v557, %v553
      %v802 = vpack.c.b16 %v558, %v554
      %v803 = vpack.c.b16 %v559, %v555
      %v804 = vpack.c.b16 %v560, %v556
      %v805 = vpack.c.b16 %v565, %v561
      %v806 = vpack.c.b16 %v566, %v562
      %v807 = vpack.c.b16 %v567, %v563
      %v808 = vpack.c.b16 %v568, %v564
      %v809 = vpack.c.b16 %v573, %v569
      %v810 = vpack.c.b16 %v574, %v570
      %v811 = vpack.c.b16 %v575, %v571
      %v812 = vpack.c.b16 %v576, %v572
      %v813 = vpack.c.b16 %v581, %v577
      %v814 = vpack.c.b16 %v582, %v578
      %v815 = vpack.c.b16 %v583, %v579
      %v816 = vpack.c.b16 %v584, %v580
      %v817 = vpack.c.b16 %v589, %v585
      %v818 = vpack.c.b16 %v590, %v586
      %v819 = vpack.c.b16 %v591, %v587
      %v820 = vpack.c.b16 %v592, %v588
      %v821 = vpack.c.b16 %v597, %v593
      %v822 = vpack.c.b16 %v598, %v594
      %v823 = vpack.c.b16 %v599, %v595
      %v824 = vpack.c.b16 %v600, %v596
      %v825 = vpack.c.b16 %v605, %v601
      %v826 = vpack.c.b16 %v606, %v602
      %v827 = vpack.c.b16 %v607, %v603
      %v828 = vpack.c.b16 %v608, %v604
      %v829 = vpack.c.b16 %v613, %v609
      %v830 = vpack.c.b16 %v614, %v610
      %v831 = vpack.c.b16 %v615, %v611
      %v832 = vpack.c.b16 %v616, %v612
      %v833 = vpack.c.b16 %v621, %v617
      %v834 = vpack.c.b16 %v622, %v618
      %v835 = vpack.c.b16 %v623, %v619
      %v836 = vpack.c.b16 %v624, %v620
      %v837 = vpack.c.b16 %v629, %v625
      %v838 = vpack.c.b16 %v630, %v626
      %v839 = vpack.c.b16 %v631, %v627
      %v840 = vpack.c.b16 %v632, %v628
      %v841 = vpack.c.b16 %v637, %v633
      %v842 = vpack.c.b16 %v638, %v634
      %v843 = vpack.c.b16 %v639, %v635
      %v844 = vpack.c.b16 %v640, %v636
      %v845 = vpack.c.b16 %v645, %v641
      %v846 = vpack.c.b16 %v646, %v642
      %v847 = vpack.c.b16 %v647, %v643
      %v848 = vpack.c.b16 %v648, %v644
      %v849 = vpack.c.b16 %v653, %v649
      %v850 = vpack.c.b16 %v654, %v650
      %v851 = vpack.c.b16 %v655, %v651
      %v852 = vpack.c.b16 %v656, %v652
      %v853 = vpack.c.b16 %v661, %v657
      %v854 = vpack.c.b16 %v662, %v658
      %v855 = vpack.c.b16 %v663, %v659
      %v856 = vpack.c.b16 %v664, %v660
      %v857 = vpack.c.b16 %v669, %v665
      %v858 = vpack.c.b16 %v670, %v666
      %v859 = vpack.c.b16 %v671, %v667
      %v860 = vpack.c.b16 %v672, %v668
      %v861 = vpack.c.b16 %v677, %v673
      %v862 = vpack.c.b16 %v678, %v674
      %v863 = vpack.c.b16 %v679, %v675
      %v864 = vpack.c.b16 %v680, %v676
      %v865 = vpack.c.b16 %v685, %v681
      %v866 = vpack.c.b16 %v686, %v682
      %v867 = vpack.c.b16 %v687, %v683
      %v868 = vpack.c.b16 %v688, %v684
      %v869 = vpack.c.b16 %v693, %v689
      %v870 = vpack.c.b16 %v694, %v690
      %v871 = vpack.c.b16 %v695, %v691
      %v872 = vpack.c.b16 %v696, %v692
      %v873 = vpack.c.b16 %v701, %v697
      %v874 = vpack.c.b16 %v702, %v698
      %v875 = vpack.c.b16 %v703, %v699
      %v876 = vpack.c.b16 %v704, %v700
      %v877 = vpack.c.b16 %v709, %v705
      %v878 = vpack.c.b16 %v710, %v706
      %v879 = vpack.c.b16 %v711, %v707
      %v880 = vpack.c.b16 %v712, %v708
      %v881 = vpack.c.b16 %v717, %v713
      %v882 = vpack.c.b16 %v718, %v714
      %v883 = vpack.c.b16 %v719, %v715
      %v884 = vpack.c.b16 %v720, %v716
      %v885 = vpack.c.b16 %v725, %v721
      %v886 = vpack.c.b16 %v726, %v722
      %v887 = vpack.c.b16 %v727, %v723
      %v888 = vpack.c.b16 %v728, %v724
      %v889 = vpack.c.b16 %v733, %v729
      %v890 = vpack.c.b16 %v734, %v730
      %v891 = vpack.c.b16 %v735, %v731
      %v892 = vpack.c.b16 %v736, %v732
      %v893 = vpack.c.b16 %v741, %v737
      %v894 = vpack.c.b16 %v742, %v738
      %v895 = vpack.c.b16 %v743, %v739
      %v896 = vpack.c.b16 %v744, %v740
      %v897 = vpack.c.b16 %v749, %v745
      %v898 = vpack.c.b16 %v750, %v746
      %v899 = vpack.c.b16 %v751, %v747
      %v900 = vpack.c.b16 %v752, %v748
      %v901 = vpack.c.b16 %v757, %v753
      %v902 = vpack.c.b16 %v758, %v754
      %v903 = vpack.c.b16 %v759, %v755
      %v904 = vpack.c.b16 %v760, %v756
      %v905 = vpack.c.b16 %v765, %v761
      %v906 = vpack.c.b16 %v766, %v762
      %v907 = vpack.c.b16 %v767, %v763
      %v908 = vpack.c.b16 %v768, %v764
      %v909 = vpack.c.b16 %v773, %v769
      %v910 = vpack.c.b16 %v774, %v770
      %v911 = vpack.c.b16 %v775, %v771
      %v912 = vpack.c.b16 %v776, %v772
      %v913 = vpack.c.b16 %v781, %v777
      %v914 = vpack.c.b16 %v782, %v778
      %v915 = vpack.c.b16 %v783, %v779
      %v916 = vpack.c.b16 %v784, %v780
      %v917 = vpack.c.b16 %v789, %v785
      %v918 = vpack.c.b16 %v790, %v786
      %v919 = vpack.c.b16 %v791, %v787
      %v920 = vpack.c.b16 %v792, %v788
      %v1113 = vunpack.c.l.b16 %v341
      %v1114 = vunpack.c.l.b16 %v342
      %v1115 = vunpack.c.l.b16 %v343
      %v1116 = vunpack.c.l.b16 %v344
      %v1117 = vunpack.c.l.b16 %v345
      %v1118 = vunpack.c.l.b16 %v346
      %v1119 = vunpack.c.l.b16 %v347
      %v1120 = vunpack.c.l.b16 %v348
      %v1121 = vunpack.c.l.b16 %v349
      %v1122 = vunpack.c.l.b16 %v350
      %v1123 = vunpack.c.l.b16 %v351
      %v1124 = vunpack.c.l.b16 %v352
      %v1125 = vunpack.c.l.b16 %v353
      %v1126 = vunpack.c.l.b16 %v354
      %v1127 = vunpack.c.l.b16 %v355
      %v1128 = vunpack.c.l.b16 %v356
      %v1129 = vunpack.c.l.b16 %v357
      %v1130 = vunpack.c.l.b16 %v358
      %v1131 = vunpack.c.l.b16 %v359
      %v1132 = vunpack.c.l.b16 %v360
      %v1133 = vunpack.c.l.b16 %v361
      %v1134 = vunpack.c.l.b16 %v362
      %v1135 = vunpack.c.l.b16 %v363
      %v1136 = vunpack.c.l.b16 %v364
      %v1137 = vunpack.c.l.b16 %v365
      %v1138 = vunpack.c.l.b16 %v366
      %v1139 = vunpack.c.l.b16 %v367
      %v1140 = vunpack.c.l.b16 %v368
      %v1141 = vunpack.c.l.b16 %v369
      %v1142 = vunpack.c.l.b16 %v370
      %v1143 = vunpack.c.l.b16 %v371
      %v1144 = vunpack.c.l.b16 %v372
      %v1145 = vunpack.c.l.b16 %v373
      %v1146 = vunpack.c.l.b16 %v374
      %v1147 = vunpack.c.l.b16 %v375
      %v1148 = vunpack.c.l.b16 %v376
      %v1149 = vunpack.c.l.b16 %v377
      %v1150 = vunpack.c.l.b16 %v378
      %v1151 = vunpack.c.l.b16 %v379
      %v1152 = vunpack.c.l.b16 %v380
      %v1153 = vunpack.c.l.b16 %v381
      %v1154 = vunpack.c.l.b16 %v382
      %v1155 = vunpack.c.l.b16 %v383
      %v1156 = vunpack.c.l.b16 %v384
      %v1157 = vunpack.c.l.b16 %v385
      %v1158 = vunpack.c.l.b16 %v386
      %v1159 = vunpack.c.l.b16 %v387
      %v1160 = vunpack.c.l.b16 %v388
      %v1161 = vunpack.c.l.b16 %v389
      %v1162 = vunpack.c.l.b16 %v390
      %v1163 = vunpack.c.l.b16 %v391
      %v1164 = vunpack.c.l.b16 %v392
      %v1165 = vunpack.c.l.b16 %v393
      %v1166 = vunpack.c.l.b16 %v394
      %v1167 = vunpack.c.l.b16 %v395
      %v1168 = vunpack.c.l.b16 %v396
      %v1169 = vunpack.c.l.b16 %v397
      %v1170 = vunpack.c.l.b16 %v398
      %v1171 = vunpack.c.l.b16 %v399
      %v1172 = vunpack.c.l.b16 %v400
      %v1173 = vunpack.c.l.b16 %v401
      %v1174 = vunpack.c.l.b16 %v402
      %v1175 = vunpack.c.l.b16 %v403
      %v1176 = vunpack.c.l.b16 %v404
      %v1177 = vpack.c.b16 %v1114, %v1113
      %v1178 = vpack.c.b16 %v1116, %v1115
      %v1179 = vpack.c.b16 %v1118, %v1117
      %v1180 = vpack.c.b16 %v1120, %v1119
      %v1181 = vpack.c.b16 %v1122, %v1121
      %v1182 = vpack.c.b16 %v1124, %v1123
      %v1183 = vpack.c.b16 %v1126, %v1125
      %v1184 = vpack.c.b16 %v1128, %v1127
      %v1185 = vpack.c.b16 %v1130, %v1129
      %v1186 = vpack.c.b16 %v1132, %v1131
      %v1187 = vpack.c.b16 %v1134, %v1133
      %v1188 = vpack.c.b16 %v1136, %v1135
      %v1189 = vpack.c.b16 %v1138, %v1137
      %v1190 = vpack.c.b16 %v1140, %v1139
      %v1191 = vpack.c.b16 %v1142, %v1141
      %v1192 = vpack.c.b16 %v1144, %v1143
      %v1193 = vpack.c.b16 %v1146, %v1145
      %v1194 = vpack.c.b16 %v1148, %v1147
      %v1195 = vpack.c.b16 %v1150, %v1149
      %v1196 = vpack.c.b16 %v1152, %v1151
      %v1197 = vpack.c.b16 %v1154, %v1153
      %v1198 = vpack.c.b16 %v1156, %v1155
      %v1199 = vpack.c.b16 %v1158, %v1157
      %v1200 = vpack.c.b16 %v1160, %v1159
      %v1201 = vpack.c.b16 %v1162, %v1161
      %v1202 = vpack.c.b16 %v1164, %v1163
      %v1203 = vpack.c.b16 %v1166, %v1165
      %v1204 = vpack.c.b16 %v1168, %v1167
      %v1205 = vpack.c.b16 %v1170, %v1169
      %v1206 = vpack.c.b16 %v1172, %v1171
      %v1207 = vpack.c.b16 %v1174, %v1173
      %v1208 = vpack.c.b16 %v1176, %v1175
      %1241 = vmatpush.bf16.msra.mxu0 %v1184
      %1242 = vmatpush.bf16.msra.mxu0 %v1183
      %1243 = vmatpush.bf16.msra.mxu0 %v1182
      %1244 = vmatpush.bf16.msra.mxu0 %v1181
      %1245 = vmatpush.bf16.msra.mxu0 %v1180
      %1246 = vmatpush.bf16.msra.mxu0 %v1179
      %1247 = vmatpush.bf16.msra.mxu0 %v1178
      %1248 = vmatpush.bf16.msra.mxu0 %v1177
      %1249 = vmatmul.bf16.gmra.mxu0 %v793
      %v1250 = vpop.f32.mrf.mxu0
      %v1251 = vadd.f32 %v407, %v1250
      %v1252 = vpop.f32.mrf.mxu0
      %v1253 = vadd.f32 %v407, %v1252
      %1254 = vmatmul.bf16.gmra.mxu0 %v797
      %v1255 = vpop.f32.mrf.mxu0
      %v1256 = vadd.f32 %v407, %v1255
      %v1257 = vpop.f32.mrf.mxu0
      %v1258 = vadd.f32 %v407, %v1257
      %1259 = vmatmul.bf16.gmra.mxu0 %v801
      %v1260 = vpop.f32.mrf.mxu0
      %v1261 = vadd.f32 %v407, %v1260
      %v1262 = vpop.f32.mrf.mxu0
      %v1263 = vadd.f32 %v407, %v1262
      %1264 = vmatmul.bf16.gmra.mxu0 %v805
      %v1265 = vpop.f32.mrf.mxu0
      %v1266 = vadd.f32 %v407, %v1265
      %v1267 = vpop.f32.mrf.mxu0
      %v1268 = vadd.f32 %v407, %v1267
      %1269 = vmatmul.bf16.gmra.mxu0 %v809
      %v1270 = vpop.f32.mrf.mxu0
      %v1271 = vadd.f32 %v407, %v1270
      %v1272 = vpop.f32.mrf.mxu0
      %v1273 = vadd.f32 %v407, %v1272
      %1274 = vmatmul.bf16.gmra.mxu0 %v813
      %v1275 = vpop.f32.mrf.mxu0
      %v1276 = vadd.f32 %v407, %v1275
      %v1277 = vpop.f32.mrf.mxu0
      %v1278 = vadd.f32 %v407, %v1277
      %1279 = vmatmul.bf16.gmra.mxu0 %v817
      %v1280 = vpop.f32.mrf.mxu0
      %v1281 = vadd.f32 %v407, %v1280
      %v1282 = vpop.f32.mrf.mxu0
      %v1283 = vadd.f32 %v407, %v1282
      %1284 = vmatmul.bf16.gmra.mxu0 %v821
      %v1285 = vpop.f32.mrf.mxu0
      %v1286 = vadd.f32 %v407, %v1285
      %v1287 = vpop.f32.mrf.mxu0
      %v1288 = vadd.f32 %v407, %v1287
      %1289 = vmatmul.bf16.gmra.mxu0 %v825
      %v1290 = vpop.f32.mrf.mxu0
      %v1291 = vadd.f32 %v407, %v1290
      %v1292 = vpop.f32.mrf.mxu0
      %v1293 = vadd.f32 %v407, %v1292
      %1294 = vmatmul.bf16.gmra.mxu0 %v829
      %v1295 = vpop.f32.mrf.mxu0
      %v1296 = vadd.f32 %v407, %v1295
      %v1297 = vpop.f32.mrf.mxu0
      %v1298 = vadd.f32 %v407, %v1297
      %1299 = vmatmul.bf16.gmra.mxu0 %v833
      %v1300 = vpop.f32.mrf.mxu0
      %v1301 = vadd.f32 %v407, %v1300
      %v1302 = vpop.f32.mrf.mxu0
      %v1303 = vadd.f32 %v407, %v1302
      %1304 = vmatmul.bf16.gmra.mxu0 %v837
      %v1305 = vpop.f32.mrf.mxu0
      %v1306 = vadd.f32 %v407, %v1305
      %v1307 = vpop.f32.mrf.mxu0
      %v1308 = vadd.f32 %v407, %v1307
      %1309 = vmatmul.bf16.gmra.mxu0 %v841
      %v1310 = vpop.f32.mrf.mxu0
      %v1311 = vadd.f32 %v407, %v1310
      %v1312 = vpop.f32.mrf.mxu0
      %v1313 = vadd.f32 %v407, %v1312
      %1314 = vmatmul.bf16.gmra.mxu0 %v845
      %v1315 = vpop.f32.mrf.mxu0
      %v1316 = vadd.f32 %v407, %v1315
      %v1317 = vpop.f32.mrf.mxu0
      %v1318 = vadd.f32 %v407, %v1317
      %1319 = vmatmul.bf16.gmra.mxu0 %v849
      %v1320 = vpop.f32.mrf.mxu0
      %v1321 = vadd.f32 %v407, %v1320
      %v1322 = vpop.f32.mrf.mxu0
      %v1323 = vadd.f32 %v407, %v1322
      %1324 = vmatmul.bf16.gmra.mxu0 %v853
      %v1325 = vpop.f32.mrf.mxu0
      %v1326 = vadd.f32 %v407, %v1325
      %v1327 = vpop.f32.mrf.mxu0
      %v1328 = vadd.f32 %v407, %v1327
      %1329 = vmatmul.bf16.gmra.mxu0 %v857
      %v1330 = vpop.f32.mrf.mxu0
      %v1331 = vadd.f32 %v407, %v1330
      %v1332 = vpop.f32.mrf.mxu0
      %v1333 = vadd.f32 %v407, %v1332
      %1334 = vmatmul.bf16.gmra.mxu0 %v861
      %v1335 = vpop.f32.mrf.mxu0
      %v1336 = vadd.f32 %v407, %v1335
      %v1337 = vpop.f32.mrf.mxu0
      %v1338 = vadd.f32 %v407, %v1337
      %1339 = vmatmul.bf16.gmra.mxu0 %v865
      %v1340 = vpop.f32.mrf.mxu0
      %v1341 = vadd.f32 %v407, %v1340
      %v1342 = vpop.f32.mrf.mxu0
      %v1343 = vadd.f32 %v407, %v1342
      %1344 = vmatmul.bf16.gmra.mxu0 %v869
      %v1345 = vpop.f32.mrf.mxu0
      %v1346 = vadd.f32 %v407, %v1345
      %v1347 = vpop.f32.mrf.mxu0
      %v1348 = vadd.f32 %v407, %v1347
      %1349 = vmatmul.bf16.gmra.mxu0 %v873
      %v1350 = vpop.f32.mrf.mxu0
      %v1351 = vadd.f32 %v407, %v1350
      %v1352 = vpop.f32.mrf.mxu0
      %v1353 = vadd.f32 %v407, %v1352
      %1354 = vmatmul.bf16.gmra.mxu0 %v877
      %v1355 = vpop.f32.mrf.mxu0
      %v1356 = vadd.f32 %v407, %v1355
      %v1357 = vpop.f32.mrf.mxu0
      %v1358 = vadd.f32 %v407, %v1357
      %1359 = vmatmul.bf16.gmra.mxu0 %v881
      %v1360 = vpop.f32.mrf.mxu0
      %v1361 = vadd.f32 %v407, %v1360
      %v1362 = vpop.f32.mrf.mxu0
      %v1363 = vadd.f32 %v407, %v1362
      %1364 = vmatmul.bf16.gmra.mxu0 %v885
      %v1365 = vpop.f32.mrf.mxu0
      %v1366 = vadd.f32 %v407, %v1365
      %v1367 = vpop.f32.mrf.mxu0
      %v1368 = vadd.f32 %v407, %v1367
      %1369 = vmatmul.bf16.gmra.mxu0 %v889
      %v1370 = vpop.f32.mrf.mxu0
      %v1371 = vadd.f32 %v407, %v1370
      %v1372 = vpop.f32.mrf.mxu0
      %v1373 = vadd.f32 %v407, %v1372
      %1374 = vmatmul.bf16.gmra.mxu0 %v893
      %v1375 = vpop.f32.mrf.mxu0
      %v1376 = vadd.f32 %v407, %v1375
      %v1377 = vpop.f32.mrf.mxu0
      %v1378 = vadd.f32 %v407, %v1377
      %1379 = vmatmul.bf16.gmra.mxu0 %v897
      %v1380 = vpop.f32.mrf.mxu0
      %v1381 = vadd.f32 %v407, %v1380
      %v1382 = vpop.f32.mrf.mxu0
      %v1383 = vadd.f32 %v407, %v1382
      %1384 = vmatmul.bf16.gmra.mxu0 %v901
      %v1385 = vpop.f32.mrf.mxu0
      %v1386 = vadd.f32 %v407, %v1385
      %v1387 = vpop.f32.mrf.mxu0
      %v1388 = vadd.f32 %v407, %v1387
      %1389 = vmatmul.bf16.gmra.mxu0 %v905
      %v1390 = vpop.f32.mrf.mxu0
      %v1391 = vadd.f32 %v407, %v1390
      %v1392 = vpop.f32.mrf.mxu0
      %v1393 = vadd.f32 %v407, %v1392
      %1394 = vmatmul.bf16.gmra.mxu0 %v909
      %v1395 = vpop.f32.mrf.mxu0
      %v1396 = vadd.f32 %v407, %v1395
      %v1397 = vpop.f32.mrf.mxu0
      %v1398 = vadd.f32 %v407, %v1397
      %1399 = vmatmul.bf16.gmra.mxu0 %v913
      %v1400 = vpop.f32.mrf.mxu0
      %v1401 = vadd.f32 %v407, %v1400
      %v1402 = vpop.f32.mrf.mxu0
      %v1403 = vadd.f32 %v407, %v1402
      %1404 = vmatmul.bf16.gmra.mxu0 %v917
      %v1405 = vpop.f32.mrf.mxu0
      %v1406 = vadd.f32 %v407, %v1405
      %v1407 = vpop.f32.mrf.mxu0
      %v1408 = vadd.f32 %v407, %v1407
      %1409 = vdwg.mxu0
      %1410 = vmatpush.bf16.msra.mxu0 %v1192
      %1411 = vmatpush.bf16.msra.mxu0 %v1191
      %1412 = vmatpush.bf16.msra.mxu0 %v1190
      %1413 = vmatpush.bf16.msra.mxu0 %v1189
      %1414 = vmatpush.bf16.msra.mxu0 %v1188
      %1415 = vmatpush.bf16.msra.mxu0 %v1187
      %1416 = vmatpush.bf16.msra.mxu0 %v1186
      %1417 = vmatpush.bf16.msra.mxu0 %v1185
      %1418 = vmatmul.bf16.gmra.mxu0 %v794
      %v1419 = vpop.f32.mrf.mxu0
      %v1420 = vadd.f32 %v1251, %v1419
      %v1421 = vpop.f32.mrf.mxu0
      %v1422 = vadd.f32 %v1253, %v1421
      %1423 = vmatmul.bf16.gmra.mxu0 %v798
      %v1424 = vpop.f32.mrf.mxu0
      %v1425 = vadd.f32 %v1256, %v1424
      %v1426 = vpop.f32.mrf.mxu0
      %v1427 = vadd.f32 %v1258, %v1426
      %1428 = vmatmul.bf16.gmra.mxu0 %v802
      %v1429 = vpop.f32.mrf.mxu0
      %v1430 = vadd.f32 %v1261, %v1429
      %v1431 = vpop.f32.mrf.mxu0
      %v1432 = vadd.f32 %v1263, %v1431
      %1433 = vmatmul.bf16.gmra.mxu0 %v806
      %v1434 = vpop.f32.mrf.mxu0
      %v1435 = vadd.f32 %v1266, %v1434
      %v1436 = vpop.f32.mrf.mxu0
      %v1437 = vadd.f32 %v1268, %v1436
      %1438 = vmatmul.bf16.gmra.mxu0 %v810
      %v1439 = vpop.f32.mrf.mxu0
      %v1440 = vadd.f32 %v1271, %v1439
      %v1441 = vpop.f32.mrf.mxu0
      %v1442 = vadd.f32 %v1273, %v1441
      %1443 = vmatmul.bf16.gmra.mxu0 %v814
      %v1444 = vpop.f32.mrf.mxu0
      %v1445 = vadd.f32 %v1276, %v1444
      %v1446 = vpop.f32.mrf.mxu0
      %v1447 = vadd.f32 %v1278, %v1446
      %1448 = vmatmul.bf16.gmra.mxu0 %v818
      %v1449 = vpop.f32.mrf.mxu0
      %v1450 = vadd.f32 %v1281, %v1449
      %v1451 = vpop.f32.mrf.mxu0
      %v1452 = vadd.f32 %v1283, %v1451
      %1453 = vmatmul.bf16.gmra.mxu0 %v822
      %v1454 = vpop.f32.mrf.mxu0
      %v1455 = vadd.f32 %v1286, %v1454
      %v1456 = vpop.f32.mrf.mxu0
      %v1457 = vadd.f32 %v1288, %v1456
      %1458 = vmatmul.bf16.gmra.mxu0 %v826
      %v1459 = vpop.f32.mrf.mxu0
      %v1460 = vadd.f32 %v1291, %v1459
      %v1461 = vpop.f32.mrf.mxu0
      %v1462 = vadd.f32 %v1293, %v1461
      %1463 = vmatmul.bf16.gmra.mxu0 %v830
      %v1464 = vpop.f32.mrf.mxu0
      %v1465 = vadd.f32 %v1296, %v1464
      %v1466 = vpop.f32.mrf.mxu0
      %v1467 = vadd.f32 %v1298, %v1466
      %1468 = vmatmul.bf16.gmra.mxu0 %v834
      %v1469 = vpop.f32.mrf.mxu0
      %v1470 = vadd.f32 %v1301, %v1469
      %v1471 = vpop.f32.mrf.mxu0
      %v1472 = vadd.f32 %v1303, %v1471
      %1473 = vmatmul.bf16.gmra.mxu0 %v838
      %v1474 = vpop.f32.mrf.mxu0
      %v1475 = vadd.f32 %v1306, %v1474
      %v1476 = vpop.f32.mrf.mxu0
      %v1477 = vadd.f32 %v1308, %v1476
      %1478 = vmatmul.bf16.gmra.mxu0 %v842
      %v1479 = vpop.f32.mrf.mxu0
      %v1480 = vadd.f32 %v1311, %v1479
      %v1481 = vpop.f32.mrf.mxu0
      %v1482 = vadd.f32 %v1313, %v1481
      %1483 = vmatmul.bf16.gmra.mxu0 %v846
      %v1484 = vpop.f32.mrf.mxu0
      %v1485 = vadd.f32 %v1316, %v1484
      %v1486 = vpop.f32.mrf.mxu0
      %v1487 = vadd.f32 %v1318, %v1486
      %1488 = vmatmul.bf16.gmra.mxu0 %v850
      %v1489 = vpop.f32.mrf.mxu0
      %v1490 = vadd.f32 %v1321, %v1489
      %v1491 = vpop.f32.mrf.mxu0
      %v1492 = vadd.f32 %v1323, %v1491
      %1493 = vmatmul.bf16.gmra.mxu0 %v854
      %v1494 = vpop.f32.mrf.mxu0
      %v1495 = vadd.f32 %v1326, %v1494
      %v1496 = vpop.f32.mrf.mxu0
      %v1497 = vadd.f32 %v1328, %v1496
      %1498 = vmatmul.bf16.gmra.mxu0 %v858
      %v1499 = vpop.f32.mrf.mxu0
      %v1500 = vadd.f32 %v1331, %v1499
      %v1501 = vpop.f32.mrf.mxu0
      %v1502 = vadd.f32 %v1333, %v1501
      %1503 = vmatmul.bf16.gmra.mxu0 %v862
      %v1504 = vpop.f32.mrf.mxu0
      %v1505 = vadd.f32 %v1336, %v1504
      %v1506 = vpop.f32.mrf.mxu0
      %v1507 = vadd.f32 %v1338, %v1506
      %1508 = vmatmul.bf16.gmra.mxu0 %v866
      %v1509 = vpop.f32.mrf.mxu0
      %v1510 = vadd.f32 %v1341, %v1509
      %v1511 = vpop.f32.mrf.mxu0
      %v1512 = vadd.f32 %v1343, %v1511
      %1513 = vmatmul.bf16.gmra.mxu0 %v870
      %v1514 = vpop.f32.mrf.mxu0
      %v1515 = vadd.f32 %v1346, %v1514
      %v1516 = vpop.f32.mrf.mxu0
      %v1517 = vadd.f32 %v1348, %v1516
      %1518 = vmatmul.bf16.gmra.mxu0 %v874
      %v1519 = vpop.f32.mrf.mxu0
      %v1520 = vadd.f32 %v1351, %v1519
      %v1521 = vpop.f32.mrf.mxu0
      %v1522 = vadd.f32 %v1353, %v1521
      %1523 = vmatmul.bf16.gmra.mxu0 %v878
      %v1524 = vpop.f32.mrf.mxu0
      %v1525 = vadd.f32 %v1356, %v1524
      %v1526 = vpop.f32.mrf.mxu0
      %v1527 = vadd.f32 %v1358, %v1526
      %1528 = vmatmul.bf16.gmra.mxu0 %v882
      %v1529 = vpop.f32.mrf.mxu0
      %v1530 = vadd.f32 %v1361, %v1529
      %v1531 = vpop.f32.mrf.mxu0
      %v1532 = vadd.f32 %v1363, %v1531
      %1533 = vmatmul.bf16.gmra.mxu0 %v886
      %v1534 = vpop.f32.mrf.mxu0
      %v1535 = vadd.f32 %v1366, %v1534
      %v1536 = vpop.f32.mrf.mxu0
      %v1537 = vadd.f32 %v1368, %v1536
      %1538 = vmatmul.bf16.gmra.mxu0 %v890
      %v1539 = vpop.f32.mrf.mxu0
      %v1540 = vadd.f32 %v1371, %v1539
      %v1541 = vpop.f32.mrf.mxu0
      %v1542 = vadd.f32 %v1373, %v1541
      %1543 = vmatmul.bf16.gmra.mxu0 %v894
      %v1544 = vpop.f32.mrf.mxu0
      %v1545 = vadd.f32 %v1376, %v1544
      %v1546 = vpop.f32.mrf.mxu0
      %v1547 = vadd.f32 %v1378, %v1546
      %1548 = vmatmul.bf16.gmra.mxu0 %v898
      %v1549 = vpop.f32.mrf.mxu0
      %v1550 = vadd.f32 %v1381, %v1549
      %v1551 = vpop.f32.mrf.mxu0
      %v1552 = vadd.f32 %v1383, %v1551
      %1553 = vmatmul.bf16.gmra.mxu0 %v902
      %v1554 = vpop.f32.mrf.mxu0
      %v1555 = vadd.f32 %v1386, %v1554
      %v1556 = vpop.f32.mrf.mxu0
      %v1557 = vadd.f32 %v1388, %v1556
      %1558 = vmatmul.bf16.gmra.mxu0 %v906
      %v1559 = vpop.f32.mrf.mxu0
      %v1560 = vadd.f32 %v1391, %v1559
      %v1561 = vpop.f32.mrf.mxu0
      %v1562 = vadd.f32 %v1393, %v1561
      %1563 = vmatmul.bf16.gmra.mxu0 %v910
      %v1564 = vpop.f32.mrf.mxu0
      %v1565 = vadd.f32 %v1396, %v1564
      %v1566 = vpop.f32.mrf.mxu0
      %v1567 = vadd.f32 %v1398, %v1566
      %1568 = vmatmul.bf16.gmra.mxu0 %v914
      %v1569 = vpop.f32.mrf.mxu0
      %v1570 = vadd.f32 %v1401, %v1569
      %v1571 = vpop.f32.mrf.mxu0
      %v1572 = vadd.f32 %v1403, %v1571
      %1573 = vmatmul.bf16.gmra.mxu0 %v918
      %v1574 = vpop.f32.mrf.mxu0
      %v1575 = vadd.f32 %v1406, %v1574
      %v1576 = vpop.f32.mrf.mxu0
      %v1577 = vadd.f32 %v1408, %v1576
      %1578 = vdwg.mxu0
      %1579 = vmatpush.bf16.msra.mxu0 %v1200
      %1580 = vmatpush.bf16.msra.mxu0 %v1199
      %1581 = vmatpush.bf16.msra.mxu0 %v1198
      %1582 = vmatpush.bf16.msra.mxu0 %v1197
      %1583 = vmatpush.bf16.msra.mxu0 %v1196
      %1584 = vmatpush.bf16.msra.mxu0 %v1195
      %1585 = vmatpush.bf16.msra.mxu0 %v1194
      %1586 = vmatpush.bf16.msra.mxu0 %v1193
      %1587 = vmatmul.bf16.gmra.mxu0 %v795
      %v1588 = vpop.f32.mrf.mxu0
      %v1589 = vadd.f32 %v1420, %v1588
      %v1590 = vpop.f32.mrf.mxu0
      %v1591 = vadd.f32 %v1422, %v1590
      %1592 = vmatmul.bf16.gmra.mxu0 %v799
      %v1593 = vpop.f32.mrf.mxu0
      %v1594 = vadd.f32 %v1425, %v1593
      %v1595 = vpop.f32.mrf.mxu0
      %v1596 = vadd.f32 %v1427, %v1595
      %1597 = vmatmul.bf16.gmra.mxu0 %v803
      %v1598 = vpop.f32.mrf.mxu0
      %v1599 = vadd.f32 %v1430, %v1598
      %v1600 = vpop.f32.mrf.mxu0
      %v1601 = vadd.f32 %v1432, %v1600
      %1602 = vmatmul.bf16.gmra.mxu0 %v807
      %v1603 = vpop.f32.mrf.mxu0
      %v1604 = vadd.f32 %v1435, %v1603
      %v1605 = vpop.f32.mrf.mxu0
      %v1606 = vadd.f32 %v1437, %v1605
      %1607 = vmatmul.bf16.gmra.mxu0 %v811
      %v1608 = vpop.f32.mrf.mxu0
      %v1609 = vadd.f32 %v1440, %v1608
      %v1610 = vpop.f32.mrf.mxu0
      %v1611 = vadd.f32 %v1442, %v1610
      %1612 = vmatmul.bf16.gmra.mxu0 %v815
      %v1613 = vpop.f32.mrf.mxu0
      %v1614 = vadd.f32 %v1445, %v1613
      %v1615 = vpop.f32.mrf.mxu0
      %v1616 = vadd.f32 %v1447, %v1615
      %1617 = vmatmul.bf16.gmra.mxu0 %v819
      %v1618 = vpop.f32.mrf.mxu0
      %v1619 = vadd.f32 %v1450, %v1618
      %v1620 = vpop.f32.mrf.mxu0
      %v1621 = vadd.f32 %v1452, %v1620
      %1622 = vmatmul.bf16.gmra.mxu0 %v823
      %v1623 = vpop.f32.mrf.mxu0
      %v1624 = vadd.f32 %v1455, %v1623
      %v1625 = vpop.f32.mrf.mxu0
      %v1626 = vadd.f32 %v1457, %v1625
      %1627 = vmatmul.bf16.gmra.mxu0 %v827
      %v1628 = vpop.f32.mrf.mxu0
      %v1629 = vadd.f32 %v1460, %v1628
      %v1630 = vpop.f32.mrf.mxu0
      %v1631 = vadd.f32 %v1462, %v1630
      %1632 = vmatmul.bf16.gmra.mxu0 %v831
      %v1633 = vpop.f32.mrf.mxu0
      %v1634 = vadd.f32 %v1465, %v1633
      %v1635 = vpop.f32.mrf.mxu0
      %v1636 = vadd.f32 %v1467, %v1635
      %1637 = vmatmul.bf16.gmra.mxu0 %v835
      %v1638 = vpop.f32.mrf.mxu0
      %v1639 = vadd.f32 %v1470, %v1638
      %v1640 = vpop.f32.mrf.mxu0
      %v1641 = vadd.f32 %v1472, %v1640
      %1642 = vmatmul.bf16.gmra.mxu0 %v839
      %v1643 = vpop.f32.mrf.mxu0
      %v1644 = vadd.f32 %v1475, %v1643
      %v1645 = vpop.f32.mrf.mxu0
      %v1646 = vadd.f32 %v1477, %v1645
      %1647 = vmatmul.bf16.gmra.mxu0 %v843
      %v1648 = vpop.f32.mrf.mxu0
      %v1649 = vadd.f32 %v1480, %v1648
      %v1650 = vpop.f32.mrf.mxu0
      %v1651 = vadd.f32 %v1482, %v1650
      %1652 = vmatmul.bf16.gmra.mxu0 %v847
      %v1653 = vpop.f32.mrf.mxu0
      %v1654 = vadd.f32 %v1485, %v1653
      %v1655 = vpop.f32.mrf.mxu0
      %v1656 = vadd.f32 %v1487, %v1655
      %1657 = vmatmul.bf16.gmra.mxu0 %v851
      %v1658 = vpop.f32.mrf.mxu0
      %v1659 = vadd.f32 %v1490, %v1658
      %v1660 = vpop.f32.mrf.mxu0
      %v1661 = vadd.f32 %v1492, %v1660
      %1662 = vmatmul.bf16.gmra.mxu0 %v855
      %v1663 = vpop.f32.mrf.mxu0
      %v1664 = vadd.f32 %v1495, %v1663
      %v1665 = vpop.f32.mrf.mxu0
      %v1666 = vadd.f32 %v1497, %v1665
      %1667 = vmatmul.bf16.gmra.mxu0 %v859
      %v1668 = vpop.f32.mrf.mxu0
      %v1669 = vadd.f32 %v1500, %v1668
      %v1670 = vpop.f32.mrf.mxu0
      %v1671 = vadd.f32 %v1502, %v1670
      %1672 = vmatmul.bf16.gmra.mxu0 %v863
      %v1673 = vpop.f32.mrf.mxu0
      %v1674 = vadd.f32 %v1505, %v1673
      %v1675 = vpop.f32.mrf.mxu0
      %v1676 = vadd.f32 %v1507, %v1675
      %1677 = vmatmul.bf16.gmra.mxu0 %v867
      %v1678 = vpop.f32.mrf.mxu0
      %v1679 = vadd.f32 %v1510, %v1678
      %v1680 = vpop.f32.mrf.mxu0
      %v1681 = vadd.f32 %v1512, %v1680
      %1682 = vmatmul.bf16.gmra.mxu0 %v871
      %v1683 = vpop.f32.mrf.mxu0
      %v1684 = vadd.f32 %v1515, %v1683
      %v1685 = vpop.f32.mrf.mxu0
      %v1686 = vadd.f32 %v1517, %v1685
      %1687 = vmatmul.bf16.gmra.mxu0 %v875
      %v1688 = vpop.f32.mrf.mxu0
      %v1689 = vadd.f32 %v1520, %v1688
      %v1690 = vpop.f32.mrf.mxu0
      %v1691 = vadd.f32 %v1522, %v1690
      %1692 = vmatmul.bf16.gmra.mxu0 %v879
      %v1693 = vpop.f32.mrf.mxu0
      %v1694 = vadd.f32 %v1525, %v1693
      %v1695 = vpop.f32.mrf.mxu0
      %v1696 = vadd.f32 %v1527, %v1695
      %1697 = vmatmul.bf16.gmra.mxu0 %v883
      %v1698 = vpop.f32.mrf.mxu0
      %v1699 = vadd.f32 %v1530, %v1698
      %v1700 = vpop.f32.mrf.mxu0
      %v1701 = vadd.f32 %v1532, %v1700
      %1702 = vmatmul.bf16.gmra.mxu0 %v887
      %v1703 = vpop.f32.mrf.mxu0
      %v1704 = vadd.f32 %v1535, %v1703
      %v1705 = vpop.f32.mrf.mxu0
      %v1706 = vadd.f32 %v1537, %v1705
      %1707 = vmatmul.bf16.gmra.mxu0 %v891
      %v1708 = vpop.f32.mrf.mxu0
      %v1709 = vadd.f32 %v1540, %v1708
      %v1710 = vpop.f32.mrf.mxu0
      %v1711 = vadd.f32 %v1542, %v1710
      %1712 = vmatmul.bf16.gmra.mxu0 %v895
      %v1713 = vpop.f32.mrf.mxu0
      %v1714 = vadd.f32 %v1545, %v1713
      %v1715 = vpop.f32.mrf.mxu0
      %v1716 = vadd.f32 %v1547, %v1715
      %1717 = vmatmul.bf16.gmra.mxu0 %v899
      %v1718 = vpop.f32.mrf.mxu0
      %v1719 = vadd.f32 %v1550, %v1718
      %v1720 = vpop.f32.mrf.mxu0
      %v1721 = vadd.f32 %v1552, %v1720
      %1722 = vmatmul.bf16.gmra.mxu0 %v903
      %v1723 = vpop.f32.mrf.mxu0
      %v1724 = vadd.f32 %v1555, %v1723
      %v1725 = vpop.f32.mrf.mxu0
      %v1726 = vadd.f32 %v1557, %v1725
      %1727 = vmatmul.bf16.gmra.mxu0 %v907
      %v1728 = vpop.f32.mrf.mxu0
      %v1729 = vadd.f32 %v1560, %v1728
      %v1730 = vpop.f32.mrf.mxu0
      %v1731 = vadd.f32 %v1562, %v1730
      %1732 = vmatmul.bf16.gmra.mxu0 %v911
      %v1733 = vpop.f32.mrf.mxu0
      %v1734 = vadd.f32 %v1565, %v1733
      %v1735 = vpop.f32.mrf.mxu0
      %v1736 = vadd.f32 %v1567, %v1735
      %1737 = vmatmul.bf16.gmra.mxu0 %v915
      %v1738 = vpop.f32.mrf.mxu0
      %v1739 = vadd.f32 %v1570, %v1738
      %v1740 = vpop.f32.mrf.mxu0
      %v1741 = vadd.f32 %v1572, %v1740
      %1742 = vmatmul.bf16.gmra.mxu0 %v919
      %v1743 = vpop.f32.mrf.mxu0
      %v1744 = vadd.f32 %v1575, %v1743
      %v1745 = vpop.f32.mrf.mxu0
      %v1746 = vadd.f32 %v1577, %v1745
      %1747 = vdwg.mxu0
      %1748 = vmatpush.bf16.msra.mxu0 %v1208
      %1749 = vmatpush.bf16.msra.mxu0 %v1207
      %1750 = vmatpush.bf16.msra.mxu0 %v1206
      %1751 = vmatpush.bf16.msra.mxu0 %v1205
      %1752 = vmatpush.bf16.msra.mxu0 %v1204
      %1753 = vmatpush.bf16.msra.mxu0 %v1203
      %1754 = vmatpush.bf16.msra.mxu0 %v1202
      %1755 = vmatpush.bf16.msra.mxu0 %v1201
      %1756 = vmatmul.bf16.gmra.mxu0 %v796
      %v1757 = vpop.f32.mrf.mxu0
      %v1758 = vadd.f32 %v1589, %v1757
      %v1759 = vpop.f32.mrf.mxu0
      %v1760 = vadd.f32 %v1591, %v1759
      %1761 = vmatmul.bf16.gmra.mxu0 %v800
      %v1762 = vpop.f32.mrf.mxu0
      %v1763 = vadd.f32 %v1594, %v1762
      %v1764 = vpop.f32.mrf.mxu0
      %v1765 = vadd.f32 %v1596, %v1764
      %1766 = vmatmul.bf16.gmra.mxu0 %v804
      %v1767 = vpop.f32.mrf.mxu0
      %v1768 = vadd.f32 %v1599, %v1767
      %v1769 = vpop.f32.mrf.mxu0
      %v1770 = vadd.f32 %v1601, %v1769
      %1771 = vmatmul.bf16.gmra.mxu0 %v808
      %v1772 = vpop.f32.mrf.mxu0
      %v1773 = vadd.f32 %v1604, %v1772
      %v1774 = vpop.f32.mrf.mxu0
      %v1775 = vadd.f32 %v1606, %v1774
      %1776 = vmatmul.bf16.gmra.mxu0 %v812
      %v1777 = vpop.f32.mrf.mxu0
      %v1778 = vadd.f32 %v1609, %v1777
      %v1779 = vpop.f32.mrf.mxu0
      %v1780 = vadd.f32 %v1611, %v1779
      %1781 = vmatmul.bf16.gmra.mxu0 %v816
      %v1782 = vpop.f32.mrf.mxu0
      %v1783 = vadd.f32 %v1614, %v1782
      %v1784 = vpop.f32.mrf.mxu0
      %v1785 = vadd.f32 %v1616, %v1784
      %1786 = vmatmul.bf16.gmra.mxu0 %v820
      %v1787 = vpop.f32.mrf.mxu0
      %v1788 = vadd.f32 %v1619, %v1787
      %v1789 = vpop.f32.mrf.mxu0
      %v1790 = vadd.f32 %v1621, %v1789
      %1791 = vmatmul.bf16.gmra.mxu0 %v824
      %v1792 = vpop.f32.mrf.mxu0
      %v1793 = vadd.f32 %v1624, %v1792
      %v1794 = vpop.f32.mrf.mxu0
      %v1795 = vadd.f32 %v1626, %v1794
      %1796 = vmatmul.bf16.gmra.mxu0 %v828
      %v1797 = vpop.f32.mrf.mxu0
      %v1798 = vadd.f32 %v1629, %v1797
      %v1799 = vpop.f32.mrf.mxu0
      %v1800 = vadd.f32 %v1631, %v1799
      %1801 = vmatmul.bf16.gmra.mxu0 %v832
      %v1802 = vpop.f32.mrf.mxu0
      %v1803 = vadd.f32 %v1634, %v1802
      %v1804 = vpop.f32.mrf.mxu0
      %v1805 = vadd.f32 %v1636, %v1804
      %1806 = vmatmul.bf16.gmra.mxu0 %v836
      %v1807 = vpop.f32.mrf.mxu0
      %v1808 = vadd.f32 %v1639, %v1807
      %v1809 = vpop.f32.mrf.mxu0
      %v1810 = vadd.f32 %v1641, %v1809
      %1811 = vmatmul.bf16.gmra.mxu0 %v840
      %v1812 = vpop.f32.mrf.mxu0
      %v1813 = vadd.f32 %v1644, %v1812
      %v1814 = vpop.f32.mrf.mxu0
      %v1815 = vadd.f32 %v1646, %v1814
      %1816 = vmatmul.bf16.gmra.mxu0 %v844
      %v1817 = vpop.f32.mrf.mxu0
      %v1818 = vadd.f32 %v1649, %v1817
      %v1819 = vpop.f32.mrf.mxu0
      %v1820 = vadd.f32 %v1651, %v1819
      %1821 = vmatmul.bf16.gmra.mxu0 %v848
      %v1822 = vpop.f32.mrf.mxu0
      %v1823 = vadd.f32 %v1654, %v1822
      %v1824 = vpop.f32.mrf.mxu0
      %v1825 = vadd.f32 %v1656, %v1824
      %1826 = vmatmul.bf16.gmra.mxu0 %v852
      %v1827 = vpop.f32.mrf.mxu0
      %v1828 = vadd.f32 %v1659, %v1827
      %v1829 = vpop.f32.mrf.mxu0
      %v1830 = vadd.f32 %v1661, %v1829
      %1831 = vmatmul.bf16.gmra.mxu0 %v856
      %v1832 = vpop.f32.mrf.mxu0
      %v1833 = vadd.f32 %v1664, %v1832
      %v1834 = vpop.f32.mrf.mxu0
      %v1835 = vadd.f32 %v1666, %v1834
      %1836 = vmatmul.bf16.gmra.mxu0 %v860
      %v1837 = vpop.f32.mrf.mxu0
      %v1838 = vadd.f32 %v1669, %v1837
      %v1839 = vpop.f32.mrf.mxu0
      %v1840 = vadd.f32 %v1671, %v1839
      %1841 = vmatmul.bf16.gmra.mxu0 %v864
      %v1842 = vpop.f32.mrf.mxu0
      %v1843 = vadd.f32 %v1674, %v1842
      %v1844 = vpop.f32.mrf.mxu0
      %v1845 = vadd.f32 %v1676, %v1844
      %1846 = vmatmul.bf16.gmra.mxu0 %v868
      %v1847 = vpop.f32.mrf.mxu0
      %v1848 = vadd.f32 %v1679, %v1847
      %v1849 = vpop.f32.mrf.mxu0
      %v1850 = vadd.f32 %v1681, %v1849
      %1851 = vmatmul.bf16.gmra.mxu0 %v872
      %v1852 = vpop.f32.mrf.mxu0
      %v1853 = vadd.f32 %v1684, %v1852
      %v1854 = vpop.f32.mrf.mxu0
      %v1855 = vadd.f32 %v1686, %v1854
      %1856 = vmatmul.bf16.gmra.mxu0 %v876
      %v1857 = vpop.f32.mrf.mxu0
      %v1858 = vadd.f32 %v1689, %v1857
      %v1859 = vpop.f32.mrf.mxu0
      %v1860 = vadd.f32 %v1691, %v1859
      %1861 = vmatmul.bf16.gmra.mxu0 %v880
      %v1862 = vpop.f32.mrf.mxu0
      %v1863 = vadd.f32 %v1694, %v1862
      %v1864 = vpop.f32.mrf.mxu0
      %v1865 = vadd.f32 %v1696, %v1864
      %1866 = vmatmul.bf16.gmra.mxu0 %v884
      %v1867 = vpop.f32.mrf.mxu0
      %v1868 = vadd.f32 %v1699, %v1867
      %v1869 = vpop.f32.mrf.mxu0
      %v1870 = vadd.f32 %v1701, %v1869
      %1871 = vmatmul.bf16.gmra.mxu0 %v888
      %v1872 = vpop.f32.mrf.mxu0
      %v1873 = vadd.f32 %v1704, %v1872
      %v1874 = vpop.f32.mrf.mxu0
      %v1875 = vadd.f32 %v1706, %v1874
      %1876 = vmatmul.bf16.gmra.mxu0 %v892
      %v1877 = vpop.f32.mrf.mxu0
      %v1878 = vadd.f32 %v1709, %v1877
      %v1879 = vpop.f32.mrf.mxu0
      %v1880 = vadd.f32 %v1711, %v1879
      %1881 = vmatmul.bf16.gmra.mxu0 %v896
      %v1882 = vpop.f32.mrf.mxu0
      %v1883 = vadd.f32 %v1714, %v1882
      %v1884 = vpop.f32.mrf.mxu0
      %v1885 = vadd.f32 %v1716, %v1884
      %1886 = vmatmul.bf16.gmra.mxu0 %v900
      %v1887 = vpop.f32.mrf.mxu0
      %v1888 = vadd.f32 %v1719, %v1887
      %v1889 = vpop.f32.mrf.mxu0
      %v1890 = vadd.f32 %v1721, %v1889
      %1891 = vmatmul.bf16.gmra.mxu0 %v904
      %v1892 = vpop.f32.mrf.mxu0
      %v1893 = vadd.f32 %v1724, %v1892
      %v1894 = vpop.f32.mrf.mxu0
      %v1895 = vadd.f32 %v1726, %v1894
      %1896 = vmatmul.bf16.gmra.mxu0 %v908
      %v1897 = vpop.f32.mrf.mxu0
      %v1898 = vadd.f32 %v1729, %v1897
      %v1899 = vpop.f32.mrf.mxu0
      %v1900 = vadd.f32 %v1731, %v1899
      %1901 = vmatmul.bf16.gmra.mxu0 %v912
      %v1902 = vpop.f32.mrf.mxu0
      %v1903 = vadd.f32 %v1734, %v1902
      %v1904 = vpop.f32.mrf.mxu0
      %v1905 = vadd.f32 %v1736, %v1904
      %1906 = vmatmul.bf16.gmra.mxu0 %v916
      %v1907 = vpop.f32.mrf.mxu0
      %v1908 = vadd.f32 %v1739, %v1907
      %v1909 = vpop.f32.mrf.mxu0
      %v1910 = vadd.f32 %v1741, %v1909
      %1911 = vmatmul.bf16.gmra.mxu0 %v920
      %v1912 = vpop.f32.mrf.mxu0
      %v1913 = vadd.f32 %v1744, %v1912
      %v1914 = vpop.f32.mrf.mxu0
      %v1915 = vadd.f32 %v1746, %v1914
      %1916 = vdwg.mxu0
      %v1917 = vadd.f32 %v1758, %v1760
      %v1918 = vadd.f32 %v1917, %v1763
      %v1919 = vadd.f32 %v1918, %v1765
      %v1920 = vadd.f32 %v1919, %v1768
      %v1921 = vadd.f32 %v1920, %v1770
      %v1922 = vadd.f32 %v1921, %v1773
      %v1923 = vadd.f32 %v1922, %v1775
      %v1924 = vadd.f32 %v1923, %v1778
      %v1925 = vadd.f32 %v1924, %v1780
      %v1926 = vadd.f32 %v1925, %v1783
      %v1927 = vadd.f32 %v1926, %v1785
      %v1928 = vadd.f32 %v1927, %v1788
      %v1929 = vadd.f32 %v1928, %v1790
      %v1930 = vadd.f32 %v1929, %v1793
      %v1931 = vadd.f32 %v1930, %v1795
      %v1932 = vadd.f32 %v1931, %v1798
      %v1933 = vadd.f32 %v1932, %v1800
      %v1934 = vadd.f32 %v1933, %v1803
      %v1935 = vadd.f32 %v1934, %v1805
      %v1936 = vadd.f32 %v1935, %v1808
      %v1937 = vadd.f32 %v1936, %v1810
      %v1938 = vadd.f32 %v1937, %v1813
      %v1939 = vadd.f32 %v1938, %v1815
      %v1940 = vadd.f32 %v1939, %v1818
      %v1941 = vadd.f32 %v1940, %v1820
      %v1942 = vadd.f32 %v1941, %v1823
      %v1943 = vadd.f32 %v1942, %v1825
      %v1944 = vadd.f32 %v1943, %v1828
      %v1945 = vadd.f32 %v1944, %v1830
      %v1946 = vadd.f32 %v1945, %v1833
      %v1947 = vadd.f32 %v1946, %v1835
      %v1948 = vadd.f32 %v1947, %v1838
      %v1949 = vadd.f32 %v1948, %v1840
      %v1950 = vadd.f32 %v1949, %v1843
      %v1951 = vadd.f32 %v1950, %v1845
      %v1952 = vadd.f32 %v1951, %v1848
      %v1953 = vadd.f32 %v1952, %v1850
      %v1954 = vadd.f32 %v1953, %v1853
      %v1955 = vadd.f32 %v1954, %v1855
      %v1956 = vadd.f32 %v1955, %v1858
      %v1957 = vadd.f32 %v1956, %v1860
      %v1958 = vadd.f32 %v1957, %v1863
      %v1959 = vadd.f32 %v1958, %v1865
      %v1960 = vadd.f32 %v1959, %v1868
      %v1961 = vadd.f32 %v1960, %v1870
      %v1962 = vadd.f32 %v1961, %v1873
      %v1963 = vadd.f32 %v1962, %v1875
      %v1964 = vadd.f32 %v1963, %v1878
      %v1965 = vadd.f32 %v1964, %v1880
      %v1966 = vadd.f32 %v1965, %v1883
      %v1967 = vadd.f32 %v1966, %v1885
      %v1968 = vadd.f32 %v1967, %v1888
      %v1969 = vadd.f32 %v1968, %v1890
      %v1970 = vadd.f32 %v1969, %v1893
      %v1971 = vadd.f32 %v1970, %v1895
      %v1972 = vadd.f32 %v1971, %v1898
      %v1973 = vadd.f32 %v1972, %v1900
      %v1974 = vadd.f32 %v1973, %v1903
      %v1975 = vadd.f32 %v1974, %v1905
      %v1976 = vadd.f32 %v1975, %v1908
      %v1977 = vadd.f32 %v1976, %v1910
      %v1978 = vadd.f32 %v1977, %v1913
      %v1979 = vadd.f32 %v1978, %v1915
      %v1980 = vrot.slane %v1979, 4
      %v1981 = vadd.f32 %v1979, %v1980
      %v1982 = vrot.slane %v1981, 2
      %v1983 = vadd.f32 %v1981, %v1982
      %v1984 = vrot.slane %v1983, 1
      %v1985 = vadd.f32 %v1983, %v1984
      %v1986 = vmul.f32 %v1985, 0.001953125
      %v1987 = vmul.f32 %v1758, %v1758
      %v1988 = vmul.f32 %v1760, %v1760
      %v1989 = vmul.f32 %v1763, %v1763
      %v1990 = vmul.f32 %v1765, %v1765
      %v1991 = vmul.f32 %v1768, %v1768
      %v1992 = vmul.f32 %v1770, %v1770
      %v1993 = vmul.f32 %v1773, %v1773
      %v1994 = vmul.f32 %v1775, %v1775
      %v1995 = vmul.f32 %v1778, %v1778
      %v1996 = vmul.f32 %v1780, %v1780
      %v1997 = vmul.f32 %v1783, %v1783
      %v1998 = vmul.f32 %v1785, %v1785
      %v1999 = vmul.f32 %v1788, %v1788
      %v2000 = vmul.f32 %v1790, %v1790
      %v2001 = vmul.f32 %v1793, %v1793
      %v2002 = vmul.f32 %v1795, %v1795
      %v2003 = vmul.f32 %v1798, %v1798
      %v2004 = vmul.f32 %v1800, %v1800
      %v2005 = vmul.f32 %v1803, %v1803
      %v2006 = vmul.f32 %v1805, %v1805
      %v2007 = vmul.f32 %v1808, %v1808
      %v2008 = vmul.f32 %v1810, %v1810
      %v2009 = vmul.f32 %v1813, %v1813
      %v2010 = vmul.f32 %v1815, %v1815
      %v2011 = vmul.f32 %v1818, %v1818
      %v2012 = vmul.f32 %v1820, %v1820
      %v2013 = vmul.f32 %v1823, %v1823
      %v2014 = vmul.f32 %v1825, %v1825
      %v2015 = vmul.f32 %v1828, %v1828
      %v2016 = vmul.f32 %v1830, %v1830
      %v2017 = vmul.f32 %v1833, %v1833
      %v2018 = vmul.f32 %v1835, %v1835
      %v2019 = vmul.f32 %v1838, %v1838
      %v2020 = vmul.f32 %v1840, %v1840
      %v2021 = vmul.f32 %v1843, %v1843
      %v2022 = vmul.f32 %v1845, %v1845
      %v2023 = vmul.f32 %v1848, %v1848
      %v2024 = vmul.f32 %v1850, %v1850
      %v2025 = vmul.f32 %v1853, %v1853
      %v2026 = vmul.f32 %v1855, %v1855
      %v2027 = vmul.f32 %v1858, %v1858
      %v2028 = vmul.f32 %v1860, %v1860
      %v2029 = vmul.f32 %v1863, %v1863
      %v2030 = vmul.f32 %v1865, %v1865
      %v2031 = vmul.f32 %v1868, %v1868
      %v2032 = vmul.f32 %v1870, %v1870
      %v2033 = vmul.f32 %v1873, %v1873
      %v2034 = vmul.f32 %v1875, %v1875
      %v2035 = vmul.f32 %v1878, %v1878
      %v2036 = vmul.f32 %v1880, %v1880
      %v2037 = vmul.f32 %v1883, %v1883
      %v2038 = vmul.f32 %v1885, %v1885
      %v2039 = vmul.f32 %v1888, %v1888
      %v2040 = vmul.f32 %v1890, %v1890
      %v2041 = vmul.f32 %v1893, %v1893
      %v2042 = vmul.f32 %v1895, %v1895
      %v2043 = vmul.f32 %v1898, %v1898
      %v2044 = vmul.f32 %v1900, %v1900
      %v2045 = vmul.f32 %v1903, %v1903
      %v2046 = vmul.f32 %v1905, %v1905
      %v2047 = vmul.f32 %v1908, %v1908
      %v2048 = vmul.f32 %v1910, %v1910
      %v2049 = vmul.f32 %v1913, %v1913
      %v2050 = vmul.f32 %v1915, %v1915
      %v2051 = vadd.f32 %v1987, %v1988
      %v2052 = vadd.f32 %v2051, %v1989
      %v2053 = vadd.f32 %v2052, %v1990
      %v2054 = vadd.f32 %v2053, %v1991
      %v2055 = vadd.f32 %v2054, %v1992
      %v2056 = vadd.f32 %v2055, %v1993
      %v2057 = vadd.f32 %v2056, %v1994
      %v2058 = vadd.f32 %v2057, %v1995
      %v2059 = vadd.f32 %v2058, %v1996
      %v2060 = vadd.f32 %v2059, %v1997
      %v2061 = vadd.f32 %v2060, %v1998
      %v2062 = vadd.f32 %v2061, %v1999
      %v2063 = vadd.f32 %v2062, %v2000
      %v2064 = vadd.f32 %v2063, %v2001
      %v2065 = vadd.f32 %v2064, %v2002
      %v2066 = vadd.f32 %v2065, %v2003
      %v2067 = vadd.f32 %v2066, %v2004
      %v2068 = vadd.f32 %v2067, %v2005
      %v2069 = vadd.f32 %v2068, %v2006
      %v2070 = vadd.f32 %v2069, %v2007
      %v2071 = vadd.f32 %v2070, %v2008
      %v2072 = vadd.f32 %v2071, %v2009
      %v2073 = vadd.f32 %v2072, %v2010
      %v2074 = vadd.f32 %v2073, %v2011
      %v2075 = vadd.f32 %v2074, %v2012
      %v2076 = vadd.f32 %v2075, %v2013
      %v2077 = vadd.f32 %v2076, %v2014
      %v2078 = vadd.f32 %v2077, %v2015
      %v2079 = vadd.f32 %v2078, %v2016
      %v2080 = vadd.f32 %v2079, %v2017
      %v2081 = vadd.f32 %v2080, %v2018
      %v2082 = vadd.f32 %v2081, %v2019
      %v2083 = vadd.f32 %v2082, %v2020
      %v2084 = vadd.f32 %v2083, %v2021
      %v2085 = vadd.f32 %v2084, %v2022
      %v2086 = vadd.f32 %v2085, %v2023
      %v2087 = vadd.f32 %v2086, %v2024
      %v2088 = vadd.f32 %v2087, %v2025
      %v2089 = vadd.f32 %v2088, %v2026
      %v2090 = vadd.f32 %v2089, %v2027
      %v2091 = vadd.f32 %v2090, %v2028
      %v2092 = vadd.f32 %v2091, %v2029
      %v2093 = vadd.f32 %v2092, %v2030
      %v2094 = vadd.f32 %v2093, %v2031
      %v2095 = vadd.f32 %v2094, %v2032
      %v2096 = vadd.f32 %v2095, %v2033
      %v2097 = vadd.f32 %v2096, %v2034
      %v2098 = vadd.f32 %v2097, %v2035
      %v2099 = vadd.f32 %v2098, %v2036
      %v2100 = vadd.f32 %v2099, %v2037
      %v2101 = vadd.f32 %v2100, %v2038
      %v2102 = vadd.f32 %v2101, %v2039
      %v2103 = vadd.f32 %v2102, %v2040
      %v2104 = vadd.f32 %v2103, %v2041
      %v2105 = vadd.f32 %v2104, %v2042
      %v2106 = vadd.f32 %v2105, %v2043
      %v2107 = vadd.f32 %v2106, %v2044
      %v2108 = vadd.f32 %v2107, %v2045
      %v2109 = vadd.f32 %v2108, %v2046
      %v2110 = vadd.f32 %v2109, %v2047
      %v2111 = vadd.f32 %v2110, %v2048
      %v2112 = vadd.f32 %v2111, %v2049
      %v2113 = vadd.f32 %v2112, %v2050
      %v2114 = vrot.slane %v2113, 4
      %v2115 = vadd.f32 %v2113, %v2114
      %v2116 = vrot.slane %v2115, 2
      %v2117 = vadd.f32 %v2115, %v2116
      %v2118 = vrot.slane %v2117, 1
      %v2119 = vadd.f32 %v2117, %v2118
      %v2120 = vmul.f32 %v2119, 0.001953125
      %v2121 = vmul.f32 %v1986, %v1986
      %v2122 = vsub.f32 %v2120, %v2121
      %v2123 = vsub.f32 %v1758, %v1986
      %v2124 = vsub.f32 %v1760, %v1986
      %v2125 = vsub.f32 %v1763, %v1986
      %v2126 = vsub.f32 %v1765, %v1986
      %v2127 = vsub.f32 %v1768, %v1986
      %v2128 = vsub.f32 %v1770, %v1986
      %v2129 = vsub.f32 %v1773, %v1986
      %v2130 = vsub.f32 %v1775, %v1986
      %v2131 = vsub.f32 %v1778, %v1986
      %v2132 = vsub.f32 %v1780, %v1986
      %v2133 = vsub.f32 %v1783, %v1986
      %v2134 = vsub.f32 %v1785, %v1986
      %v2135 = vsub.f32 %v1788, %v1986
      %v2136 = vsub.f32 %v1790, %v1986
      %v2137 = vsub.f32 %v1793, %v1986
      %v2138 = vsub.f32 %v1795, %v1986
      %v2139 = vsub.f32 %v1798, %v1986
      %v2140 = vsub.f32 %v1800, %v1986
      %v2141 = vsub.f32 %v1803, %v1986
      %v2142 = vsub.f32 %v1805, %v1986
      %v2143 = vsub.f32 %v1808, %v1986
      %v2144 = vsub.f32 %v1810, %v1986
      %v2145 = vsub.f32 %v1813, %v1986
      %v2146 = vsub.f32 %v1815, %v1986
      %v2147 = vsub.f32 %v1818, %v1986
      %v2148 = vsub.f32 %v1820, %v1986
      %v2149 = vsub.f32 %v1823, %v1986
      %v2150 = vsub.f32 %v1825, %v1986
      %v2151 = vsub.f32 %v1828, %v1986
      %v2152 = vsub.f32 %v1830, %v1986
      %v2153 = vsub.f32 %v1833, %v1986
      %v2154 = vsub.f32 %v1835, %v1986
      %v2155 = vsub.f32 %v1838, %v1986
      %v2156 = vsub.f32 %v1840, %v1986
      %v2157 = vsub.f32 %v1843, %v1986
      %v2158 = vsub.f32 %v1845, %v1986
      %v2159 = vsub.f32 %v1848, %v1986
      %v2160 = vsub.f32 %v1850, %v1986
      %v2161 = vsub.f32 %v1853, %v1986
      %v2162 = vsub.f32 %v1855, %v1986
      %v2163 = vsub.f32 %v1858, %v1986
      %v2164 = vsub.f32 %v1860, %v1986
      %v2165 = vsub.f32 %v1863, %v1986
      %v2166 = vsub.f32 %v1865, %v1986
      %v2167 = vsub.f32 %v1868, %v1986
      %v2168 = vsub.f32 %v1870, %v1986
      %v2169 = vsub.f32 %v1873, %v1986
      %v2170 = vsub.f32 %v1875, %v1986
      %v2171 = vsub.f32 %v1878, %v1986
      %v2172 = vsub.f32 %v1880, %v1986
      %v2173 = vsub.f32 %v1883, %v1986
      %v2174 = vsub.f32 %v1885, %v1986
      %v2175 = vsub.f32 %v1888, %v1986
      %v2176 = vsub.f32 %v1890, %v1986
      %v2177 = vsub.f32 %v1893, %v1986
      %v2178 = vsub.f32 %v1895, %v1986
      %v2179 = vsub.f32 %v1898, %v1986
      %v2180 = vsub.f32 %v1900, %v1986
      %v2181 = vsub.f32 %v1903, %v1986
      %v2182 = vsub.f32 %v1905, %v1986
      %v2183 = vsub.f32 %v1908, %v1986
      %v2184 = vsub.f32 %v1910, %v1986
      %v2185 = vsub.f32 %v1913, %v1986
      %v2186 = vsub.f32 %v1915, %v1986
      %v2187 = vadd.f32 %v2122, 1e-05
      %v2188 = vrsqrt.pop %v2187
      %v2189 = vmul.f32 %v2188, %v2187
      %v2190 = vmul.f32 %v2189, %v2188
      %v2191 = vmul.f32 0.5, %v2190
      %v2192 = vsub.f32 1.5, %v2191
      %v2193 = vmul.f32 %v2188, %v2192
      %vm2194 = vweird.f32 %v2187
      %vm2195 = vweird.f32 %v2188
      %vm2196 = vmor %vm2194, %vm2195
      %v2197 = vsel %vm2196, %v2188, %v2193
      %v2198 = vmul.f32 %v2123, %v2197
      %v2199 = vmul.f32 %v2124, %v2197
      %v2200 = vmul.f32 %v2125, %v2197
      %v2201 = vmul.f32 %v2126, %v2197
      %v2202 = vmul.f32 %v2127, %v2197
      %v2203 = vmul.f32 %v2128, %v2197
      %v2204 = vmul.f32 %v2129, %v2197
      %v2205 = vmul.f32 %v2130, %v2197
      %v2206 = vmul.f32 %v2131, %v2197
      %v2207 = vmul.f32 %v2132, %v2197
      %v2208 = vmul.f32 %v2133, %v2197
      %v2209 = vmul.f32 %v2134, %v2197
      %v2210 = vmul.f32 %v2135, %v2197
      %v2211 = vmul.f32 %v2136, %v2197
      %v2212 = vmul.f32 %v2137, %v2197
      %v2213 = vmul.f32 %v2138, %v2197
      %v2214 = vmul.f32 %v2139, %v2197
      %v2215 = vmul.f32 %v2140, %v2197
      %v2216 = vmul.f32 %v2141, %v2197
      %v2217 = vmul.f32 %v2142, %v2197
      %v2218 = vmul.f32 %v2143, %v2197
      %v2219 = vmul.f32 %v2144, %v2197
      %v2220 = vmul.f32 %v2145, %v2197
      %v2221 = vmul.f32 %v2146, %v2197
      %v2222 = vmul.f32 %v2147, %v2197
      %v2223 = vmul.f32 %v2148, %v2197
      %v2224 = vmul.f32 %v2149, %v2197
      %v2225 = vmul.f32 %v2150, %v2197
      %v2226 = vmul.f32 %v2151, %v2197
      %v2227 = vmul.f32 %v2152, %v2197
      %v2228 = vmul.f32 %v2153, %v2197
      %v2229 = vmul.f32 %v2154, %v2197
      %v2230 = vmul.f32 %v2155, %v2197
      %v2231 = vmul.f32 %v2156, %v2197
      %v2232 = vmul.f32 %v2157, %v2197
      %v2233 = vmul.f32 %v2158, %v2197
      %v2234 = vmul.f32 %v2159, %v2197
      %v2235 = vmul.f32 %v2160, %v2197
      %v2236 = vmul.f32 %v2161, %v2197
      %v2237 = vmul.f32 %v2162, %v2197
      %v2238 = vmul.f32 %v2163, %v2197
      %v2239 = vmul.f32 %v2164, %v2197
      %v2240 = vmul.f32 %v2165, %v2197
      %v2241 = vmul.f32 %v2166, %v2197
      %v2242 = vmul.f32 %v2167, %v2197
      %v2243 = vmul.f32 %v2168, %v2197
      %v2244 = vmul.f32 %v2169, %v2197
      %v2245 = vmul.f32 %v2170, %v2197
      %v2246 = vmul.f32 %v2171, %v2197
      %v2247 = vmul.f32 %v2172, %v2197
      %v2248 = vmul.f32 %v2173, %v2197
      %v2249 = vmul.f32 %v2174, %v2197
      %v2250 = vmul.f32 %v2175, %v2197
      %v2251 = vmul.f32 %v2176, %v2197
      %v2252 = vmul.f32 %v2177, %v2197
      %v2253 = vmul.f32 %v2178, %v2197
      %v2254 = vmul.f32 %v2179, %v2197
      %v2255 = vmul.f32 %v2180, %v2197
      %v2256 = vmul.f32 %v2181, %v2197
      %v2257 = vmul.f32 %v2182, %v2197
      %v2258 = vmul.f32 %v2183, %v2197
      %v2259 = vmul.f32 %v2184, %v2197
      %v2260 = vmul.f32 %v2185, %v2197
      %v2261 = vmul.f32 %v2186, %v2197
      %vm2262 = vcmp.ge.f32.partialorder %v2198, 0.0
      %vm2263 = vcmp.ge.f32.partialorder %v2199, 0.0
      %vm2264 = vcmp.ge.f32.partialorder %v2200, 0.0
      %vm2265 = vcmp.ge.f32.partialorder %v2201, 0.0
      %vm2266 = vcmp.ge.f32.partialorder %v2202, 0.0
      %vm2267 = vcmp.ge.f32.partialorder %v2203, 0.0
      %vm2268 = vcmp.ge.f32.partialorder %v2204, 0.0
      %vm2269 = vcmp.ge.f32.partialorder %v2205, 0.0
      %vm2270 = vcmp.ge.f32.partialorder %v2206, 0.0
      %vm2271 = vcmp.ge.f32.partialorder %v2207, 0.0
      %vm2272 = vcmp.ge.f32.partialorder %v2208, 0.0
      %vm2273 = vcmp.ge.f32.partialorder %v2209, 0.0
      %vm2274 = vcmp.ge.f32.partialorder %v2210, 0.0
      %vm2275 = vcmp.ge.f32.partialorder %v2211, 0.0
      %vm2276 = vcmp.ge.f32.partialorder %v2212, 0.0
      %vm2277 = vcmp.ge.f32.partialorder %v2213, 0.0
      %vm2278 = vcmp.ge.f32.partialorder %v2214, 0.0
      %vm2279 = vcmp.ge.f32.partialorder %v2215, 0.0
      %vm2280 = vcmp.ge.f32.partialorder %v2216, 0.0
      %vm2281 = vcmp.ge.f32.partialorder %v2217, 0.0
      %vm2282 = vcmp.ge.f32.partialorder %v2218, 0.0
      %vm2283 = vcmp.ge.f32.partialorder %v2219, 0.0
      %vm2284 = vcmp.ge.f32.partialorder %v2220, 0.0
      %vm2285 = vcmp.ge.f32.partialorder %v2221, 0.0
      %vm2286 = vcmp.ge.f32.partialorder %v2222, 0.0
      %vm2287 = vcmp.ge.f32.partialorder %v2223, 0.0
      %vm2288 = vcmp.ge.f32.partialorder %v2224, 0.0
      %vm2289 = vcmp.ge.f32.partialorder %v2225, 0.0
      %vm2290 = vcmp.ge.f32.partialorder %v2226, 0.0
      %vm2291 = vcmp.ge.f32.partialorder %v2227, 0.0
      %vm2292 = vcmp.ge.f32.partialorder %v2228, 0.0
      %vm2293 = vcmp.ge.f32.partialorder %v2229, 0.0
      %vm2294 = vcmp.ge.f32.partialorder %v2230, 0.0
      %vm2295 = vcmp.ge.f32.partialorder %v2231, 0.0
      %vm2296 = vcmp.ge.f32.partialorder %v2232, 0.0
      %vm2297 = vcmp.ge.f32.partialorder %v2233, 0.0
      %vm2298 = vcmp.ge.f32.partialorder %v2234, 0.0
      %vm2299 = vcmp.ge.f32.partialorder %v2235, 0.0
      %vm2300 = vcmp.ge.f32.partialorder %v2236, 0.0
      %vm2301 = vcmp.ge.f32.partialorder %v2237, 0.0
      %vm2302 = vcmp.ge.f32.partialorder %v2238, 0.0
      %vm2303 = vcmp.ge.f32.partialorder %v2239, 0.0
      %vm2304 = vcmp.ge.f32.partialorder %v2240, 0.0
      %vm2305 = vcmp.ge.f32.partialorder %v2241, 0.0
      %vm2306 = vcmp.ge.f32.partialorder %v2242, 0.0
      %vm2307 = vcmp.ge.f32.partialorder %v2243, 0.0
      %vm2308 = vcmp.ge.f32.partialorder %v2244, 0.0
      %vm2309 = vcmp.ge.f32.partialorder %v2245, 0.0
      %vm2310 = vcmp.ge.f32.partialorder %v2246, 0.0
      %vm2311 = vcmp.ge.f32.partialorder %v2247, 0.0
      %vm2312 = vcmp.ge.f32.partialorder %v2248, 0.0
      %vm2313 = vcmp.ge.f32.partialorder %v2249, 0.0
      %vm2314 = vcmp.ge.f32.partialorder %v2250, 0.0
      %vm2315 = vcmp.ge.f32.partialorder %v2251, 0.0
      %vm2316 = vcmp.ge.f32.partialorder %v2252, 0.0
      %vm2317 = vcmp.ge.f32.partialorder %v2253, 0.0
      %vm2318 = vcmp.ge.f32.partialorder %v2254, 0.0
      %vm2319 = vcmp.ge.f32.partialorder %v2255, 0.0
      %vm2320 = vcmp.ge.f32.partialorder %v2256, 0.0
      %vm2321 = vcmp.ge.f32.partialorder %v2257, 0.0
      %vm2322 = vcmp.ge.f32.partialorder %v2258, 0.0
      %vm2323 = vcmp.ge.f32.partialorder %v2259, 0.0
      %vm2324 = vcmp.ge.f32.partialorder %v2260, 0.0
      %vm2325 = vcmp.ge.f32.partialorder %v2261, 0.0
      %v2326 = vmul.f32 %v2198, 0.2
      %v2327 = vmul.f32 %v2199, 0.2
      %v2328 = vmul.f32 %v2200, 0.2
      %v2329 = vmul.f32 %v2201, 0.2
      %v2330 = vmul.f32 %v2202, 0.2
      %v2331 = vmul.f32 %v2203, 0.2
      %v2332 = vmul.f32 %v2204, 0.2
      %v2333 = vmul.f32 %v2205, 0.2
      %v2334 = vmul.f32 %v2206, 0.2
      %v2335 = vmul.f32 %v2207, 0.2
      %v2336 = vmul.f32 %v2208, 0.2
      %v2337 = vmul.f32 %v2209, 0.2
      %v2338 = vmul.f32 %v2210, 0.2
      %v2339 = vmul.f32 %v2211, 0.2
      %v2340 = vmul.f32 %v2212, 0.2
      %v2341 = vmul.f32 %v2213, 0.2
      %v2342 = vmul.f32 %v2214, 0.2
      %v2343 = vmul.f32 %v2215, 0.2
      %v2344 = vmul.f32 %v2216, 0.2
      %v2345 = vmul.f32 %v2217, 0.2
      %v2346 = vmul.f32 %v2218, 0.2
      %v2347 = vmul.f32 %v2219, 0.2
      %v2348 = vmul.f32 %v2220, 0.2
      %v2349 = vmul.f32 %v2221, 0.2
      %v2350 = vmul.f32 %v2222, 0.2
      %v2351 = vmul.f32 %v2223, 0.2
      %v2352 = vmul.f32 %v2224, 0.2
      %v2353 = vmul.f32 %v2225, 0.2
      %v2354 = vmul.f32 %v2226, 0.2
      %v2355 = vmul.f32 %v2227, 0.2
      %v2356 = vmul.f32 %v2228, 0.2
      %v2357 = vmul.f32 %v2229, 0.2
      %v2358 = vmul.f32 %v2230, 0.2
      %v2359 = vmul.f32 %v2231, 0.2
      %v2360 = vmul.f32 %v2232, 0.2
      %v2361 = vmul.f32 %v2233, 0.2
      %v2362 = vmul.f32 %v2234, 0.2
      %v2363 = vmul.f32 %v2235, 0.2
      %v2364 = vmul.f32 %v2236, 0.2
      %v2365 = vmul.f32 %v2237, 0.2
      %v2366 = vmul.f32 %v2238, 0.2
      %v2367 = vmul.f32 %v2239, 0.2
      %v2368 = vmul.f32 %v2240, 0.2
      %v2369 = vmul.f32 %v2241, 0.2
      %v2370 = vmul.f32 %v2242, 0.2
      %v2371 = vmul.f32 %v2243, 0.2
      %v2372 = vmul.f32 %v2244, 0.2
      %v2373 = vmul.f32 %v2245, 0.2
      %v2374 = vmul.f32 %v2246, 0.2
      %v2375 = vmul.f32 %v2247, 0.2
      %v2376 = vmul.f32 %v2248, 0.2
      %v2377 = vmul.f32 %v2249, 0.2
      %v2378 = vmul.f32 %v2250, 0.2
      %v2379 = vmul.f32 %v2251, 0.2
      %v2380 = vmul.f32 %v2252, 0.2
      %v2381 = vmul.f32 %v2253, 0.2
      %v2382 = vmul.f32 %v2254, 0.2
      %v2383 = vmul.f32 %v2255, 0.2
      %v2384 = vmul.f32 %v2256, 0.2
      %v2385 = vmul.f32 %v2257, 0.2
      %v2386 = vmul.f32 %v2258, 0.2
      %v2387 = vmul.f32 %v2259, 0.2
      %v2388 = vmul.f32 %v2260, 0.2
      %v2389 = vmul.f32 %v2261, 0.2
      %v2390 = vsel %vm2262, %v2198, %v2326
      %v2391 = vsel %vm2263, %v2199, %v2327
      %v2392 = vsel %vm2264, %v2200, %v2328
      %v2393 = vsel %vm2265, %v2201, %v2329
      %v2394 = vsel %vm2266, %v2202, %v2330
      %v2395 = vsel %vm2267, %v2203, %v2331
      %v2396 = vsel %vm2268, %v2204, %v2332
      %v2397 = vsel %vm2269, %v2205, %v2333
      %v2398 = vsel %vm2270, %v2206, %v2334
      %v2399 = vsel %vm2271, %v2207, %v2335
      %v2400 = vsel %vm2272, %v2208, %v2336
      %v2401 = vsel %vm2273, %v2209, %v2337
      %v2402 = vsel %vm2274, %v2210, %v2338
      %v2403 = vsel %vm2275, %v2211, %v2339
      %v2404 = vsel %vm2276, %v2212, %v2340
      %v2405 = vsel %vm2277, %v2213, %v2341
      %v2406 = vsel %vm2278, %v2214, %v2342
      %v2407 = vsel %vm2279, %v2215, %v2343
      %v2408 = vsel %vm2280, %v2216, %v2344
      %v2409 = vsel %vm2281, %v2217, %v2345
      %v2410 = vsel %vm2282, %v2218, %v2346
      %v2411 = vsel %vm2283, %v2219, %v2347
      %v2412 = vsel %vm2284, %v2220, %v2348
      %v2413 = vsel %vm2285, %v2221, %v2349
      %v2414 = vsel %vm2286, %v2222, %v2350
      %v2415 = vsel %vm2287, %v2223, %v2351
      %v2416 = vsel %vm2288, %v2224, %v2352
      %v2417 = vsel %vm2289, %v2225, %v2353
      %v2418 = vsel %vm2290, %v2226, %v2354
      %v2419 = vsel %vm2291, %v2227, %v2355
      %v2420 = vsel %vm2292, %v2228, %v2356
      %v2421 = vsel %vm2293, %v2229, %v2357
      %v2422 = vsel %vm2294, %v2230, %v2358
      %v2423 = vsel %vm2295, %v2231, %v2359
      %v2424 = vsel %vm2296, %v2232, %v2360
      %v2425 = vsel %vm2297, %v2233, %v2361
      %v2426 = vsel %vm2298, %v2234, %v2362
      %v2427 = vsel %vm2299, %v2235, %v2363
      %v2428 = vsel %vm2300, %v2236, %v2364
      %v2429 = vsel %vm2301, %v2237, %v2365
      %v2430 = vsel %vm2302, %v2238, %v2366
      %v2431 = vsel %vm2303, %v2239, %v2367
      %v2432 = vsel %vm2304, %v2240, %v2368
      %v2433 = vsel %vm2305, %v2241, %v2369
      %v2434 = vsel %vm2306, %v2242, %v2370
      %v2435 = vsel %vm2307, %v2243, %v2371
      %v2436 = vsel %vm2308, %v2244, %v2372
      %v2437 = vsel %vm2309, %v2245, %v2373
      %v2438 = vsel %vm2310, %v2246, %v2374
      %v2439 = vsel %vm2311, %v2247, %v2375
      %v2440 = vsel %vm2312, %v2248, %v2376
      %v2441 = vsel %vm2313, %v2249, %v2377
      %v2442 = vsel %vm2314, %v2250, %v2378
      %v2443 = vsel %vm2315, %v2251, %v2379
      %v2444 = vsel %vm2316, %v2252, %v2380
      %v2445 = vsel %vm2317, %v2253, %v2381
      %v2446 = vsel %vm2318, %v2254, %v2382
      %v2447 = vsel %vm2319, %v2255, %v2383
      %v2448 = vsel %vm2320, %v2256, %v2384
      %v2449 = vsel %vm2321, %v2257, %v2385
      %v2450 = vsel %vm2322, %v2258, %v2386
      %v2451 = vsel %vm2323, %v2259, %v2387
      %v2452 = vsel %vm2324, %v2260, %v2388
      %v2453 = vsel %vm2325, %v2261, %v2389
      %v2454 = vpack.c.bf16 %v2390, %v2390
      %v2455 = vpack.c.bf16 %v2391, %v2391
      %v2456 = vpack.c.bf16 %v2392, %v2392
      %v2457 = vpack.c.bf16 %v2393, %v2393
      %v2458 = vpack.c.bf16 %v2394, %v2394
      %v2459 = vpack.c.bf16 %v2395, %v2395
      %v2460 = vpack.c.bf16 %v2396, %v2396
      %v2461 = vpack.c.bf16 %v2397, %v2397
      %v2462 = vpack.c.bf16 %v2398, %v2398
      %v2463 = vpack.c.bf16 %v2399, %v2399
      %v2464 = vpack.c.bf16 %v2400, %v2400
      %v2465 = vpack.c.bf16 %v2401, %v2401
      %v2466 = vpack.c.bf16 %v2402, %v2402
      %v2467 = vpack.c.bf16 %v2403, %v2403
      %v2468 = vpack.c.bf16 %v2404, %v2404
      %v2469 = vpack.c.bf16 %v2405, %v2405
      %v2470 = vpack.c.bf16 %v2406, %v2406
      %v2471 = vpack.c.bf16 %v2407, %v2407
      %v2472 = vpack.c.bf16 %v2408, %v2408
      %v2473 = vpack.c.bf16 %v2409, %v2409
      %v2474 = vpack.c.bf16 %v2410, %v2410
      %v2475 = vpack.c.bf16 %v2411, %v2411
      %v2476 = vpack.c.bf16 %v2412, %v2412
      %v2477 = vpack.c.bf16 %v2413, %v2413
      %v2478 = vpack.c.bf16 %v2414, %v2414
      %v2479 = vpack.c.bf16 %v2415, %v2415
      %v2480 = vpack.c.bf16 %v2416, %v2416
      %v2481 = vpack.c.bf16 %v2417, %v2417
      %v2482 = vpack.c.bf16 %v2418, %v2418
      %v2483 = vpack.c.bf16 %v2419, %v2419
      %v2484 = vpack.c.bf16 %v2420, %v2420
      %v2485 = vpack.c.bf16 %v2421, %v2421
      %v2486 = vpack.c.bf16 %v2422, %v2422
      %v2487 = vpack.c.bf16 %v2423, %v2423
      %v2488 = vpack.c.bf16 %v2424, %v2424
      %v2489 = vpack.c.bf16 %v2425, %v2425
      %v2490 = vpack.c.bf16 %v2426, %v2426
      %v2491 = vpack.c.bf16 %v2427, %v2427
      %v2492 = vpack.c.bf16 %v2428, %v2428
      %v2493 = vpack.c.bf16 %v2429, %v2429
      %v2494 = vpack.c.bf16 %v2430, %v2430
      %v2495 = vpack.c.bf16 %v2431, %v2431
      %v2496 = vpack.c.bf16 %v2432, %v2432
      %v2497 = vpack.c.bf16 %v2433, %v2433
      %v2498 = vpack.c.bf16 %v2434, %v2434
      %v2499 = vpack.c.bf16 %v2435, %v2435
      %v2500 = vpack.c.bf16 %v2436, %v2436
      %v2501 = vpack.c.bf16 %v2437, %v2437
      %v2502 = vpack.c.bf16 %v2438, %v2438
      %v2503 = vpack.c.bf16 %v2439, %v2439
      %v2504 = vpack.c.bf16 %v2440, %v2440
      %v2505 = vpack.c.bf16 %v2441, %v2441
      %v2506 = vpack.c.bf16 %v2442, %v2442
      %v2507 = vpack.c.bf16 %v2443, %v2443
      %v2508 = vpack.c.bf16 %v2444, %v2444
      %v2509 = vpack.c.bf16 %v2445, %v2445
      %v2510 = vpack.c.bf16 %v2446, %v2446
      %v2511 = vpack.c.bf16 %v2447, %v2447
      %v2512 = vpack.c.bf16 %v2448, %v2448
      %v2513 = vpack.c.bf16 %v2449, %v2449
      %v2514 = vpack.c.bf16 %v2450, %v2450
      %v2515 = vpack.c.bf16 %v2451, %v2451
      %v2516 = vpack.c.bf16 %v2452, %v2452
      %v2517 = vpack.c.bf16 %v2453, %v2453
      %vm2518 = vcmask 125952
      %2519 = vst.msk [vmem:[%s211] sm:$0xf] %vm2518, %v2454
      %2520 = vst.msk [vmem:[%s211 + $0x4] sm:$0xf] %vm2518, %v2455
      %2521 = vst.msk [vmem:[%s211 + $0x8] sm:$0xf] %vm2518, %v2456
      %2522 = vst.msk [vmem:[%s211 + $0xc] sm:$0xf] %vm2518, %v2457
      %2523 = vst.msk [vmem:[%s211 + $0x10] sm:$0xf] %vm2518, %v2458
      %2524 = vst.msk [vmem:[%s211 + $0x14] sm:$0xf] %vm2518, %v2459
      %2525 = vst.msk [vmem:[%s211 + $0x18] sm:$0xf] %vm2518, %v2460
      %2526 = vst.msk [vmem:[%s211 + $0x1c] sm:$0xf] %vm2518, %v2461
      %2527 = vst.msk [vmem:[%s211 + $0x20] sm:$0xf] %vm2518, %v2462
      %2528 = vst.msk [vmem:[%s211 + $0x24] sm:$0xf] %vm2518, %v2463
      %2529 = vst.msk [vmem:[%s211 + $0x28] sm:$0xf] %vm2518, %v2464
      %2530 = vst.msk [vmem:[%s211 + $0x2c] sm:$0xf] %vm2518, %v2465
      %2531 = vst.msk [vmem:[%s211 + $0x30] sm:$0xf] %vm2518, %v2466
      %2532 = vst.msk [vmem:[%s211 + $0x34] sm:$0xf] %vm2518, %v2467
      %2533 = vst.msk [vmem:[%s211 + $0x38] sm:$0xf] %vm2518, %v2468
      %2534 = vst.msk [vmem:[%s211 + $0x3c] sm:$0xf] %vm2518, %v2469
      %2535 = vst.msk [vmem:[%s211 + $0x40] sm:$0xf] %vm2518, %v2470
      %2536 = vst.msk [vmem:[%s211 + $0x44] sm:$0xf] %vm2518, %v2471
      %2537 = vst.msk [vmem:[%s211 + $0x48] sm:$0xf] %vm2518, %v2472
      %2538 = vst.msk [vmem:[%s211 + $0x4c] sm:$0xf] %vm2518, %v2473
      %2539 = vst.msk [vmem:[%s211 + $0x50] sm:$0xf] %vm2518, %v2474
      %2540 = vst.msk [vmem:[%s211 + $0x54] sm:$0xf] %vm2518, %v2475
      %2541 = vst.msk [vmem:[%s211 + $0x58] sm:$0xf] %vm2518, %v2476
      %2542 = vst.msk [vmem:[%s211 + $0x5c] sm:$0xf] %vm2518, %v2477
      %2543 = vst.msk [vmem:[%s211 + $0x60] sm:$0xf] %vm2518, %v2478
      %2544 = vst.msk [vmem:[%s211 + $0x64] sm:$0xf] %vm2518, %v2479
      %2545 = vst.msk [vmem:[%s211 + $0x68] sm:$0xf] %vm2518, %v2480
      %2546 = vst.msk [vmem:[%s211 + $0x6c] sm:$0xf] %vm2518, %v2481
      %2547 = vst.msk [vmem:[%s211 + $0x70] sm:$0xf] %vm2518, %v2482
      %2548 = vst.msk [vmem:[%s211 + $0x74] sm:$0xf] %vm2518, %v2483
      %2549 = vst.msk [vmem:[%s211 + $0x78] sm:$0xf] %vm2518, %v2484
      %2550 = vst.msk [vmem:[%s211 + $0x7c] sm:$0xf] %vm2518, %v2485
      %2551 = vst.msk [vmem:[%s211 + $0x80] sm:$0xf] %vm2518, %v2486
      %2552 = vst.msk [vmem:[%s211 + $0x84] sm:$0xf] %vm2518, %v2487
      %2553 = vst.msk [vmem:[%s211 + $0x88] sm:$0xf] %vm2518, %v2488
      %2554 = vst.msk [vmem:[%s211 + $0x8c] sm:$0xf] %vm2518, %v2489
      %2555 = vst.msk [vmem:[%s211 + $0x90] sm:$0xf] %vm2518, %v2490
      %2556 = vst.msk [vmem:[%s211 + $0x94] sm:$0xf] %vm2518, %v2491
      %2557 = vst.msk [vmem:[%s211 + $0x98] sm:$0xf] %vm2518, %v2492
      %2558 = vst.msk [vmem:[%s211 + $0x9c] sm:$0xf] %vm2518, %v2493
      %2559 = vst.msk [vmem:[%s211 + $0xa0] sm:$0xf] %vm2518, %v2494
      %2560 = vst.msk [vmem:[%s211 + $0xa4] sm:$0xf] %vm2518, %v2495
      %2561 = vst.msk [vmem:[%s211 + $0xa8] sm:$0xf] %vm2518, %v2496
      %2562 = vst.msk [vmem:[%s211 + $0xac] sm:$0xf] %vm2518, %v2497
      %2563 = vst.msk [vmem:[%s211 + $0xb0] sm:$0xf] %vm2518, %v2498
      %2564 = vst.msk [vmem:[%s211 + $0xb4] sm:$0xf] %vm2518, %v2499
      %2565 = vst.msk [vmem:[%s211 + $0xb8] sm:$0xf] %vm2518, %v2500
      %2566 = vst.msk [vmem:[%s211 + $0xbc] sm:$0xf] %vm2518, %v2501
      %2567 = vst.msk [vmem:[%s211 + $0xc0] sm:$0xf] %vm2518, %v2502
      %2568 = vst.msk [vmem:[%s211 + $0xc4] sm:$0xf] %vm2518, %v2503
      %2569 = vst.msk [vmem:[%s211 + $0xc8] sm:$0xf] %vm2518, %v2504
      %2570 = vst.msk [vmem:[%s211 + $0xcc] sm:$0xf] %vm2518, %v2505
      %2571 = vst.msk [vmem:[%s211 + $0xd0] sm:$0xf] %vm2518, %v2506
      %2572 = vst.msk [vmem:[%s211 + $0xd4] sm:$0xf] %vm2518, %v2507
      %2573 = vst.msk [vmem:[%s211 + $0xd8] sm:$0xf] %vm2518, %v2508
      %2574 = vst.msk [vmem:[%s211 + $0xdc] sm:$0xf] %vm2518, %v2509
      %2575 = vst.msk [vmem:[%s211 + $0xe0] sm:$0xf] %vm2518, %v2510
      %2576 = vst.msk [vmem:[%s211 + $0xe4] sm:$0xf] %vm2518, %v2511
      %2577 = vst.msk [vmem:[%s211 + $0xe8] sm:$0xf] %vm2518, %v2512
      %2578 = vst.msk [vmem:[%s211 + $0xec] sm:$0xf] %vm2518, %v2513
      %2579 = vst.msk [vmem:[%s211 + $0xf0] sm:$0xf] %vm2518, %v2514
      %2580 = vst.msk [vmem:[%s211 + $0xf4] sm:$0xf] %vm2518, %v2515
      %2581 = vst.msk [vmem:[%s211 + $0xf8] sm:$0xf] %vm2518, %v2516
      %2582 = vst.msk [vmem:[%s211 + $0xfc] sm:$0xf] %vm2518, %v2517
      %s2583 = smul.u32 64, %s19
      %p2584 = scmp.lt.s32.totalorder %s18, 1
      %s2585 = scalar_select %p2584, %s18, 1
      %p2586 = scmp.lt.s32.totalorder %s2583, 63
      %s2587 = scalar_select %p2586, %s2583, 63
      %s2588 = smul.addr %s2585, 64
      %s2589 = sadd.s32 %s2587, %s2588
      %s2590 = smul.addr %s2589, 4
      %s2591 = scalar_lea.vmem %s3, %s2590
      // Predicated region
      $region33: #{_lambda_.6} parent=31 // pred_check
        %p2592 = pneg %p116
      $region34: #{_lambda_.6} parent=31 // pred_check_branch
        %2594 = sbr.rel (%p2592) target = $region36
      $region35: #{_lambda_.6} parent=31 // pred_region
        %s2595 = smul.u32 64, %s19
      $region36: #{_lambda_.6} parent=31 // pred_fallthru
        _
    $region32: #{_lambda_.6} parent=5 // pred_fallthru
      _
    %p2596 = scmp.le.s32.totalorder 2, %s9
    // Predicated region
    $region37: #{_lambda_.6} parent=5 // pred_check
      %p2597 = pneg %p2596
    $region38: #{_lambda_.6} parent=5 // pred_check_branch
      %2599 = sbr.rel (%p2597) target = $region40
    $region39: #{_lambda_.6} parent=5 // pred_region
      %s2600 = ssub.s32 %s9, 2
      // Predicated region
      $region41: #{_lambda_.6} parent=39 // pred_check
        %p2601 = pneg %p122
      $region42: #{_lambda_.6} parent=39 // pred_check_branch
        %2603 = sbr.rel (%p2601) target = $region44
      $region43: #{_lambda_.6} parent=39 // pred_region
        %s2604 = smul.u32 64, %s21
        %p2605 = scmp.lt.s32.totalorder %s20, 1
        %s2606 = scalar_select %p2605, %s20, 1
        %p2607 = scmp.lt.s32.totalorder %s2604, 63
        %s2608 = scalar_select %p2607, %s2604, 63
        %s2609 = smul.addr %s2606, 64
        %s2610 = sadd.s32 %s2608, %s2609
        %s2611 = smul.addr %s2610, 4
        %s2612 = scalar_lea.vmem %s3, %s2611
      $region44: #{_lambda_.6} parent=39 // pred_fallthru
        _
    $region40: #{_lambda_.6} parent=5 // pred_fallthru
      _
  $region6: #{_lambda_.6} parent=0 // loop_footer
    %s13 = sadd.s32 1, %s9
  $region7: #{_lambda_.6} parent=0 // loop_footer_branch
    %8 = sbr.rel target = $region3
  $region8: #{_lambda_.6} parent=0 // loop_exit
    _

// kernel: _lambda_.7
$region0: #{_lambda_.7}
  #allocation0 [shape = 'u32[]', space=smem, size = 0x4, offset = 0x4, fixed_abs, tag = 'smem constant byte address 0x4 - core index']
  #allocation1 [shape = 'u32[72,128]{1,0:T(1,128)}', space=vmem, size = 0x9000, scoped, tag = 'internal scratch']
  %s0 = inlined_call_operand.vmem [shape: bf16[2,64,1024], index: 0, kind: input, shape index: {}]
  %s1 = inlined_call_operand.vmem [shape: bf16[1024,128], index: 1, kind: input, shape index: {}]
  %s2 = inlined_call_operand.vmem [shape: f32[1,128], index: 2, kind: input, shape index: {}]
  %s3 = inlined_call_operand.vmem [shape: bf16[2,64,32], index: 3, kind: output, shape index: {}]
  %s4 = sld [smem:[#allocation0]]
  $region45: #{_lambda_.7} parent=0
    _
  %s6 = ssub.s32 1, %s4
  %s7 = scalar_select 0, %s6, %s4
  loop: start=0, step=1, limit=4
  $region2: #{_lambda_.7} parent=0 // loop_pre_header
    _
  $region3: #{_lambda_.7} parent=0 // loop_header
    %s9 = sphi 0, %s13
    %p10 = scmp.ge.s32.totalorder %s9, 4
    %s16 = sphi 0, %s28
    %s17 = sphi 0, %s24
    %s18 = sphi 0, %s16
    %s19 = sphi 0, %s17
    %s20 = sphi 0, %s18
    %s21 = sphi 0, %s19
    %s33 = sphi 0, %s35
    %s36 = sphi 0, %s33
    %s37 = sphi 0, %s36
    %s53 = sphi 0, %s37
    %s57 = sphi 0, %s57
    %s59 = sphi 0, %s57
    %s60 = sphi 0, %s59
    %s74 = sphi 0, %s60
    %s78 = sphi 0, %s78
    %s80 = sphi 0, %s78
    %s81 = sphi 0, %s80
    %s95 = sphi 0, %s81
    %s103 = sphi 0, %s105
    %s106 = sphi 0, %s103
    %s107 = sphi 0, %s106
    %s123 = sphi 0, %s107
  $region4: #{_lambda_.7} parent=0 // loop_header_branch
    %12 = sbr.rel (%p10) target = $region8
  $region5: #{_lambda_.7} parent=0 // loop_body
    %s14 = ssub.s32 %s9, 1
    %s15 = ssub.s32 %s9, 2
    %s22 = sadd.s32 1, %s17
    %p23 = scmp.ge.s32.totalorder %s22, 1
    %s24 = scalar_select %p23, 0, %s22
    %s25 = sadd.s32 1, %s16
    %s26 = scalar_select %p23, %s25, %s16
    %p27 = scmp.ge.s32.totalorder %s26, 2
    %s28 = scalar_select %p27, 0, %s26
    %s29 = ssub.s32 %s16, %s28
    %s30 = ssub.s32 %s17, %s24
    %s31 = sor.u32 %s29, %s30
    %p32 = scmp.eq.s32.totalorder %s31, 0
    %s34 = sadd.s32 %s33, 1
    %s35 = scalar_select %p32, %s33, %s34
    %p38 = pneg %p32
    %p39 = scmp.eq.s32.totalorder %s9, 1
    %p40 = por %p38, %p39
    %p41 = scmp.ne.s32.totalorder %s33, %s36
    %p42 = scmp.eq.s32.totalorder %s9, 0
    %p43 = por %p41, %p42
    %p44 = scmp.ne.s32.totalorder %s33, %s36
    %p45 = scmp.eq.s32.totalorder %s14, 1
    %p46 = por %p44, %p45
    %p47 = scmp.ne.s32.totalorder %s36, %s37
    %p48 = scmp.eq.s32.totalorder %s14, 0
    %p49 = por %p47, %p48
    %p50 = scmp.ne.s32.totalorder %s36, %s37
    %p51 = scmp.eq.s32.totalorder %s15, 1
    %p52 = por %p50, %p51
    %p54 = scmp.ne.s32.totalorder %s37, %s53
    %p55 = scmp.eq.s32.totalorder %s15, 0
    %p56 = por %p54, %p55
    %s58 = sadd.s32 %s57, 1
    %p61 = scmp.eq.s32.totalorder %s9, 1
    %p62 = scmp.ne.s32.totalorder %s57, %s59
    %p63 = scmp.eq.s32.totalorder %s9, 0
    %p64 = por %p62, %p63
    %p65 = scmp.ne.s32.totalorder %s57, %s59
    %p66 = scmp.eq.s32.totalorder %s14, 1
    %p67 = por %p65, %p66
    %p68 = scmp.ne.s32.totalorder %s59, %s60
    %p69 = scmp.eq.s32.totalorder %s14, 0
    %p70 = por %p68, %p69
    %p71 = scmp.ne.s32.totalorder %s59, %s60
    %p72 = scmp.eq.s32.totalorder %s15, 1
    %p73 = por %p71, %p72
    %p75 = scmp.ne.s32.totalorder %s60, %s74
    %p76 = scmp.eq.s32.totalorder %s15, 0
    %p77 = por %p75, %p76
    %s79 = sadd.s32 %s78, 1
    %p82 = scmp.eq.s32.totalorder %s9, 1
    %p83 = scmp.ne.s32.totalorder %s78, %s80
    %p84 = scmp.eq.s32.totalorder %s9, 0
    %p85 = por %p83, %p84
    %p86 = scmp.ne.s32.totalorder %s78, %s80
    %p87 = scmp.eq.s32.totalorder %s14, 1
    %p88 = por %p86, %p87
    %p89 = scmp.ne.s32.totalorder %s80, %s81
    %p90 = scmp.eq.s32.totalorder %s14, 0
    %p91 = por %p89, %p90
    %p92 = scmp.ne.s32.totalorder %s80, %s81
    %p93 = scmp.eq.s32.totalorder %s15, 1
    %p94 = por %p92, %p93
    %p96 = scmp.ne.s32.totalorder %s81, %s95
    %p97 = scmp.eq.s32.totalorder %s15, 0
    %p98 = por %p96, %p97
    %s99 = ssub.s32 %s16, %s28
    %s100 = ssub.s32 %s17, %s24
    %s101 = sor.u32 %s99, %s100
    %p102 = scmp.eq.s32.totalorder %s101, 0
    %s104 = sadd.s32 %s103, 1
    %s105 = scalar_select %p102, %s103, %s104
    %p108 = pneg %p102
    %p109 = scmp.eq.s32.totalorder %s9, 1
    %p110 = por %p108, %p109
    %p111 = scmp.ne.s32.totalorder %s103, %s106
    %p112 = scmp.eq.s32.totalorder %s9, 0
    %p113 = por %p111, %p112
    %p114 = scmp.ne.s32.totalorder %s103, %s106
    %p115 = scmp.eq.s32.totalorder %s14, 1
    %p116 = por %p114, %p115
    %p117 = scmp.ne.s32.totalorder %s106, %s107
    %p118 = scmp.eq.s32.totalorder %s14, 0
    %p119 = por %p117, %p118
    %p120 = scmp.ne.s32.totalorder %s106, %s107
    %p121 = scmp.eq.s32.totalorder %s15, 1
    %p122 = por %p120, %p121
    %p124 = scmp.ne.s32.totalorder %s107, %s123
    %p125 = scmp.eq.s32.totalorder %s15, 0
    %p126 = por %p124, %p125
    %p127 = scmp.le.s32.totalorder 1, %s9
    %p128 = scmp.lt.s32.totalorder %s9, 3
    %p129 = pnand %p127, %p128
    %p130 = pneg %p129
    // Predicated region
    $region9: #{_lambda_.7} parent=5 // pred_check
      _
    $region10: #{_lambda_.7} parent=5 // pred_check_branch
      %132 = sbr.rel (%p129) target = $region12
    $region11: #{_lambda_.7} parent=5 // pred_region
      %s133 = ssub.s32 %s9, 1
      // Predicated region
      $region13: #{_lambda_.7} parent=11 // pred_check
        %p134 = pneg %p70
      $region14: #{_lambda_.7} parent=11 // pred_check_branch
        %136 = sbr.rel (%p134) target = $region16
      $region15: #{_lambda_.7} parent=11 // pred_region
        _
      $region16: #{_lambda_.7} parent=11 // pred_fallthru
        _
      // Predicated region
      $region17: #{_lambda_.7} parent=11 // pred_check
        %p137 = pneg %p91
      $region18: #{_lambda_.7} parent=11 // pred_check_branch
        %139 = sbr.rel (%p137) target = $region20
      $region19: #{_lambda_.7} parent=11 // pred_region
        _
      $region20: #{_lambda_.7} parent=11 // pred_fallthru
        _
    $region12: #{_lambda_.7} parent=5 // pred_fallthru
      _
    %p140 = scmp.lt.s32.totalorder %s9, 2
    // Predicated region
    $region21: #{_lambda_.7} parent=5 // pred_check
      %p141 = pneg %p140
    $region22: #{_lambda_.7} parent=5 // pred_check_branch
      %143 = sbr.rel (%p141) target = $region24
    $region23: #{_lambda_.7} parent=5 // pred_region
      // Predicated region
      $region25: #{_lambda_.7} parent=23 // pred_check
        %p144 = pneg %p43
      $region26: #{_lambda_.7} parent=23 // pred_check_branch
        %146 = sbr.rel (%p144) target = $region28
      $region27: #{_lambda_.7} parent=23 // pred_region
        %s147 = smul.u32 8, %s17
        %p148 = scmp.lt.s32.totalorder %s16, 1
        %s149 = scalar_select %p148, %s16, 1
        %p150 = scmp.lt.s32.totalorder %s147, 7
        %s151 = scalar_select %p150, %s147, 7
        %s152 = smul.addr %s151, 8
        %s153 = smul.addr %s149, 64
        %s154 = sadd.s32 %s152, %s153
        %s155 = smul.addr %s154, 4
        %s156 = scalar_lea.vmem %s0, %s155
        %s157 = smul.u32 8, %s17
      $region28: #{_lambda_.7} parent=23 // pred_fallthru
        _
    $region24: #{_lambda_.7} parent=5 // pred_fallthru
      _
    %p158 = scmp.le.s32.totalorder 1, %s9
    %p159 = scmp.lt.s32.totalorder %s9, 3
    %p160 = pnand %p158, %p159
    %p161 = pneg %p160
    // Predicated region
    $region29: #{_lambda_.7} parent=5 // pred_check
      _
    $region30: #{_lambda_.7} parent=5 // pred_check_branch
      %163 = sbr.rel (%p160) target = $region32
    $region31: #{_lambda_.7} parent=5 // pred_region
      %s164 = ssub.s32 %s9, 1
      %s165 = smul.u32 8, %s19
      %p166 = scmp.lt.s32.totalorder %s18, 1
      %s167 = scalar_select %p166, %s18, 1
      %p168 = scmp.lt.s32.totalorder %s165, 7
      %s169 = scalar_select %p168, %s165, 7
      %s170 = smul.addr %s169, 8
      %s171 = smul.addr %s167, 64
      %s172 = sadd.s32 %s170, %s171
      %s173 = smul.addr %s172, 4
      %s174 = scalar_lea.vmem %s0, %s173
      %p175 = pneg %p49
      %p176 = pneg %p46
      %p177 = pneg %p70
      %p178 = pneg %p67
      %p179 = pneg %p91
      %p180 = pneg %p88
      %p181 = pneg %p119
      %p182 = pneg %p116
      %s183 = smul.u32 8, %s19
      %p184 = scmp.lt.s32.totalorder %s18, 1
      %s185 = scalar_select %p184, %s18, 1
      %p186 = scmp.lt.s32.totalorder %s183, 7
      %s187 = scalar_select %p186, %s183, 7
      %s188 = smul.addr %s185, 8
      %s189 = sadd.s32 %s187, %s188
      %s190 = smul.addr %s189, 4
      %s191 = scalar_lea.vmem %s3, %s190
      %s192 = smul.u32 8, %s19
      %p193 = scmp.lt.s32.totalorder %s18, 1
      %s194 = scalar_select %p193, %s18, 1
      %p195 = scmp.lt.s32.totalorder %s192, 7
      %s196 = scalar_select %p195, %s192, 7
      %s197 = smul.addr %s196, 8
      %s198 = smul.addr %s194, 64
      %s199 = sadd.s32 %s197, %s198
      %s200 = smul.addr %s199, 4
      %s201 = scalar_lea.vmem %s0, %s200
      %s202 = smul.u32 8, %s19
      %s203 = smul.u32 8, %s19
      %p204 = scmp.lt.s32.totalorder %s18, 1
      %s205 = scalar_select %p204, %s18, 1
      %p206 = scmp.lt.s32.totalorder %s203, 7
      %s207 = scalar_select %p206, %s203, 7
      %s208 = smul.addr %s205, 8
      %s209 = sadd.s32 %s207, %s208
      %s210 = smul.addr %s209, 4
      %s211 = scalar_lea.vmem %s3, %s210
      %s212 = smul.u32 8, %s19
      %v213 = vld [vmem:[%s201] sm:$0xff]
      %v214 = vld [vmem:[%s201 + $0x8] sm:$0xff]
      %v215 = vld [vmem:[%s201 + $0x10] sm:$0xff]
      %v216 = vld [vmem:[%s201 + $0x18] sm:$0xff]
      %v217 = vld [vmem:[%s201 + $0x20] sm:$0xff]
      %v218 = vld [vmem:[%s201 + $0x28] sm:$0xff]
      %v219 = vld [vmem:[%s201 + $0x30] sm:$0xff]
      %v220 = vld [vmem:[%s201 + $0x38] sm:$0xff]
      %v221 = vld [vmem:[%s201 + $0x40] sm:$0xff]
      %v222 = vld [vmem:[%s201 + $0x48] sm:$0xff]
      %v223 = vld [vmem:[%s201 + $0x50] sm:$0xff]
      %v224 = vld [vmem:[%s201 + $0x58] sm:$0xff]
      %v225 = vld [vmem:[%s201 + $0x60] sm:$0xff]
      %v226 = vld [vmem:[%s201 + $0x68] sm:$0xff]
      %v227 = vld [vmem:[%s201 + $0x70] sm:$0xff]
      %v228 = vld [vmem:[%s201 + $0x78] sm:$0xff]
      %v229 = vld [vmem:[%s201 + $0x80] sm:$0xff]
      %v230 = vld [vmem:[%s201 + $0x88] sm:$0xff]
      %v231 = vld [vmem:[%s201 + $0x90] sm:$0xff]
      %v232 = vld [vmem:[%s201 + $0x98] sm:$0xff]
      %v233 = vld [vmem:[%s201 + $0xa0] sm:$0xff]
      %v234 = vld [vmem:[%s201 + $0xa8] sm:$0xff]
      %v235 = vld [vmem:[%s201 + $0xb0] sm:$0xff]
      %v236 = vld [vmem:[%s201 + $0xb8] sm:$0xff]
      %v237 = vld [vmem:[%s201 + $0xc0] sm:$0xff]
      %v238 = vld [vmem:[%s201 + $0xc8] sm:$0xff]
      %v239 = vld [vmem:[%s201 + $0xd0] sm:$0xff]
      %v240 = vld [vmem:[%s201 + $0xd8] sm:$0xff]
      %v241 = vld [vmem:[%s201 + $0xe0] sm:$0xff]
      %v242 = vld [vmem:[%s201 + $0xe8] sm:$0xff]
      %v243 = vld [vmem:[%s201 + $0xf0] sm:$0xff]
      %v244 = vld [vmem:[%s201 + $0xf8] sm:$0xff]
      %v245 = vld [vmem:[%s1] sm:$0xf]
      %v246 = vld [vmem:[%s1 + $0x4] sm:$0xf]
      %v247 = vld [vmem:[%s1 + $0x8] sm:$0xf]
      %v248 = vld [vmem:[%s1 + $0xc] sm:$0xf]
      %v249 = vld [vmem:[%s1 + $0x10] sm:$0xf]
      %v250 = vld [vmem:[%s1 + $0x14] sm:$0xf]
      %v251 = vld [vmem:[%s1 + $0x18] sm:$0xf]
      %v252 = vld [vmem:[%s1 + $0x1c] sm:$0xf]
      %v253 = vld [vmem:[%s1 + $0x20] sm:$0xf]
      %v254 = vld [vmem:[%s1 + $0x24] sm:$0xf]
      %v255 = vld [vmem:[%s1 + $0x28] sm:$0xf]
      %v256 = vld [vmem:[%s1 + $0x2c] sm:$0xf]
      %v257 = vld [vmem:[%s1 + $0x30] sm:$0xf]
      %v258 = vld [vmem:[%s1 + $0x34] sm:$0xf]
      %v259 = vld [vmem:[%s1 + $0x38] sm:$0xf]
      %v260 = vld [vmem:[%s1 + $0x3c] sm:$0xf]
      %v261 = vld [vmem:[%s1 + $0x40] sm:$0xf]
      %v262 = vld [vmem:[%s1 + $0x44] sm:$0xf]
      %v263 = vld [vmem:[%s1 + $0x48] sm:$0xf]
      %v264 = vld [vmem:[%s1 + $0x4c] sm:$0xf]
      %v265 = vld [vmem:[%s1 + $0x50] sm:$0xf]
      %v266 = vld [vmem:[%s1 + $0x54] sm:$0xf]
      %v267 = vld [vmem:[%s1 + $0x58] sm:$0xf]
      %v268 = vld [vmem:[%s1 + $0x5c] sm:$0xf]
      %v269 = vld [vmem:[%s1 + $0x60] sm:$0xf]
      %v270 = vld [vmem:[%s1 + $0x64] sm:$0xf]
      %v271 = vld [vmem:[%s1 + $0x68] sm:$0xf]
      %v272 = vld [vmem:[%s1 + $0x6c] sm:$0xf]
      %v273 = vld [vmem:[%s1 + $0x70] sm:$0xf]
      %v274 = vld [vmem:[%s1 + $0x74] sm:$0xf]
      %v275 = vld [vmem:[%s1 + $0x78] sm:$0xf]
      %v276 = vld [vmem:[%s1 + $0x7c] sm:$0xf]
      %v277 = vld [vmem:[%s1 + $0x80] sm:$0xf]
      %v278 = vld [vmem:[%s1 + $0x84] sm:$0xf]
      %v279 = vld [vmem:[%s1 + $0x88] sm:$0xf]
      %v280 = vld [vmem:[%s1 + $0x8c] sm:$0xf]
      %v281 = vld [vmem:[%s1 + $0x90] sm:$0xf]
      %v282 = vld [vmem:[%s1 + $0x94] sm:$0xf]
      %v283 = vld [vmem:[%s1 + $0x98] sm:$0xf]
      %v284 = vld [vmem:[%s1 + $0x9c] sm:$0xf]
      %v285 = vld [vmem:[%s1 + $0xa0] sm:$0xf]
      %v286 = vld [vmem:[%s1 + $0xa4] sm:$0xf]
      %v287 = vld [vmem:[%s1 + $0xa8] sm:$0xf]
      %v288 = vld [vmem:[%s1 + $0xac] sm:$0xf]
      %v289 = vld [vmem:[%s1 + $0xb0] sm:$0xf]
      %v290 = vld [vmem:[%s1 + $0xb4] sm:$0xf]
      %v291 = vld [vmem:[%s1 + $0xb8] sm:$0xf]
      %v292 = vld [vmem:[%s1 + $0xbc] sm:$0xf]
      %v293 = vld [vmem:[%s1 + $0xc0] sm:$0xf]
      %v294 = vld [vmem:[%s1 + $0xc4] sm:$0xf]
      %v295 = vld [vmem:[%s1 + $0xc8] sm:$0xf]
      %v296 = vld [vmem:[%s1 + $0xcc] sm:$0xf]
      %v297 = vld [vmem:[%s1 + $0xd0] sm:$0xf]
      %v298 = vld [vmem:[%s1 + $0xd4] sm:$0xf]
      %v299 = vld [vmem:[%s1 + $0xd8] sm:$0xf]
      %v300 = vld [vmem:[%s1 + $0xdc] sm:$0xf]
      %v301 = vld [vmem:[%s1 + $0xe0] sm:$0xf]
      %v302 = vld [vmem:[%s1 + $0xe4] sm:$0xf]
      %v303 = vld [vmem:[%s1 + $0xe8] sm:$0xf]
      %v304 = vld [vmem:[%s1 + $0xec] sm:$0xf]
      %v305 = vld [vmem:[%s1 + $0xf0] sm:$0xf]
      %v306 = vld [vmem:[%s1 + $0xf4] sm:$0xf]
      %v307 = vld [vmem:[%s1 + $0xf8] sm:$0xf]
      %v308 = vld [vmem:[%s1 + $0xfc] sm:$0xf]
      %v309 = vld [vmem:[%s1 + $0x100] sm:$0xf]
      %v310 = vld [vmem:[%s1 + $0x104] sm:$0xf]
      %v311 = vld [vmem:[%s1 + $0x108] sm:$0xf]
      %v312 = vld [vmem:[%s1 + $0x10c] sm:$0xf]
      %v313 = vld [vmem:[%s1 + $0x110] sm:$0xf]
      %v314 = vld [vmem:[%s1 + $0x114] sm:$0xf]
      %v315 = vld [vmem:[%s1 + $0x118] sm:$0xf]
      %v316 = vld [vmem:[%s1 + $0x11c] sm:$0xf]
      %v317 = vld [vmem:[%s1 + $0x120] sm:$0xf]
      %v318 = vld [vmem:[%s1 + $0x124] sm:$0xf]
      %v319 = vld [vmem:[%s1 + $0x128] sm:$0xf]
      %v320 = vld [vmem:[%s1 + $0x12c] sm:$0xf]
      %v321 = vld [vmem:[%s1 + $0x130] sm:$0xf]
      %v322 = vld [vmem:[%s1 + $0x134] sm:$0xf]
      %v323 = vld [vmem:[%s1 + $0x138] sm:$0xf]
      %v324 = vld [vmem:[%s1 + $0x13c] sm:$0xf]
      %v325 = vld [vmem:[%s1 + $0x140] sm:$0xf]
      %v326 = vld [vmem:[%s1 + $0x144] sm:$0xf]
      %v327 = vld [vmem:[%s1 + $0x148] sm:$0xf]
      %v328 = vld [vmem:[%s1 + $0x14c] sm:$0xf]
      %v329 = vld [vmem:[%s1 + $0x150] sm:$0xf]
      %v330 = vld [vmem:[%s1 + $0x154] sm:$0xf]
      %v331 = vld [vmem:[%s1 + $0x158] sm:$0xf]
      %v332 = vld [vmem:[%s1 + $0x15c] sm:$0xf]
      %v333 = vld [vmem:[%s1 + $0x160] sm:$0xf]
      %v334 = vld [vmem:[%s1 + $0x164] sm:$0xf]
      %v335 = vld [vmem:[%s1 + $0x168] sm:$0xf]
      %v336 = vld [vmem:[%s1 + $0x16c] sm:$0xf]
      %v337 = vld [vmem:[%s1 + $0x170] sm:$0xf]
      %v338 = vld [vmem:[%s1 + $0x174] sm:$0xf]
      %v339 = vld [vmem:[%s1 + $0x178] sm:$0xf]
      %v340 = vld [vmem:[%s1 + $0x17c] sm:$0xf]
      %v341 = vld [vmem:[%s1 + $0x180] sm:$0xf]
      %v342 = vld [vmem:[%s1 + $0x184] sm:$0xf]
      %v343 = vld [vmem:[%s1 + $0x188] sm:$0xf]
      %v344 = vld [vmem:[%s1 + $0x18c] sm:$0xf]
      %v345 = vld [vmem:[%s1 + $0x190] sm:$0xf]
      %v346 = vld [vmem:[%s1 + $0x194] sm:$0xf]
      %v347 = vld [vmem:[%s1 + $0x198] sm:$0xf]
      %v348 = vld [vmem:[%s1 + $0x19c] sm:$0xf]
      %v349 = vld [vmem:[%s1 + $0x1a0] sm:$0xf]
      %v350 = vld [vmem:[%s1 + $0x1a4] sm:$0xf]
      %v351 = vld [vmem:[%s1 + $0x1a8] sm:$0xf]
      %v352 = vld [vmem:[%s1 + $0x1ac] sm:$0xf]
      %v353 = vld [vmem:[%s1 + $0x1b0] sm:$0xf]
      %v354 = vld [vmem:[%s1 + $0x1b4] sm:$0xf]
      %v355 = vld [vmem:[%s1 + $0x1b8] sm:$0xf]
      %v356 = vld [vmem:[%s1 + $0x1bc] sm:$0xf]
      %v357 = vld [vmem:[%s1 + $0x1c0] sm:$0xf]
      %v358 = vld [vmem:[%s1 + $0x1c4] sm:$0xf]
      %v359 = vld [vmem:[%s1 + $0x1c8] sm:$0xf]
      %v360 = vld [vmem:[%s1 + $0x1cc] sm:$0xf]
      %v361 = vld [vmem:[%s1 + $0x1d0] sm:$0xf]
      %v362 = vld [vmem:[%s1 + $0x1d4] sm:$0xf]
      %v363 = vld [vmem:[%s1 + $0x1d8] sm:$0xf]
      %v364 = vld [vmem:[%s1 + $0x1dc] sm:$0xf]
      %v365 = vld [vmem:[%s1 + $0x1e0] sm:$0xf]
      %v366 = vld [vmem:[%s1 + $0x1e4] sm:$0xf]
      %v367 = vld [vmem:[%s1 + $0x1e8] sm:$0xf]
      %v368 = vld [vmem:[%s1 + $0x1ec] sm:$0xf]
      %v369 = vld [vmem:[%s1 + $0x1f0] sm:$0xf]
      %v370 = vld [vmem:[%s1 + $0x1f4] sm:$0xf]
      %v371 = vld [vmem:[%s1 + $0x1f8] sm:$0xf]
      %v372 = vld [vmem:[%s1 + $0x1fc] sm:$0xf]
      %v373 = vld [vmem:[%s2] sm:$0x1]
      %v375 = vperm.slane %v373, 0
      %v409 = vunpack.c.l.b16 %v213
      %v410 = vunpack.c.h.b16 %v213
      %v411 = vunpack.c.l.b16 %v214
      %v412 = vunpack.c.h.b16 %v214
      %v413 = vunpack.c.l.b16 %v215
      %v414 = vunpack.c.h.b16 %v215
      %v415 = vunpack.c.l.b16 %v216
      %v416 = vunpack.c.h.b16 %v216
      %v417 = vunpack.c.l.b16 %v217
      %v418 = vunpack.c.h.b16 %v217
      %v419 = vunpack.c.l.b16 %v218
      %v420 = vunpack.c.h.b16 %v218
      %v421 = vunpack.c.l.b16 %v219
      %v422 = vunpack.c.h.b16 %v219
      %v423 = vunpack.c.l.b16 %v220
      %v424 = vunpack.c.h.b16 %v220
      %v425 = vunpack.c.l.b16 %v221
      %v426 = vunpack.c.h.b16 %v221
      %v427 = vunpack.c.l.b16 %v222
      %v428 = vunpack.c.h.b16 %v222
      %v429 = vunpack.c.l.b16 %v223
      %v430 = vunpack.c.h.b16 %v223
      %v431 = vunpack.c.l.b16 %v224
      %v432 = vunpack.c.h.b16 %v224
      %v433 = vunpack.c.l.b16 %v225
      %v434 = vunpack.c.h.b16 %v225
      %v435 = vunpack.c.l.b16 %v226
      %v436 = vunpack.c.h.b16 %v226
      %v437 = vunpack.c.l.b16 %v227
      %v438 = vunpack.c.h.b16 %v227
      %v439 = vunpack.c.l.b16 %v228
      %v440 = vunpack.c.h.b16 %v228
      %v441 = vunpack.c.l.b16 %v229
      %v442 = vunpack.c.h.b16 %v229
      %v443 = vunpack.c.l.b16 %v230
      %v444 = vunpack.c.h.b16 %v230
      %v445 = vunpack.c.l.b16 %v231
      %v446 = vunpack.c.h.b16 %v231
      %v447 = vunpack.c.l.b16 %v232
      %v448 = vunpack.c.h.b16 %v232
      %v449 = vunpack.c.l.b16 %v233
      %v450 = vunpack.c.h.b16 %v233
      %v451 = vunpack.c.l.b16 %v234
      %v452 = vunpack.c.h.b16 %v234
      %v453 = vunpack.c.l.b16 %v235
      %v454 = vunpack.c.h.b16 %v235
      %v455 = vunpack.c.l.b16 %v236
      %v456 = vunpack.c.h.b16 %v236
      %v457 = vunpack.c.l.b16 %v237
      %v458 = vunpack.c.h.b16 %v237
      %v459 = vunpack.c.l.b16 %v238
      %v460 = vunpack.c.h.b16 %v238
      %v461 = vunpack.c.l.b16 %v239
      %v462 = vunpack.c.h.b16 %v239
      %v463 = vunpack.c.l.b16 %v240
      %v464 = vunpack.c.h.b16 %v240
      %v465 = vunpack.c.l.b16 %v241
      %v466 = vunpack.c.h.b16 %v241
      %v467 = vunpack.c.l.b16 %v242
      %v468 = vunpack.c.h.b16 %v242
      %v469 = vunpack.c.l.b16 %v243
      %v470 = vunpack.c.h.b16 %v243
      %v471 = vunpack.c.l.b16 %v244
      %v472 = vunpack.c.h.b16 %v244
      %v473 = vpack.c.b16 %v417, %v409
      %v474 = vpack.c.b16 %v418, %v410
      %v475 = vpack.c.b16 %v419, %v411
      %v476 = vpack.c.b16 %v420, %v412
      %v477 = vpack.c.b16 %v421, %v413
      %v478 = vpack.c.b16 %v422, %v414
      %v479 = vpack.c.b16 %v423, %v415
      %v480 = vpack.c.b16 %v424, %v416
      %v481 = vpack.c.b16 %v433, %v425
      %v482 = vpack.c.b16 %v434, %v426
      %v483 = vpack.c.b16 %v435, %v427
      %v484 = vpack.c.b16 %v436, %v428
      %v485 = vpack.c.b16 %v437, %v429
      %v486 = vpack.c.b16 %v438, %v430
      %v487 = vpack.c.b16 %v439, %v431
      %v488 = vpack.c.b16 %v440, %v432
      %v489 = vpack.c.b16 %v449, %v441
      %v490 = vpack.c.b16 %v450, %v442
      %v491 = vpack.c.b16 %v451, %v443
      %v492 = vpack.c.b16 %v452, %v444
      %v493 = vpack.c.b16 %v453, %v445
      %v494 = vpack.c.b16 %v454, %v446
      %v495 = vpack.c.b16 %v455, %v447
      %v496 = vpack.c.b16 %v456, %v448
      %v497 = vpack.c.b16 %v465, %v457
      %v498 = vpack.c.b16 %v466, %v458
      %v499 = vpack.c.b16 %v467, %v459
      %v500 = vpack.c.b16 %v468, %v460
      %v501 = vpack.c.b16 %v469, %v461
      %v502 = vpack.c.b16 %v470, %v462
      %v503 = vpack.c.b16 %v471, %v463
      %v504 = vpack.c.b16 %v472, %v464
      %v665 = vunpack.c.l.b16 %v245
      %v666 = vunpack.c.l.b16 %v246
      %v667 = vunpack.c.l.b16 %v247
      %v668 = vunpack.c.l.b16 %v248
      %v669 = vunpack.c.l.b16 %v249
      %v670 = vunpack.c.l.b16 %v250
      %v671 = vunpack.c.l.b16 %v251
      %v672 = vunpack.c.l.b16 %v252
      %v673 = vunpack.c.l.b16 %v253
      %v674 = vunpack.c.l.b16 %v254
      %v675 = vunpack.c.l.b16 %v255
      %v676 = vunpack.c.l.b16 %v256
      %v677 = vunpack.c.l.b16 %v257
      %v678 = vunpack.c.l.b16 %v258
      %v679 = vunpack.c.l.b16 %v259
      %v680 = vunpack.c.l.b16 %v260
      %v681 = vunpack.c.l.b16 %v261
      %v682 = vunpack.c.l.b16 %v262
      %v683 = vunpack.c.l.b16 %v263
      %v684 = vunpack.c.l.b16 %v264
      %v685 = vunpack.c.l.b16 %v265
      %v686 = vunpack.c.l.b16 %v266
      %v687 = vunpack.c.l.b16 %v267
      %v688 = vunpack.c.l.b16 %v268
      %v689 = vunpack.c.l.b16 %v269
      %v690 = vunpack.c.l.b16 %v270
      %v691 = vunpack.c.l.b16 %v271
      %v692 = vunpack.c.l.b16 %v272
      %v693 = vunpack.c.l.b16 %v273
      %v694 = vunpack.c.l.b16 %v274
      %v695 = vunpack.c.l.b16 %v275
      %v696 = vunpack.c.l.b16 %v276
      %v697 = vunpack.c.l.b16 %v277
      %v698 = vunpack.c.l.b16 %v278
      %v699 = vunpack.c.l.b16 %v279
      %v700 = vunpack.c.l.b16 %v280
      %v701 = vunpack.c.l.b16 %v281
      %v702 = vunpack.c.l.b16 %v282
      %v703 = vunpack.c.l.b16 %v283
      %v704 = vunpack.c.l.b16 %v284
      %v705 = vunpack.c.l.b16 %v285
      %v706 = vunpack.c.l.b16 %v286
      %v707 = vunpack.c.l.b16 %v287
      %v708 = vunpack.c.l.b16 %v288
      %v709 = vunpack.c.l.b16 %v289
      %v710 = vunpack.c.l.b16 %v290
      %v711 = vunpack.c.l.b16 %v291
      %v712 = vunpack.c.l.b16 %v292
      %v713 = vunpack.c.l.b16 %v293
      %v714 = vunpack.c.l.b16 %v294
      %v715 = vunpack.c.l.b16 %v295
      %v716 = vunpack.c.l.b16 %v296
      %v717 = vunpack.c.l.b16 %v297
      %v718 = vunpack.c.l.b16 %v298
      %v719 = vunpack.c.l.b16 %v299
      %v720 = vunpack.c.l.b16 %v300
      %v721 = vunpack.c.l.b16 %v301
      %v722 = vunpack.c.l.b16 %v302
      %v723 = vunpack.c.l.b16 %v303
      %v724 = vunpack.c.l.b16 %v304
      %v725 = vunpack.c.l.b16 %v305
      %v726 = vunpack.c.l.b16 %v306
      %v727 = vunpack.c.l.b16 %v307
      %v728 = vunpack.c.l.b16 %v308
      %v729 = vunpack.c.l.b16 %v309
      %v730 = vunpack.c.l.b16 %v310
      %v731 = vunpack.c.l.b16 %v311
      %v732 = vunpack.c.l.b16 %v312
      %v733 = vunpack.c.l.b16 %v313
      %v734 = vunpack.c.l.b16 %v314
      %v735 = vunpack.c.l.b16 %v315
      %v736 = vunpack.c.l.b16 %v316
      %v737 = vunpack.c.l.b16 %v317
      %v738 = vunpack.c.l.b16 %v318
      %v739 = vunpack.c.l.b16 %v319
      %v740 = vunpack.c.l.b16 %v320
      %v741 = vunpack.c.l.b16 %v321
      %v742 = vunpack.c.l.b16 %v322
      %v743 = vunpack.c.l.b16 %v323
      %v744 = vunpack.c.l.b16 %v324
      %v745 = vunpack.c.l.b16 %v325
      %v746 = vunpack.c.l.b16 %v326
      %v747 = vunpack.c.l.b16 %v327
      %v748 = vunpack.c.l.b16 %v328
      %v749 = vunpack.c.l.b16 %v329
      %v750 = vunpack.c.l.b16 %v330
      %v751 = vunpack.c.l.b16 %v331
      %v752 = vunpack.c.l.b16 %v332
      %v753 = vunpack.c.l.b16 %v333
      %v754 = vunpack.c.l.b16 %v334
      %v755 = vunpack.c.l.b16 %v335
      %v756 = vunpack.c.l.b16 %v336
      %v757 = vunpack.c.l.b16 %v337
      %v758 = vunpack.c.l.b16 %v338
      %v759 = vunpack.c.l.b16 %v339
      %v760 = vunpack.c.l.b16 %v340
      %v761 = vunpack.c.l.b16 %v341
      %v762 = vunpack.c.l.b16 %v342
      %v763 = vunpack.c.l.b16 %v343
      %v764 = vunpack.c.l.b16 %v344
      %v765 = vunpack.c.l.b16 %v345
      %v766 = vunpack.c.l.b16 %v346
      %v767 = vunpack.c.l.b16 %v347
      %v768 = vunpack.c.l.b16 %v348
      %v769 = vunpack.c.l.b16 %v349
      %v770 = vunpack.c.l.b16 %v350
      %v771 = vunpack.c.l.b16 %v351
      %v772 = vunpack.c.l.b16 %v352
      %v773 = vunpack.c.l.b16 %v353
      %v774 = vunpack.c.l.b16 %v354
      %v775 = vunpack.c.l.b16 %v355
      %v776 = vunpack.c.l.b16 %v356
      %v777 = vunpack.c.l.b16 %v357
      %v778 = vunpack.c.l.b16 %v358
      %v779 = vunpack.c.l.b16 %v359
      %v780 = vunpack.c.l.b16 %v360
      %v781 = vunpack.c.l.b16 %v361
      %v782 = vunpack.c.l.b16 %v362
      %v783 = vunpack.c.l.b16 %v363
      %v784 = vunpack.c.l.b16 %v364
      %v785 = vunpack.c.l.b16 %v365
      %v786 = vunpack.c.l.b16 %v366
      %v787 = vunpack.c.l.b16 %v367
      %v788 = vunpack.c.l.b16 %v368
      %v789 = vunpack.c.l.b16 %v369
      %v790 = vunpack.c.l.b16 %v370
      %v791 = vunpack.c.l.b16 %v371
      %v792 = vunpack.c.l.b16 %v372
      %v793 = vpack.c.b16 %v666, %v665
      %v794 = vpack.c.b16 %v668, %v667
      %v795 = vpack.c.b16 %v670, %v669
      %v796 = vpack.c.b16 %v672, %v671
      %v797 = vpack.c.b16 %v674, %v673
      %v798 = vpack.c.b16 %v676, %v675
      %v799 = vpack.c.b16 %v678, %v677
      %v800 = vpack.c.b16 %v680, %v679
      %v801 = vpack.c.b16 %v682, %v681
      %v802 = vpack.c.b16 %v684, %v683
      %v803 = vpack.c.b16 %v686, %v685
      %v804 = vpack.c.b16 %v688, %v687
      %v805 = vpack.c.b16 %v690, %v689
      %v806 = vpack.c.b16 %v692, %v691
      %v807 = vpack.c.b16 %v694, %v693
      %v808 = vpack.c.b16 %v696, %v695
      %v809 = vpack.c.b16 %v698, %v697
      %v810 = vpack.c.b16 %v700, %v699
      %v811 = vpack.c.b16 %v702, %v701
      %v812 = vpack.c.b16 %v704, %v703
      %v813 = vpack.c.b16 %v706, %v705
      %v814 = vpack.c.b16 %v708, %v707
      %v815 = vpack.c.b16 %v710, %v709
      %v816 = vpack.c.b16 %v712, %v711
      %v817 = vpack.c.b16 %v714, %v713
      %v818 = vpack.c.b16 %v716, %v715
      %v819 = vpack.c.b16 %v718, %v717
      %v820 = vpack.c.b16 %v720, %v719
      %v821 = vpack.c.b16 %v722, %v721
      %v822 = vpack.c.b16 %v724, %v723
      %v823 = vpack.c.b16 %v726, %v725
      %v824 = vpack.c.b16 %v728, %v727
      %v825 = vpack.c.b16 %v730, %v729
      %v826 = vpack.c.b16 %v732, %v731
      %v827 = vpack.c.b16 %v734, %v733
      %v828 = vpack.c.b16 %v736, %v735
      %v829 = vpack.c.b16 %v738, %v737
      %v830 = vpack.c.b16 %v740, %v739
      %v831 = vpack.c.b16 %v742, %v741
      %v832 = vpack.c.b16 %v744, %v743
      %v833 = vpack.c.b16 %v746, %v745
      %v834 = vpack.c.b16 %v748, %v747
      %v835 = vpack.c.b16 %v750, %v749
      %v836 = vpack.c.b16 %v752, %v751
      %v837 = vpack.c.b16 %v754, %v753
      %v838 = vpack.c.b16 %v756, %v755
      %v839 = vpack.c.b16 %v758, %v757
      %v840 = vpack.c.b16 %v760, %v759
      %v841 = vpack.c.b16 %v762, %v761
      %v842 = vpack.c.b16 %v764, %v763
      %v843 = vpack.c.b16 %v766, %v765
      %v844 = vpack.c.b16 %v768, %v767
      %v845 = vpack.c.b16 %v770, %v769
      %v846 = vpack.c.b16 %v772, %v771
      %v847 = vpack.c.b16 %v774, %v773
      %v848 = vpack.c.b16 %v776, %v775
      %v849 = vpack.c.b16 %v778, %v777
      %v850 = vpack.c.b16 %v780, %v779
      %v851 = vpack.c.b16 %v782, %v781
      %v852 = vpack.c.b16 %v784, %v783
      %v853 = vpack.c.b16 %v786, %v785
      %v854 = vpack.c.b16 %v788, %v787
      %v855 = vpack.c.b16 %v790, %v789
      %v856 = vpack.c.b16 %v792, %v791
      %921 = vmatpush.bf16.msra.mxu0 %v800
      %922 = vmatpush.bf16.msra.mxu0 %v799
      %923 = vmatpush.bf16.msra.mxu0 %v798
      %924 = vmatpush.bf16.msra.mxu0 %v797
      %925 = vmatpush.bf16.msra.mxu0 %v796
      %926 = vmatpush.bf16.msra.mxu0 %v795
      %927 = vmatpush.bf16.msra.mxu0 %v794
      %928 = vmatpush.bf16.msra.mxu0 %v793
      %929 = vmatmul.bf16.gmra.mxu0 %v473
      %v930 = vpop.f32.mrf.mxu0
      %v931 = vadd.f32 %v375, %v930
      %v932 = vpop.f32.mrf.mxu0
      %v933 = vadd.f32 %v375, %v932
      %934 = vmatmul.bf16.gmra.mxu0 %v481
      %v935 = vpop.f32.mrf.mxu0
      %v936 = vadd.f32 %v375, %v935
      %v937 = vpop.f32.mrf.mxu0
      %v938 = vadd.f32 %v375, %v937
      %939 = vmatmul.bf16.gmra.mxu0 %v489
      %v940 = vpop.f32.mrf.mxu0
      %v941 = vadd.f32 %v375, %v940
      %v942 = vpop.f32.mrf.mxu0
      %v943 = vadd.f32 %v375, %v942
      %944 = vmatmul.bf16.gmra.mxu0 %v497
      %v945 = vpop.f32.mrf.mxu0
      %v946 = vadd.f32 %v375, %v945
      %v947 = vpop.f32.mrf.mxu0
      %v948 = vadd.f32 %v375, %v947
      %949 = vdwg.mxu0
      %950 = vmatpush.bf16.msra.mxu0 %v808
      %951 = vmatpush.bf16.msra.mxu0 %v807
      %952 = vmatpush.bf16.msra.mxu0 %v806
      %953 = vmatpush.bf16.msra.mxu0 %v805
      %954 = vmatpush.bf16.msra.mxu0 %v804
      %955 = vmatpush.bf16.msra.mxu0 %v803
      %956 = vmatpush.bf16.msra.mxu0 %v802
      %957 = vmatpush.bf16.msra.mxu0 %v801
      %958 = vmatmul.bf16.gmra.mxu0 %v474
      %v959 = vpop.f32.mrf.mxu0
      %v960 = vadd.f32 %v931, %v959
      %v961 = vpop.f32.mrf.mxu0
      %v962 = vadd.f32 %v933, %v961
      %963 = vmatmul.bf16.gmra.mxu0 %v482
      %v964 = vpop.f32.mrf.mxu0
      %v965 = vadd.f32 %v936, %v964
      %v966 = vpop.f32.mrf.mxu0
      %v967 = vadd.f32 %v938, %v966
      %968 = vmatmul.bf16.gmra.mxu0 %v490
      %v969 = vpop.f32.mrf.mxu0
      %v970 = vadd.f32 %v941, %v969
      %v971 = vpop.f32.mrf.mxu0
      %v972 = vadd.f32 %v943, %v971
      %973 = vmatmul.bf16.gmra.mxu0 %v498
      %v974 = vpop.f32.mrf.mxu0
      %v975 = vadd.f32 %v946, %v974
      %v976 = vpop.f32.mrf.mxu0
      %v977 = vadd.f32 %v948, %v976
      %978 = vdwg.mxu0
      %979 = vmatpush.bf16.msra.mxu0 %v816
      %980 = vmatpush.bf16.msra.mxu0 %v815
      %981 = vmatpush.bf16.msra.mxu0 %v814
      %982 = vmatpush.bf16.msra.mxu0 %v813
      %983 = vmatpush.bf16.msra.mxu0 %v812
      %984 = vmatpush.bf16.msra.mxu0 %v811
      %985 = vmatpush.bf16.msra.mxu0 %v810
      %986 = vmatpush.bf16.msra.mxu0 %v809
      %987 = vmatmul.bf16.gmra.mxu0 %v475
      %v988 = vpop.f32.mrf.mxu0
      %v989 = vadd.f32 %v960, %v988
      %v990 = vpop.f32.mrf.mxu0
      %v991 = vadd.f32 %v962, %v990
      %992 = vmatmul.bf16.gmra.mxu0 %v483
      %v993 = vpop.f32.mrf.mxu0
      %v994 = vadd.f32 %v965, %v993
      %v995 = vpop.f32.mrf.mxu0
      %v996 = vadd.f32 %v967, %v995
      %997 = vmatmul.bf16.gmra.mxu0 %v491
      %v998 = vpop.f32.mrf.mxu0
      %v999 = vadd.f32 %v970, %v998
      %v1000 = vpop.f32.mrf.mxu0
      %v1001 = vadd.f32 %v972, %v1000
      %1002 = vmatmul.bf16.gmra.mxu0 %v499
      %v1003 = vpop.f32.mrf.mxu0
      %v1004 = vadd.f32 %v975, %v1003
      %v1005 = vpop.f32.mrf.mxu0
      %v1006 = vadd.f32 %v977, %v1005
      %1007 = vdwg.mxu0
      %1008 = vmatpush.bf16.msra.mxu0 %v824
      %1009 = vmatpush.bf16.msra.mxu0 %v823
      %1010 = vmatpush.bf16.msra.mxu0 %v822
      %1011 = vmatpush.bf16.msra.mxu0 %v821
      %1012 = vmatpush.bf16.msra.mxu0 %v820
      %1013 = vmatpush.bf16.msra.mxu0 %v819
      %1014 = vmatpush.bf16.msra.mxu0 %v818
      %1015 = vmatpush.bf16.msra.mxu0 %v817
      %1016 = vmatmul.bf16.gmra.mxu0 %v476
      %v1017 = vpop.f32.mrf.mxu0
      %v1018 = vadd.f32 %v989, %v1017
      %v1019 = vpop.f32.mrf.mxu0
      %v1020 = vadd.f32 %v991, %v1019
      %1021 = vmatmul.bf16.gmra.mxu0 %v484
      %v1022 = vpop.f32.mrf.mxu0
      %v1023 = vadd.f32 %v994, %v1022
      %v1024 = vpop.f32.mrf.mxu0
      %v1025 = vadd.f32 %v996, %v1024
      %1026 = vmatmul.bf16.gmra.mxu0 %v492
      %v1027 = vpop.f32.mrf.mxu0
      %v1028 = vadd.f32 %v999, %v1027
      %v1029 = vpop.f32.mrf.mxu0
      %v1030 = vadd.f32 %v1001, %v1029
      %1031 = vmatmul.bf16.gmra.mxu0 %v500
      %v1032 = vpop.f32.mrf.mxu0
      %v1033 = vadd.f32 %v1004, %v1032
      %v1034 = vpop.f32.mrf.mxu0
      %v1035 = vadd.f32 %v1006, %v1034
      %1036 = vdwg.mxu0
      %1037 = vmatpush.bf16.msra.mxu0 %v832
      %1038 = vmatpush.bf16.msra.mxu0 %v831
      %1039 = vmatpush.bf16.msra.mxu0 %v830
      %1040 = vmatpush.bf16.msra.mxu0 %v829
      %1041 = vmatpush.bf16.msra.mxu0 %v828
      %1042 = vmatpush.bf16.msra.mxu0 %v827
      %1043 = vmatpush.bf16.msra.mxu0 %v826
      %1044 = vmatpush.bf16.msra.mxu0 %v825
      %1045 = vmatmul.bf16.gmra.mxu0 %v477
      %v1046 = vpop.f32.mrf.mxu0
      %v1047 = vadd.f32 %v1018, %v1046
      %v1048 = vpop.f32.mrf.mxu0
      %v1049 = vadd.f32 %v1020, %v1048
      %1050 = vmatmul.bf16.gmra.mxu0 %v485
      %v1051 = vpop.f32.mrf.mxu0
      %v1052 = vadd.f32 %v1023, %v1051
      %v1053 = vpop.f32.mrf.mxu0
      %v1054 = vadd.f32 %v1025, %v1053
      %1055 = vmatmul.bf16.gmra.mxu0 %v493
      %v1056 = vpop.f32.mrf.mxu0
      %v1057 = vadd.f32 %v1028, %v1056
      %v1058 = vpop.f32.mrf.mxu0
      %v1059 = vadd.f32 %v1030, %v1058
      %1060 = vmatmul.bf16.gmra.mxu0 %v501
      %v1061 = vpop.f32.mrf.mxu0
      %v1062 = vadd.f32 %v1033, %v1061
      %v1063 = vpop.f32.mrf.mxu0
      %v1064 = vadd.f32 %v1035, %v1063
      %1065 = vdwg.mxu0
      %1066 = vmatpush.bf16.msra.mxu0 %v840
      %1067 = vmatpush.bf16.msra.mxu0 %v839
      %1068 = vmatpush.bf16.msra.mxu0 %v838
      %1069 = vmatpush.bf16.msra.mxu0 %v837
      %1070 = vmatpush.bf16.msra.mxu0 %v836
      %1071 = vmatpush.bf16.msra.mxu0 %v835
      %1072 = vmatpush.bf16.msra.mxu0 %v834
      %1073 = vmatpush.bf16.msra.mxu0 %v833
      %1074 = vmatmul.bf16.gmra.mxu0 %v478
      %v1075 = vpop.f32.mrf.mxu0
      %v1076 = vadd.f32 %v1047, %v1075
      %v1077 = vpop.f32.mrf.mxu0
      %v1078 = vadd.f32 %v1049, %v1077
      %1079 = vmatmul.bf16.gmra.mxu0 %v486
      %v1080 = vpop.f32.mrf.mxu0
      %v1081 = vadd.f32 %v1052, %v1080
      %v1082 = vpop.f32.mrf.mxu0
      %v1083 = vadd.f32 %v1054, %v1082
      %1084 = vmatmul.bf16.gmra.mxu0 %v494
      %v1085 = vpop.f32.mrf.mxu0
      %v1086 = vadd.f32 %v1057, %v1085
      %v1087 = vpop.f32.mrf.mxu0
      %v1088 = vadd.f32 %v1059, %v1087
      %1089 = vmatmul.bf16.gmra.mxu0 %v502
      %v1090 = vpop.f32.mrf.mxu0
      %v1091 = vadd.f32 %v1062, %v1090
      %v1092 = vpop.f32.mrf.mxu0
      %v1093 = vadd.f32 %v1064, %v1092
      %1094 = vdwg.mxu0
      %1095 = vmatpush.bf16.msra.mxu0 %v848
      %1096 = vmatpush.bf16.msra.mxu0 %v847
      %1097 = vmatpush.bf16.msra.mxu0 %v846
      %1098 = vmatpush.bf16.msra.mxu0 %v845
      %1099 = vmatpush.bf16.msra.mxu0 %v844
      %1100 = vmatpush.bf16.msra.mxu0 %v843
      %1101 = vmatpush.bf16.msra.mxu0 %v842
      %1102 = vmatpush.bf16.msra.mxu0 %v841
      %1103 = vmatmul.bf16.gmra.mxu0 %v479
      %v1104 = vpop.f32.mrf.mxu0
      %v1105 = vadd.f32 %v1076, %v1104
      %v1106 = vpop.f32.mrf.mxu0
      %v1107 = vadd.f32 %v1078, %v1106
      %1108 = vmatmul.bf16.gmra.mxu0 %v487
      %v1109 = vpop.f32.mrf.mxu0
      %v1110 = vadd.f32 %v1081, %v1109
      %v1111 = vpop.f32.mrf.mxu0
      %v1112 = vadd.f32 %v1083, %v1111
      %1113 = vmatmul.bf16.gmra.mxu0 %v495
      %v1114 = vpop.f32.mrf.mxu0
      %v1115 = vadd.f32 %v1086, %v1114
      %v1116 = vpop.f32.mrf.mxu0
      %v1117 = vadd.f32 %v1088, %v1116
      %1118 = vmatmul.bf16.gmra.mxu0 %v503
      %v1119 = vpop.f32.mrf.mxu0
      %v1120 = vadd.f32 %v1091, %v1119
      %v1121 = vpop.f32.mrf.mxu0
      %v1122 = vadd.f32 %v1093, %v1121
      %1123 = vdwg.mxu0
      %1124 = vmatpush.bf16.msra.mxu0 %v856
      %1125 = vmatpush.bf16.msra.mxu0 %v855
      %1126 = vmatpush.bf16.msra.mxu0 %v854
      %1127 = vmatpush.bf16.msra.mxu0 %v853
      %1128 = vmatpush.bf16.msra.mxu0 %v852
      %1129 = vmatpush.bf16.msra.mxu0 %v851
      %1130 = vmatpush.bf16.msra.mxu0 %v850
      %1131 = vmatpush.bf16.msra.mxu0 %v849
      %1132 = vmatmul.bf16.gmra.mxu0 %v480
      %v1133 = vpop.f32.mrf.mxu0
      %v1134 = vadd.f32 %v1105, %v1133
      %v1135 = vpop.f32.mrf.mxu0
      %v1136 = vadd.f32 %v1107, %v1135
      %1137 = vmatmul.bf16.gmra.mxu0 %v488
      %v1138 = vpop.f32.mrf.mxu0
      %v1139 = vadd.f32 %v1110, %v1138
      %v1140 = vpop.f32.mrf.mxu0
      %v1141 = vadd.f32 %v1112, %v1140
      %1142 = vmatmul.bf16.gmra.mxu0 %v496
      %v1143 = vpop.f32.mrf.mxu0
      %v1144 = vadd.f32 %v1115, %v1143
      %v1145 = vpop.f32.mrf.mxu0
      %v1146 = vadd.f32 %v1117, %v1145
      %1147 = vmatmul.bf16.gmra.mxu0 %v504
      %v1148 = vpop.f32.mrf.mxu0
      %v1149 = vadd.f32 %v1120, %v1148
      %v1150 = vpop.f32.mrf.mxu0
      %v1151 = vadd.f32 %v1122, %v1150
      %1152 = vdwg.mxu0
      %v1153 = vadd.f32 %v1134, %v1136
      %v1154 = vadd.f32 %v1153, %v1139
      %v1155 = vadd.f32 %v1154, %v1141
      %v1156 = vadd.f32 %v1155, %v1144
      %v1157 = vadd.f32 %v1156, %v1146
      %v1158 = vadd.f32 %v1157, %v1149
      %v1159 = vadd.f32 %v1158, %v1151
      %v1160 = vrot.slane %v1159, 4
      %v1161 = vadd.f32 %v1159, %v1160
      %v1162 = vrot.slane %v1161, 2
      %v1163 = vadd.f32 %v1161, %v1162
      %v1164 = vrot.slane %v1163, 1
      %v1165 = vadd.f32 %v1163, %v1164
      %v1166 = vmul.f32 %v1165, 0.015625
      %v1167 = vmul.f32 %v1134, %v1134
      %v1168 = vmul.f32 %v1136, %v1136
      %v1169 = vmul.f32 %v1139, %v1139
      %v1170 = vmul.f32 %v1141, %v1141
      %v1171 = vmul.f32 %v1144, %v1144
      %v1172 = vmul.f32 %v1146, %v1146
      %v1173 = vmul.f32 %v1149, %v1149
      %v1174 = vmul.f32 %v1151, %v1151
      %v1175 = vadd.f32 %v1167, %v1168
      %v1176 = vadd.f32 %v1175, %v1169
      %v1177 = vadd.f32 %v1176, %v1170
      %v1178 = vadd.f32 %v1177, %v1171
      %v1179 = vadd.f32 %v1178, %v1172
      %v1180 = vadd.f32 %v1179, %v1173
      %v1181 = vadd.f32 %v1180, %v1174
      %v1182 = vrot.slane %v1181, 4
      %v1183 = vadd.f32 %v1181, %v1182
      %v1184 = vrot.slane %v1183, 2
      %v1185 = vadd.f32 %v1183, %v1184
      %v1186 = vrot.slane %v1185, 1
      %v1187 = vadd.f32 %v1185, %v1186
      %v1188 = vmul.f32 %v1187, 0.015625
      %v1189 = vmul.f32 %v1166, %v1166
      %v1190 = vsub.f32 %v1188, %v1189
      %v1191 = vsub.f32 %v1134, %v1166
      %v1192 = vsub.f32 %v1136, %v1166
      %v1193 = vsub.f32 %v1139, %v1166
      %v1194 = vsub.f32 %v1141, %v1166
      %v1195 = vsub.f32 %v1144, %v1166
      %v1196 = vsub.f32 %v1146, %v1166
      %v1197 = vsub.f32 %v1149, %v1166
      %v1198 = vsub.f32 %v1151, %v1166
      %v1199 = vadd.f32 %v1190, 1e-05
      %v1200 = vrsqrt.pop %v1199
      %v1201 = vmul.f32 %v1200, %v1199
      %v1202 = vmul.f32 %v1201, %v1200
      %v1203 = vmul.f32 0.5, %v1202
      %v1204 = vsub.f32 1.5, %v1203
      %v1205 = vmul.f32 %v1200, %v1204
      %vm1206 = vweird.f32 %v1199
      %vm1207 = vweird.f32 %v1200
      %vm1208 = vmor %vm1206, %vm1207
      %v1209 = vsel %vm1208, %v1200, %v1205
      %v1210 = vmul.f32 %v1191, %v1209
      %v1211 = vmul.f32 %v1192, %v1209
      %v1212 = vmul.f32 %v1193, %v1209
      %v1213 = vmul.f32 %v1194, %v1209
      %v1214 = vmul.f32 %v1195, %v1209
      %v1215 = vmul.f32 %v1196, %v1209
      %v1216 = vmul.f32 %v1197, %v1209
      %v1217 = vmul.f32 %v1198, %v1209
      %vm1218 = vcmp.ge.f32.partialorder %v1210, 0.0
      %vm1219 = vcmp.ge.f32.partialorder %v1211, 0.0
      %vm1220 = vcmp.ge.f32.partialorder %v1212, 0.0
      %vm1221 = vcmp.ge.f32.partialorder %v1213, 0.0
      %vm1222 = vcmp.ge.f32.partialorder %v1214, 0.0
      %vm1223 = vcmp.ge.f32.partialorder %v1215, 0.0
      %vm1224 = vcmp.ge.f32.partialorder %v1216, 0.0
      %vm1225 = vcmp.ge.f32.partialorder %v1217, 0.0
      %v1226 = vmul.f32 %v1210, 0.2
      %v1227 = vmul.f32 %v1211, 0.2
      %v1228 = vmul.f32 %v1212, 0.2
      %v1229 = vmul.f32 %v1213, 0.2
      %v1230 = vmul.f32 %v1214, 0.2
      %v1231 = vmul.f32 %v1215, 0.2
      %v1232 = vmul.f32 %v1216, 0.2
      %v1233 = vmul.f32 %v1217, 0.2
      %v1234 = vsel %vm1218, %v1210, %v1226
      %v1235 = vsel %vm1219, %v1211, %v1227
      %v1236 = vsel %vm1220, %v1212, %v1228
      %v1237 = vsel %vm1221, %v1213, %v1229
      %v1238 = vsel %vm1222, %v1214, %v1230
      %v1239 = vsel %vm1223, %v1215, %v1231
      %v1240 = vsel %vm1224, %v1216, %v1232
      %v1241 = vsel %vm1225, %v1217, %v1233
      %v1242 = vpack.c.bf16 %v1234, %v1234
      %v1243 = vpack.c.bf16 %v1235, %v1235
      %v1244 = vpack.c.bf16 %v1236, %v1236
      %v1245 = vpack.c.bf16 %v1237, %v1237
      %v1246 = vpack.c.bf16 %v1238, %v1238
      %v1247 = vpack.c.bf16 %v1239, %v1239
      %v1248 = vpack.c.bf16 %v1240, %v1240
      %v1249 = vpack.c.bf16 %v1241, %v1241
      %vm1250 = vcmask 257024
      %1251 = vst.msk [vmem:[%s211] sm:$0xf] %vm1250, %v1242
      %1252 = vst.msk [vmem:[%s211 + $0x4] sm:$0xf] %vm1250, %v1243
      %1253 = vst.msk [vmem:[%s211 + $0x8] sm:$0xf] %vm1250, %v1244
      %1254 = vst.msk [vmem:[%s211 + $0xc] sm:$0xf] %vm1250, %v1245
      %1255 = vst.msk [vmem:[%s211 + $0x10] sm:$0xf] %vm1250, %v1246
      %1256 = vst.msk [vmem:[%s211 + $0x14] sm:$0xf] %vm1250, %v1247
      %1257 = vst.msk [vmem:[%s211 + $0x18] sm:$0xf] %vm1250, %v1248
      %1258 = vst.msk [vmem:[%s211 + $0x1c] sm:$0xf] %vm1250, %v1249
      %s1259 = smul.u32 8, %s19
      %p1260 = scmp.lt.s32.totalorder %s18, 1
      %s1261 = scalar_select %p1260, %s18, 1
      %p1262 = scmp.lt.s32.totalorder %s1259, 7
      %s1263 = scalar_select %p1262, %s1259, 7
      %s1264 = smul.addr %s1261, 8
      %s1265 = sadd.s32 %s1263, %s1264
      %s1266 = smul.addr %s1265, 4
      %s1267 = scalar_lea.vmem %s3, %s1266
      // Predicated region
      $region33: #{_lambda_.7} parent=31 // pred_check
        %p1268 = pneg %p116
      $region34: #{_lambda_.7} parent=31 // pred_check_branch
        %1270 = sbr.rel (%p1268) target = $region36
      $region35: #{_lambda_.7} parent=31 // pred_region
        %s1271 = smul.u32 8, %s19
      $region36: #{_lambda_.7} parent=31 // pred_fallthru
        _
    $region32: #{_lambda_.7} parent=5 // pred_fallthru
      _
    %p1272 = scmp.le.s32.totalorder 2, %s9
    // Predicated region
    $region37: #{_lambda_.7} parent=5 // pred_check
      %p1273 = pneg %p1272
    $region38: #{_lambda_.7} parent=5 // pred_check_branch
      %1275 = sbr.rel (%p1273) target = $region40
    $region39: #{_lambda_.7} parent=5 // pred_region
      %s1276 = ssub.s32 %s9, 2
      // Predicated region
      $region41: #{_lambda_.7} parent=39 // pred_check
        %p1277 = pneg %p122
      $region42: #{_lambda_.7} parent=39 // pred_check_branch
        %1279 = sbr.rel (%p1277) target = $region44
      $region43: #{_lambda_.7} parent=39 // pred_region
        %s1280 = smul.u32 8, %s21
        %p1281 = scmp.lt.s32.totalorder %s20, 1
        %s1282 = scalar_select %p1281, %s20, 1
        %p1283 = scmp.lt.s32.totalorder %s1280, 7
        %s1284 = scalar_select %p1283, %s1280, 7
        %s1285 = smul.addr %s1282, 8
        %s1286 = sadd.s32 %s1284, %s1285
        %s1287 = smul.addr %s1286, 4
        %s1288 = scalar_lea.vmem %s3, %s1287
      $region44: #{_lambda_.7} parent=39 // pred_fallthru
        _
    $region40: #{_lambda_.7} parent=5 // pred_fallthru
      _
  $region6: #{_lambda_.7} parent=0 // loop_footer
    %s13 = sadd.s32 1, %s9
  $region7: #{_lambda_.7} parent=0 // loop_footer_branch
    %8 = sbr.rel target = $region3
  $region8: #{_lambda_.7} parent=0 // loop_exit
    _

// kernel: _lambda_.8
$region0: #{_lambda_.8}
  #allocation0 [shape = 'u32[]', space=smem, size = 0x4, offset = 0x4, fixed_abs, tag = 'smem constant byte address 0x4 - core index']
  #allocation1 [shape = 'u32[72,128]{1,0:T(1,128)}', space=vmem, size = 0x9000, scoped, tag = 'internal scratch']
  %s0 = inlined_call_operand.vmem [shape: bf16[2,27,2048], index: 0, kind: input, shape index: {}]
  %s1 = inlined_call_operand.vmem [shape: bf16[2048,128], index: 1, kind: input, shape index: {}]
  %s2 = inlined_call_operand.vmem [shape: f32[1,128], index: 2, kind: input, shape index: {}]
  %s3 = inlined_call_operand.vmem [shape: bf16[2,27,64], index: 3, kind: output, shape index: {}]
  %s4 = sld [smem:[#allocation0]]
  $region45: #{_lambda_.8} parent=0
    _
  %s6 = ssub.s32 1, %s4
  %s7 = scalar_select 0, %s6, %s4
  loop: start=0, step=1, limit=4
  $region2: #{_lambda_.8} parent=0 // loop_pre_header
    _
  $region3: #{_lambda_.8} parent=0 // loop_header
    %s9 = sphi 0, %s13
    %p10 = scmp.ge.s32.totalorder %s9, 4
    %s16 = sphi 0, %s28
    %s17 = sphi 0, %s24
    %s18 = sphi 0, %s16
    %s19 = sphi 0, %s17
    %s20 = sphi 0, %s18
    %s21 = sphi 0, %s19
    %s33 = sphi 0, %s35
    %s36 = sphi 0, %s33
    %s37 = sphi 0, %s36
    %s53 = sphi 0, %s37
    %s57 = sphi 0, %s57
    %s59 = sphi 0, %s57
    %s60 = sphi 0, %s59
    %s74 = sphi 0, %s60
    %s78 = sphi 0, %s78
    %s80 = sphi 0, %s78
    %s81 = sphi 0, %s80
    %s95 = sphi 0, %s81
    %s103 = sphi 0, %s105
    %s106 = sphi 0, %s103
    %s107 = sphi 0, %s106
    %s123 = sphi 0, %s107
  $region4: #{_lambda_.8} parent=0 // loop_header_branch
    %12 = sbr.rel (%p10) target = $region8
  $region5: #{_lambda_.8} parent=0 // loop_body
    %s14 = ssub.s32 %s9, 1
    %s15 = ssub.s32 %s9, 2
    %s22 = sadd.s32 1, %s17
    %p23 = scmp.ge.s32.totalorder %s22, 1
    %s24 = scalar_select %p23, 0, %s22
    %s25 = sadd.s32 1, %s16
    %s26 = scalar_select %p23, %s25, %s16
    %p27 = scmp.ge.s32.totalorder %s26, 2
    %s28 = scalar_select %p27, 0, %s26
    %s29 = ssub.s32 %s16, %s28
    %s30 = ssub.s32 %s17, %s24
    %s31 = sor.u32 %s29, %s30
    %p32 = scmp.eq.s32.totalorder %s31, 0
    %s34 = sadd.s32 %s33, 1
    %s35 = scalar_select %p32, %s33, %s34
    %p38 = pneg %p32
    %p39 = scmp.eq.s32.totalorder %s9, 1
    %p40 = por %p38, %p39
    %p41 = scmp.ne.s32.totalorder %s33, %s36
    %p42 = scmp.eq.s32.totalorder %s9, 0
    %p43 = por %p41, %p42
    %p44 = scmp.ne.s32.totalorder %s33, %s36
    %p45 = scmp.eq.s32.totalorder %s14, 1
    %p46 = por %p44, %p45
    %p47 = scmp.ne.s32.totalorder %s36, %s37
    %p48 = scmp.eq.s32.totalorder %s14, 0
    %p49 = por %p47, %p48
    %p50 = scmp.ne.s32.totalorder %s36, %s37
    %p51 = scmp.eq.s32.totalorder %s15, 1
    %p52 = por %p50, %p51
    %p54 = scmp.ne.s32.totalorder %s37, %s53
    %p55 = scmp.eq.s32.totalorder %s15, 0
    %p56 = por %p54, %p55
    %s58 = sadd.s32 %s57, 1
    %p61 = scmp.eq.s32.totalorder %s9, 1
    %p62 = scmp.ne.s32.totalorder %s57, %s59
    %p63 = scmp.eq.s32.totalorder %s9, 0
    %p64 = por %p62, %p63
    %p65 = scmp.ne.s32.totalorder %s57, %s59
    %p66 = scmp.eq.s32.totalorder %s14, 1
    %p67 = por %p65, %p66
    %p68 = scmp.ne.s32.totalorder %s59, %s60
    %p69 = scmp.eq.s32.totalorder %s14, 0
    %p70 = por %p68, %p69
    %p71 = scmp.ne.s32.totalorder %s59, %s60
    %p72 = scmp.eq.s32.totalorder %s15, 1
    %p73 = por %p71, %p72
    %p75 = scmp.ne.s32.totalorder %s60, %s74
    %p76 = scmp.eq.s32.totalorder %s15, 0
    %p77 = por %p75, %p76
    %s79 = sadd.s32 %s78, 1
    %p82 = scmp.eq.s32.totalorder %s9, 1
    %p83 = scmp.ne.s32.totalorder %s78, %s80
    %p84 = scmp.eq.s32.totalorder %s9, 0
    %p85 = por %p83, %p84
    %p86 = scmp.ne.s32.totalorder %s78, %s80
    %p87 = scmp.eq.s32.totalorder %s14, 1
    %p88 = por %p86, %p87
    %p89 = scmp.ne.s32.totalorder %s80, %s81
    %p90 = scmp.eq.s32.totalorder %s14, 0
    %p91 = por %p89, %p90
    %p92 = scmp.ne.s32.totalorder %s80, %s81
    %p93 = scmp.eq.s32.totalorder %s15, 1
    %p94 = por %p92, %p93
    %p96 = scmp.ne.s32.totalorder %s81, %s95
    %p97 = scmp.eq.s32.totalorder %s15, 0
    %p98 = por %p96, %p97
    %s99 = ssub.s32 %s16, %s28
    %s100 = ssub.s32 %s17, %s24
    %s101 = sor.u32 %s99, %s100
    %p102 = scmp.eq.s32.totalorder %s101, 0
    %s104 = sadd.s32 %s103, 1
    %s105 = scalar_select %p102, %s103, %s104
    %p108 = pneg %p102
    %p109 = scmp.eq.s32.totalorder %s9, 1
    %p110 = por %p108, %p109
    %p111 = scmp.ne.s32.totalorder %s103, %s106
    %p112 = scmp.eq.s32.totalorder %s9, 0
    %p113 = por %p111, %p112
    %p114 = scmp.ne.s32.totalorder %s103, %s106
    %p115 = scmp.eq.s32.totalorder %s14, 1
    %p116 = por %p114, %p115
    %p117 = scmp.ne.s32.totalorder %s106, %s107
    %p118 = scmp.eq.s32.totalorder %s14, 0
    %p119 = por %p117, %p118
    %p120 = scmp.ne.s32.totalorder %s106, %s107
    %p121 = scmp.eq.s32.totalorder %s15, 1
    %p122 = por %p120, %p121
    %p124 = scmp.ne.s32.totalorder %s107, %s123
    %p125 = scmp.eq.s32.totalorder %s15, 0
    %p126 = por %p124, %p125
    %p127 = scmp.le.s32.totalorder 1, %s9
    %p128 = scmp.lt.s32.totalorder %s9, 3
    %p129 = pnand %p127, %p128
    %p130 = pneg %p129
    // Predicated region
    $region9: #{_lambda_.8} parent=5 // pred_check
      _
    $region10: #{_lambda_.8} parent=5 // pred_check_branch
      %132 = sbr.rel (%p129) target = $region12
    $region11: #{_lambda_.8} parent=5 // pred_region
      %s133 = ssub.s32 %s9, 1
      // Predicated region
      $region13: #{_lambda_.8} parent=11 // pred_check
        %p134 = pneg %p70
      $region14: #{_lambda_.8} parent=11 // pred_check_branch
        %136 = sbr.rel (%p134) target = $region16
      $region15: #{_lambda_.8} parent=11 // pred_region
        _
      $region16: #{_lambda_.8} parent=11 // pred_fallthru
        _
      // Predicated region
      $region17: #{_lambda_.8} parent=11 // pred_check
        %p137 = pneg %p91
      $region18: #{_lambda_.8} parent=11 // pred_check_branch
        %139 = sbr.rel (%p137) target = $region20
      $region19: #{_lambda_.8} parent=11 // pred_region
        _
      $region20: #{_lambda_.8} parent=11 // pred_fallthru
        _
    $region12: #{_lambda_.8} parent=5 // pred_fallthru
      _
    %p140 = scmp.lt.s32.totalorder %s9, 2
    // Predicated region
    $region21: #{_lambda_.8} parent=5 // pred_check
      %p141 = pneg %p140
    $region22: #{_lambda_.8} parent=5 // pred_check_branch
      %143 = sbr.rel (%p141) target = $region24
    $region23: #{_lambda_.8} parent=5 // pred_region
      // Predicated region
      $region25: #{_lambda_.8} parent=23 // pred_check
        %p144 = pneg %p43
      $region26: #{_lambda_.8} parent=23 // pred_check_branch
        %146 = sbr.rel (%p144) target = $region28
      $region27: #{_lambda_.8} parent=23 // pred_region
        %s147 = smul.u32 4, %s17
        %p148 = scmp.lt.s32.totalorder %s16, 1
        %s149 = scalar_select %p148, %s16, 1
        %p150 = scmp.lt.s32.totalorder %s147, 3
        %s151 = scalar_select %p150, %s147, 3
        %s152 = smul.addr %s151, 16
        %s153 = smul.addr %s149, 64
        %s154 = sadd.s32 %s152, %s153
        %s155 = smul.addr %s154, 4
        %s156 = scalar_lea.vmem %s0, %s155
        %s157 = smul.u32 4, %s17
      $region28: #{_lambda_.8} parent=23 // pred_fallthru
        _
    $region24: #{_lambda_.8} parent=5 // pred_fallthru
      _
    %p158 = scmp.le.s32.totalorder 1, %s9
    %p159 = scmp.lt.s32.totalorder %s9, 3
    %p160 = pnand %p158, %p159
    %p161 = pneg %p160
    // Predicated region
    $region29: #{_lambda_.8} parent=5 // pred_check
      _
    $region30: #{_lambda_.8} parent=5 // pred_check_branch
      %163 = sbr.rel (%p160) target = $region32
    $region31: #{_lambda_.8} parent=5 // pred_region
      %s164 = ssub.s32 %s9, 1
      %s165 = smul.u32 4, %s19
      %p166 = scmp.lt.s32.totalorder %s18, 1
      %s167 = scalar_select %p166, %s18, 1
      %p168 = scmp.lt.s32.totalorder %s165, 3
      %s169 = scalar_select %p168, %s165, 3
      %s170 = smul.addr %s169, 16
      %s171 = smul.addr %s167, 64
      %s172 = sadd.s32 %s170, %s171
      %s173 = smul.addr %s172, 4
      %s174 = scalar_lea.vmem %s0, %s173
      %p175 = pneg %p49
      %p176 = pneg %p46
      %p177 = pneg %p70
      %p178 = pneg %p67
      %p179 = pneg %p91
      %p180 = pneg %p88
      %p181 = pneg %p119
      %p182 = pneg %p116
      %s183 = smul.u32 4, %s19
      %p184 = scmp.lt.s32.totalorder %s18, 1
      %s185 = scalar_select %p184, %s18, 1
      %p186 = scmp.lt.s32.totalorder %s183, 3
      %s187 = scalar_select %p186, %s183, 3
      %s188 = smul.addr %s185, 4
      %s189 = sadd.s32 %s187, %s188
      %s190 = smul.addr %s189, 4
      %s191 = scalar_lea.vmem %s3, %s190
      %s192 = smul.u32 4, %s19
      %p193 = scmp.lt.s32.totalorder %s18, 1
      %s194 = scalar_select %p193, %s18, 1
      %p195 = scmp.lt.s32.totalorder %s192, 3
      %s196 = scalar_select %p195, %s192, 3
      %s197 = smul.addr %s196, 16
      %s198 = smul.addr %s194, 64
      %s199 = sadd.s32 %s197, %s198
      %s200 = smul.addr %s199, 4
      %s201 = scalar_lea.vmem %s0, %s200
      %s202 = smul.u32 4, %s19
      %s203 = smul.u32 4, %s19
      %p204 = scmp.lt.s32.totalorder %s18, 1
      %s205 = scalar_select %p204, %s18, 1
      %p206 = scmp.lt.s32.totalorder %s203, 3
      %s207 = scalar_select %p206, %s203, 3
      %s208 = smul.addr %s205, 4
      %s209 = sadd.s32 %s207, %s208
      %s210 = smul.addr %s209, 4
      %s211 = scalar_lea.vmem %s3, %s210
      %s212 = smul.u32 4, %s19
      %v213 = vld [vmem:[%s201] sm:$0xff]
      %v214 = vld [vmem:[%s201 + $0x8] sm:$0xff]
      %v215 = vld [vmem:[%s201 + $0x10] sm:$0xff]
      %v216 = vld [vmem:[%s201 + $0x18] sm:$0xff]
      %v217 = vld [vmem:[%s201 + $0x20] sm:$0xff]
      %v218 = vld [vmem:[%s201 + $0x28] sm:$0xff]
      %v219 = vld [vmem:[%s201 + $0x30] sm:$0xff]
      %v220 = vld [vmem:[%s201 + $0x38] sm:$0xff]
      %v221 = vld [vmem:[%s201 + $0x40] sm:$0xff]
      %v222 = vld [vmem:[%s201 + $0x48] sm:$0xff]
      %v223 = vld [vmem:[%s201 + $0x50] sm:$0xff]
      %v224 = vld [vmem:[%s201 + $0x58] sm:$0xff]
      %v225 = vld [vmem:[%s201 + $0x60] sm:$0xff]
      %v226 = vld [vmem:[%s201 + $0x68] sm:$0xff]
      %v227 = vld [vmem:[%s201 + $0x70] sm:$0xff]
      %v228 = vld [vmem:[%s201 + $0x78] sm:$0xff]
      %v229 = vld [vmem:[%s201 + $0x80] sm:$0xff]
      %v230 = vld [vmem:[%s201 + $0x88] sm:$0xff]
      %v231 = vld [vmem:[%s201 + $0x90] sm:$0xff]
      %v232 = vld [vmem:[%s201 + $0x98] sm:$0xff]
      %v233 = vld [vmem:[%s201 + $0xa0] sm:$0xff]
      %v234 = vld [vmem:[%s201 + $0xa8] sm:$0xff]
      %v235 = vld [vmem:[%s201 + $0xb0] sm:$0xff]
      %v236 = vld [vmem:[%s201 + $0xb8] sm:$0xff]
      %v237 = vld [vmem:[%s201 + $0xc0] sm:$0x33]
      %v238 = vld [vmem:[%s201 + $0xc8] sm:$0x33]
      %v239 = vld [vmem:[%s201 + $0xd0] sm:$0x33]
      %v240 = vld [vmem:[%s201 + $0xd8] sm:$0x33]
      %v241 = vld [vmem:[%s201 + $0xe0] sm:$0x33]
      %v242 = vld [vmem:[%s201 + $0xe8] sm:$0x33]
      %v243 = vld [vmem:[%s201 + $0xf0] sm:$0x33]
      %v244 = vld [vmem:[%s201 + $0xf8] sm:$0x33]
      %v245 = vld [vmem:[%s1] sm:$0xf]
      %v246 = vld [vmem:[%s1 + $0x4] sm:$0xf]
      %v247 = vld [vmem:[%s1 + $0x8] sm:$0xf]
      %v248 = vld [vmem:[%s1 + $0xc] sm:$0xf]
      %v249 = vld [vmem:[%s1 + $0x10] sm:$0xf]
      %v250 = vld [vmem:[%s1 + $0x14] sm:$0xf]
      %v251 = vld [vmem:[%s1 + $0x18] sm:$0xf]
      %v252 = vld [vmem:[%s1 + $0x1c] sm:$0xf]
      %v253 = vld [vmem:[%s1 + $0x20] sm:$0xf]
      %v254 = vld [vmem:[%s1 + $0x24] sm:$0xf]
      %v255 = vld [vmem:[%s1 + $0x28] sm:$0xf]
      %v256 = vld [vmem:[%s1 + $0x2c] sm:$0xf]
      %v257 = vld [vmem:[%s1 + $0x30] sm:$0xf]
      %v258 = vld [vmem:[%s1 + $0x34] sm:$0xf]
      %v259 = vld [vmem:[%s1 + $0x38] sm:$0xf]
      %v260 = vld [vmem:[%s1 + $0x3c] sm:$0xf]
      %v261 = vld [vmem:[%s1 + $0x40] sm:$0xf]
      %v262 = vld [vmem:[%s1 + $0x44] sm:$0xf]
      %v263 = vld [vmem:[%s1 + $0x48] sm:$0xf]
      %v264 = vld [vmem:[%s1 + $0x4c] sm:$0xf]
      %v265 = vld [vmem:[%s1 + $0x50] sm:$0xf]
      %v266 = vld [vmem:[%s1 + $0x54] sm:$0xf]
      %v267 = vld [vmem:[%s1 + $0x58] sm:$0xf]
      %v268 = vld [vmem:[%s1 + $0x5c] sm:$0xf]
      %v269 = vld [vmem:[%s1 + $0x60] sm:$0xf]
      %v270 = vld [vmem:[%s1 + $0x64] sm:$0xf]
      %v271 = vld [vmem:[%s1 + $0x68] sm:$0xf]
      %v272 = vld [vmem:[%s1 + $0x6c] sm:$0xf]
      %v273 = vld [vmem:[%s1 + $0x70] sm:$0xf]
      %v274 = vld [vmem:[%s1 + $0x74] sm:$0xf]
      %v275 = vld [vmem:[%s1 + $0x78] sm:$0xf]
      %v276 = vld [vmem:[%s1 + $0x7c] sm:$0xf]
      %v277 = vld [vmem:[%s1 + $0x80] sm:$0xf]
      %v278 = vld [vmem:[%s1 + $0x84] sm:$0xf]
      %v279 = vld [vmem:[%s1 + $0x88] sm:$0xf]
      %v280 = vld [vmem:[%s1 + $0x8c] sm:$0xf]
      %v281 = vld [vmem:[%s1 + $0x90] sm:$0xf]
      %v282 = vld [vmem:[%s1 + $0x94] sm:$0xf]
      %v283 = vld [vmem:[%s1 + $0x98] sm:$0xf]
      %v284 = vld [vmem:[%s1 + $0x9c] sm:$0xf]
      %v285 = vld [vmem:[%s1 + $0xa0] sm:$0xf]
      %v286 = vld [vmem:[%s1 + $0xa4] sm:$0xf]
      %v287 = vld [vmem:[%s1 + $0xa8] sm:$0xf]
      %v288 = vld [vmem:[%s1 + $0xac] sm:$0xf]
      %v289 = vld [vmem:[%s1 + $0xb0] sm:$0xf]
      %v290 = vld [vmem:[%s1 + $0xb4] sm:$0xf]
      %v291 = vld [vmem:[%s1 + $0xb8] sm:$0xf]
      %v292 = vld [vmem:[%s1 + $0xbc] sm:$0xf]
      %v293 = vld [vmem:[%s1 + $0xc0] sm:$0xf]
      %v294 = vld [vmem:[%s1 + $0xc4] sm:$0xf]
      %v295 = vld [vmem:[%s1 + $0xc8] sm:$0xf]
      %v296 = vld [vmem:[%s1 + $0xcc] sm:$0xf]
      %v297 = vld [vmem:[%s1 + $0xd0] sm:$0xf]
      %v298 = vld [vmem:[%s1 + $0xd4] sm:$0xf]
      %v299 = vld [vmem:[%s1 + $0xd8] sm:$0xf]
      %v300 = vld [vmem:[%s1 + $0xdc] sm:$0xf]
      %v301 = vld [vmem:[%s1 + $0xe0] sm:$0xf]
      %v302 = vld [vmem:[%s1 + $0xe4] sm:$0xf]
      %v303 = vld [vmem:[%s1 + $0xe8] sm:$0xf]
      %v304 = vld [vmem:[%s1 + $0xec] sm:$0xf]
      %v305 = vld [vmem:[%s1 + $0xf0] sm:$0xf]
      %v306 = vld [vmem:[%s1 + $0xf4] sm:$0xf]
      %v307 = vld [vmem:[%s1 + $0xf8] sm:$0xf]
      %v308 = vld [vmem:[%s1 + $0xfc] sm:$0xf]
      %v309 = vld [vmem:[%s1 + $0x100] sm:$0xf]
      %v310 = vld [vmem:[%s1 + $0x104] sm:$0xf]
      %v311 = vld [vmem:[%s1 + $0x108] sm:$0xf]
      %v312 = vld [vmem:[%s1 + $0x10c] sm:$0xf]
      %v313 = vld [vmem:[%s1 + $0x110] sm:$0xf]
      %v314 = vld [vmem:[%s1 + $0x114] sm:$0xf]
      %v315 = vld [vmem:[%s1 + $0x118] sm:$0xf]
      %v316 = vld [vmem:[%s1 + $0x11c] sm:$0xf]
      %v317 = vld [vmem:[%s1 + $0x120] sm:$0xf]
      %v318 = vld [vmem:[%s1 + $0x124] sm:$0xf]
      %v319 = vld [vmem:[%s1 + $0x128] sm:$0xf]
      %v320 = vld [vmem:[%s1 + $0x12c] sm:$0xf]
      %v321 = vld [vmem:[%s1 + $0x130] sm:$0xf]
      %v322 = vld [vmem:[%s1 + $0x134] sm:$0xf]
      %v323 = vld [vmem:[%s1 + $0x138] sm:$0xf]
      %v324 = vld [vmem:[%s1 + $0x13c] sm:$0xf]
      %v325 = vld [vmem:[%s1 + $0x140] sm:$0xf]
      %v326 = vld [vmem:[%s1 + $0x144] sm:$0xf]
      %v327 = vld [vmem:[%s1 + $0x148] sm:$0xf]
      %v328 = vld [vmem:[%s1 + $0x14c] sm:$0xf]
      %v329 = vld [vmem:[%s1 + $0x150] sm:$0xf]
      %v330 = vld [vmem:[%s1 + $0x154] sm:$0xf]
      %v331 = vld [vmem:[%s1 + $0x158] sm:$0xf]
      %v332 = vld [vmem:[%s1 + $0x15c] sm:$0xf]
      %v333 = vld [vmem:[%s1 + $0x160] sm:$0xf]
      %v334 = vld [vmem:[%s1 + $0x164] sm:$0xf]
      %v335 = vld [vmem:[%s1 + $0x168] sm:$0xf]
      %v336 = vld [vmem:[%s1 + $0x16c] sm:$0xf]
      %v337 = vld [vmem:[%s1 + $0x170] sm:$0xf]
      %v338 = vld [vmem:[%s1 + $0x174] sm:$0xf]
      %v339 = vld [vmem:[%s1 + $0x178] sm:$0xf]
      %v340 = vld [vmem:[%s1 + $0x17c] sm:$0xf]
      %v341 = vld [vmem:[%s1 + $0x180] sm:$0xf]
      %v342 = vld [vmem:[%s1 + $0x184] sm:$0xf]
      %v343 = vld [vmem:[%s1 + $0x188] sm:$0xf]
      %v344 = vld [vmem:[%s1 + $0x18c] sm:$0xf]
      %v345 = vld [vmem:[%s1 + $0x190] sm:$0xf]
      %v346 = vld [vmem:[%s1 + $0x194] sm:$0xf]
      %v347 = vld [vmem:[%s1 + $0x198] sm:$0xf]
      %v348 = vld [vmem:[%s1 + $0x19c] sm:$0xf]
      %v349 = vld [vmem:[%s1 + $0x1a0] sm:$0xf]
      %v350 = vld [vmem:[%s1 + $0x1a4] sm:$0xf]
      %v351 = vld [vmem:[%s1 + $0x1a8] sm:$0xf]
      %v352 = vld [vmem:[%s1 + $0x1ac] sm:$0xf]
      %v353 = vld [vmem:[%s1 + $0x1b0] sm:$0xf]
      %v354 = vld [vmem:[%s1 + $0x1b4] sm:$0xf]
      %v355 = vld [vmem:[%s1 + $0x1b8] sm:$0xf]
      %v356 = vld [vmem:[%s1 + $0x1bc] sm:$0xf]
      %v357 = vld [vmem:[%s1 + $0x1c0] sm:$0xf]
      %v358 = vld [vmem:[%s1 + $0x1c4] sm:$0xf]
      %v359 = vld [vmem:[%s1 + $0x1c8] sm:$0xf]
      %v360 = vld [vmem:[%s1 + $0x1cc] sm:$0xf]
      %v361 = vld [vmem:[%s1 + $0x1d0] sm:$0xf]
      %v362 = vld [vmem:[%s1 + $0x1d4] sm:$0xf]
      %v363 = vld [vmem:[%s1 + $0x1d8] sm:$0xf]
      %v364 = vld [vmem:[%s1 + $0x1dc] sm:$0xf]
      %v365 = vld [vmem:[%s1 + $0x1e0] sm:$0xf]
      %v366 = vld [vmem:[%s1 + $0x1e4] sm:$0xf]
      %v367 = vld [vmem:[%s1 + $0x1e8] sm:$0xf]
      %v368 = vld [vmem:[%s1 + $0x1ec] sm:$0xf]
      %v369 = vld [vmem:[%s1 + $0x1f0] sm:$0xf]
      %v370 = vld [vmem:[%s1 + $0x1f4] sm:$0xf]
      %v371 = vld [vmem:[%s1 + $0x1f8] sm:$0xf]
      %v372 = vld [vmem:[%s1 + $0x1fc] sm:$0xf]
      %v373 = vld [vmem:[%s1 + $0x200] sm:$0xf]
      %v374 = vld [vmem:[%s1 + $0x204] sm:$0xf]
      %v375 = vld [vmem:[%s1 + $0x208] sm:$0xf]
      %v376 = vld [vmem:[%s1 + $0x20c] sm:$0xf]
      %v377 = vld [vmem:[%s1 + $0x210] sm:$0xf]
      %v378 = vld [vmem:[%s1 + $0x214] sm:$0xf]
      %v379 = vld [vmem:[%s1 + $0x218] sm:$0xf]
      %v380 = vld [vmem:[%s1 + $0x21c] sm:$0xf]
      %v381 = vld [vmem:[%s1 + $0x220] sm:$0xf]
      %v382 = vld [vmem:[%s1 + $0x224] sm:$0xf]
      %v383 = vld [vmem:[%s1 + $0x228] sm:$0xf]
      %v384 = vld [vmem:[%s1 + $0x22c] sm:$0xf]
      %v385 = vld [vmem:[%s1 + $0x230] sm:$0xf]
      %v386 = vld [vmem:[%s1 + $0x234] sm:$0xf]
      %v387 = vld [vmem:[%s1 + $0x238] sm:$0xf]
      %v388 = vld [vmem:[%s1 + $0x23c] sm:$0xf]
      %v389 = vld [vmem:[%s1 + $0x240] sm:$0xf]
      %v390 = vld [vmem:[%s1 + $0x244] sm:$0xf]
      %v391 = vld [vmem:[%s1 + $0x248] sm:$0xf]
      %v392 = vld [vmem:[%s1 + $0x24c] sm:$0xf]
      %v393 = vld [vmem:[%s1 + $0x250] sm:$0xf]
      %v394 = vld [vmem:[%s1 + $0x254] sm:$0xf]
      %v395 = vld [vmem:[%s1 + $0x258] sm:$0xf]
      %v396 = vld [vmem:[%s1 + $0x25c] sm:$0xf]
      %v397 = vld [vmem:[%s1 + $0x260] sm:$0xf]
      %v398 = vld [vmem:[%s1 + $0x264] sm:$0xf]
      %v399 = vld [vmem:[%s1 + $0x268] sm:$0xf]
      %v400 = vld [vmem:[%s1 + $0x26c] sm:$0xf]
      %v401 = vld [vmem:[%s1 + $0x270] sm:$0xf]
      %v402 = vld [vmem:[%s1 + $0x274] sm:$0xf]
      %v403 = vld [vmem:[%s1 + $0x278] sm:$0xf]
      %v404 = vld [vmem:[%s1 + $0x27c] sm:$0xf]
      %v405 = vld [vmem:[%s1 + $0x280] sm:$0xf]
      %v406 = vld [vmem:[%s1 + $0x284] sm:$0xf]
      %v407 = vld [vmem:[%s1 + $0x288] sm:$0xf]
      %v408 = vld [vmem:[%s1 + $0x28c] sm:$0xf]
      %v409 = vld [vmem:[%s1 + $0x290] sm:$0xf]
      %v410 = vld [vmem:[%s1 + $0x294] sm:$0xf]
      %v411 = vld [vmem:[%s1 + $0x298] sm:$0xf]
      %v412 = vld [vmem:[%s1 + $0x29c] sm:$0xf]
      %v413 = vld [vmem:[%s1 + $0x2a0] sm:$0xf]
      %v414 = vld [vmem:[%s1 + $0x2a4] sm:$0xf]
      %v415 = vld [vmem:[%s1 + $0x2a8] sm:$0xf]
      %v416 = vld [vmem:[%s1 + $0x2ac] sm:$0xf]
      %v417 = vld [vmem:[%s1 + $0x2b0] sm:$0xf]
      %v418 = vld [vmem:[%s1 + $0x2b4] sm:$0xf]
      %v419 = vld [vmem:[%s1 + $0x2b8] sm:$0xf]
      %v420 = vld [vmem:[%s1 + $0x2bc] sm:$0xf]
      %v421 = vld [vmem:[%s1 + $0x2c0] sm:$0xf]
      %v422 = vld [vmem:[%s1 + $0x2c4] sm:$0xf]
      %v423 = vld [vmem:[%s1 + $0x2c8] sm:$0xf]
      %v424 = vld [vmem:[%s1 + $0x2cc] sm:$0xf]
      %v425 = vld [vmem:[%s1 + $0x2d0] sm:$0xf]
      %v426 = vld [vmem:[%s1 + $0x2d4] sm:$0xf]
      %v427 = vld [vmem:[%s1 + $0x2d8] sm:$0xf]
      %v428 = vld [vmem:[%s1 + $0x2dc] sm:$0xf]
      %v429 = vld [vmem:[%s1 + $0x2e0] sm:$0xf]
      %v430 = vld [vmem:[%s1 + $0x2e4] sm:$0xf]
      %v431 = vld [vmem:[%s1 + $0x2e8] sm:$0xf]
      %v432 = vld [vmem:[%s1 + $0x2ec] sm:$0xf]
      %v433 = vld [vmem:[%s1 + $0x2f0] sm:$0xf]
      %v434 = vld [vmem:[%s1 + $0x2f4] sm:$0xf]
      %v435 = vld [vmem:[%s1 + $0x2f8] sm:$0xf]
      %v436 = vld [vmem:[%s1 + $0x2fc] sm:$0xf]
      %v437 = vld [vmem:[%s1 + $0x300] sm:$0xf]
      %v438 = vld [vmem:[%s1 + $0x304] sm:$0xf]
      %v439 = vld [vmem:[%s1 + $0x308] sm:$0xf]
      %v440 = vld [vmem:[%s1 + $0x30c] sm:$0xf]
      %v441 = vld [vmem:[%s1 + $0x310] sm:$0xf]
      %v442 = vld [vmem:[%s1 + $0x314] sm:$0xf]
      %v443 = vld [vmem:[%s1 + $0x318] sm:$0xf]
      %v444 = vld [vmem:[%s1 + $0x31c] sm:$0xf]
      %v445 = vld [vmem:[%s1 + $0x320] sm:$0xf]
      %v446 = vld [vmem:[%s1 + $0x324] sm:$0xf]
      %v447 = vld [vmem:[%s1 + $0x328] sm:$0xf]
      %v448 = vld [vmem:[%s1 + $0x32c] sm:$0xf]
      %v449 = vld [vmem:[%s1 + $0x330] sm:$0xf]
      %v450 = vld [vmem:[%s1 + $0x334] sm:$0xf]
      %v451 = vld [vmem:[%s1 + $0x338] sm:$0xf]
      %v452 = vld [vmem:[%s1 + $0x33c] sm:$0xf]
      %v453 = vld [vmem:[%s1 + $0x340] sm:$0xf]
      %v454 = vld [vmem:[%s1 + $0x344] sm:$0xf]
      %v455 = vld [vmem:[%s1 + $0x348] sm:$0xf]
      %v456 = vld [vmem:[%s1 + $0x34c] sm:$0xf]
      %v457 = vld [vmem:[%s1 + $0x350] sm:$0xf]
      %v458 = vld [vmem:[%s1 + $0x354] sm:$0xf]
      %v459 = vld [vmem:[%s1 + $0x358] sm:$0xf]
      %v460 = vld [vmem:[%s1 + $0x35c] sm:$0xf]
      %v461 = vld [vmem:[%s1 + $0x360] sm:$0xf]
      %v462 = vld [vmem:[%s1 + $0x364] sm:$0xf]
      %v463 = vld [vmem:[%s1 + $0x368] sm:$0xf]
      %v464 = vld [vmem:[%s1 + $0x36c] sm:$0xf]
      %v465 = vld [vmem:[%s1 + $0x370] sm:$0xf]
      %v466 = vld [vmem:[%s1 + $0x374] sm:$0xf]
      %v467 = vld [vmem:[%s1 + $0x378] sm:$0xf]
      %v468 = vld [vmem:[%s1 + $0x37c] sm:$0xf]
      %v469 = vld [vmem:[%s1 + $0x380] sm:$0xf]
      %v470 = vld [vmem:[%s1 + $0x384] sm:$0xf]
      %v471 = vld [vmem:[%s1 + $0x388] sm:$0xf]
      %v472 = vld [vmem:[%s1 + $0x38c] sm:$0xf]
      %v473 = vld [vmem:[%s1 + $0x390] sm:$0xf]
      %v474 = vld [vmem:[%s1 + $0x394] sm:$0xf]
      %v475 = vld [vmem:[%s1 + $0x398] sm:$0xf]
      %v476 = vld [vmem:[%s1 + $0x39c] sm:$0xf]
      %v477 = vld [vmem:[%s1 + $0x3a0] sm:$0xf]
      %v478 = vld [vmem:[%s1 + $0x3a4] sm:$0xf]
      %v479 = vld [vmem:[%s1 + $0x3a8] sm:$0xf]
      %v480 = vld [vmem:[%s1 + $0x3ac] sm:$0xf]
      %v481 = vld [vmem:[%s1 + $0x3b0] sm:$0xf]
      %v482 = vld [vmem:[%s1 + $0x3b4] sm:$0xf]
      %v483 = vld [vmem:[%s1 + $0x3b8] sm:$0xf]
      %v484 = vld [vmem:[%s1 + $0x3bc] sm:$0xf]
      %v485 = vld [vmem:[%s1 + $0x3c0] sm:$0xf]
      %v486 = vld [vmem:[%s1 + $0x3c4] sm:$0xf]
      %v487 = vld [vmem:[%s1 + $0x3c8] sm:$0xf]
      %v488 = vld [vmem:[%s1 + $0x3cc] sm:$0xf]
      %v489 = vld [vmem:[%s1 + $0x3d0] sm:$0xf]
      %v490 = vld [vmem:[%s1 + $0x3d4] sm:$0xf]
      %v491 = vld [vmem:[%s1 + $0x3d8] sm:$0xf]
      %v492 = vld [vmem:[%s1 + $0x3dc] sm:$0xf]
      %v493 = vld [vmem:[%s1 + $0x3e0] sm:$0xf]
      %v494 = vld [vmem:[%s1 + $0x3e4] sm:$0xf]
      %v495 = vld [vmem:[%s1 + $0x3e8] sm:$0xf]
      %v496 = vld [vmem:[%s1 + $0x3ec] sm:$0xf]
      %v497 = vld [vmem:[%s1 + $0x3f0] sm:$0xf]
      %v498 = vld [vmem:[%s1 + $0x3f4] sm:$0xf]
      %v499 = vld [vmem:[%s1 + $0x3f8] sm:$0xf]
      %v500 = vld [vmem:[%s1 + $0x3fc] sm:$0xf]
      %v501 = vld [vmem:[%s2] sm:$0x1]
      %v503 = vperm.slane %v501, 0
      %v537 = vunpack.c.l.b16 %v213
      %v538 = vunpack.c.h.b16 %v213
      %v539 = vunpack.c.l.b16 %v214
      %v540 = vunpack.c.h.b16 %v214
      %v541 = vunpack.c.l.b16 %v215
      %v542 = vunpack.c.h.b16 %v215
      %v543 = vunpack.c.l.b16 %v216
      %v544 = vunpack.c.h.b16 %v216
      %v545 = vunpack.c.l.b16 %v217
      %v546 = vunpack.c.h.b16 %v217
      %v547 = vunpack.c.l.b16 %v218
      %v548 = vunpack.c.h.b16 %v218
      %v549 = vunpack.c.l.b16 %v219
      %v550 = vunpack.c.h.b16 %v219
      %v551 = vunpack.c.l.b16 %v220
      %v552 = vunpack.c.h.b16 %v220
      %v553 = vunpack.c.l.b16 %v221
      %v554 = vunpack.c.h.b16 %v221
      %v555 = vunpack.c.l.b16 %v222
      %v556 = vunpack.c.h.b16 %v222
      %v557 = vunpack.c.l.b16 %v223
      %v558 = vunpack.c.h.b16 %v223
      %v559 = vunpack.c.l.b16 %v224
      %v560 = vunpack.c.h.b16 %v224
      %v561 = vunpack.c.l.b16 %v225
      %v562 = vunpack.c.h.b16 %v225
      %v563 = vunpack.c.l.b16 %v226
      %v564 = vunpack.c.h.b16 %v226
      %v565 = vunpack.c.l.b16 %v227
      %v566 = vunpack.c.h.b16 %v227
      %v567 = vunpack.c.l.b16 %v228
      %v568 = vunpack.c.h.b16 %v228
      %v569 = vunpack.c.l.b16 %v229
      %v570 = vunpack.c.h.b16 %v229
      %v571 = vunpack.c.l.b16 %v230
      %v572 = vunpack.c.h.b16 %v230
      %v573 = vunpack.c.l.b16 %v231
      %v574 = vunpack.c.h.b16 %v231
      %v575 = vunpack.c.l.b16 %v232
      %v576 = vunpack.c.h.b16 %v232
      %v577 = vunpack.c.l.b16 %v233
      %v578 = vunpack.c.h.b16 %v233
      %v579 = vunpack.c.l.b16 %v234
      %v580 = vunpack.c.h.b16 %v234
      %v581 = vunpack.c.l.b16 %v235
      %v582 = vunpack.c.h.b16 %v235
      %v583 = vunpack.c.l.b16 %v236
      %v584 = vunpack.c.h.b16 %v236
      %v585 = vunpack.c.l.b16 %v237
      %v586 = vunpack.c.h.b16 %v237
      %v587 = vunpack.c.l.b16 %v238
      %v588 = vunpack.c.h.b16 %v238
      %v589 = vunpack.c.l.b16 %v239
      %v590 = vunpack.c.h.b16 %v239
      %v591 = vunpack.c.l.b16 %v240
      %v592 = vunpack.c.h.b16 %v240
      %v593 = vunpack.c.l.b16 %v241
      %v594 = vunpack.c.h.b16 %v241
      %v595 = vunpack.c.l.b16 %v242
      %v596 = vunpack.c.h.b16 %v242
      %v597 = vunpack.c.l.b16 %v243
      %v598 = vunpack.c.h.b16 %v243
      %v599 = vunpack.c.l.b16 %v244
      %v600 = vunpack.c.h.b16 %v244
      %v601 = vpack.c.b16 %v553, %v537
      %v602 = vpack.c.b16 %v554, %v538
      %v603 = vpack.c.b16 %v555, %v539
      %v604 = vpack.c.b16 %v556, %v540
      %v605 = vpack.c.b16 %v557, %v541
      %v606 = vpack.c.b16 %v558, %v542
      %v607 = vpack.c.b16 %v559, %v543
      %v608 = vpack.c.b16 %v560, %v544
      %v609 = vpack.c.b16 %v561, %v545
      %v610 = vpack.c.b16 %v562, %v546
      %v611 = vpack.c.b16 %v563, %v547
      %v612 = vpack.c.b16 %v564, %v548
      %v613 = vpack.c.b16 %v565, %v549
      %v614 = vpack.c.b16 %v566, %v550
      %v615 = vpack.c.b16 %v567, %v551
      %v616 = vpack.c.b16 %v568, %v552
      %v617 = vpack.c.b16 %v585, %v569
      %v618 = vpack.c.b16 %v586, %v570
      %v619 = vpack.c.b16 %v587, %v571
      %v620 = vpack.c.b16 %v588, %v572
      %v621 = vpack.c.b16 %v589, %v573
      %v622 = vpack.c.b16 %v590, %v574
      %v623 = vpack.c.b16 %v591, %v575
      %v624 = vpack.c.b16 %v592, %v576
      %v625 = vpack.c.b16 %v593, %v577
      %v626 = vpack.c.b16 %v594, %v578
      %v627 = vpack.c.b16 %v595, %v579
      %v628 = vpack.c.b16 %v596, %v580
      %v629 = vpack.c.b16 %v597, %v581
      %v630 = vpack.c.b16 %v598, %v582
      %v631 = vpack.c.b16 %v599, %v583
      %v632 = vpack.c.b16 %v600, %v584
      %v921 = vunpack.c.l.b16 %v245
      %v922 = vunpack.c.l.b16 %v246
      %v923 = vunpack.c.l.b16 %v247
      %v924 = vunpack.c.l.b16 %v248
      %v925 = vunpack.c.l.b16 %v249
      %v926 = vunpack.c.l.b16 %v250
      %v927 = vunpack.c.l.b16 %v251
      %v928 = vunpack.c.l.b16 %v252
      %v929 = vunpack.c.l.b16 %v253
      %v930 = vunpack.c.l.b16 %v254
      %v931 = vunpack.c.l.b16 %v255
      %v932 = vunpack.c.l.b16 %v256
      %v933 = vunpack.c.l.b16 %v257
      %v934 = vunpack.c.l.b16 %v258
      %v935 = vunpack.c.l.b16 %v259
      %v936 = vunpack.c.l.b16 %v260
      %v937 = vunpack.c.l.b16 %v261
      %v938 = vunpack.c.l.b16 %v262
      %v939 = vunpack.c.l.b16 %v263
      %v940 = vunpack.c.l.b16 %v264
      %v941 = vunpack.c.l.b16 %v265
      %v942 = vunpack.c.l.b16 %v266
      %v943 = vunpack.c.l.b16 %v267
      %v944 = vunpack.c.l.b16 %v268
      %v945 = vunpack.c.l.b16 %v269
      %v946 = vunpack.c.l.b16 %v270
      %v947 = vunpack.c.l.b16 %v271
      %v948 = vunpack.c.l.b16 %v272
      %v949 = vunpack.c.l.b16 %v273
      %v950 = vunpack.c.l.b16 %v274
      %v951 = vunpack.c.l.b16 %v275
      %v952 = vunpack.c.l.b16 %v276
      %v953 = vunpack.c.l.b16 %v277
      %v954 = vunpack.c.l.b16 %v278
      %v955 = vunpack.c.l.b16 %v279
      %v956 = vunpack.c.l.b16 %v280
      %v957 = vunpack.c.l.b16 %v281
      %v958 = vunpack.c.l.b16 %v282
      %v959 = vunpack.c.l.b16 %v283
      %v960 = vunpack.c.l.b16 %v284
      %v961 = vunpack.c.l.b16 %v285
      %v962 = vunpack.c.l.b16 %v286
      %v963 = vunpack.c.l.b16 %v287
      %v964 = vunpack.c.l.b16 %v288
      %v965 = vunpack.c.l.b16 %v289
      %v966 = vunpack.c.l.b16 %v290
      %v967 = vunpack.c.l.b16 %v291
      %v968 = vunpack.c.l.b16 %v292
      %v969 = vunpack.c.l.b16 %v293
      %v970 = vunpack.c.l.b16 %v294
      %v971 = vunpack.c.l.b16 %v295
      %v972 = vunpack.c.l.b16 %v296
      %v973 = vunpack.c.l.b16 %v297
      %v974 = vunpack.c.l.b16 %v298
      %v975 = vunpack.c.l.b16 %v299
      %v976 = vunpack.c.l.b16 %v300
      %v977 = vunpack.c.l.b16 %v301
      %v978 = vunpack.c.l.b16 %v302
      %v979 = vunpack.c.l.b16 %v303
      %v980 = vunpack.c.l.b16 %v304
      %v981 = vunpack.c.l.b16 %v305
      %v982 = vunpack.c.l.b16 %v306
      %v983 = vunpack.c.l.b16 %v307
      %v984 = vunpack.c.l.b16 %v308
      %v985 = vunpack.c.l.b16 %v309
      %v986 = vunpack.c.l.b16 %v310
      %v987 = vunpack.c.l.b16 %v311
      %v988 = vunpack.c.l.b16 %v312
      %v989 = vunpack.c.l.b16 %v313
      %v990 = vunpack.c.l.b16 %v314
      %v991 = vunpack.c.l.b16 %v315
      %v992 = vunpack.c.l.b16 %v316
      %v993 = vunpack.c.l.b16 %v317
      %v994 = vunpack.c.l.b16 %v318
      %v995 = vunpack.c.l.b16 %v319
      %v996 = vunpack.c.l.b16 %v320
      %v997 = vunpack.c.l.b16 %v321
      %v998 = vunpack.c.l.b16 %v322
      %v999 = vunpack.c.l.b16 %v323
      %v1000 = vunpack.c.l.b16 %v324
      %v1001 = vunpack.c.l.b16 %v325
      %v1002 = vunpack.c.l.b16 %v326
      %v1003 = vunpack.c.l.b16 %v327
      %v1004 = vunpack.c.l.b16 %v328
      %v1005 = vunpack.c.l.b16 %v329
      %v1006 = vunpack.c.l.b16 %v330
      %v1007 = vunpack.c.l.b16 %v331
      %v1008 = vunpack.c.l.b16 %v332
      %v1009 = vunpack.c.l.b16 %v333
      %v1010 = vunpack.c.l.b16 %v334
      %v1011 = vunpack.c.l.b16 %v335
      %v1012 = vunpack.c.l.b16 %v336
      %v1013 = vunpack.c.l.b16 %v337
      %v1014 = vunpack.c.l.b16 %v338
      %v1015 = vunpack.c.l.b16 %v339
      %v1016 = vunpack.c.l.b16 %v340
      %v1017 = vunpack.c.l.b16 %v341
      %v1018 = vunpack.c.l.b16 %v342
      %v1019 = vunpack.c.l.b16 %v343
      %v1020 = vunpack.c.l.b16 %v344
      %v1021 = vunpack.c.l.b16 %v345
      %v1022 = vunpack.c.l.b16 %v346
      %v1023 = vunpack.c.l.b16 %v347
      %v1024 = vunpack.c.l.b16 %v348
      %v1025 = vunpack.c.l.b16 %v349
      %v1026 = vunpack.c.l.b16 %v350
      %v1027 = vunpack.c.l.b16 %v351
      %v1028 = vunpack.c.l.b16 %v352
      %v1029 = vunpack.c.l.b16 %v353
      %v1030 = vunpack.c.l.b16 %v354
      %v1031 = vunpack.c.l.b16 %v355
      %v1032 = vunpack.c.l.b16 %v356
      %v1033 = vunpack.c.l.b16 %v357
      %v1034 = vunpack.c.l.b16 %v358
      %v1035 = vunpack.c.l.b16 %v359
      %v1036 = vunpack.c.l.b16 %v360
      %v1037 = vunpack.c.l.b16 %v361
      %v1038 = vunpack.c.l.b16 %v362
      %v1039 = vunpack.c.l.b16 %v363
      %v1040 = vunpack.c.l.b16 %v364
      %v1041 = vunpack.c.l.b16 %v365
      %v1042 = vunpack.c.l.b16 %v366
      %v1043 = vunpack.c.l.b16 %v367
      %v1044 = vunpack.c.l.b16 %v368
      %v1045 = vunpack.c.l.b16 %v369
      %v1046 = vunpack.c.l.b16 %v370
      %v1047 = vunpack.c.l.b16 %v371
      %v1048 = vunpack.c.l.b16 %v372
      %v1049 = vunpack.c.l.b16 %v373
      %v1050 = vunpack.c.l.b16 %v374
      %v1051 = vunpack.c.l.b16 %v375
      %v1052 = vunpack.c.l.b16 %v376
      %v1053 = vunpack.c.l.b16 %v377
      %v1054 = vunpack.c.l.b16 %v378
      %v1055 = vunpack.c.l.b16 %v379
      %v1056 = vunpack.c.l.b16 %v380
      %v1057 = vunpack.c.l.b16 %v381
      %v1058 = vunpack.c.l.b16 %v382
      %v1059 = vunpack.c.l.b16 %v383
      %v1060 = vunpack.c.l.b16 %v384
      %v1061 = vunpack.c.l.b16 %v385
      %v1062 = vunpack.c.l.b16 %v386
      %v1063 = vunpack.c.l.b16 %v387
      %v1064 = vunpack.c.l.b16 %v388
      %v1065 = vunpack.c.l.b16 %v389
      %v1066 = vunpack.c.l.b16 %v390
      %v1067 = vunpack.c.l.b16 %v391
      %v1068 = vunpack.c.l.b16 %v392
      %v1069 = vunpack.c.l.b16 %v393
      %v1070 = vunpack.c.l.b16 %v394
      %v1071 = vunpack.c.l.b16 %v395
      %v1072 = vunpack.c.l.b16 %v396
      %v1073 = vunpack.c.l.b16 %v397
      %v1074 = vunpack.c.l.b16 %v398
      %v1075 = vunpack.c.l.b16 %v399
      %v1076 = vunpack.c.l.b16 %v400
      %v1077 = vunpack.c.l.b16 %v401
      %v1078 = vunpack.c.l.b16 %v402
      %v1079 = vunpack.c.l.b16 %v403
      %v1080 = vunpack.c.l.b16 %v404
      %v1081 = vunpack.c.l.b16 %v405
      %v1082 = vunpack.c.l.b16 %v406
      %v1083 = vunpack.c.l.b16 %v407
      %v1084 = vunpack.c.l.b16 %v408
      %v1085 = vunpack.c.l.b16 %v409
      %v1086 = vunpack.c.l.b16 %v410
      %v1087 = vunpack.c.l.b16 %v411
      %v1088 = vunpack.c.l.b16 %v412
      %v1089 = vunpack.c.l.b16 %v413
      %v1090 = vunpack.c.l.b16 %v414
      %v1091 = vunpack.c.l.b16 %v415
      %v1092 = vunpack.c.l.b16 %v416
      %v1093 = vunpack.c.l.b16 %v417
      %v1094 = vunpack.c.l.b16 %v418
      %v1095 = vunpack.c.l.b16 %v419
      %v1096 = vunpack.c.l.b16 %v420
      %v1097 = vunpack.c.l.b16 %v421
      %v1098 = vunpack.c.l.b16 %v422
      %v1099 = vunpack.c.l.b16 %v423
      %v1100 = vunpack.c.l.b16 %v424
      %v1101 = vunpack.c.l.b16 %v425
      %v1102 = vunpack.c.l.b16 %v426
      %v1103 = vunpack.c.l.b16 %v427
      %v1104 = vunpack.c.l.b16 %v428
      %v1105 = vunpack.c.l.b16 %v429
      %v1106 = vunpack.c.l.b16 %v430
      %v1107 = vunpack.c.l.b16 %v431
      %v1108 = vunpack.c.l.b16 %v432
      %v1109 = vunpack.c.l.b16 %v433
      %v1110 = vunpack.c.l.b16 %v434
      %v1111 = vunpack.c.l.b16 %v435
      %v1112 = vunpack.c.l.b16 %v436
      %v1113 = vunpack.c.l.b16 %v437
      %v1114 = vunpack.c.l.b16 %v438
      %v1115 = vunpack.c.l.b16 %v439
      %v1116 = vunpack.c.l.b16 %v440
      %v1117 = vunpack.c.l.b16 %v441
      %v1118 = vunpack.c.l.b16 %v442
      %v1119 = vunpack.c.l.b16 %v443
      %v1120 = vunpack.c.l.b16 %v444
      %v1121 = vunpack.c.l.b16 %v445
      %v1122 = vunpack.c.l.b16 %v446
      %v1123 = vunpack.c.l.b16 %v447
      %v1124 = vunpack.c.l.b16 %v448
      %v1125 = vunpack.c.l.b16 %v449
      %v1126 = vunpack.c.l.b16 %v450
      %v1127 = vunpack.c.l.b16 %v451
      %v1128 = vunpack.c.l.b16 %v452
      %v1129 = vunpack.c.l.b16 %v453
      %v1130 = vunpack.c.l.b16 %v454
      %v1131 = vunpack.c.l.b16 %v455
      %v1132 = vunpack.c.l.b16 %v456
      %v1133 = vunpack.c.l.b16 %v457
      %v1134 = vunpack.c.l.b16 %v458
      %v1135 = vunpack.c.l.b16 %v459
      %v1136 = vunpack.c.l.b16 %v460
      %v1137 = vunpack.c.l.b16 %v461
      %v1138 = vunpack.c.l.b16 %v462
      %v1139 = vunpack.c.l.b16 %v463
      %v1140 = vunpack.c.l.b16 %v464
      %v1141 = vunpack.c.l.b16 %v465
      %v1142 = vunpack.c.l.b16 %v466
      %v1143 = vunpack.c.l.b16 %v467
      %v1144 = vunpack.c.l.b16 %v468
      %v1145 = vunpack.c.l.b16 %v469
      %v1146 = vunpack.c.l.b16 %v470
      %v1147 = vunpack.c.l.b16 %v471
      %v1148 = vunpack.c.l.b16 %v472
      %v1149 = vunpack.c.l.b16 %v473
      %v1150 = vunpack.c.l.b16 %v474
      %v1151 = vunpack.c.l.b16 %v475
      %v1152 = vunpack.c.l.b16 %v476
      %v1153 = vunpack.c.l.b16 %v477
      %v1154 = vunpack.c.l.b16 %v478
      %v1155 = vunpack.c.l.b16 %v479
      %v1156 = vunpack.c.l.b16 %v480
      %v1157 = vunpack.c.l.b16 %v481
      %v1158 = vunpack.c.l.b16 %v482
      %v1159 = vunpack.c.l.b16 %v483
      %v1160 = vunpack.c.l.b16 %v484
      %v1161 = vunpack.c.l.b16 %v485
      %v1162 = vunpack.c.l.b16 %v486
      %v1163 = vunpack.c.l.b16 %v487
      %v1164 = vunpack.c.l.b16 %v488
      %v1165 = vunpack.c.l.b16 %v489
      %v1166 = vunpack.c.l.b16 %v490
      %v1167 = vunpack.c.l.b16 %v491
      %v1168 = vunpack.c.l.b16 %v492
      %v1169 = vunpack.c.l.b16 %v493
      %v1170 = vunpack.c.l.b16 %v494
      %v1171 = vunpack.c.l.b16 %v495
      %v1172 = vunpack.c.l.b16 %v496
      %v1173 = vunpack.c.l.b16 %v497
      %v1174 = vunpack.c.l.b16 %v498
      %v1175 = vunpack.c.l.b16 %v499
      %v1176 = vunpack.c.l.b16 %v500
      %v1177 = vpack.c.b16 %v922, %v921
      %v1178 = vpack.c.b16 %v924, %v923
      %v1179 = vpack.c.b16 %v926, %v925
      %v1180 = vpack.c.b16 %v928, %v927
      %v1181 = vpack.c.b16 %v930, %v929
      %v1182 = vpack.c.b16 %v932, %v931
      %v1183 = vpack.c.b16 %v934, %v933
      %v1184 = vpack.c.b16 %v936, %v935
      %v1185 = vpack.c.b16 %v938, %v937
      %v1186 = vpack.c.b16 %v940, %v939
      %v1187 = vpack.c.b16 %v942, %v941
      %v1188 = vpack.c.b16 %v944, %v943
      %v1189 = vpack.c.b16 %v946, %v945
      %v1190 = vpack.c.b16 %v948, %v947
      %v1191 = vpack.c.b16 %v950, %v949
      %v1192 = vpack.c.b16 %v952, %v951
      %v1193 = vpack.c.b16 %v954, %v953
      %v1194 = vpack.c.b16 %v956, %v955
      %v1195 = vpack.c.b16 %v958, %v957
      %v1196 = vpack.c.b16 %v960, %v959
      %v1197 = vpack.c.b16 %v962, %v961
      %v1198 = vpack.c.b16 %v964, %v963
      %v1199 = vpack.c.b16 %v966, %v965
      %v1200 = vpack.c.b16 %v968, %v967
      %v1201 = vpack.c.b16 %v970, %v969
      %v1202 = vpack.c.b16 %v972, %v971
      %v1203 = vpack.c.b16 %v974, %v973
      %v1204 = vpack.c.b16 %v976, %v975
      %v1205 = vpack.c.b16 %v978, %v977
      %v1206 = vpack.c.b16 %v980, %v979
      %v1207 = vpack.c.b16 %v982, %v981
      %v1208 = vpack.c.b16 %v984, %v983
      %v1209 = vpack.c.b16 %v986, %v985
      %v1210 = vpack.c.b16 %v988, %v987
      %v1211 = vpack.c.b16 %v990, %v989
      %v1212 = vpack.c.b16 %v992, %v991
      %v1213 = vpack.c.b16 %v994, %v993
      %v1214 = vpack.c.b16 %v996, %v995
      %v1215 = vpack.c.b16 %v998, %v997
      %v1216 = vpack.c.b16 %v1000, %v999
      %v1217 = vpack.c.b16 %v1002, %v1001
      %v1218 = vpack.c.b16 %v1004, %v1003
      %v1219 = vpack.c.b16 %v1006, %v1005
      %v1220 = vpack.c.b16 %v1008, %v1007
      %v1221 = vpack.c.b16 %v1010, %v1009
      %v1222 = vpack.c.b16 %v1012, %v1011
      %v1223 = vpack.c.b16 %v1014, %v1013
      %v1224 = vpack.c.b16 %v1016, %v1015
      %v1225 = vpack.c.b16 %v1018, %v1017
      %v1226 = vpack.c.b16 %v1020, %v1019
      %v1227 = vpack.c.b16 %v1022, %v1021
      %v1228 = vpack.c.b16 %v1024, %v1023
      %v1229 = vpack.c.b16 %v1026, %v1025
      %v1230 = vpack.c.b16 %v1028, %v1027
      %v1231 = vpack.c.b16 %v1030, %v1029
      %v1232 = vpack.c.b16 %v1032, %v1031
      %v1233 = vpack.c.b16 %v1034, %v1033
      %v1234 = vpack.c.b16 %v1036, %v1035
      %v1235 = vpack.c.b16 %v1038, %v1037
      %v1236 = vpack.c.b16 %v1040, %v1039
      %v1237 = vpack.c.b16 %v1042, %v1041
      %v1238 = vpack.c.b16 %v1044, %v1043
      %v1239 = vpack.c.b16 %v1046, %v1045
      %v1240 = vpack.c.b16 %v1048, %v1047
      %v1241 = vpack.c.b16 %v1050, %v1049
      %v1242 = vpack.c.b16 %v1052, %v1051
      %v1243 = vpack.c.b16 %v1054, %v1053
      %v1244 = vpack.c.b16 %v1056, %v1055
      %v1245 = vpack.c.b16 %v1058, %v1057
      %v1246 = vpack.c.b16 %v1060, %v1059
      %v1247 = vpack.c.b16 %v1062, %v1061
      %v1248 = vpack.c.b16 %v1064, %v1063
      %v1249 = vpack.c.b16 %v1066, %v1065
      %v1250 = vpack.c.b16 %v1068, %v1067
      %v1251 = vpack.c.b16 %v1070, %v1069
      %v1252 = vpack.c.b16 %v1072, %v1071
      %v1253 = vpack.c.b16 %v1074, %v1073
      %v1254 = vpack.c.b16 %v1076, %v1075
      %v1255 = vpack.c.b16 %v1078, %v1077
      %v1256 = vpack.c.b16 %v1080, %v1079
      %v1257 = vpack.c.b16 %v1082, %v1081
      %v1258 = vpack.c.b16 %v1084, %v1083
      %v1259 = vpack.c.b16 %v1086, %v1085
      %v1260 = vpack.c.b16 %v1088, %v1087
      %v1261 = vpack.c.b16 %v1090, %v1089
      %v1262 = vpack.c.b16 %v1092, %v1091
      %v1263 = vpack.c.b16 %v1094, %v1093
      %v1264 = vpack.c.b16 %v1096, %v1095
      %v1265 = vpack.c.b16 %v1098, %v1097
      %v1266 = vpack.c.b16 %v1100, %v1099
      %v1267 = vpack.c.b16 %v1102, %v1101
      %v1268 = vpack.c.b16 %v1104, %v1103
      %v1269 = vpack.c.b16 %v1106, %v1105
      %v1270 = vpack.c.b16 %v1108, %v1107
      %v1271 = vpack.c.b16 %v1110, %v1109
      %v1272 = vpack.c.b16 %v1112, %v1111
      %v1273 = vpack.c.b16 %v1114, %v1113
      %v1274 = vpack.c.b16 %v1116, %v1115
      %v1275 = vpack.c.b16 %v1118, %v1117
      %v1276 = vpack.c.b16 %v1120, %v1119
      %v1277 = vpack.c.b16 %v1122, %v1121
      %v1278 = vpack.c.b16 %v1124, %v1123
      %v1279 = vpack.c.b16 %v1126, %v1125
      %v1280 = vpack.c.b16 %v1128, %v1127
      %v1281 = vpack.c.b16 %v1130, %v1129
      %v1282 = vpack.c.b16 %v1132, %v1131
      %v1283 = vpack.c.b16 %v1134, %v1133
      %v1284 = vpack.c.b16 %v1136, %v1135
      %v1285 = vpack.c.b16 %v1138, %v1137
      %v1286 = vpack.c.b16 %v1140, %v1139
      %v1287 = vpack.c.b16 %v1142, %v1141
      %v1288 = vpack.c.b16 %v1144, %v1143
      %v1289 = vpack.c.b16 %v1146, %v1145
      %v1290 = vpack.c.b16 %v1148, %v1147
      %v1291 = vpack.c.b16 %v1150, %v1149
      %v1292 = vpack.c.b16 %v1152, %v1151
      %v1293 = vpack.c.b16 %v1154, %v1153
      %v1294 = vpack.c.b16 %v1156, %v1155
      %v1295 = vpack.c.b16 %v1158, %v1157
      %v1296 = vpack.c.b16 %v1160, %v1159
      %v1297 = vpack.c.b16 %v1162, %v1161
      %v1298 = vpack.c.b16 %v1164, %v1163
      %v1299 = vpack.c.b16 %v1166, %v1165
      %v1300 = vpack.c.b16 %v1168, %v1167
      %v1301 = vpack.c.b16 %v1170, %v1169
      %v1302 = vpack.c.b16 %v1172, %v1171
      %v1303 = vpack.c.b16 %v1174, %v1173
      %v1304 = vpack.c.b16 %v1176, %v1175
      %1433 = vmatpush.bf16.msra.mxu0 %v1184
      %1434 = vmatpush.bf16.msra.mxu0 %v1183
      %1435 = vmatpush.bf16.msra.mxu0 %v1182
      %1436 = vmatpush.bf16.msra.mxu0 %v1181
      %1437 = vmatpush.bf16.msra.mxu0 %v1180
      %1438 = vmatpush.bf16.msra.mxu0 %v1179
      %1439 = vmatpush.bf16.msra.mxu0 %v1178
      %1440 = vmatpush.bf16.msra.mxu0 %v1177
      %1441 = vmatmul.bf16.gmra.mxu0 %v601
      %v1442 = vpop.f32.mrf.mxu0
      %v1443 = vadd.f32 %v503, %v1442
      %v1444 = vpop.f32.mrf.mxu0
      %v1445 = vadd.f32 %v503, %v1444
      %1446 = vmatmul.bf16.gmra.mxu0 %v617
      %v1447 = vpop.f32.mrf.mxu0
      %v1448 = vadd.f32 %v503, %v1447
      %v1449 = vpop.f32.mrf.mxu0
      %v1450 = vadd.f32 %v503, %v1449
      %1451 = vdwg.mxu0
      %1452 = vmatpush.bf16.msra.mxu0 %v1192
      %1453 = vmatpush.bf16.msra.mxu0 %v1191
      %1454 = vmatpush.bf16.msra.mxu0 %v1190
      %1455 = vmatpush.bf16.msra.mxu0 %v1189
      %1456 = vmatpush.bf16.msra.mxu0 %v1188
      %1457 = vmatpush.bf16.msra.mxu0 %v1187
      %1458 = vmatpush.bf16.msra.mxu0 %v1186
      %1459 = vmatpush.bf16.msra.mxu0 %v1185
      %1460 = vmatmul.bf16.gmra.mxu0 %v602
      %v1461 = vpop.f32.mrf.mxu0
      %v1462 = vadd.f32 %v1443, %v1461
      %v1463 = vpop.f32.mrf.mxu0
      %v1464 = vadd.f32 %v1445, %v1463
      %1465 = vmatmul.bf16.gmra.mxu0 %v618
      %v1466 = vpop.f32.mrf.mxu0
      %v1467 = vadd.f32 %v1448, %v1466
      %v1468 = vpop.f32.mrf.mxu0
      %v1469 = vadd.f32 %v1450, %v1468
      %1470 = vdwg.mxu0
      %1471 = vmatpush.bf16.msra.mxu0 %v1200
      %1472 = vmatpush.bf16.msra.mxu0 %v1199
      %1473 = vmatpush.bf16.msra.mxu0 %v1198
      %1474 = vmatpush.bf16.msra.mxu0 %v1197
      %1475 = vmatpush.bf16.msra.mxu0 %v1196
      %1476 = vmatpush.bf16.msra.mxu0 %v1195
      %1477 = vmatpush.bf16.msra.mxu0 %v1194
      %1478 = vmatpush.bf16.msra.mxu0 %v1193
      %1479 = vmatmul.bf16.gmra.mxu0 %v603
      %v1480 = vpop.f32.mrf.mxu0
      %v1481 = vadd.f32 %v1462, %v1480
      %v1482 = vpop.f32.mrf.mxu0
      %v1483 = vadd.f32 %v1464, %v1482
      %1484 = vmatmul.bf16.gmra.mxu0 %v619
      %v1485 = vpop.f32.mrf.mxu0
      %v1486 = vadd.f32 %v1467, %v1485
      %v1487 = vpop.f32.mrf.mxu0
      %v1488 = vadd.f32 %v1469, %v1487
      %1489 = vdwg.mxu0
      %1490 = vmatpush.bf16.msra.mxu0 %v1208
      %1491 = vmatpush.bf16.msra.mxu0 %v1207
      %1492 = vmatpush.bf16.msra.mxu0 %v1206
      %1493 = vmatpush.bf16.msra.mxu0 %v1205
      %1494 = vmatpush.bf16.msra.mxu0 %v1204
      %1495 = vmatpush.bf16.msra.mxu0 %v1203
      %1496 = vmatpush.bf16.msra.mxu0 %v1202
      %1497 = vmatpush.bf16.msra.mxu0 %v1201
      %1498 = vmatmul.bf16.gmra.mxu0 %v604
      %v1499 = vpop.f32.mrf.mxu0
      %v1500 = vadd.f32 %v1481, %v1499
      %v1501 = vpop.f32.mrf.mxu0
      %v1502 = vadd.f32 %v1483, %v1501
      %1503 = vmatmul.bf16.gmra.mxu0 %v620
      %v1504 = vpop.f32.mrf.mxu0
      %v1505 = vadd.f32 %v1486, %v1504
      %v1506 = vpop.f32.mrf.mxu0
      %v1507 = vadd.f32 %v1488, %v1506
      %1508 = vdwg.mxu0
      %1509 = vmatpush.bf16.msra.mxu0 %v1216
      %1510 = vmatpush.bf16.msra.mxu0 %v1215
      %1511 = vmatpush.bf16.msra.mxu0 %v1214
      %1512 = vmatpush.bf16.msra.mxu0 %v1213
      %1513 = vmatpush.bf16.msra.mxu0 %v1212
      %1514 = vmatpush.bf16.msra.mxu0 %v1211
      %1515 = vmatpush.bf16.msra.mxu0 %v1210
      %1516 = vmatpush.bf16.msra.mxu0 %v1209
      %1517 = vmatmul.bf16.gmra.mxu0 %v605
      %v1518 = vpop.f32.mrf.mxu0
      %v1519 = vadd.f32 %v1500, %v1518
      %v1520 = vpop.f32.mrf.mxu0
      %v1521 = vadd.f32 %v1502, %v1520
      %1522 = vmatmul.bf16.gmra.mxu0 %v621
      %v1523 = vpop.f32.mrf.mxu0
      %v1524 = vadd.f32 %v1505, %v1523
      %v1525 = vpop.f32.mrf.mxu0
      %v1526 = vadd.f32 %v1507, %v1525
      %1527 = vdwg.mxu0
      %1528 = vmatpush.bf16.msra.mxu0 %v1224
      %1529 = vmatpush.bf16.msra.mxu0 %v1223
      %1530 = vmatpush.bf16.msra.mxu0 %v1222
      %1531 = vmatpush.bf16.msra.mxu0 %v1221
      %1532 = vmatpush.bf16.msra.mxu0 %v1220
      %1533 = vmatpush.bf16.msra.mxu0 %v1219
      %1534 = vmatpush.bf16.msra.mxu0 %v1218
      %1535 = vmatpush.bf16.msra.mxu0 %v1217
      %1536 = vmatmul.bf16.gmra.mxu0 %v606
      %v1537 = vpop.f32.mrf.mxu0
      %v1538 = vadd.f32 %v1519, %v1537
      %v1539 = vpop.f32.mrf.mxu0
      %v1540 = vadd.f32 %v1521, %v1539
      %1541 = vmatmul.bf16.gmra.mxu0 %v622
      %v1542 = vpop.f32.mrf.mxu0
      %v1543 = vadd.f32 %v1524, %v1542
      %v1544 = vpop.f32.mrf.mxu0
      %v1545 = vadd.f32 %v1526, %v1544
      %1546 = vdwg.mxu0
      %1547 = vmatpush.bf16.msra.mxu0 %v1232
      %1548 = vmatpush.bf16.msra.mxu0 %v1231
      %1549 = vmatpush.bf16.msra.mxu0 %v1230
      %1550 = vmatpush.bf16.msra.mxu0 %v1229
      %1551 = vmatpush.bf16.msra.mxu0 %v1228
      %1552 = vmatpush.bf16.msra.mxu0 %v1227
      %1553 = vmatpush.bf16.msra.mxu0 %v1226
      %1554 = vmatpush.bf16.msra.mxu0 %v1225
      %1555 = vmatmul.bf16.gmra.mxu0 %v607
      %v1556 = vpop.f32.mrf.mxu0
      %v1557 = vadd.f32 %v1538, %v1556
      %v1558 = vpop.f32.mrf.mxu0
      %v1559 = vadd.f32 %v1540, %v1558
      %1560 = vmatmul.bf16.gmra.mxu0 %v623
      %v1561 = vpop.f32.mrf.mxu0
      %v1562 = vadd.f32 %v1543, %v1561
      %v1563 = vpop.f32.mrf.mxu0
      %v1564 = vadd.f32 %v1545, %v1563
      %1565 = vdwg.mxu0
      %1566 = vmatpush.bf16.msra.mxu0 %v1240
      %1567 = vmatpush.bf16.msra.mxu0 %v1239
      %1568 = vmatpush.bf16.msra.mxu0 %v1238
      %1569 = vmatpush.bf16.msra.mxu0 %v1237
      %1570 = vmatpush.bf16.msra.mxu0 %v1236
      %1571 = vmatpush.bf16.msra.mxu0 %v1235
      %1572 = vmatpush.bf16.msra.mxu0 %v1234
      %1573 = vmatpush.bf16.msra.mxu0 %v1233
      %1574 = vmatmul.bf16.gmra.mxu0 %v608
      %v1575 = vpop.f32.mrf.mxu0
      %v1576 = vadd.f32 %v1557, %v1575
      %v1577 = vpop.f32.mrf.mxu0
      %v1578 = vadd.f32 %v1559, %v1577
      %1579 = vmatmul.bf16.gmra.mxu0 %v624
      %v1580 = vpop.f32.mrf.mxu0
      %v1581 = vadd.f32 %v1562, %v1580
      %v1582 = vpop.f32.mrf.mxu0
      %v1583 = vadd.f32 %v1564, %v1582
      %1584 = vdwg.mxu0
      %1585 = vmatpush.bf16.msra.mxu0 %v1248
      %1586 = vmatpush.bf16.msra.mxu0 %v1247
      %1587 = vmatpush.bf16.msra.mxu0 %v1246
      %1588 = vmatpush.bf16.msra.mxu0 %v1245
      %1589 = vmatpush.bf16.msra.mxu0 %v1244
      %1590 = vmatpush.bf16.msra.mxu0 %v1243
      %1591 = vmatpush.bf16.msra.mxu0 %v1242
      %1592 = vmatpush.bf16.msra.mxu0 %v1241
      %1593 = vmatmul.bf16.gmra.mxu0 %v609
      %v1594 = vpop.f32.mrf.mxu0
      %v1595 = vadd.f32 %v1576, %v1594
      %v1596 = vpop.f32.mrf.mxu0
      %v1597 = vadd.f32 %v1578, %v1596
      %1598 = vmatmul.bf16.gmra.mxu0 %v625
      %v1599 = vpop.f32.mrf.mxu0
      %v1600 = vadd.f32 %v1581, %v1599
      %v1601 = vpop.f32.mrf.mxu0
      %v1602 = vadd.f32 %v1583, %v1601
      %1603 = vdwg.mxu0
      %1604 = vmatpush.bf16.msra.mxu0 %v1256
      %1605 = vmatpush.bf16.msra.mxu0 %v1255
      %1606 = vmatpush.bf16.msra.mxu0 %v1254
      %1607 = vmatpush.bf16.msra.mxu0 %v1253
      %1608 = vmatpush.bf16.msra.mxu0 %v1252
      %1609 = vmatpush.bf16.msra.mxu0 %v1251
      %1610 = vmatpush.bf16.msra.mxu0 %v1250
      %1611 = vmatpush.bf16.msra.mxu0 %v1249
      %1612 = vmatmul.bf16.gmra.mxu0 %v610
      %v1613 = vpop.f32.mrf.mxu0
      %v1614 = vadd.f32 %v1595, %v1613
      %v1615 = vpop.f32.mrf.mxu0
      %v1616 = vadd.f32 %v1597, %v1615
      %1617 = vmatmul.bf16.gmra.mxu0 %v626
      %v1618 = vpop.f32.mrf.mxu0
      %v1619 = vadd.f32 %v1600, %v1618
      %v1620 = vpop.f32.mrf.mxu0
      %v1621 = vadd.f32 %v1602, %v1620
      %1622 = vdwg.mxu0
      %1623 = vmatpush.bf16.msra.mxu0 %v1264
      %1624 = vmatpush.bf16.msra.mxu0 %v1263
      %1625 = vmatpush.bf16.msra.mxu0 %v1262
      %1626 = vmatpush.bf16.msra.mxu0 %v1261
      %1627 = vmatpush.bf16.msra.mxu0 %v1260
      %1628 = vmatpush.bf16.msra.mxu0 %v1259
      %1629 = vmatpush.bf16.msra.mxu0 %v1258
      %1630 = vmatpush.bf16.msra.mxu0 %v1257
      %1631 = vmatmul.bf16.gmra.mxu0 %v611
      %v1632 = vpop.f32.mrf.mxu0
      %v1633 = vadd.f32 %v1614, %v1632
      %v1634 = vpop.f32.mrf.mxu0
      %v1635 = vadd.f32 %v1616, %v1634
      %1636 = vmatmul.bf16.gmra.mxu0 %v627
      %v1637 = vpop.f32.mrf.mxu0
      %v1638 = vadd.f32 %v1619, %v1637
      %v1639 = vpop.f32.mrf.mxu0
      %v1640 = vadd.f32 %v1621, %v1639
      %1641 = vdwg.mxu0
      %1642 = vmatpush.bf16.msra.mxu0 %v1272
      %1643 = vmatpush.bf16.msra.mxu0 %v1271
      %1644 = vmatpush.bf16.msra.mxu0 %v1270
      %1645 = vmatpush.bf16.msra.mxu0 %v1269
      %1646 = vmatpush.bf16.msra.mxu0 %v1268
      %1647 = vmatpush.bf16.msra.mxu0 %v1267
      %1648 = vmatpush.bf16.msra.mxu0 %v1266
      %1649 = vmatpush.bf16.msra.mxu0 %v1265
      %1650 = vmatmul.bf16.gmra.mxu0 %v612
      %v1651 = vpop.f32.mrf.mxu0
      %v1652 = vadd.f32 %v1633, %v1651
      %v1653 = vpop.f32.mrf.mxu0
      %v1654 = vadd.f32 %v1635, %v1653
      %1655 = vmatmul.bf16.gmra.mxu0 %v628
      %v1656 = vpop.f32.mrf.mxu0
      %v1657 = vadd.f32 %v1638, %v1656
      %v1658 = vpop.f32.mrf.mxu0
      %v1659 = vadd.f32 %v1640, %v1658
      %1660 = vdwg.mxu0
      %1661 = vmatpush.bf16.msra.mxu0 %v1280
      %1662 = vmatpush.bf16.msra.mxu0 %v1279
      %1663 = vmatpush.bf16.msra.mxu0 %v1278
      %1664 = vmatpush.bf16.msra.mxu0 %v1277
      %1665 = vmatpush.bf16.msra.mxu0 %v1276
      %1666 = vmatpush.bf16.msra.mxu0 %v1275
      %1667 = vmatpush.bf16.msra.mxu0 %v1274
      %1668 = vmatpush.bf16.msra.mxu0 %v1273
      %1669 = vmatmul.bf16.gmra.mxu0 %v613
      %v1670 = vpop.f32.mrf.mxu0
      %v1671 = vadd.f32 %v1652, %v1670
      %v1672 = vpop.f32.mrf.mxu0
      %v1673 = vadd.f32 %v1654, %v1672
      %1674 = vmatmul.bf16.gmra.mxu0 %v629
      %v1675 = vpop.f32.mrf.mxu0
      %v1676 = vadd.f32 %v1657, %v1675
      %v1677 = vpop.f32.mrf.mxu0
      %v1678 = vadd.f32 %v1659, %v1677
      %1679 = vdwg.mxu0
      %1680 = vmatpush.bf16.msra.mxu0 %v1288
      %1681 = vmatpush.bf16.msra.mxu0 %v1287
      %1682 = vmatpush.bf16.msra.mxu0 %v1286
      %1683 = vmatpush.bf16.msra.mxu0 %v1285
      %1684 = vmatpush.bf16.msra.mxu0 %v1284
      %1685 = vmatpush.bf16.msra.mxu0 %v1283
      %1686 = vmatpush.bf16.msra.mxu0 %v1282
      %1687 = vmatpush.bf16.msra.mxu0 %v1281
      %1688 = vmatmul.bf16.gmra.mxu0 %v614
      %v1689 = vpop.f32.mrf.mxu0
      %v1690 = vadd.f32 %v1671, %v1689
      %v1691 = vpop.f32.mrf.mxu0
      %v1692 = vadd.f32 %v1673, %v1691
      %1693 = vmatmul.bf16.gmra.mxu0 %v630
      %v1694 = vpop.f32.mrf.mxu0
      %v1695 = vadd.f32 %v1676, %v1694
      %v1696 = vpop.f32.mrf.mxu0
      %v1697 = vadd.f32 %v1678, %v1696
      %1698 = vdwg.mxu0
      %1699 = vmatpush.bf16.msra.mxu0 %v1296
      %1700 = vmatpush.bf16.msra.mxu0 %v1295
      %1701 = vmatpush.bf16.msra.mxu0 %v1294
      %1702 = vmatpush.bf16.msra.mxu0 %v1293
      %1703 = vmatpush.bf16.msra.mxu0 %v1292
      %1704 = vmatpush.bf16.msra.mxu0 %v1291
      %1705 = vmatpush.bf16.msra.mxu0 %v1290
      %1706 = vmatpush.bf16.msra.mxu0 %v1289
      %1707 = vmatmul.bf16.gmra.mxu0 %v615
      %v1708 = vpop.f32.mrf.mxu0
      %v1709 = vadd.f32 %v1690, %v1708
      %v1710 = vpop.f32.mrf.mxu0
      %v1711 = vadd.f32 %v1692, %v1710
      %1712 = vmatmul.bf16.gmra.mxu0 %v631
      %v1713 = vpop.f32.mrf.mxu0
      %v1714 = vadd.f32 %v1695, %v1713
      %v1715 = vpop.f32.mrf.mxu0
      %v1716 = vadd.f32 %v1697, %v1715
      %1717 = vdwg.mxu0
      %1718 = vmatpush.bf16.msra.mxu0 %v1304
      %1719 = vmatpush.bf16.msra.mxu0 %v1303
      %1720 = vmatpush.bf16.msra.mxu0 %v1302
      %1721 = vmatpush.bf16.msra.mxu0 %v1301
      %1722 = vmatpush.bf16.msra.mxu0 %v1300
      %1723 = vmatpush.bf16.msra.mxu0 %v1299
      %1724 = vmatpush.bf16.msra.mxu0 %v1298
      %1725 = vmatpush.bf16.msra.mxu0 %v1297
      %1726 = vmatmul.bf16.gmra.mxu0 %v616
      %v1727 = vpop.f32.mrf.mxu0
      %v1728 = vadd.f32 %v1709, %v1727
      %v1729 = vpop.f32.mrf.mxu0
      %v1730 = vadd.f32 %v1711, %v1729
      %1731 = vmatmul.bf16.gmra.mxu0 %v632
      %v1732 = vpop.f32.mrf.mxu0
      %v1733 = vadd.f32 %v1714, %v1732
      %v1734 = vpop.f32.mrf.mxu0
      %v1735 = vadd.f32 %v1716, %v1734
      %1736 = vdwg.mxu0
      %v1737 = vadd.f32 %v1728, %v1730
      %v1738 = vadd.f32 %v1737, %v1733
      %vm1739 = vcmask 1042432
      %v1740 = vsel %vm1739, %v1735, 0.0
      %v1741 = vadd.f32 %v1738, %v1740
      %v1742 = vrot.slane %v1741, 4
      %v1743 = vadd.f32 %v1741, %v1742
      %v1744 = vrot.slane %v1743, 2
      %v1745 = vadd.f32 %v1743, %v1744
      %v1746 = vrot.slane %v1745, 1
      %v1747 = vadd.f32 %v1745, %v1746
      %v1748 = vmul.f32 %v1747, 0.037037037
      %v1749 = vmul.f32 %v1728, %v1728
      %v1750 = vmul.f32 %v1730, %v1730
      %v1751 = vmul.f32 %v1733, %v1733
      %v1752 = vmul.f32 %v1735, %v1735
      %v1753 = vadd.f32 %v1749, %v1750
      %v1754 = vadd.f32 %v1753, %v1751
      %v1755 = vsel %vm1739, %v1752, 0.0
      %v1756 = vadd.f32 %v1754, %v1755
      %v1757 = vrot.slane %v1756, 4
      %v1758 = vadd.f32 %v1756, %v1757
      %v1759 = vrot.slane %v1758, 2
      %v1760 = vadd.f32 %v1758, %v1759
      %v1761 = vrot.slane %v1760, 1
      %v1762 = vadd.f32 %v1760, %v1761
      %v1763 = vmul.f32 %v1762, 0.037037037
      %v1764 = vmul.f32 %v1748, %v1748
      %v1765 = vsub.f32 %v1763, %v1764
      %v1766 = vsub.f32 %v1728, %v1748
      %v1767 = vsub.f32 %v1730, %v1748
      %v1768 = vsub.f32 %v1733, %v1748
      %v1769 = vsub.f32 %v1735, %v1748
      %v1770 = vadd.f32 %v1765, 1e-05
      %v1771 = vrsqrt.pop %v1770
      %v1772 = vmul.f32 %v1771, %v1770
      %v1773 = vmul.f32 %v1772, %v1771
      %v1774 = vmul.f32 0.5, %v1773
      %v1775 = vsub.f32 1.5, %v1774
      %v1776 = vmul.f32 %v1771, %v1775
      %vm1777 = vweird.f32 %v1770
      %vm1778 = vweird.f32 %v1771
      %vm1779 = vmor %vm1777, %vm1778
      %v1780 = vsel %vm1779, %v1771, %v1776
      %v1781 = vmul.f32 %v1766, %v1780
      %v1782 = vmul.f32 %v1767, %v1780
      %v1783 = vmul.f32 %v1768, %v1780
      %v1784 = vmul.f32 %v1769, %v1780
      %vm1785 = vcmp.ge.f32.partialorder %v1781, 0.0
      %vm1786 = vcmp.ge.f32.partialorder %v1782, 0.0
      %vm1787 = vcmp.ge.f32.partialorder %v1783, 0.0
      %vm1788 = vcmp.ge.f32.partialorder %v1784, 0.0
      %v1789 = vmul.f32 %v1781, 0.2
      %v1790 = vmul.f32 %v1782, 0.2
      %v1791 = vmul.f32 %v1783, 0.2
      %v1792 = vmul.f32 %v1784, 0.2
      %v1793 = vsel %vm1785, %v1781, %v1789
      %v1794 = vsel %vm1786, %v1782, %v1790
      %v1795 = vsel %vm1787, %v1783, %v1791
      %v1796 = vsel %vm1788, %v1784, %v1792
      %v1797 = vpack.c.bf16 %v1793, %v1793
      %v1798 = vpack.c.bf16 %v1794, %v1794
      %v1799 = vpack.c.bf16 %v1795, %v1795
      %v1800 = vpack.c.bf16 %v1796, %v1796
      %vm1801 = vcmask 519168
      %1802 = vst.msk [vmem:[%s211] sm:$0xf] %vm1801, %v1797
      %1803 = vst.msk [vmem:[%s211 + $0x4] sm:$0xf] %vm1801, %v1798
      %1804 = vst.msk [vmem:[%s211 + $0x8] sm:$0xf] %vm1801, %v1799
      %vm1805 = vcmask 517120
      %vm1806 = vsmask.f32 1280
      %vm1807 = vmand %vm1805, %vm1806
      %v1808 = vld [vmem:[%s211 + $0xc] sm:$0x3]
      %v1809 = vsel %vm1807, %v1800, %v1808
      %1810 = vst [vmem:[%s211 + $0xc] sm:$0x3] %v1809
      %s1811 = smul.u32 4, %s19
      %p1812 = scmp.lt.s32.totalorder %s18, 1
      %s1813 = scalar_select %p1812, %s18, 1
      %p1814 = scmp.lt.s32.totalorder %s1811, 3
      %s1815 = scalar_select %p1814, %s1811, 3
      %s1816 = smul.addr %s1813, 4
      %s1817 = sadd.s32 %s1815, %s1816
      %s1818 = smul.addr %s1817, 4
      %s1819 = scalar_lea.vmem %s3, %s1818
      // Predicated region
      $region33: #{_lambda_.8} parent=31 // pred_check
        %p1820 = pneg %p116
      $region34: #{_lambda_.8} parent=31 // pred_check_branch
        %1822 = sbr.rel (%p1820) target = $region36
      $region35: #{_lambda_.8} parent=31 // pred_region
        %s1823 = smul.u32 4, %s19
      $region36: #{_lambda_.8} parent=31 // pred_fallthru
        _
    $region32: #{_lambda_.8} parent=5 // pred_fallthru
      _
    %p1824 = scmp.le.s32.totalorder 2, %s9
    // Predicated region
    $region37: #{_lambda_.8} parent=5 // pred_check
      %p1825 = pneg %p1824
    $region38: #{_lambda_.8} parent=5 // pred_check_branch
      %1827 = sbr.rel (%p1825) target = $region40
    $region39: #{_lambda_.8} parent=5 // pred_region
      %s1828 = ssub.s32 %s9, 2
      // Predicated region
      $region41: #{_lambda_.8} parent=39 // pred_check
        %p1829 = pneg %p122
      $region42: #{_lambda_.8} parent=39 // pred_check_branch
        %1831 = sbr.rel (%p1829) target = $region44
      $region43: #{_lambda_.8} parent=39 // pred_region
        %s1832 = smul.u32 4, %s21
        %p1833 = scmp.lt.s32.totalorder %s20, 1
        %s1834 = scalar_select %p1833, %s20, 1
        %p1835 = scmp.lt.s32.totalorder %s1832, 3
        %s1836 = scalar_select %p1835, %s1832, 3
        %s1837 = smul.addr %s1834, 4
        %s1838 = sadd.s32 %s1836, %s1837
        %s1839 = smul.addr %s1838, 4
        %s1840 = scalar_lea.vmem %s3, %s1839
      $region44: #{_lambda_.8} parent=39 // pred_fallthru
        _
    $region40: #{_lambda_.8} parent=5 // pred_fallthru
      _
  $region6: #{_lambda_.8} parent=0 // loop_footer
    %s13 = sadd.s32 1, %s9
  $region7: #{_lambda_.8} parent=0 // loop_footer_branch
    %8 = sbr.rel target = $region3
  $region8: #{_lambda_.8} parent=0 // loop_exit
    _

// kernel: _lambda_.9
$region0: #{_lambda_.9}
  #allocation0 [shape = 'u32[]', space=smem, size = 0x4, offset = 0x4, fixed_abs, tag = 'smem constant byte address 0x4 - core index']
  #allocation1 [shape = 'u32[72,128]{1,0:T(1,128)}', space=vmem, size = 0x9000, scoped, tag = 'internal scratch']
  %s0 = inlined_call_operand.vmem [shape: bf16[2,8,4096], index: 0, kind: input, shape index: {}]
  %s1 = inlined_call_operand.vmem [shape: bf16[4096,128], index: 1, kind: input, shape index: {}]
  %s2 = inlined_call_operand.vmem [shape: f32[1,128], index: 2, kind: input, shape index: {}]
  %s3 = inlined_call_operand.vmem [shape: f32[2,8,1], index: 3, kind: output, shape index: {}]
  %s4 = sld [smem:[#allocation0]]
  $region45: #{_lambda_.9} parent=0
    _
  %s6 = ssub.s32 1, %s4
  %s7 = scalar_select 0, %s6, %s4
  loop: start=0, step=1, limit=4
  $region2: #{_lambda_.9} parent=0 // loop_pre_header
    _
  $region3: #{_lambda_.9} parent=0 // loop_header
    %s9 = sphi 0, %s13
    %p10 = scmp.ge.s32.totalorder %s9, 4
    %s16 = sphi 0, %s28
    %s17 = sphi 0, %s24
    %s18 = sphi 0, %s16
    %s19 = sphi 0, %s17
    %s20 = sphi 0, %s18
    %s21 = sphi 0, %s19
    %s33 = sphi 0, %s35
    %s36 = sphi 0, %s33
    %s37 = sphi 0, %s36
    %s53 = sphi 0, %s37
    %s57 = sphi 0, %s57
    %s59 = sphi 0, %s57
    %s60 = sphi 0, %s59
    %s74 = sphi 0, %s60
    %s78 = sphi 0, %s78
    %s80 = sphi 0, %s78
    %s81 = sphi 0, %s80
    %s95 = sphi 0, %s81
    %s103 = sphi 0, %s105
    %s106 = sphi 0, %s103
    %s107 = sphi 0, %s106
    %s123 = sphi 0, %s107
  $region4: #{_lambda_.9} parent=0 // loop_header_branch
    %12 = sbr.rel (%p10) target = $region8
  $region5: #{_lambda_.9} parent=0 // loop_body
    %s14 = ssub.s32 %s9, 1
    %s15 = ssub.s32 %s9, 2
    %s22 = sadd.s32 1, %s17
    %p23 = scmp.ge.s32.totalorder %s22, 1
    %s24 = scalar_select %p23, 0, %s22
    %s25 = sadd.s32 1, %s16
    %s26 = scalar_select %p23, %s25, %s16
    %p27 = scmp.ge.s32.totalorder %s26, 2
    %s28 = scalar_select %p27, 0, %s26
    %s29 = ssub.s32 %s16, %s28
    %s30 = ssub.s32 %s17, %s24
    %s31 = sor.u32 %s29, %s30
    %p32 = scmp.eq.s32.totalorder %s31, 0
    %s34 = sadd.s32 %s33, 1
    %s35 = scalar_select %p32, %s33, %s34
    %p38 = pneg %p32
    %p39 = scmp.eq.s32.totalorder %s9, 1
    %p40 = por %p38, %p39
    %p41 = scmp.ne.s32.totalorder %s33, %s36
    %p42 = scmp.eq.s32.totalorder %s9, 0
    %p43 = por %p41, %p42
    %p44 = scmp.ne.s32.totalorder %s33, %s36
    %p45 = scmp.eq.s32.totalorder %s14, 1
    %p46 = por %p44, %p45
    %p47 = scmp.ne.s32.totalorder %s36, %s37
    %p48 = scmp.eq.s32.totalorder %s14, 0
    %p49 = por %p47, %p48
    %p50 = scmp.ne.s32.totalorder %s36, %s37
    %p51 = scmp.eq.s32.totalorder %s15, 1
    %p52 = por %p50, %p51
    %p54 = scmp.ne.s32.totalorder %s37, %s53
    %p55 = scmp.eq.s32.totalorder %s15, 0
    %p56 = por %p54, %p55
    %s58 = sadd.s32 %s57, 1
    %p61 = scmp.eq.s32.totalorder %s9, 1
    %p62 = scmp.ne.s32.totalorder %s57, %s59
    %p63 = scmp.eq.s32.totalorder %s9, 0
    %p64 = por %p62, %p63
    %p65 = scmp.ne.s32.totalorder %s57, %s59
    %p66 = scmp.eq.s32.totalorder %s14, 1
    %p67 = por %p65, %p66
    %p68 = scmp.ne.s32.totalorder %s59, %s60
    %p69 = scmp.eq.s32.totalorder %s14, 0
    %p70 = por %p68, %p69
    %p71 = scmp.ne.s32.totalorder %s59, %s60
    %p72 = scmp.eq.s32.totalorder %s15, 1
    %p73 = por %p71, %p72
    %p75 = scmp.ne.s32.totalorder %s60, %s74
    %p76 = scmp.eq.s32.totalorder %s15, 0
    %p77 = por %p75, %p76
    %s79 = sadd.s32 %s78, 1
    %p82 = scmp.eq.s32.totalorder %s9, 1
    %p83 = scmp.ne.s32.totalorder %s78, %s80
    %p84 = scmp.eq.s32.totalorder %s9, 0
    %p85 = por %p83, %p84
    %p86 = scmp.ne.s32.totalorder %s78, %s80
    %p87 = scmp.eq.s32.totalorder %s14, 1
    %p88 = por %p86, %p87
    %p89 = scmp.ne.s32.totalorder %s80, %s81
    %p90 = scmp.eq.s32.totalorder %s14, 0
    %p91 = por %p89, %p90
    %p92 = scmp.ne.s32.totalorder %s80, %s81
    %p93 = scmp.eq.s32.totalorder %s15, 1
    %p94 = por %p92, %p93
    %p96 = scmp.ne.s32.totalorder %s81, %s95
    %p97 = scmp.eq.s32.totalorder %s15, 0
    %p98 = por %p96, %p97
    %s99 = ssub.s32 %s16, %s28
    %s100 = ssub.s32 %s17, %s24
    %s101 = sor.u32 %s99, %s100
    %p102 = scmp.eq.s32.totalorder %s101, 0
    %s104 = sadd.s32 %s103, 1
    %s105 = scalar_select %p102, %s103, %s104
    %p108 = pneg %p102
    %p109 = scmp.eq.s32.totalorder %s9, 1
    %p110 = por %p108, %p109
    %p111 = scmp.ne.s32.totalorder %s103, %s106
    %p112 = scmp.eq.s32.totalorder %s9, 0
    %p113 = por %p111, %p112
    %p114 = scmp.ne.s32.totalorder %s103, %s106
    %p115 = scmp.eq.s32.totalorder %s14, 1
    %p116 = por %p114, %p115
    %p117 = scmp.ne.s32.totalorder %s106, %s107
    %p118 = scmp.eq.s32.totalorder %s14, 0
    %p119 = por %p117, %p118
    %p120 = scmp.ne.s32.totalorder %s106, %s107
    %p121 = scmp.eq.s32.totalorder %s15, 1
    %p122 = por %p120, %p121
    %p124 = scmp.ne.s32.totalorder %s107, %s123
    %p125 = scmp.eq.s32.totalorder %s15, 0
    %p126 = por %p124, %p125
    %p127 = scmp.le.s32.totalorder 1, %s9
    %p128 = scmp.lt.s32.totalorder %s9, 3
    %p129 = pnand %p127, %p128
    %p130 = pneg %p129
    // Predicated region
    $region9: #{_lambda_.9} parent=5 // pred_check
      _
    $region10: #{_lambda_.9} parent=5 // pred_check_branch
      %132 = sbr.rel (%p129) target = $region12
    $region11: #{_lambda_.9} parent=5 // pred_region
      %s133 = ssub.s32 %s9, 1
      // Predicated region
      $region13: #{_lambda_.9} parent=11 // pred_check
        %p134 = pneg %p70
      $region14: #{_lambda_.9} parent=11 // pred_check_branch
        %136 = sbr.rel (%p134) target = $region16
      $region15: #{_lambda_.9} parent=11 // pred_region
        _
      $region16: #{_lambda_.9} parent=11 // pred_fallthru
        _
      // Predicated region
      $region17: #{_lambda_.9} parent=11 // pred_check
        %p137 = pneg %p91
      $region18: #{_lambda_.9} parent=11 // pred_check_branch
        %139 = sbr.rel (%p137) target = $region20
      $region19: #{_lambda_.9} parent=11 // pred_region
        _
      $region20: #{_lambda_.9} parent=11 // pred_fallthru
        _
    $region12: #{_lambda_.9} parent=5 // pred_fallthru
      _
    %p140 = scmp.lt.s32.totalorder %s9, 2
    // Predicated region
    $region21: #{_lambda_.9} parent=5 // pred_check
      %p141 = pneg %p140
    $region22: #{_lambda_.9} parent=5 // pred_check_branch
      %143 = sbr.rel (%p141) target = $region24
    $region23: #{_lambda_.9} parent=5 // pred_region
      // Predicated region
      $region25: #{_lambda_.9} parent=23 // pred_check
        %p144 = pneg %p43
      $region26: #{_lambda_.9} parent=23 // pred_check_branch
        %146 = sbr.rel (%p144) target = $region28
      $region27: #{_lambda_.9} parent=23 // pred_region
        %p147 = scmp.lt.s32.totalorder %s16, 1
        %s148 = scalar_select %p147, %s16, 1
        %p149 = scmp.lt.s32.totalorder %s17, 0
        %s150 = scalar_select %p149, %s17, 0
        %s151 = smul.addr %s150, 32
        %s152 = smul.addr %s148, 32
        %s153 = sadd.s32 %s151, %s152
        %s154 = smul.addr %s153, 4
        %s155 = scalar_lea.vmem %s0, %s154
      $region28: #{_lambda_.9} parent=23 // pred_fallthru
        _
    $region24: #{_lambda_.9} parent=5 // pred_fallthru
      _
    %p156 = scmp.le.s32.totalorder 1, %s9
    %p157 = scmp.lt.s32.totalorder %s9, 3
    %p158 = pnand %p156, %p157
    %p159 = pneg %p158
    // Predicated region
    $region29: #{_lambda_.9} parent=5 // pred_check
      _
    $region30: #{_lambda_.9} parent=5 // pred_check_branch
      %161 = sbr.rel (%p158) target = $region32
    $region31: #{_lambda_.9} parent=5 // pred_region
      %s162 = ssub.s32 %s9, 1
      %p163 = scmp.lt.s32.totalorder %s18, 1
      %s164 = scalar_select %p163, %s18, 1
      %p165 = scmp.lt.s32.totalorder %s19, 0
      %s166 = scalar_select %p165, %s19, 0
      %s167 = smul.addr %s166, 32
      %s168 = smul.addr %s164, 32
      %s169 = sadd.s32 %s167, %s168
      %s170 = smul.addr %s169, 4
      %s171 = scalar_lea.vmem %s0, %s170
      %p172 = pneg %p49
      %p173 = pneg %p46
      %p174 = pneg %p70
      %p175 = pneg %p67
      %p176 = pneg %p91
      %p177 = pneg %p88
      %p178 = pneg %p119
      %p179 = pneg %p116
      %p180 = scmp.lt.s32.totalorder %s18, 1
      %s181 = scalar_select %p180, %s18, 1
      %p182 = scmp.lt.s32.totalorder %s19, 0
      %s183 = scalar_select %p182, %s19, 0
      %s184 = sadd.s32 %s183, %s181
      %s185 = smul.addr %s184, 8
      %s186 = scalar_lea.vmem %s3, %s185
      %p187 = scmp.lt.s32.totalorder %s18, 1
      %s188 = scalar_select %p187, %s18, 1
      %p189 = scmp.lt.s32.totalorder %s19, 0
      %s190 = scalar_select %p189, %s19, 0
      %s191 = smul.addr %s190, 32
      %s192 = smul.addr %s188, 32
      %s193 = sadd.s32 %s191, %s192
      %s194 = smul.addr %s193, 4
      %s195 = scalar_lea.vmem %s0, %s194
      %p196 = scmp.lt.s32.totalorder %s18, 1
      %s197 = scalar_select %p196, %s18, 1
      %p198 = scmp.lt.s32.totalorder %s19, 0
      %s199 = scalar_select %p198, %s19, 0
      %s200 = sadd.s32 %s199, %s197
      %s201 = smul.addr %s200, 8
      %s202 = scalar_lea.vmem %s3, %s201
      %v203 = vld [vmem:[%s195] sm:$0xff]
      %v204 = vld [vmem:[%s195 + $0x8] sm:$0xff]
      %v205 = vld [vmem:[%s195 + $0x10] sm:$0xff]
      %v206 = vld [vmem:[%s195 + $0x18] sm:$0xff]
      %v207 = vld [vmem:[%s195 + $0x20] sm:$0xff]
      %v208 = vld [vmem:[%s195 + $0x28] sm:$0xff]
      %v209 = vld [vmem:[%s195 + $0x30] sm:$0xff]
      %v210 = vld [vmem:[%s195 + $0x38] sm:$0xff]
      %v211 = vld [vmem:[%s195 + $0x40] sm:$0xff]
      %v212 = vld [vmem:[%s195 + $0x48] sm:$0xff]
      %v213 = vld [vmem:[%s195 + $0x50] sm:$0xff]
      %v214 = vld [vmem:[%s195 + $0x58] sm:$0xff]
      %v215 = vld [vmem:[%s195 + $0x60] sm:$0xff]
      %v216 = vld [vmem:[%s195 + $0x68] sm:$0xff]
      %v217 = vld [vmem:[%s195 + $0x70] sm:$0xff]
      %v218 = vld [vmem:[%s195 + $0x78] sm:$0xff]
      %v219 = vld [vmem:[%s1] sm:$0xf]
      %v220 = vld [vmem:[%s1 + $0x4] sm:$0xf]
      %v221 = vld [vmem:[%s1 + $0x8] sm:$0xf]
      %v222 = vld [vmem:[%s1 + $0xc] sm:$0xf]
      %v223 = vld [vmem:[%s1 + $0x10] sm:$0xf]
      %v224 = vld [vmem:[%s1 + $0x14] sm:$0xf]
      %v225 = vld [vmem:[%s1 + $0x18] sm:$0xf]
      %v226 = vld [vmem:[%s1 + $0x1c] sm:$0xf]
      %v227 = vld [vmem:[%s1 + $0x20] sm:$0xf]
      %v228 = vld [vmem:[%s1 + $0x24] sm:$0xf]
      %v229 = vld [vmem:[%s1 + $0x28] sm:$0xf]
      %v230 = vld [vmem:[%s1 + $0x2c] sm:$0xf]
      %v231 = vld [vmem:[%s1 + $0x30] sm:$0xf]
      %v232 = vld [vmem:[%s1 + $0x34] sm:$0xf]
      %v233 = vld [vmem:[%s1 + $0x38] sm:$0xf]
      %v234 = vld [vmem:[%s1 + $0x3c] sm:$0xf]
      %v235 = vld [vmem:[%s1 + $0x40] sm:$0xf]
      %v236 = vld [vmem:[%s1 + $0x44] sm:$0xf]
      %v237 = vld [vmem:[%s1 + $0x48] sm:$0xf]
      %v238 = vld [vmem:[%s1 + $0x4c] sm:$0xf]
      %v239 = vld [vmem:[%s1 + $0x50] sm:$0xf]
      %v240 = vld [vmem:[%s1 + $0x54] sm:$0xf]
      %v241 = vld [vmem:[%s1 + $0x58] sm:$0xf]
      %v242 = vld [vmem:[%s1 + $0x5c] sm:$0xf]
      %v243 = vld [vmem:[%s1 + $0x60] sm:$0xf]
      %v244 = vld [vmem:[%s1 + $0x64] sm:$0xf]
      %v245 = vld [vmem:[%s1 + $0x68] sm:$0xf]
      %v246 = vld [vmem:[%s1 + $0x6c] sm:$0xf]
      %v247 = vld [vmem:[%s1 + $0x70] sm:$0xf]
      %v248 = vld [vmem:[%s1 + $0x74] sm:$0xf]
      %v249 = vld [vmem:[%s1 + $0x78] sm:$0xf]
      %v250 = vld [vmem:[%s1 + $0x7c] sm:$0xf]
      %v251 = vld [vmem:[%s1 + $0x80] sm:$0xf]
      %v252 = vld [vmem:[%s1 + $0x84] sm:$0xf]
      %v253 = vld [vmem:[%s1 + $0x88] sm:$0xf]
      %v254 = vld [vmem:[%s1 + $0x8c] sm:$0xf]
      %v255 = vld [vmem:[%s1 + $0x90] sm:$0xf]
      %v256 = vld [vmem:[%s1 + $0x94] sm:$0xf]
      %v257 = vld [vmem:[%s1 + $0x98] sm:$0xf]
      %v258 = vld [vmem:[%s1 + $0x9c] sm:$0xf]
      %v259 = vld [vmem:[%s1 + $0xa0] sm:$0xf]
      %v260 = vld [vmem:[%s1 + $0xa4] sm:$0xf]
      %v261 = vld [vmem:[%s1 + $0xa8] sm:$0xf]
      %v262 = vld [vmem:[%s1 + $0xac] sm:$0xf]
      %v263 = vld [vmem:[%s1 + $0xb0] sm:$0xf]
      %v264 = vld [vmem:[%s1 + $0xb4] sm:$0xf]
      %v265 = vld [vmem:[%s1 + $0xb8] sm:$0xf]
      %v266 = vld [vmem:[%s1 + $0xbc] sm:$0xf]
      %v267 = vld [vmem:[%s1 + $0xc0] sm:$0xf]
      %v268 = vld [vmem:[%s1 + $0xc4] sm:$0xf]
      %v269 = vld [vmem:[%s1 + $0xc8] sm:$0xf]
      %v270 = vld [vmem:[%s1 + $0xcc] sm:$0xf]
      %v271 = vld [vmem:[%s1 + $0xd0] sm:$0xf]
      %v272 = vld [vmem:[%s1 + $0xd4] sm:$0xf]
      %v273 = vld [vmem:[%s1 + $0xd8] sm:$0xf]
      %v274 = vld [vmem:[%s1 + $0xdc] sm:$0xf]
      %v275 = vld [vmem:[%s1 + $0xe0] sm:$0xf]
      %v276 = vld [vmem:[%s1 + $0xe4] sm:$0xf]
      %v277 = vld [vmem:[%s1 + $0xe8] sm:$0xf]
      %v278 = vld [vmem:[%s1 + $0xec] sm:$0xf]
      %v279 = vld [vmem:[%s1 + $0xf0] sm:$0xf]
      %v280 = vld [vmem:[%s1 + $0xf4] sm:$0xf]
      %v281 = vld [vmem:[%s1 + $0xf8] sm:$0xf]
      %v282 = vld [vmem:[%s1 + $0xfc] sm:$0xf]
      %v283 = vld [vmem:[%s1 + $0x100] sm:$0xf]
      %v284 = vld [vmem:[%s1 + $0x104] sm:$0xf]
      %v285 = vld [vmem:[%s1 + $0x108] sm:$0xf]
      %v286 = vld [vmem:[%s1 + $0x10c] sm:$0xf]
      %v287 = vld [vmem:[%s1 + $0x110] sm:$0xf]
      %v288 = vld [vmem:[%s1 + $0x114] sm:$0xf]
      %v289 = vld [vmem:[%s1 + $0x118] sm:$0xf]
      %v290 = vld [vmem:[%s1 + $0x11c] sm:$0xf]
      %v291 = vld [vmem:[%s1 + $0x120] sm:$0xf]
      %v292 = vld [vmem:[%s1 + $0x124] sm:$0xf]
      %v293 = vld [vmem:[%s1 + $0x128] sm:$0xf]
      %v294 = vld [vmem:[%s1 + $0x12c] sm:$0xf]
      %v295 = vld [vmem:[%s1 + $0x130] sm:$0xf]
      %v296 = vld [vmem:[%s1 + $0x134] sm:$0xf]
      %v297 = vld [vmem:[%s1 + $0x138] sm:$0xf]
      %v298 = vld [vmem:[%s1 + $0x13c] sm:$0xf]
      %v299 = vld [vmem:[%s1 + $0x140] sm:$0xf]
      %v300 = vld [vmem:[%s1 + $0x144] sm:$0xf]
      %v301 = vld [vmem:[%s1 + $0x148] sm:$0xf]
      %v302 = vld [vmem:[%s1 + $0x14c] sm:$0xf]
      %v303 = vld [vmem:[%s1 + $0x150] sm:$0xf]
      %v304 = vld [vmem:[%s1 + $0x154] sm:$0xf]
      %v305 = vld [vmem:[%s1 + $0x158] sm:$0xf]
      %v306 = vld [vmem:[%s1 + $0x15c] sm:$0xf]
      %v307 = vld [vmem:[%s1 + $0x160] sm:$0xf]
      %v308 = vld [vmem:[%s1 + $0x164] sm:$0xf]
      %v309 = vld [vmem:[%s1 + $0x168] sm:$0xf]
      %v310 = vld [vmem:[%s1 + $0x16c] sm:$0xf]
      %v311 = vld [vmem:[%s1 + $0x170] sm:$0xf]
      %v312 = vld [vmem:[%s1 + $0x174] sm:$0xf]
      %v313 = vld [vmem:[%s1 + $0x178] sm:$0xf]
      %v314 = vld [vmem:[%s1 + $0x17c] sm:$0xf]
      %v315 = vld [vmem:[%s1 + $0x180] sm:$0xf]
      %v316 = vld [vmem:[%s1 + $0x184] sm:$0xf]
      %v317 = vld [vmem:[%s1 + $0x188] sm:$0xf]
      %v318 = vld [vmem:[%s1 + $0x18c] sm:$0xf]
      %v319 = vld [vmem:[%s1 + $0x190] sm:$0xf]
      %v320 = vld [vmem:[%s1 + $0x194] sm:$0xf]
      %v321 = vld [vmem:[%s1 + $0x198] sm:$0xf]
      %v322 = vld [vmem:[%s1 + $0x19c] sm:$0xf]
      %v323 = vld [vmem:[%s1 + $0x1a0] sm:$0xf]
      %v324 = vld [vmem:[%s1 + $0x1a4] sm:$0xf]
      %v325 = vld [vmem:[%s1 + $0x1a8] sm:$0xf]
      %v326 = vld [vmem:[%s1 + $0x1ac] sm:$0xf]
      %v327 = vld [vmem:[%s1 + $0x1b0] sm:$0xf]
      %v328 = vld [vmem:[%s1 + $0x1b4] sm:$0xf]
      %v329 = vld [vmem:[%s1 + $0x1b8] sm:$0xf]
      %v330 = vld [vmem:[%s1 + $0x1bc] sm:$0xf]
      %v331 = vld [vmem:[%s1 + $0x1c0] sm:$0xf]
      %v332 = vld [vmem:[%s1 + $0x1c4] sm:$0xf]
      %v333 = vld [vmem:[%s1 + $0x1c8] sm:$0xf]
      %v334 = vld [vmem:[%s1 + $0x1cc] sm:$0xf]
      %v335 = vld [vmem:[%s1 + $0x1d0] sm:$0xf]
      %v336 = vld [vmem:[%s1 + $0x1d4] sm:$0xf]
      %v337 = vld [vmem:[%s1 + $0x1d8] sm:$0xf]
      %v338 = vld [vmem:[%s1 + $0x1dc] sm:$0xf]
      %v339 = vld [vmem:[%s1 + $0x1e0] sm:$0xf]
      %v340 = vld [vmem:[%s1 + $0x1e4] sm:$0xf]
      %v341 = vld [vmem:[%s1 + $0x1e8] sm:$0xf]
      %v342 = vld [vmem:[%s1 + $0x1ec] sm:$0xf]
      %v343 = vld [vmem:[%s1 + $0x1f0] sm:$0xf]
      %v344 = vld [vmem:[%s1 + $0x1f4] sm:$0xf]
      %v345 = vld [vmem:[%s1 + $0x1f8] sm:$0xf]
      %v346 = vld [vmem:[%s1 + $0x1fc] sm:$0xf]
      %v347 = vld [vmem:[%s1 + $0x200] sm:$0xf]
      %v348 = vld [vmem:[%s1 + $0x204] sm:$0xf]
      %v349 = vld [vmem:[%s1 + $0x208] sm:$0xf]
      %v350 = vld [vmem:[%s1 + $0x20c] sm:$0xf]
      %v351 = vld [vmem:[%s1 + $0x210] sm:$0xf]
      %v352 = vld [vmem:[%s1 + $0x214] sm:$0xf]
      %v353 = vld [vmem:[%s1 + $0x218] sm:$0xf]
      %v354 = vld [vmem:[%s1 + $0x21c] sm:$0xf]
      %v355 = vld [vmem:[%s1 + $0x220] sm:$0xf]
      %v356 = vld [vmem:[%s1 + $0x224] sm:$0xf]
      %v357 = vld [vmem:[%s1 + $0x228] sm:$0xf]
      %v358 = vld [vmem:[%s1 + $0x22c] sm:$0xf]
      %v359 = vld [vmem:[%s1 + $0x230] sm:$0xf]
      %v360 = vld [vmem:[%s1 + $0x234] sm:$0xf]
      %v361 = vld [vmem:[%s1 + $0x238] sm:$0xf]
      %v362 = vld [vmem:[%s1 + $0x23c] sm:$0xf]
      %v363 = vld [vmem:[%s1 + $0x240] sm:$0xf]
      %v364 = vld [vmem:[%s1 + $0x244] sm:$0xf]
      %v365 = vld [vmem:[%s1 + $0x248] sm:$0xf]
      %v366 = vld [vmem:[%s1 + $0x24c] sm:$0xf]
      %v367 = vld [vmem:[%s1 + $0x250] sm:$0xf]
      %v368 = vld [vmem:[%s1 + $0x254] sm:$0xf]
      %v369 = vld [vmem:[%s1 + $0x258] sm:$0xf]
      %v370 = vld [vmem:[%s1 + $0x25c] sm:$0xf]
      %v371 = vld [vmem:[%s1 + $0x260] sm:$0xf]
      %v372 = vld [vmem:[%s1 + $0x264] sm:$0xf]
      %v373 = vld [vmem:[%s1 + $0x268] sm:$0xf]
      %v374 = vld [vmem:[%s1 + $0x26c] sm:$0xf]
      %v375 = vld [vmem:[%s1 + $0x270] sm:$0xf]
      %v376 = vld [vmem:[%s1 + $0x274] sm:$0xf]
      %v377 = vld [vmem:[%s1 + $0x278] sm:$0xf]
      %v378 = vld [vmem:[%s1 + $0x27c] sm:$0xf]
      %v379 = vld [vmem:[%s1 + $0x280] sm:$0xf]
      %v380 = vld [vmem:[%s1 + $0x284] sm:$0xf]
      %v381 = vld [vmem:[%s1 + $0x288] sm:$0xf]
      %v382 = vld [vmem:[%s1 + $0x28c] sm:$0xf]
      %v383 = vld [vmem:[%s1 + $0x290] sm:$0xf]
      %v384 = vld [vmem:[%s1 + $0x294] sm:$0xf]
      %v385 = vld [vmem:[%s1 + $0x298] sm:$0xf]
      %v386 = vld [vmem:[%s1 + $0x29c] sm:$0xf]
      %v387 = vld [vmem:[%s1 + $0x2a0] sm:$0xf]
      %v388 = vld [vmem:[%s1 + $0x2a4] sm:$0xf]
      %v389 = vld [vmem:[%s1 + $0x2a8] sm:$0xf]
      %v390 = vld [vmem:[%s1 + $0x2ac] sm:$0xf]
      %v391 = vld [vmem:[%s1 + $0x2b0] sm:$0xf]
      %v392 = vld [vmem:[%s1 + $0x2b4] sm:$0xf]
      %v393 = vld [vmem:[%s1 + $0x2b8] sm:$0xf]
      %v394 = vld [vmem:[%s1 + $0x2bc] sm:$0xf]
      %v395 = vld [vmem:[%s1 + $0x2c0] sm:$0xf]
      %v396 = vld [vmem:[%s1 + $0x2c4] sm:$0xf]
      %v397 = vld [vmem:[%s1 + $0x2c8] sm:$0xf]
      %v398 = vld [vmem:[%s1 + $0x2cc] sm:$0xf]
      %v399 = vld [vmem:[%s1 + $0x2d0] sm:$0xf]
      %v400 = vld [vmem:[%s1 + $0x2d4] sm:$0xf]
      %v401 = vld [vmem:[%s1 + $0x2d8] sm:$0xf]
      %v402 = vld [vmem:[%s1 + $0x2dc] sm:$0xf]
      %v403 = vld [vmem:[%s1 + $0x2e0] sm:$0xf]
      %v404 = vld [vmem:[%s1 + $0x2e4] sm:$0xf]
      %v405 = vld [vmem:[%s1 + $0x2e8] sm:$0xf]
      %v406 = vld [vmem:[%s1 + $0x2ec] sm:$0xf]
      %v407 = vld [vmem:[%s1 + $0x2f0] sm:$0xf]
      %v408 = vld [vmem:[%s1 + $0x2f4] sm:$0xf]
      %v409 = vld [vmem:[%s1 + $0x2f8] sm:$0xf]
      %v410 = vld [vmem:[%s1 + $0x2fc] sm:$0xf]
      %v411 = vld [vmem:[%s1 + $0x300] sm:$0xf]
      %v412 = vld [vmem:[%s1 + $0x304] sm:$0xf]
      %v413 = vld [vmem:[%s1 + $0x308] sm:$0xf]
      %v414 = vld [vmem:[%s1 + $0x30c] sm:$0xf]
      %v415 = vld [vmem:[%s1 + $0x310] sm:$0xf]
      %v416 = vld [vmem:[%s1 + $0x314] sm:$0xf]
      %v417 = vld [vmem:[%s1 + $0x318] sm:$0xf]
      %v418 = vld [vmem:[%s1 + $0x31c] sm:$0xf]
      %v419 = vld [vmem:[%s1 + $0x320] sm:$0xf]
      %v420 = vld [vmem:[%s1 + $0x324] sm:$0xf]
      %v421 = vld [vmem:[%s1 + $0x328] sm:$0xf]
      %v422 = vld [vmem:[%s1 + $0x32c] sm:$0xf]
      %v423 = vld [vmem:[%s1 + $0x330] sm:$0xf]
      %v424 = vld [vmem:[%s1 + $0x334] sm:$0xf]
      %v425 = vld [vmem:[%s1 + $0x338] sm:$0xf]
      %v426 = vld [vmem:[%s1 + $0x33c] sm:$0xf]
      %v427 = vld [vmem:[%s1 + $0x340] sm:$0xf]
      %v428 = vld [vmem:[%s1 + $0x344] sm:$0xf]
      %v429 = vld [vmem:[%s1 + $0x348] sm:$0xf]
      %v430 = vld [vmem:[%s1 + $0x34c] sm:$0xf]
      %v431 = vld [vmem:[%s1 + $0x350] sm:$0xf]
      %v432 = vld [vmem:[%s1 + $0x354] sm:$0xf]
      %v433 = vld [vmem:[%s1 + $0x358] sm:$0xf]
      %v434 = vld [vmem:[%s1 + $0x35c] sm:$0xf]
      %v435 = vld [vmem:[%s1 + $0x360] sm:$0xf]
      %v436 = vld [vmem:[%s1 + $0x364] sm:$0xf]
      %v437 = vld [vmem:[%s1 + $0x368] sm:$0xf]
      %v438 = vld [vmem:[%s1 + $0x36c] sm:$0xf]
      %v439 = vld [vmem:[%s1 + $0x370] sm:$0xf]
      %v440 = vld [vmem:[%s1 + $0x374] sm:$0xf]
      %v441 = vld [vmem:[%s1 + $0x378] sm:$0xf]
      %v442 = vld [vmem:[%s1 + $0x37c] sm:$0xf]
      %v443 = vld [vmem:[%s1 + $0x380] sm:$0xf]
      %v444 = vld [vmem:[%s1 + $0x384] sm:$0xf]
      %v445 = vld [vmem:[%s1 + $0x388] sm:$0xf]
      %v446 = vld [vmem:[%s1 + $0x38c] sm:$0xf]
      %v447 = vld [vmem:[%s1 + $0x390] sm:$0xf]
      %v448 = vld [vmem:[%s1 + $0x394] sm:$0xf]
      %v449 = vld [vmem:[%s1 + $0x398] sm:$0xf]
      %v450 = vld [vmem:[%s1 + $0x39c] sm:$0xf]
      %v451 = vld [vmem:[%s1 + $0x3a0] sm:$0xf]
      %v452 = vld [vmem:[%s1 + $0x3a4] sm:$0xf]
      %v453 = vld [vmem:[%s1 + $0x3a8] sm:$0xf]
      %v454 = vld [vmem:[%s1 + $0x3ac] sm:$0xf]
      %v455 = vld [vmem:[%s1 + $0x3b0] sm:$0xf]
      %v456 = vld [vmem:[%s1 + $0x3b4] sm:$0xf]
      %v457 = vld [vmem:[%s1 + $0x3b8] sm:$0xf]
      %v458 = vld [vmem:[%s1 + $0x3bc] sm:$0xf]
      %v459 = vld [vmem:[%s1 + $0x3c0] sm:$0xf]
      %v460 = vld [vmem:[%s1 + $0x3c4] sm:$0xf]
      %v461 = vld [vmem:[%s1 + $0x3c8] sm:$0xf]
      %v462 = vld [vmem:[%s1 + $0x3cc] sm:$0xf]
      %v463 = vld [vmem:[%s1 + $0x3d0] sm:$0xf]
      %v464 = vld [vmem:[%s1 + $0x3d4] sm:$0xf]
      %v465 = vld [vmem:[%s1 + $0x3d8] sm:$0xf]
      %v466 = vld [vmem:[%s1 + $0x3dc] sm:$0xf]
      %v467 = vld [vmem:[%s1 + $0x3e0] sm:$0xf]
      %v468 = vld [vmem:[%s1 + $0x3e4] sm:$0xf]
      %v469 = vld [vmem:[%s1 + $0x3e8] sm:$0xf]
      %v470 = vld [vmem:[%s1 + $0x3ec] sm:$0xf]
      %v471 = vld [vmem:[%s1 + $0x3f0] sm:$0xf]
      %v472 = vld [vmem:[%s1 + $0x3f4] sm:$0xf]
      %v473 = vld [vmem:[%s1 + $0x3f8] sm:$0xf]
      %v474 = vld [vmem:[%s1 + $0x3fc] sm:$0xf]
      %v475 = vld [vmem:[%s1 + $0x400] sm:$0xf]
      %v476 = vld [vmem:[%s1 + $0x404] sm:$0xf]
      %v477 = vld [vmem:[%s1 + $0x408] sm:$0xf]
      %v478 = vld [vmem:[%s1 + $0x40c] sm:$0xf]
      %v479 = vld [vmem:[%s1 + $0x410] sm:$0xf]
      %v480 = vld [vmem:[%s1 + $0x414] sm:$0xf]
      %v481 = vld [vmem:[%s1 + $0x418] sm:$0xf]
      %v482 = vld [vmem:[%s1 + $0x41c] sm:$0xf]
      %v483 = vld [vmem:[%s1 + $0x420] sm:$0xf]
      %v484 = vld [vmem:[%s1 + $0x424] sm:$0xf]
      %v485 = vld [vmem:[%s1 + $0x428] sm:$0xf]
      %v486 = vld [vmem:[%s1 + $0x42c] sm:$0xf]
      %v487 = vld [vmem:[%s1 + $0x430] sm:$0xf]
      %v488 = vld [vmem:[%s1 + $0x434] sm:$0xf]
      %v489 = vld [vmem:[%s1 + $0x438] sm:$0xf]
      %v490 = vld [vmem:[%s1 + $0x43c] sm:$0xf]
      %v491 = vld [vmem:[%s1 + $0x440] sm:$0xf]
      %v492 = vld [vmem:[%s1 + $0x444] sm:$0xf]
      %v493 = vld [vmem:[%s1 + $0x448] sm:$0xf]
      %v494 = vld [vmem:[%s1 + $0x44c] sm:$0xf]
      %v495 = vld [vmem:[%s1 + $0x450] sm:$0xf]
      %v496 = vld [vmem:[%s1 + $0x454] sm:$0xf]
      %v497 = vld [vmem:[%s1 + $0x458] sm:$0xf]
      %v498 = vld [vmem:[%s1 + $0x45c] sm:$0xf]
      %v499 = vld [vmem:[%s1 + $0x460] sm:$0xf]
      %v500 = vld [vmem:[%s1 + $0x464] sm:$0xf]
      %v501 = vld [vmem:[%s1 + $0x468] sm:$0xf]
      %v502 = vld [vmem:[%s1 + $0x46c] sm:$0xf]
      %v503 = vld [vmem:[%s1 + $0x470] sm:$0xf]
      %v504 = vld [vmem:[%s1 + $0x474] sm:$0xf]
      %v505 = vld [vmem:[%s1 + $0x478] sm:$0xf]
      %v506 = vld [vmem:[%s1 + $0x47c] sm:$0xf]
      %v507 = vld [vmem:[%s1 + $0x480] sm:$0xf]
      %v508 = vld [vmem:[%s1 + $0x484] sm:$0xf]
      %v509 = vld [vmem:[%s1 + $0x488] sm:$0xf]
      %v510 = vld [vmem:[%s1 + $0x48c] sm:$0xf]
      %v511 = vld [vmem:[%s1 + $0x490] sm:$0xf]
      %v512 = vld [vmem:[%s1 + $0x494] sm:$0xf]
      %v513 = vld [vmem:[%s1 + $0x498] sm:$0xf]
      %v514 = vld [vmem:[%s1 + $0x49c] sm:$0xf]
      %v515 = vld [vmem:[%s1 + $0x4a0] sm:$0xf]
      %v516 = vld [vmem:[%s1 + $0x4a4] sm:$0xf]
      %v517 = vld [vmem:[%s1 + $0x4a8] sm:$0xf]
      %v518 = vld [vmem:[%s1 + $0x4ac] sm:$0xf]
      %v519 = vld [vmem:[%s1 + $0x4b0] sm:$0xf]
      %v520 = vld [vmem:[%s1 + $0x4b4] sm:$0xf]
      %v521 = vld [vmem:[%s1 + $0x4b8] sm:$0xf]
      %v522 = vld [vmem:[%s1 + $0x4bc] sm:$0xf]
      %v523 = vld [vmem:[%s1 + $0x4c0] sm:$0xf]
      %v524 = vld [vmem:[%s1 + $0x4c4] sm:$0xf]
      %v525 = vld [vmem:[%s1 + $0x4c8] sm:$0xf]
      %v526 = vld [vmem:[%s1 + $0x4cc] sm:$0xf]
      %v527 = vld [vmem:[%s1 + $0x4d0] sm:$0xf]
      %v528 = vld [vmem:[%s1 + $0x4d4] sm:$0xf]
      %v529 = vld [vmem:[%s1 + $0x4d8] sm:$0xf]
      %v530 = vld [vmem:[%s1 + $0x4dc] sm:$0xf]
      %v531 = vld [vmem:[%s1 + $0x4e0] sm:$0xf]
      %v532 = vld [vmem:[%s1 + $0x4e4] sm:$0xf]
      %v533 = vld [vmem:[%s1 + $0x4e8] sm:$0xf]
      %v534 = vld [vmem:[%s1 + $0x4ec] sm:$0xf]
      %v535 = vld [vmem:[%s1 + $0x4f0] sm:$0xf]
      %v536 = vld [vmem:[%s1 + $0x4f4] sm:$0xf]
      %v537 = vld [vmem:[%s1 + $0x4f8] sm:$0xf]
      %v538 = vld [vmem:[%s1 + $0x4fc] sm:$0xf]
      %v539 = vld [vmem:[%s1 + $0x500] sm:$0xf]
      %v540 = vld [vmem:[%s1 + $0x504] sm:$0xf]
      %v541 = vld [vmem:[%s1 + $0x508] sm:$0xf]
      %v542 = vld [vmem:[%s1 + $0x50c] sm:$0xf]
      %v543 = vld [vmem:[%s1 + $0x510] sm:$0xf]
      %v544 = vld [vmem:[%s1 + $0x514] sm:$0xf]
      %v545 = vld [vmem:[%s1 + $0x518] sm:$0xf]
      %v546 = vld [vmem:[%s1 + $0x51c] sm:$0xf]
      %v547 = vld [vmem:[%s1 + $0x520] sm:$0xf]
      %v548 = vld [vmem:[%s1 + $0x524] sm:$0xf]
      %v549 = vld [vmem:[%s1 + $0x528] sm:$0xf]
      %v550 = vld [vmem:[%s1 + $0x52c] sm:$0xf]
      %v551 = vld [vmem:[%s1 + $0x530] sm:$0xf]
      %v552 = vld [vmem:[%s1 + $0x534] sm:$0xf]
      %v553 = vld [vmem:[%s1 + $0x538] sm:$0xf]
      %v554 = vld [vmem:[%s1 + $0x53c] sm:$0xf]
      %v555 = vld [vmem:[%s1 + $0x540] sm:$0xf]
      %v556 = vld [vmem:[%s1 + $0x544] sm:$0xf]
      %v557 = vld [vmem:[%s1 + $0x548] sm:$0xf]
      %v558 = vld [vmem:[%s1 + $0x54c] sm:$0xf]
      %v559 = vld [vmem:[%s1 + $0x550] sm:$0xf]
      %v560 = vld [vmem:[%s1 + $0x554] sm:$0xf]
      %v561 = vld [vmem:[%s1 + $0x558] sm:$0xf]
      %v562 = vld [vmem:[%s1 + $0x55c] sm:$0xf]
      %v563 = vld [vmem:[%s1 + $0x560] sm:$0xf]
      %v564 = vld [vmem:[%s1 + $0x564] sm:$0xf]
      %v565 = vld [vmem:[%s1 + $0x568] sm:$0xf]
      %v566 = vld [vmem:[%s1 + $0x56c] sm:$0xf]
      %v567 = vld [vmem:[%s1 + $0x570] sm:$0xf]
      %v568 = vld [vmem:[%s1 + $0x574] sm:$0xf]
      %v569 = vld [vmem:[%s1 + $0x578] sm:$0xf]
      %v570 = vld [vmem:[%s1 + $0x57c] sm:$0xf]
      %v571 = vld [vmem:[%s1 + $0x580] sm:$0xf]
      %v572 = vld [vmem:[%s1 + $0x584] sm:$0xf]
      %v573 = vld [vmem:[%s1 + $0x588] sm:$0xf]
      %v574 = vld [vmem:[%s1 + $0x58c] sm:$0xf]
      %v575 = vld [vmem:[%s1 + $0x590] sm:$0xf]
      %v576 = vld [vmem:[%s1 + $0x594] sm:$0xf]
      %v577 = vld [vmem:[%s1 + $0x598] sm:$0xf]
      %v578 = vld [vmem:[%s1 + $0x59c] sm:$0xf]
      %v579 = vld [vmem:[%s1 + $0x5a0] sm:$0xf]
      %v580 = vld [vmem:[%s1 + $0x5a4] sm:$0xf]
      %v581 = vld [vmem:[%s1 + $0x5a8] sm:$0xf]
      %v582 = vld [vmem:[%s1 + $0x5ac] sm:$0xf]
      %v583 = vld [vmem:[%s1 + $0x5b0] sm:$0xf]
      %v584 = vld [vmem:[%s1 + $0x5b4] sm:$0xf]
      %v585 = vld [vmem:[%s1 + $0x5b8] sm:$0xf]
      %v586 = vld [vmem:[%s1 + $0x5bc] sm:$0xf]
      %v587 = vld [vmem:[%s1 + $0x5c0] sm:$0xf]
      %v588 = vld [vmem:[%s1 + $0x5c4] sm:$0xf]
      %v589 = vld [vmem:[%s1 + $0x5c8] sm:$0xf]
      %v590 = vld [vmem:[%s1 + $0x5cc] sm:$0xf]
      %v591 = vld [vmem:[%s1 + $0x5d0] sm:$0xf]
      %v592 = vld [vmem:[%s1 + $0x5d4] sm:$0xf]
      %v593 = vld [vmem:[%s1 + $0x5d8] sm:$0xf]
      %v594 = vld [vmem:[%s1 + $0x5dc] sm:$0xf]
      %v595 = vld [vmem:[%s1 + $0x5e0] sm:$0xf]
      %v596 = vld [vmem:[%s1 + $0x5e4] sm:$0xf]
      %v597 = vld [vmem:[%s1 + $0x5e8] sm:$0xf]
      %v598 = vld [vmem:[%s1 + $0x5ec] sm:$0xf]
      %v599 = vld [vmem:[%s1 + $0x5f0] sm:$0xf]
      %v600 = vld [vmem:[%s1 + $0x5f4] sm:$0xf]
      %v601 = vld [vmem:[%s1 + $0x5f8] sm:$0xf]
      %v602 = vld [vmem:[%s1 + $0x5fc] sm:$0xf]
      %v603 = vld [vmem:[%s1 + $0x600] sm:$0xf]
      %v604 = vld [vmem:[%s1 + $0x604] sm:$0xf]
      %v605 = vld [vmem:[%s1 + $0x608] sm:$0xf]
      %v606 = vld [vmem:[%s1 + $0x60c] sm:$0xf]
      %v607 = vld [vmem:[%s1 + $0x610] sm:$0xf]
      %v608 = vld [vmem:[%s1 + $0x614] sm:$0xf]
      %v609 = vld [vmem:[%s1 + $0x618] sm:$0xf]
      %v610 = vld [vmem:[%s1 + $0x61c] sm:$0xf]
      %v611 = vld [vmem:[%s1 + $0x620] sm:$0xf]
      %v612 = vld [vmem:[%s1 + $0x624] sm:$0xf]
      %v613 = vld [vmem:[%s1 + $0x628] sm:$0xf]
      %v614 = vld [vmem:[%s1 + $0x62c] sm:$0xf]
      %v615 = vld [vmem:[%s1 + $0x630] sm:$0xf]
      %v616 = vld [vmem:[%s1 + $0x634] sm:$0xf]
      %v617 = vld [vmem:[%s1 + $0x638] sm:$0xf]
      %v618 = vld [vmem:[%s1 + $0x63c] sm:$0xf]
      %v619 = vld [vmem:[%s1 + $0x640] sm:$0xf]
      %v620 = vld [vmem:[%s1 + $0x644] sm:$0xf]
      %v621 = vld [vmem:[%s1 + $0x648] sm:$0xf]
      %v622 = vld [vmem:[%s1 + $0x64c] sm:$0xf]
      %v623 = vld [vmem:[%s1 + $0x650] sm:$0xf]
      %v624 = vld [vmem:[%s1 + $0x654] sm:$0xf]
      %v625 = vld [vmem:[%s1 + $0x658] sm:$0xf]
      %v626 = vld [vmem:[%s1 + $0x65c] sm:$0xf]
      %v627 = vld [vmem:[%s1 + $0x660] sm:$0xf]
      %v628 = vld [vmem:[%s1 + $0x664] sm:$0xf]
      %v629 = vld [vmem:[%s1 + $0x668] sm:$0xf]
      %v630 = vld [vmem:[%s1 + $0x66c] sm:$0xf]
      %v631 = vld [vmem:[%s1 + $0x670] sm:$0xf]
      %v632 = vld [vmem:[%s1 + $0x674] sm:$0xf]
      %v633 = vld [vmem:[%s1 + $0x678] sm:$0xf]
      %v634 = vld [vmem:[%s1 + $0x67c] sm:$0xf]
      %v635 = vld [vmem:[%s1 + $0x680] sm:$0xf]
      %v636 = vld [vmem:[%s1 + $0x684] sm:$0xf]
      %v637 = vld [vmem:[%s1 + $0x688] sm:$0xf]
      %v638 = vld [vmem:[%s1 + $0x68c] sm:$0xf]
      %v639 = vld [vmem:[%s1 + $0x690] sm:$0xf]
      %v640 = vld [vmem:[%s1 + $0x694] sm:$0xf]
      %v641 = vld [vmem:[%s1 + $0x698] sm:$0xf]
      %v642 = vld [vmem:[%s1 + $0x69c] sm:$0xf]
      %v643 = vld [vmem:[%s1 + $0x6a0] sm:$0xf]
      %v644 = vld [vmem:[%s1 + $0x6a4] sm:$0xf]
      %v645 = vld [vmem:[%s1 + $0x6a8] sm:$0xf]
      %v646 = vld [vmem:[%s1 + $0x6ac] sm:$0xf]
      %v647 = vld [vmem:[%s1 + $0x6b0] sm:$0xf]
      %v648 = vld [vmem:[%s1 + $0x6b4] sm:$0xf]
      %v649 = vld [vmem:[%s1 + $0x6b8] sm:$0xf]
      %v650 = vld [vmem:[%s1 + $0x6bc] sm:$0xf]
      %v651 = vld [vmem:[%s1 + $0x6c0] sm:$0xf]
      %v652 = vld [vmem:[%s1 + $0x6c4] sm:$0xf]
      %v653 = vld [vmem:[%s1 + $0x6c8] sm:$0xf]
      %v654 = vld [vmem:[%s1 + $0x6cc] sm:$0xf]
      %v655 = vld [vmem:[%s1 + $0x6d0] sm:$0xf]
      %v656 = vld [vmem:[%s1 + $0x6d4] sm:$0xf]
      %v657 = vld [vmem:[%s1 + $0x6d8] sm:$0xf]
      %v658 = vld [vmem:[%s1 + $0x6dc] sm:$0xf]
      %v659 = vld [vmem:[%s1 + $0x6e0] sm:$0xf]
      %v660 = vld [vmem:[%s1 + $0x6e4] sm:$0xf]
      %v661 = vld [vmem:[%s1 + $0x6e8] sm:$0xf]
      %v662 = vld [vmem:[%s1 + $0x6ec] sm:$0xf]
      %v663 = vld [vmem:[%s1 + $0x6f0] sm:$0xf]
      %v664 = vld [vmem:[%s1 + $0x6f4] sm:$0xf]
      %v665 = vld [vmem:[%s1 + $0x6f8] sm:$0xf]
      %v666 = vld [vmem:[%s1 + $0x6fc] sm:$0xf]
      %v667 = vld [vmem:[%s1 + $0x700] sm:$0xf]
      %v668 = vld [vmem:[%s1 + $0x704] sm:$0xf]
      %v669 = vld [vmem:[%s1 + $0x708] sm:$0xf]
      %v670 = vld [vmem:[%s1 + $0x70c] sm:$0xf]
      %v671 = vld [vmem:[%s1 + $0x710] sm:$0xf]
      %v672 = vld [vmem:[%s1 + $0x714] sm:$0xf]
      %v673 = vld [vmem:[%s1 + $0x718] sm:$0xf]
      %v674 = vld [vmem:[%s1 + $0x71c] sm:$0xf]
      %v675 = vld [vmem:[%s1 + $0x720] sm:$0xf]
      %v676 = vld [vmem:[%s1 + $0x724] sm:$0xf]
      %v677 = vld [vmem:[%s1 + $0x728] sm:$0xf]
      %v678 = vld [vmem:[%s1 + $0x72c] sm:$0xf]
      %v679 = vld [vmem:[%s1 + $0x730] sm:$0xf]
      %v680 = vld [vmem:[%s1 + $0x734] sm:$0xf]
      %v681 = vld [vmem:[%s1 + $0x738] sm:$0xf]
      %v682 = vld [vmem:[%s1 + $0x73c] sm:$0xf]
      %v683 = vld [vmem:[%s1 + $0x740] sm:$0xf]
      %v684 = vld [vmem:[%s1 + $0x744] sm:$0xf]
      %v685 = vld [vmem:[%s1 + $0x748] sm:$0xf]
      %v686 = vld [vmem:[%s1 + $0x74c] sm:$0xf]
      %v687 = vld [vmem:[%s1 + $0x750] sm:$0xf]
      %v688 = vld [vmem:[%s1 + $0x754] sm:$0xf]
      %v689 = vld [vmem:[%s1 + $0x758] sm:$0xf]
      %v690 = vld [vmem:[%s1 + $0x75c] sm:$0xf]
      %v691 = vld [vmem:[%s1 + $0x760] sm:$0xf]
      %v692 = vld [vmem:[%s1 + $0x764] sm:$0xf]
      %v693 = vld [vmem:[%s1 + $0x768] sm:$0xf]
      %v694 = vld [vmem:[%s1 + $0x76c] sm:$0xf]
      %v695 = vld [vmem:[%s1 + $0x770] sm:$0xf]
      %v696 = vld [vmem:[%s1 + $0x774] sm:$0xf]
      %v697 = vld [vmem:[%s1 + $0x778] sm:$0xf]
      %v698 = vld [vmem:[%s1 + $0x77c] sm:$0xf]
      %v699 = vld [vmem:[%s1 + $0x780] sm:$0xf]
      %v700 = vld [vmem:[%s1 + $0x784] sm:$0xf]
      %v701 = vld [vmem:[%s1 + $0x788] sm:$0xf]
      %v702 = vld [vmem:[%s1 + $0x78c] sm:$0xf]
      %v703 = vld [vmem:[%s1 + $0x790] sm:$0xf]
      %v704 = vld [vmem:[%s1 + $0x794] sm:$0xf]
      %v705 = vld [vmem:[%s1 + $0x798] sm:$0xf]
      %v706 = vld [vmem:[%s1 + $0x79c] sm:$0xf]
      %v707 = vld [vmem:[%s1 + $0x7a0] sm:$0xf]
      %v708 = vld [vmem:[%s1 + $0x7a4] sm:$0xf]
      %v709 = vld [vmem:[%s1 + $0x7a8] sm:$0xf]
      %v710 = vld [vmem:[%s1 + $0x7ac] sm:$0xf]
      %v711 = vld [vmem:[%s1 + $0x7b0] sm:$0xf]
      %v712 = vld [vmem:[%s1 + $0x7b4] sm:$0xf]
      %v713 = vld [vmem:[%s1 + $0x7b8] sm:$0xf]
      %v714 = vld [vmem:[%s1 + $0x7bc] sm:$0xf]
      %v715 = vld [vmem:[%s1 + $0x7c0] sm:$0xf]
      %v716 = vld [vmem:[%s1 + $0x7c4] sm:$0xf]
      %v717 = vld [vmem:[%s1 + $0x7c8] sm:$0xf]
      %v718 = vld [vmem:[%s1 + $0x7cc] sm:$0xf]
      %v719 = vld [vmem:[%s1 + $0x7d0] sm:$0xf]
      %v720 = vld [vmem:[%s1 + $0x7d4] sm:$0xf]
      %v721 = vld [vmem:[%s1 + $0x7d8] sm:$0xf]
      %v722 = vld [vmem:[%s1 + $0x7dc] sm:$0xf]
      %v723 = vld [vmem:[%s1 + $0x7e0] sm:$0xf]
      %v724 = vld [vmem:[%s1 + $0x7e4] sm:$0xf]
      %v725 = vld [vmem:[%s1 + $0x7e8] sm:$0xf]
      %v726 = vld [vmem:[%s1 + $0x7ec] sm:$0xf]
      %v727 = vld [vmem:[%s1 + $0x7f0] sm:$0xf]
      %v728 = vld [vmem:[%s1 + $0x7f4] sm:$0xf]
      %v729 = vld [vmem:[%s1 + $0x7f8] sm:$0xf]
      %v730 = vld [vmem:[%s1 + $0x7fc] sm:$0xf]
      %v731 = vld [vmem:[%s2] sm:$0x1]
      %v733 = vperm.slane %v731, 0
      %v751 = vunpack.c.l.b16 %v203
      %v752 = vunpack.c.h.b16 %v203
      %v753 = vunpack.c.l.b16 %v204
      %v754 = vunpack.c.h.b16 %v204
      %v755 = vunpack.c.l.b16 %v205
      %v756 = vunpack.c.h.b16 %v205
      %v757 = vunpack.c.l.b16 %v206
      %v758 = vunpack.c.h.b16 %v206
      %v759 = vunpack.c.l.b16 %v207
      %v760 = vunpack.c.h.b16 %v207
      %v761 = vunpack.c.l.b16 %v208
      %v762 = vunpack.c.h.b16 %v208
      %v763 = vunpack.c.l.b16 %v209
      %v764 = vunpack.c.h.b16 %v209
      %v765 = vunpack.c.l.b16 %v210
      %v766 = vunpack.c.h.b16 %v210
      %v767 = vunpack.c.l.b16 %v211
      %v768 = vunpack.c.h.b16 %v211
      %v769 = vunpack.c.l.b16 %v212
      %v770 = vunpack.c.h.b16 %v212
      %v771 = vunpack.c.l.b16 %v213
      %v772 = vunpack.c.h.b16 %v213
      %v773 = vunpack.c.l.b16 %v214
      %v774 = vunpack.c.h.b16 %v214
      %v775 = vunpack.c.l.b16 %v215
      %v776 = vunpack.c.h.b16 %v215
      %v777 = vunpack.c.l.b16 %v216
      %v778 = vunpack.c.h.b16 %v216
      %v779 = vunpack.c.l.b16 %v217
      %v780 = vunpack.c.h.b16 %v217
      %v781 = vunpack.c.l.b16 %v218
      %v782 = vunpack.c.h.b16 %v218
      %v783 = vpack.c.b16 %v751, %v751
      %v784 = vpack.c.b16 %v752, %v752
      %v785 = vpack.c.b16 %v753, %v753
      %v786 = vpack.c.b16 %v754, %v754
      %v787 = vpack.c.b16 %v755, %v755
      %v788 = vpack.c.b16 %v756, %v756
      %v789 = vpack.c.b16 %v757, %v757
      %v790 = vpack.c.b16 %v758, %v758
      %v791 = vpack.c.b16 %v759, %v759
      %v792 = vpack.c.b16 %v760, %v760
      %v793 = vpack.c.b16 %v761, %v761
      %v794 = vpack.c.b16 %v762, %v762
      %v795 = vpack.c.b16 %v763, %v763
      %v796 = vpack.c.b16 %v764, %v764
      %v797 = vpack.c.b16 %v765, %v765
      %v798 = vpack.c.b16 %v766, %v766
      %v799 = vpack.c.b16 %v767, %v767
      %v800 = vpack.c.b16 %v768, %v768
      %v801 = vpack.c.b16 %v769, %v769
      %v802 = vpack.c.b16 %v770, %v770
      %v803 = vpack.c.b16 %v771, %v771
      %v804 = vpack.c.b16 %v772, %v772
      %v805 = vpack.c.b16 %v773, %v773
      %v806 = vpack.c.b16 %v774, %v774
      %v807 = vpack.c.b16 %v775, %v775
      %v808 = vpack.c.b16 %v776, %v776
      %v809 = vpack.c.b16 %v777, %v777
      %v810 = vpack.c.b16 %v778, %v778
      %v811 = vpack.c.b16 %v779, %v779
      %v812 = vpack.c.b16 %v780, %v780
      %v813 = vpack.c.b16 %v781, %v781
      %v814 = vpack.c.b16 %v782, %v782
      %v1359 = vunpack.c.l.b16 %v219
      %v1360 = vunpack.c.l.b16 %v220
      %v1361 = vunpack.c.l.b16 %v221
      %v1362 = vunpack.c.l.b16 %v222
      %v1363 = vunpack.c.l.b16 %v223
      %v1364 = vunpack.c.l.b16 %v224
      %v1365 = vunpack.c.l.b16 %v225
      %v1366 = vunpack.c.l.b16 %v226
      %v1367 = vunpack.c.l.b16 %v227
      %v1368 = vunpack.c.l.b16 %v228
      %v1369 = vunpack.c.l.b16 %v229
      %v1370 = vunpack.c.l.b16 %v230
      %v1371 = vunpack.c.l.b16 %v231
      %v1372 = vunpack.c.l.b16 %v232
      %v1373 = vunpack.c.l.b16 %v233
      %v1374 = vunpack.c.l.b16 %v234
      %v1375 = vunpack.c.l.b16 %v235
      %v1376 = vunpack.c.l.b16 %v236
      %v1377 = vunpack.c.l.b16 %v237
      %v1378 = vunpack.c.l.b16 %v238
      %v1379 = vunpack.c.l.b16 %v239
      %v1380 = vunpack.c.l.b16 %v240
      %v1381 = vunpack.c.l.b16 %v241
      %v1382 = vunpack.c.l.b16 %v242
      %v1383 = vunpack.c.l.b16 %v243
      %v1384 = vunpack.c.l.b16 %v244
      %v1385 = vunpack.c.l.b16 %v245
      %v1386 = vunpack.c.l.b16 %v246
      %v1387 = vunpack.c.l.b16 %v247
      %v1388 = vunpack.c.l.b16 %v248
      %v1389 = vunpack.c.l.b16 %v249
      %v1390 = vunpack.c.l.b16 %v250
      %v1391 = vunpack.c.l.b16 %v251
      %v1392 = vunpack.c.l.b16 %v252
      %v1393 = vunpack.c.l.b16 %v253
      %v1394 = vunpack.c.l.b16 %v254
      %v1395 = vunpack.c.l.b16 %v255
      %v1396 = vunpack.c.l.b16 %v256
      %v1397 = vunpack.c.l.b16 %v257
      %v1398 = vunpack.c.l.b16 %v258
      %v1399 = vunpack.c.l.b16 %v259
      %v1400 = vunpack.c.l.b16 %v260
      %v1401 = vunpack.c.l.b16 %v261
      %v1402 = vunpack.c.l.b16 %v262
      %v1403 = vunpack.c.l.b16 %v263
      %v1404 = vunpack.c.l.b16 %v264
      %v1405 = vunpack.c.l.b16 %v265
      %v1406 = vunpack.c.l.b16 %v266
      %v1407 = vunpack.c.l.b16 %v267
      %v1408 = vunpack.c.l.b16 %v268
      %v1409 = vunpack.c.l.b16 %v269
      %v1410 = vunpack.c.l.b16 %v270
      %v1411 = vunpack.c.l.b16 %v271
      %v1412 = vunpack.c.l.b16 %v272
      %v1413 = vunpack.c.l.b16 %v273
      %v1414 = vunpack.c.l.b16 %v274
      %v1415 = vunpack.c.l.b16 %v275
      %v1416 = vunpack.c.l.b16 %v276
      %v1417 = vunpack.c.l.b16 %v277
      %v1418 = vunpack.c.l.b16 %v278
      %v1419 = vunpack.c.l.b16 %v279
      %v1420 = vunpack.c.l.b16 %v280
      %v1421 = vunpack.c.l.b16 %v281
      %v1422 = vunpack.c.l.b16 %v282
      %v1423 = vunpack.c.l.b16 %v283
      %v1424 = vunpack.c.l.b16 %v284
      %v1425 = vunpack.c.l.b16 %v285
      %v1426 = vunpack.c.l.b16 %v286
      %v1427 = vunpack.c.l.b16 %v287
      %v1428 = vunpack.c.l.b16 %v288
      %v1429 = vunpack.c.l.b16 %v289
      %v1430 = vunpack.c.l.b16 %v290
      %v1431 = vunpack.c.l.b16 %v291
      %v1432 = vunpack.c.l.b16 %v292
      %v1433 = vunpack.c.l.b16 %v293
      %v1434 = vunpack.c.l.b16 %v294
      %v1435 = vunpack.c.l.b16 %v295
      %v1436 = vunpack.c.l.b16 %v296
      %v1437 = vunpack.c.l.b16 %v297
      %v1438 = vunpack.c.l.b16 %v298
      %v1439 = vunpack.c.l.b16 %v299
      %v1440 = vunpack.c.l.b16 %v300
      %v1441 = vunpack.c.l.b16 %v301
      %v1442 = vunpack.c.l.b16 %v302
      %v1443 = vunpack.c.l.b16 %v303
      %v1444 = vunpack.c.l.b16 %v304
      %v1445 = vunpack.c.l.b16 %v305
      %v1446 = vunpack.c.l.b16 %v306
      %v1447 = vunpack.c.l.b16 %v307
      %v1448 = vunpack.c.l.b16 %v308
      %v1449 = vunpack.c.l.b16 %v309
      %v1450 = vunpack.c.l.b16 %v310
      %v1451 = vunpack.c.l.b16 %v311
      %v1452 = vunpack.c.l.b16 %v312
      %v1453 = vunpack.c.l.b16 %v313
      %v1454 = vunpack.c.l.b16 %v314
      %v1455 = vunpack.c.l.b16 %v315
      %v1456 = vunpack.c.l.b16 %v316
      %v1457 = vunpack.c.l.b16 %v317
      %v1458 = vunpack.c.l.b16 %v318
      %v1459 = vunpack.c.l.b16 %v319
      %v1460 = vunpack.c.l.b16 %v320
      %v1461 = vunpack.c.l.b16 %v321
      %v1462 = vunpack.c.l.b16 %v322
      %v1463 = vunpack.c.l.b16 %v323
      %v1464 = vunpack.c.l.b16 %v324
      %v1465 = vunpack.c.l.b16 %v325
      %v1466 = vunpack.c.l.b16 %v326
      %v1467 = vunpack.c.l.b16 %v327
      %v1468 = vunpack.c.l.b16 %v328
      %v1469 = vunpack.c.l.b16 %v329
      %v1470 = vunpack.c.l.b16 %v330
      %v1471 = vunpack.c.l.b16 %v331
      %v1472 = vunpack.c.l.b16 %v332
      %v1473 = vunpack.c.l.b16 %v333
      %v1474 = vunpack.c.l.b16 %v334
      %v1475 = vunpack.c.l.b16 %v335
      %v1476 = vunpack.c.l.b16 %v336
      %v1477 = vunpack.c.l.b16 %v337
      %v1478 = vunpack.c.l.b16 %v338
      %v1479 = vunpack.c.l.b16 %v339
      %v1480 = vunpack.c.l.b16 %v340
      %v1481 = vunpack.c.l.b16 %v341
      %v1482 = vunpack.c.l.b16 %v342
      %v1483 = vunpack.c.l.b16 %v343
      %v1484 = vunpack.c.l.b16 %v344
      %v1485 = vunpack.c.l.b16 %v345
      %v1486 = vunpack.c.l.b16 %v346
      %v1487 = vunpack.c.l.b16 %v347
      %v1488 = vunpack.c.l.b16 %v348
      %v1489 = vunpack.c.l.b16 %v349
      %v1490 = vunpack.c.l.b16 %v350
      %v1491 = vunpack.c.l.b16 %v351
      %v1492 = vunpack.c.l.b16 %v352
      %v1493 = vunpack.c.l.b16 %v353
      %v1494 = vunpack.c.l.b16 %v354
      %v1495 = vunpack.c.l.b16 %v355
      %v1496 = vunpack.c.l.b16 %v356
      %v1497 = vunpack.c.l.b16 %v357
      %v1498 = vunpack.c.l.b16 %v358
      %v1499 = vunpack.c.l.b16 %v359
      %v1500 = vunpack.c.l.b16 %v360
      %v1501 = vunpack.c.l.b16 %v361
      %v1502 = vunpack.c.l.b16 %v362
      %v1503 = vunpack.c.l.b16 %v363
      %v1504 = vunpack.c.l.b16 %v364
      %v1505 = vunpack.c.l.b16 %v365
      %v1506 = vunpack.c.l.b16 %v366
      %v1507 = vunpack.c.l.b16 %v367
      %v1508 = vunpack.c.l.b16 %v368
      %v1509 = vunpack.c.l.b16 %v369
      %v1510 = vunpack.c.l.b16 %v370
      %v1511 = vunpack.c.l.b16 %v371
      %v1512 = vunpack.c.l.b16 %v372
      %v1513 = vunpack.c.l.b16 %v373
      %v1514 = vunpack.c.l.b16 %v374
      %v1515 = vunpack.c.l.b16 %v375
      %v1516 = vunpack.c.l.b16 %v376
      %v1517 = vunpack.c.l.b16 %v377
      %v1518 = vunpack.c.l.b16 %v378
      %v1519 = vunpack.c.l.b16 %v379
      %v1520 = vunpack.c.l.b16 %v380
      %v1521 = vunpack.c.l.b16 %v381
      %v1522 = vunpack.c.l.b16 %v382
      %v1523 = vunpack.c.l.b16 %v383
      %v1524 = vunpack.c.l.b16 %v384
      %v1525 = vunpack.c.l.b16 %v385
      %v1526 = vunpack.c.l.b16 %v386
      %v1527 = vunpack.c.l.b16 %v387
      %v1528 = vunpack.c.l.b16 %v388
      %v1529 = vunpack.c.l.b16 %v389
      %v1530 = vunpack.c.l.b16 %v390
      %v1531 = vunpack.c.l.b16 %v391
      %v1532 = vunpack.c.l.b16 %v392
      %v1533 = vunpack.c.l.b16 %v393
      %v1534 = vunpack.c.l.b16 %v394
      %v1535 = vunpack.c.l.b16 %v395
      %v1536 = vunpack.c.l.b16 %v396
      %v1537 = vunpack.c.l.b16 %v397
      %v1538 = vunpack.c.l.b16 %v398
      %v1539 = vunpack.c.l.b16 %v399
      %v1540 = vunpack.c.l.b16 %v400
      %v1541 = vunpack.c.l.b16 %v401
      %v1542 = vunpack.c.l.b16 %v402
      %v1543 = vunpack.c.l.b16 %v403
      %v1544 = vunpack.c.l.b16 %v404
      %v1545 = vunpack.c.l.b16 %v405
      %v1546 = vunpack.c.l.b16 %v406
      %v1547 = vunpack.c.l.b16 %v407
      %v1548 = vunpack.c.l.b16 %v408
      %v1549 = vunpack.c.l.b16 %v409
      %v1550 = vunpack.c.l.b16 %v410
      %v1551 = vunpack.c.l.b16 %v411
      %v1552 = vunpack.c.l.b16 %v412
      %v1553 = vunpack.c.l.b16 %v413
      %v1554 = vunpack.c.l.b16 %v414
      %v1555 = vunpack.c.l.b16 %v415
      %v1556 = vunpack.c.l.b16 %v416
      %v1557 = vunpack.c.l.b16 %v417
      %v1558 = vunpack.c.l.b16 %v418
      %v1559 = vunpack.c.l.b16 %v419
      %v1560 = vunpack.c.l.b16 %v420
      %v1561 = vunpack.c.l.b16 %v421
      %v1562 = vunpack.c.l.b16 %v422
      %v1563 = vunpack.c.l.b16 %v423
      %v1564 = vunpack.c.l.b16 %v424
      %v1565 = vunpack.c.l.b16 %v425
      %v1566 = vunpack.c.l.b16 %v426
      %v1567 = vunpack.c.l.b16 %v427
      %v1568 = vunpack.c.l.b16 %v428
      %v1569 = vunpack.c.l.b16 %v429
      %v1570 = vunpack.c.l.b16 %v430
      %v1571 = vunpack.c.l.b16 %v431
      %v1572 = vunpack.c.l.b16 %v432
      %v1573 = vunpack.c.l.b16 %v433
      %v1574 = vunpack.c.l.b16 %v434
      %v1575 = vunpack.c.l.b16 %v435
      %v1576 = vunpack.c.l.b16 %v436
      %v1577 = vunpack.c.l.b16 %v437
      %v1578 = vunpack.c.l.b16 %v438
      %v1579 = vunpack.c.l.b16 %v439
      %v1580 = vunpack.c.l.b16 %v440
      %v1581 = vunpack.c.l.b16 %v441
      %v1582 = vunpack.c.l.b16 %v442
      %v1583 = vunpack.c.l.b16 %v443
      %v1584 = vunpack.c.l.b16 %v444
      %v1585 = vunpack.c.l.b16 %v445
      %v1586 = vunpack.c.l.b16 %v446
      %v1587 = vunpack.c.l.b16 %v447
      %v1588 = vunpack.c.l.b16 %v448
      %v1589 = vunpack.c.l.b16 %v449
      %v1590 = vunpack.c.l.b16 %v450
      %v1591 = vunpack.c.l.b16 %v451
      %v1592 = vunpack.c.l.b16 %v452
      %v1593 = vunpack.c.l.b16 %v453
      %v1594 = vunpack.c.l.b16 %v454
      %v1595 = vunpack.c.l.b16 %v455
      %v1596 = vunpack.c.l.b16 %v456
      %v1597 = vunpack.c.l.b16 %v457
      %v1598 = vunpack.c.l.b16 %v458
      %v1599 = vunpack.c.l.b16 %v459
      %v1600 = vunpack.c.l.b16 %v460
      %v1601 = vunpack.c.l.b16 %v461
      %v1602 = vunpack.c.l.b16 %v462
      %v1603 = vunpack.c.l.b16 %v463
      %v1604 = vunpack.c.l.b16 %v464
      %v1605 = vunpack.c.l.b16 %v465
      %v1606 = vunpack.c.l.b16 %v466
      %v1607 = vunpack.c.l.b16 %v467
      %v1608 = vunpack.c.l.b16 %v468
      %v1609 = vunpack.c.l.b16 %v469
      %v1610 = vunpack.c.l.b16 %v470
      %v1611 = vunpack.c.l.b16 %v471
      %v1612 = vunpack.c.l.b16 %v472
      %v1613 = vunpack.c.l.b16 %v473
      %v1614 = vunpack.c.l.b16 %v474
      %v1615 = vunpack.c.l.b16 %v475
      %v1616 = vunpack.c.l.b16 %v476
      %v1617 = vunpack.c.l.b16 %v477
      %v1618 = vunpack.c.l.b16 %v478
      %v1619 = vunpack.c.l.b16 %v479
      %v1620 = vunpack.c.l.b16 %v480
      %v1621 = vunpack.c.l.b16 %v481
      %v1622 = vunpack.c.l.b16 %v482
      %v1623 = vunpack.c.l.b16 %v483
      %v1624 = vunpack.c.l.b16 %v484
      %v1625 = vunpack.c.l.b16 %v485
      %v1626 = vunpack.c.l.b16 %v486
      %v1627 = vunpack.c.l.b16 %v487
      %v1628 = vunpack.c.l.b16 %v488
      %v1629 = vunpack.c.l.b16 %v489
      %v1630 = vunpack.c.l.b16 %v490
      %v1631 = vunpack.c.l.b16 %v491
      %v1632 = vunpack.c.l.b16 %v492
      %v1633 = vunpack.c.l.b16 %v493
      %v1634 = vunpack.c.l.b16 %v494
      %v1635 = vunpack.c.l.b16 %v495
      %v1636 = vunpack.c.l.b16 %v496
      %v1637 = vunpack.c.l.b16 %v497
      %v1638 = vunpack.c.l.b16 %v498
      %v1639 = vunpack.c.l.b16 %v499
      %v1640 = vunpack.c.l.b16 %v500
      %v1641 = vunpack.c.l.b16 %v501
      %v1642 = vunpack.c.l.b16 %v502
      %v1643 = vunpack.c.l.b16 %v503
      %v1644 = vunpack.c.l.b16 %v504
      %v1645 = vunpack.c.l.b16 %v505
      %v1646 = vunpack.c.l.b16 %v506
      %v1647 = vunpack.c.l.b16 %v507
      %v1648 = vunpack.c.l.b16 %v508
      %v1649 = vunpack.c.l.b16 %v509
      %v1650 = vunpack.c.l.b16 %v510
      %v1651 = vunpack.c.l.b16 %v511
      %v1652 = vunpack.c.l.b16 %v512
      %v1653 = vunpack.c.l.b16 %v513
      %v1654 = vunpack.c.l.b16 %v514
      %v1655 = vunpack.c.l.b16 %v515
      %v1656 = vunpack.c.l.b16 %v516
      %v1657 = vunpack.c.l.b16 %v517
      %v1658 = vunpack.c.l.b16 %v518
      %v1659 = vunpack.c.l.b16 %v519
      %v1660 = vunpack.c.l.b16 %v520
      %v1661 = vunpack.c.l.b16 %v521
      %v1662 = vunpack.c.l.b16 %v522
      %v1663 = vunpack.c.l.b16 %v523
      %v1664 = vunpack.c.l.b16 %v524
      %v1665 = vunpack.c.l.b16 %v525
      %v1666 = vunpack.c.l.b16 %v526
      %v1667 = vunpack.c.l.b16 %v527
      %v1668 = vunpack.c.l.b16 %v528
      %v1669 = vunpack.c.l.b16 %v529
      %v1670 = vunpack.c.l.b16 %v530
      %v1671 = vunpack.c.l.b16 %v531
      %v1672 = vunpack.c.l.b16 %v532
      %v1673 = vunpack.c.l.b16 %v533
      %v1674 = vunpack.c.l.b16 %v534
      %v1675 = vunpack.c.l.b16 %v535
      %v1676 = vunpack.c.l.b16 %v536
      %v1677 = vunpack.c.l.b16 %v537
      %v1678 = vunpack.c.l.b16 %v538
      %v1679 = vunpack.c.l.b16 %v539
      %v1680 = vunpack.c.l.b16 %v540
      %v1681 = vunpack.c.l.b16 %v541
      %v1682 = vunpack.c.l.b16 %v542
      %v1683 = vunpack.c.l.b16 %v543
      %v1684 = vunpack.c.l.b16 %v544
      %v1685 = vunpack.c.l.b16 %v545
      %v1686 = vunpack.c.l.b16 %v546
      %v1687 = vunpack.c.l.b16 %v547
      %v1688 = vunpack.c.l.b16 %v548
      %v1689 = vunpack.c.l.b16 %v549
      %v1690 = vunpack.c.l.b16 %v550
      %v1691 = vunpack.c.l.b16 %v551
      %v1692 = vunpack.c.l.b16 %v552
      %v1693 = vunpack.c.l.b16 %v553
      %v1694 = vunpack.c.l.b16 %v554
      %v1695 = vunpack.c.l.b16 %v555
      %v1696 = vunpack.c.l.b16 %v556
      %v1697 = vunpack.c.l.b16 %v557
      %v1698 = vunpack.c.l.b16 %v558
      %v1699 = vunpack.c.l.b16 %v559
      %v1700 = vunpack.c.l.b16 %v560
      %v1701 = vunpack.c.l.b16 %v561
      %v1702 = vunpack.c.l.b16 %v562
      %v1703 = vunpack.c.l.b16 %v563
      %v1704 = vunpack.c.l.b16 %v564
      %v1705 = vunpack.c.l.b16 %v565
      %v1706 = vunpack.c.l.b16 %v566
      %v1707 = vunpack.c.l.b16 %v567
      %v1708 = vunpack.c.l.b16 %v568
      %v1709 = vunpack.c.l.b16 %v569
      %v1710 = vunpack.c.l.b16 %v570
      %v1711 = vunpack.c.l.b16 %v571
      %v1712 = vunpack.c.l.b16 %v572
      %v1713 = vunpack.c.l.b16 %v573
      %v1714 = vunpack.c.l.b16 %v574
      %v1715 = vunpack.c.l.b16 %v575
      %v1716 = vunpack.c.l.b16 %v576
      %v1717 = vunpack.c.l.b16 %v577
      %v1718 = vunpack.c.l.b16 %v578
      %v1719 = vunpack.c.l.b16 %v579
      %v1720 = vunpack.c.l.b16 %v580
      %v1721 = vunpack.c.l.b16 %v581
      %v1722 = vunpack.c.l.b16 %v582
      %v1723 = vunpack.c.l.b16 %v583
      %v1724 = vunpack.c.l.b16 %v584
      %v1725 = vunpack.c.l.b16 %v585
      %v1726 = vunpack.c.l.b16 %v586
      %v1727 = vunpack.c.l.b16 %v587
      %v1728 = vunpack.c.l.b16 %v588
      %v1729 = vunpack.c.l.b16 %v589
      %v1730 = vunpack.c.l.b16 %v590
      %v1731 = vunpack.c.l.b16 %v591
      %v1732 = vunpack.c.l.b16 %v592
      %v1733 = vunpack.c.l.b16 %v593
      %v1734 = vunpack.c.l.b16 %v594
      %v1735 = vunpack.c.l.b16 %v595
      %v1736 = vunpack.c.l.b16 %v596
      %v1737 = vunpack.c.l.b16 %v597
      %v1738 = vunpack.c.l.b16 %v598
      %v1739 = vunpack.c.l.b16 %v599
      %v1740 = vunpack.c.l.b16 %v600
      %v1741 = vunpack.c.l.b16 %v601
      %v1742 = vunpack.c.l.b16 %v602
      %v1743 = vunpack.c.l.b16 %v603
      %v1744 = vunpack.c.l.b16 %v604
      %v1745 = vunpack.c.l.b16 %v605
      %v1746 = vunpack.c.l.b16 %v606
      %v1747 = vunpack.c.l.b16 %v607
      %v1748 = vunpack.c.l.b16 %v608
      %v1749 = vunpack.c.l.b16 %v609
      %v1750 = vunpack.c.l.b16 %v610
      %v1751 = vunpack.c.l.b16 %v611
      %v1752 = vunpack.c.l.b16 %v612
      %v1753 = vunpack.c.l.b16 %v613
      %v1754 = vunpack.c.l.b16 %v614
      %v1755 = vunpack.c.l.b16 %v615
      %v1756 = vunpack.c.l.b16 %v616
      %v1757 = vunpack.c.l.b16 %v617
      %v1758 = vunpack.c.l.b16 %v618
      %v1759 = vunpack.c.l.b16 %v619
      %v1760 = vunpack.c.l.b16 %v620
      %v1761 = vunpack.c.l.b16 %v621
      %v1762 = vunpack.c.l.b16 %v622
      %v1763 = vunpack.c.l.b16 %v623
      %v1764 = vunpack.c.l.b16 %v624
      %v1765 = vunpack.c.l.b16 %v625
      %v1766 = vunpack.c.l.b16 %v626
      %v1767 = vunpack.c.l.b16 %v627
      %v1768 = vunpack.c.l.b16 %v628
      %v1769 = vunpack.c.l.b16 %v629
      %v1770 = vunpack.c.l.b16 %v630
      %v1771 = vunpack.c.l.b16 %v631
      %v1772 = vunpack.c.l.b16 %v632
      %v1773 = vunpack.c.l.b16 %v633
      %v1774 = vunpack.c.l.b16 %v634
      %v1775 = vunpack.c.l.b16 %v635
      %v1776 = vunpack.c.l.b16 %v636
      %v1777 = vunpack.c.l.b16 %v637
      %v1778 = vunpack.c.l.b16 %v638
      %v1779 = vunpack.c.l.b16 %v639
      %v1780 = vunpack.c.l.b16 %v640
      %v1781 = vunpack.c.l.b16 %v641
      %v1782 = vunpack.c.l.b16 %v642
      %v1783 = vunpack.c.l.b16 %v643
      %v1784 = vunpack.c.l.b16 %v644
      %v1785 = vunpack.c.l.b16 %v645
      %v1786 = vunpack.c.l.b16 %v646
      %v1787 = vunpack.c.l.b16 %v647
      %v1788 = vunpack.c.l.b16 %v648
      %v1789 = vunpack.c.l.b16 %v649
      %v1790 = vunpack.c.l.b16 %v650
      %v1791 = vunpack.c.l.b16 %v651
      %v1792 = vunpack.c.l.b16 %v652
      %v1793 = vunpack.c.l.b16 %v653
      %v1794 = vunpack.c.l.b16 %v654
      %v1795 = vunpack.c.l.b16 %v655
      %v1796 = vunpack.c.l.b16 %v656
      %v1797 = vunpack.c.l.b16 %v657
      %v1798 = vunpack.c.l.b16 %v658
      %v1799 = vunpack.c.l.b16 %v659
      %v1800 = vunpack.c.l.b16 %v660
      %v1801 = vunpack.c.l.b16 %v661
      %v1802 = vunpack.c.l.b16 %v662
      %v1803 = vunpack.c.l.b16 %v663
      %v1804 = vunpack.c.l.b16 %v664
      %v1805 = vunpack.c.l.b16 %v665
      %v1806 = vunpack.c.l.b16 %v666
      %v1807 = vunpack.c.l.b16 %v667
      %v1808 = vunpack.c.l.b16 %v668
      %v1809 = vunpack.c.l.b16 %v669
      %v1810 = vunpack.c.l.b16 %v670
      %v1811 = vunpack.c.l.b16 %v671
      %v1812 = vunpack.c.l.b16 %v672
      %v1813 = vunpack.c.l.b16 %v673
      %v1814 = vunpack.c.l.b16 %v674
      %v1815 = vunpack.c.l.b16 %v675
      %v1816 = vunpack.c.l.b16 %v676
      %v1817 = vunpack.c.l.b16 %v677
      %v1818 = vunpack.c.l.b16 %v678
      %v1819 = vunpack.c.l.b16 %v679
      %v1820 = vunpack.c.l.b16 %v680
      %v1821 = vunpack.c.l.b16 %v681
      %v1822 = vunpack.c.l.b16 %v682
      %v1823 = vunpack.c.l.b16 %v683
      %v1824 = vunpack.c.l.b16 %v684
      %v1825 = vunpack.c.l.b16 %v685
      %v1826 = vunpack.c.l.b16 %v686
      %v1827 = vunpack.c.l.b16 %v687
      %v1828 = vunpack.c.l.b16 %v688
      %v1829 = vunpack.c.l.b16 %v689
      %v1830 = vunpack.c.l.b16 %v690
      %v1831 = vunpack.c.l.b16 %v691
      %v1832 = vunpack.c.l.b16 %v692
      %v1833 = vunpack.c.l.b16 %v693
      %v1834 = vunpack.c.l.b16 %v694
      %v1835 = vunpack.c.l.b16 %v695
      %v1836 = vunpack.c.l.b16 %v696
      %v1837 = vunpack.c.l.b16 %v697
      %v1838 = vunpack.c.l.b16 %v698
      %v1839 = vunpack.c.l.b16 %v699
      %v1840 = vunpack.c.l.b16 %v700
      %v1841 = vunpack.c.l.b16 %v701
      %v1842 = vunpack.c.l.b16 %v702
      %v1843 = vunpack.c.l.b16 %v703
      %v1844 = vunpack.c.l.b16 %v704
      %v1845 = vunpack.c.l.b16 %v705
      %v1846 = vunpack.c.l.b16 %v706
      %v1847 = vunpack.c.l.b16 %v707
      %v1848 = vunpack.c.l.b16 %v708
      %v1849 = vunpack.c.l.b16 %v709
      %v1850 = vunpack.c.l.b16 %v710
      %v1851 = vunpack.c.l.b16 %v711
      %v1852 = vunpack.c.l.b16 %v712
      %v1853 = vunpack.c.l.b16 %v713
      %v1854 = vunpack.c.l.b16 %v714
      %v1855 = vunpack.c.l.b16 %v715
      %v1856 = vunpack.c.l.b16 %v716
      %v1857 = vunpack.c.l.b16 %v717
      %v1858 = vunpack.c.l.b16 %v718
      %v1859 = vunpack.c.l.b16 %v719
      %v1860 = vunpack.c.l.b16 %v720
      %v1861 = vunpack.c.l.b16 %v721
      %v1862 = vunpack.c.l.b16 %v722
      %v1863 = vunpack.c.l.b16 %v723
      %v1864 = vunpack.c.l.b16 %v724
      %v1865 = vunpack.c.l.b16 %v725
      %v1866 = vunpack.c.l.b16 %v726
      %v1867 = vunpack.c.l.b16 %v727
      %v1868 = vunpack.c.l.b16 %v728
      %v1869 = vunpack.c.l.b16 %v729
      %v1870 = vunpack.c.l.b16 %v730
      %v1871 = vpack.c.b16 %v1360, %v1359
      %v1872 = vpack.c.b16 %v1362, %v1361
      %v1873 = vpack.c.b16 %v1364, %v1363
      %v1874 = vpack.c.b16 %v1366, %v1365
      %v1875 = vpack.c.b16 %v1368, %v1367
      %v1876 = vpack.c.b16 %v1370, %v1369
      %v1877 = vpack.c.b16 %v1372, %v1371
      %v1878 = vpack.c.b16 %v1374, %v1373
      %v1879 = vpack.c.b16 %v1376, %v1375
      %v1880 = vpack.c.b16 %v1378, %v1377
      %v1881 = vpack.c.b16 %v1380, %v1379
      %v1882 = vpack.c.b16 %v1382, %v1381
      %v1883 = vpack.c.b16 %v1384, %v1383
      %v1884 = vpack.c.b16 %v1386, %v1385
      %v1885 = vpack.c.b16 %v1388, %v1387
      %v1886 = vpack.c.b16 %v1390, %v1389
      %v1887 = vpack.c.b16 %v1392, %v1391
      %v1888 = vpack.c.b16 %v1394, %v1393
      %v1889 = vpack.c.b16 %v1396, %v1395
      %v1890 = vpack.c.b16 %v1398, %v1397
      %v1891 = vpack.c.b16 %v1400, %v1399
      %v1892 = vpack.c.b16 %v1402, %v1401
      %v1893 = vpack.c.b16 %v1404, %v1403
      %v1894 = vpack.c.b16 %v1406, %v1405
      %v1895 = vpack.c.b16 %v1408, %v1407
      %v1896 = vpack.c.b16 %v1410, %v1409
      %v1897 = vpack.c.b16 %v1412, %v1411
      %v1898 = vpack.c.b16 %v1414, %v1413
      %v1899 = vpack.c.b16 %v1416, %v1415
      %v1900 = vpack.c.b16 %v1418, %v1417
      %v1901 = vpack.c.b16 %v1420, %v1419
      %v1902 = vpack.c.b16 %v1422, %v1421
      %v1903 = vpack.c.b16 %v1424, %v1423
      %v1904 = vpack.c.b16 %v1426, %v1425
      %v1905 = vpack.c.b16 %v1428, %v1427
      %v1906 = vpack.c.b16 %v1430, %v1429
      %v1907 = vpack.c.b16 %v1432, %v1431
      %v1908 = vpack.c.b16 %v1434, %v1433
      %v1909 = vpack.c.b16 %v1436, %v1435
      %v1910 = vpack.c.b16 %v1438, %v1437
      %v1911 = vpack.c.b16 %v1440, %v1439
      %v1912 = vpack.c.b16 %v1442, %v1441
      %v1913 = vpack.c.b16 %v1444, %v1443
      %v1914 = vpack.c.b16 %v1446, %v1445
      %v1915 = vpack.c.b16 %v1448, %v1447
      %v1916 = vpack.c.b16 %v1450, %v1449
      %v1917 = vpack.c.b16 %v1452, %v1451
      %v1918 = vpack.c.b16 %v1454, %v1453
      %v1919 = vpack.c.b16 %v1456, %v1455
      %v1920 = vpack.c.b16 %v1458, %v1457
      %v1921 = vpack.c.b16 %v1460, %v1459
      %v1922 = vpack.c.b16 %v1462, %v1461
      %v1923 = vpack.c.b16 %v1464, %v1463
      %v1924 = vpack.c.b16 %v1466, %v1465
      %v1925 = vpack.c.b16 %v1468, %v1467
      %v1926 = vpack.c.b16 %v1470, %v1469
      %v1927 = vpack.c.b16 %v1472, %v1471
      %v1928 = vpack.c.b16 %v1474, %v1473
      %v1929 = vpack.c.b16 %v1476, %v1475
      %v1930 = vpack.c.b16 %v1478, %v1477
      %v1931 = vpack.c.b16 %v1480, %v1479
      %v1932 = vpack.c.b16 %v1482, %v1481
      %v1933 = vpack.c.b16 %v1484, %v1483
      %v1934 = vpack.c.b16 %v1486, %v1485
      %v1935 = vpack.c.b16 %v1488, %v1487
      %v1936 = vpack.c.b16 %v1490, %v1489
      %v1937 = vpack.c.b16 %v1492, %v1491
      %v1938 = vpack.c.b16 %v1494, %v1493
      %v1939 = vpack.c.b16 %v1496, %v1495
      %v1940 = vpack.c.b16 %v1498, %v1497
      %v1941 = vpack.c.b16 %v1500, %v1499
      %v1942 = vpack.c.b16 %v1502, %v1501
      %v1943 = vpack.c.b16 %v1504, %v1503
      %v1944 = vpack.c.b16 %v1506, %v1505
      %v1945 = vpack.c.b16 %v1508, %v1507
      %v1946 = vpack.c.b16 %v1510, %v1509
      %v1947 = vpack.c.b16 %v1512, %v1511
      %v1948 = vpack.c.b16 %v1514, %v1513
      %v1949 = vpack.c.b16 %v1516, %v1515
      %v1950 = vpack.c.b16 %v1518, %v1517
      %v1951 = vpack.c.b16 %v1520, %v1519
      %v1952 = vpack.c.b16 %v1522, %v1521
      %v1953 = vpack.c.b16 %v1524, %v1523
      %v1954 = vpack.c.b16 %v1526, %v1525
      %v1955 = vpack.c.b16 %v1528, %v1527
      %v1956 = vpack.c.b16 %v1530, %v1529
      %v1957 = vpack.c.b16 %v1532, %v1531
      %v1958 = vpack.c.b16 %v1534, %v1533
      %v1959 = vpack.c.b16 %v1536, %v1535
      %v1960 = vpack.c.b16 %v1538, %v1537
      %v1961 = vpack.c.b16 %v1540, %v1539
      %v1962 = vpack.c.b16 %v1542, %v1541
      %v1963 = vpack.c.b16 %v1544, %v1543
      %v1964 = vpack.c.b16 %v1546, %v1545
      %v1965 = vpack.c.b16 %v1548, %v1547
      %v1966 = vpack.c.b16 %v1550, %v1549
      %v1967 = vpack.c.b16 %v1552, %v1551
      %v1968 = vpack.c.b16 %v1554, %v1553
      %v1969 = vpack.c.b16 %v1556, %v1555
      %v1970 = vpack.c.b16 %v1558, %v1557
      %v1971 = vpack.c.b16 %v1560, %v1559
      %v1972 = vpack.c.b16 %v1562, %v1561
      %v1973 = vpack.c.b16 %v1564, %v1563
      %v1974 = vpack.c.b16 %v1566, %v1565
      %v1975 = vpack.c.b16 %v1568, %v1567
      %v1976 = vpack.c.b16 %v1570, %v1569
      %v1977 = vpack.c.b16 %v1572, %v1571
      %v1978 = vpack.c.b16 %v1574, %v1573
      %v1979 = vpack.c.b16 %v1576, %v1575
      %v1980 = vpack.c.b16 %v1578, %v1577
      %v1981 = vpack.c.b16 %v1580, %v1579
      %v1982 = vpack.c.b16 %v1582, %v1581
      %v1983 = vpack.c.b16 %v1584, %v1583
      %v1984 = vpack.c.b16 %v1586, %v1585
      %v1985 = vpack.c.b16 %v1588, %v1587
      %v1986 = vpack.c.b16 %v1590, %v1589
      %v1987 = vpack.c.b16 %v1592, %v1591
      %v1988 = vpack.c.b16 %v1594, %v1593
      %v1989 = vpack.c.b16 %v1596, %v1595
      %v1990 = vpack.c.b16 %v1598, %v1597
      %v1991 = vpack.c.b16 %v1600, %v1599
      %v1992 = vpack.c.b16 %v1602, %v1601
      %v1993 = vpack.c.b16 %v1604, %v1603
      %v1994 = vpack.c.b16 %v1606, %v1605
      %v1995 = vpack.c.b16 %v1608, %v1607
      %v1996 = vpack.c.b16 %v1610, %v1609
      %v1997 = vpack.c.b16 %v1612, %v1611
      %v1998 = vpack.c.b16 %v1614, %v1613
      %v1999 = vpack.c.b16 %v1616, %v1615
      %v2000 = vpack.c.b16 %v1618, %v1617
      %v2001 = vpack.c.b16 %v1620, %v1619
      %v2002 = vpack.c.b16 %v1622, %v1621
      %v2003 = vpack.c.b16 %v1624, %v1623
      %v2004 = vpack.c.b16 %v1626, %v1625
      %v2005 = vpack.c.b16 %v1628, %v1627
      %v2006 = vpack.c.b16 %v1630, %v1629
      %v2007 = vpack.c.b16 %v1632, %v1631
      %v2008 = vpack.c.b16 %v1634, %v1633
      %v2009 = vpack.c.b16 %v1636, %v1635
      %v2010 = vpack.c.b16 %v1638, %v1637
      %v2011 = vpack.c.b16 %v1640, %v1639
      %v2012 = vpack.c.b16 %v1642, %v1641
      %v2013 = vpack.c.b16 %v1644, %v1643
      %v2014 = vpack.c.b16 %v1646, %v1645
      %v2015 = vpack.c.b16 %v1648, %v1647
      %v2016 = vpack.c.b16 %v1650, %v1649
      %v2017 = vpack.c.b16 %v1652, %v1651
      %v2018 = vpack.c.b16 %v1654, %v1653
      %v2019 = vpack.c.b16 %v1656, %v1655
      %v2020 = vpack.c.b16 %v1658, %v1657
      %v2021 = vpack.c.b16 %v1660, %v1659
      %v2022 = vpack.c.b16 %v1662, %v1661
      %v2023 = vpack.c.b16 %v1664, %v1663
      %v2024 = vpack.c.b16 %v1666, %v1665
      %v2025 = vpack.c.b16 %v1668, %v1667
      %v2026 = vpack.c.b16 %v1670, %v1669
      %v2027 = vpack.c.b16 %v1672, %v1671
      %v2028 = vpack.c.b16 %v1674, %v1673
      %v2029 = vpack.c.b16 %v1676, %v1675
      %v2030 = vpack.c.b16 %v1678, %v1677
      %v2031 = vpack.c.b16 %v1680, %v1679
      %v2032 = vpack.c.b16 %v1682, %v1681
      %v2033 = vpack.c.b16 %v1684, %v1683
      %v2034 = vpack.c.b16 %v1686, %v1685
      %v2035 = vpack.c.b16 %v1688, %v1687
      %v2036 = vpack.c.b16 %v1690, %v1689
      %v2037 = vpack.c.b16 %v1692, %v1691
      %v2038 = vpack.c.b16 %v1694, %v1693
      %v2039 = vpack.c.b16 %v1696, %v1695
      %v2040 = vpack.c.b16 %v1698, %v1697
      %v2041 = vpack.c.b16 %v1700, %v1699
      %v2042 = vpack.c.b16 %v1702, %v1701
      %v2043 = vpack.c.b16 %v1704, %v1703
      %v2044 = vpack.c.b16 %v1706, %v1705
      %v2045 = vpack.c.b16 %v1708, %v1707
      %v2046 = vpack.c.b16 %v1710, %v1709
      %v2047 = vpack.c.b16 %v1712, %v1711
      %v2048 = vpack.c.b16 %v1714, %v1713
      %v2049 = vpack.c.b16 %v1716, %v1715
      %v2050 = vpack.c.b16 %v1718, %v1717
      %v2051 = vpack.c.b16 %v1720, %v1719
      %v2052 = vpack.c.b16 %v1722, %v1721
      %v2053 = vpack.c.b16 %v1724, %v1723
      %v2054 = vpack.c.b16 %v1726, %v1725
      %v2055 = vpack.c.b16 %v1728, %v1727
      %v2056 = vpack.c.b16 %v1730, %v1729
      %v2057 = vpack.c.b16 %v1732, %v1731
      %v2058 = vpack.c.b16 %v1734, %v1733
      %v2059 = vpack.c.b16 %v1736, %v1735
      %v2060 = vpack.c.b16 %v1738, %v1737
      %v2061 = vpack.c.b16 %v1740, %v1739
      %v2062 = vpack.c.b16 %v1742, %v1741
      %v2063 = vpack.c.b16 %v1744, %v1743
      %v2064 = vpack.c.b16 %v1746, %v1745
      %v2065 = vpack.c.b16 %v1748, %v1747
      %v2066 = vpack.c.b16 %v1750, %v1749
      %v2067 = vpack.c.b16 %v1752, %v1751
      %v2068 = vpack.c.b16 %v1754, %v1753
      %v2069 = vpack.c.b16 %v1756, %v1755
      %v2070 = vpack.c.b16 %v1758, %v1757
      %v2071 = vpack.c.b16 %v1760, %v1759
      %v2072 = vpack.c.b16 %v1762, %v1761
      %v2073 = vpack.c.b16 %v1764, %v1763
      %v2074 = vpack.c.b16 %v1766, %v1765
      %v2075 = vpack.c.b16 %v1768, %v1767
      %v2076 = vpack.c.b16 %v1770, %v1769
      %v2077 = vpack.c.b16 %v1772, %v1771
      %v2078 = vpack.c.b16 %v1774, %v1773
      %v2079 = vpack.c.b16 %v1776, %v1775
      %v2080 = vpack.c.b16 %v1778, %v1777
      %v2081 = vpack.c.b16 %v1780, %v1779
      %v2082 = vpack.c.b16 %v1782, %v1781
      %v2083 = vpack.c.b16 %v1784, %v1783
      %v2084 = vpack.c.b16 %v1786, %v1785
      %v2085 = vpack.c.b16 %v1788, %v1787
      %v2086 = vpack.c.b16 %v1790, %v1789
      %v2087 = vpack.c.b16 %v1792, %v1791
      %v2088 = vpack.c.b16 %v1794, %v1793
      %v2089 = vpack.c.b16 %v1796, %v1795
      %v2090 = vpack.c.b16 %v1798, %v1797
      %v2091 = vpack.c.b16 %v1800, %v1799
      %v2092 = vpack.c.b16 %v1802, %v1801
      %v2093 = vpack.c.b16 %v1804, %v1803
      %v2094 = vpack.c.b16 %v1806, %v1805
      %v2095 = vpack.c.b16 %v1808, %v1807
      %v2096 = vpack.c.b16 %v1810, %v1809
      %v2097 = vpack.c.b16 %v1812, %v1811
      %v2098 = vpack.c.b16 %v1814, %v1813
      %v2099 = vpack.c.b16 %v1816, %v1815
      %v2100 = vpack.c.b16 %v1818, %v1817
      %v2101 = vpack.c.b16 %v1820, %v1819
      %v2102 = vpack.c.b16 %v1822, %v1821
      %v2103 = vpack.c.b16 %v1824, %v1823
      %v2104 = vpack.c.b16 %v1826, %v1825
      %v2105 = vpack.c.b16 %v1828, %v1827
      %v2106 = vpack.c.b16 %v1830, %v1829
      %v2107 = vpack.c.b16 %v1832, %v1831
      %v2108 = vpack.c.b16 %v1834, %v1833
      %v2109 = vpack.c.b16 %v1836, %v1835
      %v2110 = vpack.c.b16 %v1838, %v1837
      %v2111 = vpack.c.b16 %v1840, %v1839
      %v2112 = vpack.c.b16 %v1842, %v1841
      %v2113 = vpack.c.b16 %v1844, %v1843
      %v2114 = vpack.c.b16 %v1846, %v1845
      %v2115 = vpack.c.b16 %v1848, %v1847
      %v2116 = vpack.c.b16 %v1850, %v1849
      %v2117 = vpack.c.b16 %v1852, %v1851
      %v2118 = vpack.c.b16 %v1854, %v1853
      %v2119 = vpack.c.b16 %v1856, %v1855
      %v2120 = vpack.c.b16 %v1858, %v1857
      %v2121 = vpack.c.b16 %v1860, %v1859
      %v2122 = vpack.c.b16 %v1862, %v1861
      %v2123 = vpack.c.b16 %v1864, %v1863
      %v2124 = vpack.c.b16 %v1866, %v1865
      %v2125 = vpack.c.b16 %v1868, %v1867
      %v2126 = vpack.c.b16 %v1870, %v1869
      %2383 = vmatpush.bf16.msra.mxu0 %v1878
      %2384 = vmatpush.bf16.msra.mxu0 %v1877
      %2385 = vmatpush.bf16.msra.mxu0 %v1876
      %2386 = vmatpush.bf16.msra.mxu0 %v1875
      %2387 = vmatpush.bf16.msra.mxu0 %v1874
      %2388 = vmatpush.bf16.msra.mxu0 %v1873
      %2389 = vmatpush.bf16.msra.mxu0 %v1872
      %2390 = vmatpush.bf16.msra.mxu0 %v1871
      %2391 = vmatmul.bf16.gmra.mxu0 %v783
      %v2392 = vpop.f32.mrf.mxu0
      %v2393 = vadd.f32 %v733, %v2392
      %v2394 = vpop.f32.mrf.mxu0
      %2395 = vdwg.mxu0
      %2396 = vmatpush.bf16.msra.mxu0 %v1886
      %2397 = vmatpush.bf16.msra.mxu0 %v1885
      %2398 = vmatpush.bf16.msra.mxu0 %v1884
      %2399 = vmatpush.bf16.msra.mxu0 %v1883
      %2400 = vmatpush.bf16.msra.mxu0 %v1882
      %2401 = vmatpush.bf16.msra.mxu0 %v1881
      %2402 = vmatpush.bf16.msra.mxu0 %v1880
      %2403 = vmatpush.bf16.msra.mxu0 %v1879
      %2404 = vmatmul.bf16.gmra.mxu0 %v784
      %v2405 = vpop.f32.mrf.mxu0
      %v2406 = vadd.f32 %v2393, %v2405
      %v2407 = vpop.f32.mrf.mxu0
      %2408 = vdwg.mxu0
      %2409 = vmatpush.bf16.msra.mxu0 %v1894
      %2410 = vmatpush.bf16.msra.mxu0 %v1893
      %2411 = vmatpush.bf16.msra.mxu0 %v1892
      %2412 = vmatpush.bf16.msra.mxu0 %v1891
      %2413 = vmatpush.bf16.msra.mxu0 %v1890
      %2414 = vmatpush.bf16.msra.mxu0 %v1889
      %2415 = vmatpush.bf16.msra.mxu0 %v1888
      %2416 = vmatpush.bf16.msra.mxu0 %v1887
      %2417 = vmatmul.bf16.gmra.mxu0 %v785
      %v2418 = vpop.f32.mrf.mxu0
      %v2419 = vadd.f32 %v2406, %v2418
      %v2420 = vpop.f32.mrf.mxu0
      %2421 = vdwg.mxu0
      %2422 = vmatpush.bf16.msra.mxu0 %v1902
      %2423 = vmatpush.bf16.msra.mxu0 %v1901
      %2424 = vmatpush.bf16.msra.mxu0 %v1900
      %2425 = vmatpush.bf16.msra.mxu0 %v1899
      %2426 = vmatpush.bf16.msra.mxu0 %v1898
      %2427 = vmatpush.bf16.msra.mxu0 %v1897
      %2428 = vmatpush.bf16.msra.mxu0 %v1896
      %2429 = vmatpush.bf16.msra.mxu0 %v1895
      %2430 = vmatmul.bf16.gmra.mxu0 %v786
      %v2431 = vpop.f32.mrf.mxu0
      %v2432 = vadd.f32 %v2419, %v2431
      %v2433 = vpop.f32.mrf.mxu0
      %2434 = vdwg.mxu0
      %2435 = vmatpush.bf16.msra.mxu0 %v1910
      %2436 = vmatpush.bf16.msra.mxu0 %v1909
      %2437 = vmatpush.bf16.msra.mxu0 %v1908
      %2438 = vmatpush.bf16.msra.mxu0 %v1907
      %2439 = vmatpush.bf16.msra.mxu0 %v1906
      %2440 = vmatpush.bf16.msra.mxu0 %v1905
      %2441 = vmatpush.bf16.msra.mxu0 %v1904
      %2442 = vmatpush.bf16.msra.mxu0 %v1903
      %2443 = vmatmul.bf16.gmra.mxu0 %v787
      %v2444 = vpop.f32.mrf.mxu0
      %v2445 = vadd.f32 %v2432, %v2444
      %v2446 = vpop.f32.mrf.mxu0
      %2447 = vdwg.mxu0
      %2448 = vmatpush.bf16.msra.mxu0 %v1918
      %2449 = vmatpush.bf16.msra.mxu0 %v1917
      %2450 = vmatpush.bf16.msra.mxu0 %v1916
      %2451 = vmatpush.bf16.msra.mxu0 %v1915
      %2452 = vmatpush.bf16.msra.mxu0 %v1914
      %2453 = vmatpush.bf16.msra.mxu0 %v1913
      %2454 = vmatpush.bf16.msra.mxu0 %v1912
      %2455 = vmatpush.bf16.msra.mxu0 %v1911
      %2456 = vmatmul.bf16.gmra.mxu0 %v788
      %v2457 = vpop.f32.mrf.mxu0
      %v2458 = vadd.f32 %v2445, %v2457
      %v2459 = vpop.f32.mrf.mxu0
      %2460 = vdwg.mxu0
      %2461 = vmatpush.bf16.msra.mxu0 %v1926
      %2462 = vmatpush.bf16.msra.mxu0 %v1925
      %2463 = vmatpush.bf16.msra.mxu0 %v1924
      %2464 = vmatpush.bf16.msra.mxu0 %v1923
      %2465 = vmatpush.bf16.msra.mxu0 %v1922
      %2466 = vmatpush.bf16.msra.mxu0 %v1921
      %2467 = vmatpush.bf16.msra.mxu0 %v1920
      %2468 = vmatpush.bf16.msra.mxu0 %v1919
      %2469 = vmatmul.bf16.gmra.mxu0 %v789
      %v2470 = vpop.f32.mrf.mxu0
      %v2471 = vadd.f32 %v2458, %v2470
      %v2472 = vpop.f32.mrf.mxu0
      %2473 = vdwg.mxu0
      %2474 = vmatpush.bf16.msra.mxu0 %v1934
      %2475 = vmatpush.bf16.msra.mxu0 %v1933
      %2476 = vmatpush.bf16.msra.mxu0 %v1932
      %2477 = vmatpush.bf16.msra.mxu0 %v1931
      %2478 = vmatpush.bf16.msra.mxu0 %v1930
      %2479 = vmatpush.bf16.msra.mxu0 %v1929
      %2480 = vmatpush.bf16.msra.mxu0 %v1928
      %2481 = vmatpush.bf16.msra.mxu0 %v1927
      %2482 = vmatmul.bf16.gmra.mxu0 %v790
      %v2483 = vpop.f32.mrf.mxu0
      %v2484 = vadd.f32 %v2471, %v2483
      %v2485 = vpop.f32.mrf.mxu0
      %2486 = vdwg.mxu0
      %2487 = vmatpush.bf16.msra.mxu0 %v1942
      %2488 = vmatpush.bf16.msra.mxu0 %v1941
      %2489 = vmatpush.bf16.msra.mxu0 %v1940
      %2490 = vmatpush.bf16.msra.mxu0 %v1939
      %2491 = vmatpush.bf16.msra.mxu0 %v1938
      %2492 = vmatpush.bf16.msra.mxu0 %v1937
      %2493 = vmatpush.bf16.msra.mxu0 %v1936
      %2494 = vmatpush.bf16.msra.mxu0 %v1935
      %2495 = vmatmul.bf16.gmra.mxu0 %v791
      %v2496 = vpop.f32.mrf.mxu0
      %v2497 = vadd.f32 %v2484, %v2496
      %v2498 = vpop.f32.mrf.mxu0
      %2499 = vdwg.mxu0
      %2500 = vmatpush.bf16.msra.mxu0 %v1950
      %2501 = vmatpush.bf16.msra.mxu0 %v1949
      %2502 = vmatpush.bf16.msra.mxu0 %v1948
      %2503 = vmatpush.bf16.msra.mxu0 %v1947
      %2504 = vmatpush.bf16.msra.mxu0 %v1946
      %2505 = vmatpush.bf16.msra.mxu0 %v1945
      %2506 = vmatpush.bf16.msra.mxu0 %v1944
      %2507 = vmatpush.bf16.msra.mxu0 %v1943
      %2508 = vmatmul.bf16.gmra.mxu0 %v792
      %v2509 = vpop.f32.mrf.mxu0
      %v2510 = vadd.f32 %v2497, %v2509
      %v2511 = vpop.f32.mrf.mxu0
      %2512 = vdwg.mxu0
      %2513 = vmatpush.bf16.msra.mxu0 %v1958
      %2514 = vmatpush.bf16.msra.mxu0 %v1957
      %2515 = vmatpush.bf16.msra.mxu0 %v1956
      %2516 = vmatpush.bf16.msra.mxu0 %v1955
      %2517 = vmatpush.bf16.msra.mxu0 %v1954
      %2518 = vmatpush.bf16.msra.mxu0 %v1953
      %2519 = vmatpush.bf16.msra.mxu0 %v1952
      %2520 = vmatpush.bf16.msra.mxu0 %v1951
      %2521 = vmatmul.bf16.gmra.mxu0 %v793
      %v2522 = vpop.f32.mrf.mxu0
      %v2523 = vadd.f32 %v2510, %v2522
      %v2524 = vpop.f32.mrf.mxu0
      %2525 = vdwg.mxu0
      %2526 = vmatpush.bf16.msra.mxu0 %v1966
      %2527 = vmatpush.bf16.msra.mxu0 %v1965
      %2528 = vmatpush.bf16.msra.mxu0 %v1964
      %2529 = vmatpush.bf16.msra.mxu0 %v1963
      %2530 = vmatpush.bf16.msra.mxu0 %v1962
      %2531 = vmatpush.bf16.msra.mxu0 %v1961
      %2532 = vmatpush.bf16.msra.mxu0 %v1960
      %2533 = vmatpush.bf16.msra.mxu0 %v1959
      %2534 = vmatmul.bf16.gmra.mxu0 %v794
      %v2535 = vpop.f32.mrf.mxu0
      %v2536 = vadd.f32 %v2523, %v2535
      %v2537 = vpop.f32.mrf.mxu0
      %2538 = vdwg.mxu0
      %2539 = vmatpush.bf16.msra.mxu0 %v1974
      %2540 = vmatpush.bf16.msra.mxu0 %v1973
      %2541 = vmatpush.bf16.msra.mxu0 %v1972
      %2542 = vmatpush.bf16.msra.mxu0 %v1971
      %2543 = vmatpush.bf16.msra.mxu0 %v1970
      %2544 = vmatpush.bf16.msra.mxu0 %v1969
      %2545 = vmatpush.bf16.msra.mxu0 %v1968
      %2546 = vmatpush.bf16.msra.mxu0 %v1967
      %2547 = vmatmul.bf16.gmra.mxu0 %v795
      %v2548 = vpop.f32.mrf.mxu0
      %v2549 = vadd.f32 %v2536, %v2548
      %v2550 = vpop.f32.mrf.mxu0
      %2551 = vdwg.mxu0
      %2552 = vmatpush.bf16.msra.mxu0 %v1982
      %2553 = vmatpush.bf16.msra.mxu0 %v1981
      %2554 = vmatpush.bf16.msra.mxu0 %v1980
      %2555 = vmatpush.bf16.msra.mxu0 %v1979
      %2556 = vmatpush.bf16.msra.mxu0 %v1978
      %2557 = vmatpush.bf16.msra.mxu0 %v1977
      %2558 = vmatpush.bf16.msra.mxu0 %v1976
      %2559 = vmatpush.bf16.msra.mxu0 %v1975
      %2560 = vmatmul.bf16.gmra.mxu0 %v796
      %v2561 = vpop.f32.mrf.mxu0
      %v2562 = vadd.f32 %v2549, %v2561
      %v2563 = vpop.f32.mrf.mxu0
      %2564 = vdwg.mxu0
      %2565 = vmatpush.bf16.msra.mxu0 %v1990
      %2566 = vmatpush.bf16.msra.mxu0 %v1989
      %2567 = vmatpush.bf16.msra.mxu0 %v1988
      %2568 = vmatpush.bf16.msra.mxu0 %v1987
      %2569 = vmatpush.bf16.msra.mxu0 %v1986
      %2570 = vmatpush.bf16.msra.mxu0 %v1985
      %2571 = vmatpush.bf16.msra.mxu0 %v1984
      %2572 = vmatpush.bf16.msra.mxu0 %v1983
      %2573 = vmatmul.bf16.gmra.mxu0 %v797
      %v2574 = vpop.f32.mrf.mxu0
      %v2575 = vadd.f32 %v2562, %v2574
      %v2576 = vpop.f32.mrf.mxu0
      %2577 = vdwg.mxu0
      %2578 = vmatpush.bf16.msra.mxu0 %v1998
      %2579 = vmatpush.bf16.msra.mxu0 %v1997
      %2580 = vmatpush.bf16.msra.mxu0 %v1996
      %2581 = vmatpush.bf16.msra.mxu0 %v1995
      %2582 = vmatpush.bf16.msra.mxu0 %v1994
      %2583 = vmatpush.bf16.msra.mxu0 %v1993
      %2584 = vmatpush.bf16.msra.mxu0 %v1992
      %2585 = vmatpush.bf16.msra.mxu0 %v1991
      %2586 = vmatmul.bf16.gmra.mxu0 %v798
      %v2587 = vpop.f32.mrf.mxu0
      %v2588 = vadd.f32 %v2575, %v2587
      %v2589 = vpop.f32.mrf.mxu0
      %2590 = vdwg.mxu0
      %2591 = vmatpush.bf16.msra.mxu0 %v2006
      %2592 = vmatpush.bf16.msra.mxu0 %v2005
      %2593 = vmatpush.bf16.msra.mxu0 %v2004
      %2594 = vmatpush.bf16.msra.mxu0 %v2003
      %2595 = vmatpush.bf16.msra.mxu0 %v2002
      %2596 = vmatpush.bf16.msra.mxu0 %v2001
      %2597 = vmatpush.bf16.msra.mxu0 %v2000
      %2598 = vmatpush.bf16.msra.mxu0 %v1999
      %2599 = vmatmul.bf16.gmra.mxu0 %v799
      %v2600 = vpop.f32.mrf.mxu0
      %v2601 = vadd.f32 %v2588, %v2600
      %v2602 = vpop.f32.mrf.mxu0
      %2603 = vdwg.mxu0
      %2604 = vmatpush.bf16.msra.mxu0 %v2014
      %2605 = vmatpush.bf16.msra.mxu0 %v2013
      %2606 = vmatpush.bf16.msra.mxu0 %v2012
      %2607 = vmatpush.bf16.msra.mxu0 %v2011
      %2608 = vmatpush.bf16.msra.mxu0 %v2010
      %2609 = vmatpush.bf16.msra.mxu0 %v2009
      %2610 = vmatpush.bf16.msra.mxu0 %v2008
      %2611 = vmatpush.bf16.msra.mxu0 %v2007
      %2612 = vmatmul.bf16.gmra.mxu0 %v800
      %v2613 = vpop.f32.mrf.mxu0
      %v2614 = vadd.f32 %v2601, %v2613
      %v2615 = vpop.f32.mrf.mxu0
      %2616 = vdwg.mxu0
      %2617 = vmatpush.bf16.msra.mxu0 %v2022
      %2618 = vmatpush.bf16.msra.mxu0 %v2021
      %2619 = vmatpush.bf16.msra.mxu0 %v2020
      %2620 = vmatpush.bf16.msra.mxu0 %v2019
      %2621 = vmatpush.bf16.msra.mxu0 %v2018
      %2622 = vmatpush.bf16.msra.mxu0 %v2017
      %2623 = vmatpush.bf16.msra.mxu0 %v2016
      %2624 = vmatpush.bf16.msra.mxu0 %v2015
      %2625 = vmatmul.bf16.gmra.mxu0 %v801
      %v2626 = vpop.f32.mrf.mxu0
      %v2627 = vadd.f32 %v2614, %v2626
      %v2628 = vpop.f32.mrf.mxu0
      %2629 = vdwg.mxu0
      %2630 = vmatpush.bf16.msra.mxu0 %v2030
      %2631 = vmatpush.bf16.msra.mxu0 %v2029
      %2632 = vmatpush.bf16.msra.mxu0 %v2028
      %2633 = vmatpush.bf16.msra.mxu0 %v2027
      %2634 = vmatpush.bf16.msra.mxu0 %v2026
      %2635 = vmatpush.bf16.msra.mxu0 %v2025
      %2636 = vmatpush.bf16.msra.mxu0 %v2024
      %2637 = vmatpush.bf16.msra.mxu0 %v2023
      %2638 = vmatmul.bf16.gmra.mxu0 %v802
      %v2639 = vpop.f32.mrf.mxu0
      %v2640 = vadd.f32 %v2627, %v2639
      %v2641 = vpop.f32.mrf.mxu0
      %2642 = vdwg.mxu0
      %2643 = vmatpush.bf16.msra.mxu0 %v2038
      %2644 = vmatpush.bf16.msra.mxu0 %v2037
      %2645 = vmatpush.bf16.msra.mxu0 %v2036
      %2646 = vmatpush.bf16.msra.mxu0 %v2035
      %2647 = vmatpush.bf16.msra.mxu0 %v2034
      %2648 = vmatpush.bf16.msra.mxu0 %v2033
      %2649 = vmatpush.bf16.msra.mxu0 %v2032
      %2650 = vmatpush.bf16.msra.mxu0 %v2031
      %2651 = vmatmul.bf16.gmra.mxu0 %v803
      %v2652 = vpop.f32.mrf.mxu0
      %v2653 = vadd.f32 %v2640, %v2652
      %v2654 = vpop.f32.mrf.mxu0
      %2655 = vdwg.mxu0
      %2656 = vmatpush.bf16.msra.mxu0 %v2046
      %2657 = vmatpush.bf16.msra.mxu0 %v2045
      %2658 = vmatpush.bf16.msra.mxu0 %v2044
      %2659 = vmatpush.bf16.msra.mxu0 %v2043
      %2660 = vmatpush.bf16.msra.mxu0 %v2042
      %2661 = vmatpush.bf16.msra.mxu0 %v2041
      %2662 = vmatpush.bf16.msra.mxu0 %v2040
      %2663 = vmatpush.bf16.msra.mxu0 %v2039
      %2664 = vmatmul.bf16.gmra.mxu0 %v804
      %v2665 = vpop.f32.mrf.mxu0
      %v2666 = vadd.f32 %v2653, %v2665
      %v2667 = vpop.f32.mrf.mxu0
      %2668 = vdwg.mxu0
      %2669 = vmatpush.bf16.msra.mxu0 %v2054
      %2670 = vmatpush.bf16.msra.mxu0 %v2053
      %2671 = vmatpush.bf16.msra.mxu0 %v2052
      %2672 = vmatpush.bf16.msra.mxu0 %v2051
      %2673 = vmatpush.bf16.msra.mxu0 %v2050
      %2674 = vmatpush.bf16.msra.mxu0 %v2049
      %2675 = vmatpush.bf16.msra.mxu0 %v2048
      %2676 = vmatpush.bf16.msra.mxu0 %v2047
      %2677 = vmatmul.bf16.gmra.mxu0 %v805
      %v2678 = vpop.f32.mrf.mxu0
      %v2679 = vadd.f32 %v2666, %v2678
      %v2680 = vpop.f32.mrf.mxu0
      %2681 = vdwg.mxu0
      %2682 = vmatpush.bf16.msra.mxu0 %v2062
      %2683 = vmatpush.bf16.msra.mxu0 %v2061
      %2684 = vmatpush.bf16.msra.mxu0 %v2060
      %2685 = vmatpush.bf16.msra.mxu0 %v2059
      %2686 = vmatpush.bf16.msra.mxu0 %v2058
      %2687 = vmatpush.bf16.msra.mxu0 %v2057
      %2688 = vmatpush.bf16.msra.mxu0 %v2056
      %2689 = vmatpush.bf16.msra.mxu0 %v2055
      %2690 = vmatmul.bf16.gmra.mxu0 %v806
      %v2691 = vpop.f32.mrf.mxu0
      %v2692 = vadd.f32 %v2679, %v2691
      %v2693 = vpop.f32.mrf.mxu0
      %2694 = vdwg.mxu0
      %2695 = vmatpush.bf16.msra.mxu0 %v2070
      %2696 = vmatpush.bf16.msra.mxu0 %v2069
      %2697 = vmatpush.bf16.msra.mxu0 %v2068
      %2698 = vmatpush.bf16.msra.mxu0 %v2067
      %2699 = vmatpush.bf16.msra.mxu0 %v2066
      %2700 = vmatpush.bf16.msra.mxu0 %v2065
      %2701 = vmatpush.bf16.msra.mxu0 %v2064
      %2702 = vmatpush.bf16.msra.mxu0 %v2063
      %2703 = vmatmul.bf16.gmra.mxu0 %v807
      %v2704 = vpop.f32.mrf.mxu0
      %v2705 = vadd.f32 %v2692, %v2704
      %v2706 = vpop.f32.mrf.mxu0
      %2707 = vdwg.mxu0
      %2708 = vmatpush.bf16.msra.mxu0 %v2078
      %2709 = vmatpush.bf16.msra.mxu0 %v2077
      %2710 = vmatpush.bf16.msra.mxu0 %v2076
      %2711 = vmatpush.bf16.msra.mxu0 %v2075
      %2712 = vmatpush.bf16.msra.mxu0 %v2074
      %2713 = vmatpush.bf16.msra.mxu0 %v2073
      %2714 = vmatpush.bf16.msra.mxu0 %v2072
      %2715 = vmatpush.bf16.msra.mxu0 %v2071
      %2716 = vmatmul.bf16.gmra.mxu0 %v808
      %v2717 = vpop.f32.mrf.mxu0
      %v2718 = vadd.f32 %v2705, %v2717
      %v2719 = vpop.f32.mrf.mxu0
      %2720 = vdwg.mxu0
      %2721 = vmatpush.bf16.msra.mxu0 %v2086
      %2722 = vmatpush.bf16.msra.mxu0 %v2085
      %2723 = vmatpush.bf16.msra.mxu0 %v2084
      %2724 = vmatpush.bf16.msra.mxu0 %v2083
      %2725 = vmatpush.bf16.msra.mxu0 %v2082
      %2726 = vmatpush.bf16.msra.mxu0 %v2081
      %2727 = vmatpush.bf16.msra.mxu0 %v2080
      %2728 = vmatpush.bf16.msra.mxu0 %v2079
      %2729 = vmatmul.bf16.gmra.mxu0 %v809
      %v2730 = vpop.f32.mrf.mxu0
      %v2731 = vadd.f32 %v2718, %v2730
      %v2732 = vpop.f32.mrf.mxu0
      %2733 = vdwg.mxu0
      %2734 = vmatpush.bf16.msra.mxu0 %v2094
      %2735 = vmatpush.bf16.msra.mxu0 %v2093
      %2736 = vmatpush.bf16.msra.mxu0 %v2092
      %2737 = vmatpush.bf16.msra.mxu0 %v2091
      %2738 = vmatpush.bf16.msra.mxu0 %v2090
      %2739 = vmatpush.bf16.msra.mxu0 %v2089
      %2740 = vmatpush.bf16.msra.mxu0 %v2088
      %2741 = vmatpush.bf16.msra.mxu0 %v2087
      %2742 = vmatmul.bf16.gmra.mxu0 %v810
      %v2743 = vpop.f32.mrf.mxu0
      %v2744 = vadd.f32 %v2731, %v2743
      %v2745 = vpop.f32.mrf.mxu0
      %2746 = vdwg.mxu0
      %2747 = vmatpush.bf16.msra.mxu0 %v2102
      %2748 = vmatpush.bf16.msra.mxu0 %v2101
      %2749 = vmatpush.bf16.msra.mxu0 %v2100
      %2750 = vmatpush.bf16.msra.mxu0 %v2099
      %2751 = vmatpush.bf16.msra.mxu0 %v2098
      %2752 = vmatpush.bf16.msra.mxu0 %v2097
      %2753 = vmatpush.bf16.msra.mxu0 %v2096
      %2754 = vmatpush.bf16.msra.mxu0 %v2095
      %2755 = vmatmul.bf16.gmra.mxu0 %v811
      %v2756 = vpop.f32.mrf.mxu0
      %v2757 = vadd.f32 %v2744, %v2756
      %v2758 = vpop.f32.mrf.mxu0
      %2759 = vdwg.mxu0
      %2760 = vmatpush.bf16.msra.mxu0 %v2110
      %2761 = vmatpush.bf16.msra.mxu0 %v2109
      %2762 = vmatpush.bf16.msra.mxu0 %v2108
      %2763 = vmatpush.bf16.msra.mxu0 %v2107
      %2764 = vmatpush.bf16.msra.mxu0 %v2106
      %2765 = vmatpush.bf16.msra.mxu0 %v2105
      %2766 = vmatpush.bf16.msra.mxu0 %v2104
      %2767 = vmatpush.bf16.msra.mxu0 %v2103
      %2768 = vmatmul.bf16.gmra.mxu0 %v812
      %v2769 = vpop.f32.mrf.mxu0
      %v2770 = vadd.f32 %v2757, %v2769
      %v2771 = vpop.f32.mrf.mxu0
      %2772 = vdwg.mxu0
      %2773 = vmatpush.bf16.msra.mxu0 %v2118
      %2774 = vmatpush.bf16.msra.mxu0 %v2117
      %2775 = vmatpush.bf16.msra.mxu0 %v2116
      %2776 = vmatpush.bf16.msra.mxu0 %v2115
      %2777 = vmatpush.bf16.msra.mxu0 %v2114
      %2778 = vmatpush.bf16.msra.mxu0 %v2113
      %2779 = vmatpush.bf16.msra.mxu0 %v2112
      %2780 = vmatpush.bf16.msra.mxu0 %v2111
      %2781 = vmatmul.bf16.gmra.mxu0 %v813
      %v2782 = vpop.f32.mrf.mxu0
      %v2783 = vadd.f32 %v2770, %v2782
      %v2784 = vpop.f32.mrf.mxu0
      %2785 = vdwg.mxu0
      %2786 = vmatpush.bf16.msra.mxu0 %v2126
      %2787 = vmatpush.bf16.msra.mxu0 %v2125
      %2788 = vmatpush.bf16.msra.mxu0 %v2124
      %2789 = vmatpush.bf16.msra.mxu0 %v2123
      %2790 = vmatpush.bf16.msra.mxu0 %v2122
      %2791 = vmatpush.bf16.msra.mxu0 %v2121
      %2792 = vmatpush.bf16.msra.mxu0 %v2120
      %2793 = vmatpush.bf16.msra.mxu0 %v2119
      %2794 = vmatmul.bf16.gmra.mxu0 %v814
      %v2795 = vpop.f32.mrf.mxu0
      %v2796 = vadd.f32 %v2783, %v2795
      %v2797 = vpop.f32.mrf.mxu0
      %2798 = vdwg.mxu0
      %vm2799 = vcmask 7168
      %2800 = vst.msk [vmem:[%s202] sm:$0xff] %vm2799, %v2796
      %p2801 = scmp.lt.s32.totalorder %s18, 1
      %s2802 = scalar_select %p2801, %s18, 1
      %p2803 = scmp.lt.s32.totalorder %s19, 0
      %s2804 = scalar_select %p2803, %s19, 0
      %s2805 = sadd.s32 %s2804, %s2802
      %s2806 = smul.addr %s2805, 8
      %s2807 = scalar_lea.vmem %s3, %s2806
      // Predicated region
      $region33: #{_lambda_.9} parent=31 // pred_check
        %p2808 = pneg %p116
      $region34: #{_lambda_.9} parent=31 // pred_check_branch
        %2810 = sbr.rel (%p2808) target = $region36
      $region35: #{_lambda_.9} parent=31 // pred_region
        _
      $region36: #{_lambda_.9} parent=31 // pred_fallthru
        _
    $region32: #{_lambda_.9} parent=5 // pred_fallthru
      _
    %p2811 = scmp.le.s32.totalorder 2, %s9
    // Predicated region
    $region37: #{_lambda_.9} parent=5 // pred_check
      %p2812 = pneg %p2811
    $region38: #{_lambda_.9} parent=5 // pred_check_branch
      %2814 = sbr.rel (%p2812) target = $region40
    $region39: #{_lambda_.9} parent=5 // pred_region
      %s2815 = ssub.s32 %s9, 2
      // Predicated region
      $region41: #{_lambda_.9} parent=39 // pred_check
        %p2816 = pneg %p122
      $region42: #{_lambda_.9} parent=39 // pred_check_branch
        %2818 = sbr.rel (%p2816) target = $region44
      $region43: #{_lambda_.9} parent=39 // pred_region
        %p2819 = scmp.lt.s32.totalorder %s20, 1
        %s2820 = scalar_select %p2819, %s20, 1
        %p2821 = scmp.lt.s32.totalorder %s21, 0
        %s2822 = scalar_select %p2821, %s21, 0
        %s2823 = sadd.s32 %s2822, %s2820
        %s2824 = smul.addr %s2823, 8
        %s2825 = scalar_lea.vmem %s3, %s2824
      $region44: #{_lambda_.9} parent=39 // pred_fallthru
        _
    $region40: #{_lambda_.9} parent=5 // pred_fallthru
      _
  $region6: #{_lambda_.9} parent=0 // loop_footer
    %s13 = sadd.s32 1, %s9
  $region7: #{_lambda_.9} parent=0 // loop_footer_branch
    %8 = sbr.rel target = $region3
  $region8: #{_lambda_.9} parent=0 // loop_exit
    _

</llo_original>
